<compile_context>
chip_gen: v7x
topology: tpu7x:2x2x1
jax: 0.10.0
libtpu: 0.0.40
codegen_flags: <defaults>
</compile_context>

<pallas_src>
import functools

import jax
import jax.numpy as jnp
from jax.experimental import pallas as pl
from jax.experimental.pallas import tpu as pltpu


DEFAULT_TILE_M = 512  # rows (flattened batch*spatial) per grid step for the stem


def _round_up(x, m):
    return (x + m - 1) // m * m


@functools.lru_cache(maxsize=None)
def _vmem_limit_bytes():
    # ~3/4 of the generation's VMEM: ~96 MiB on v5e/v6e (128 MiB), ~48 MiB on v7x (64 MiB).
    try:
        cap = int(pltpu.get_tpu_info().vmem_capacity_bytes)
    except Exception:
        cap = 64 * 1024 * 1024
    return max(32 * 1024 * 1024, min(cap * 3 // 4, 96 * 1024 * 1024))


def _compiler_params():
    return pltpu.CompilerParams(
        dimension_semantics=("parallel",),       # megacore: split grid steps
        vmem_limit_bytes=_vmem_limit_bytes(),
    )


# ----------------------------------------------------------------------------
# Pallas kernels
# ----------------------------------------------------------------------------
def _matmul_bias_relu6_kernel(x_ref, w_ref, b_ref, o_ref):
    # Stem: im2col patches [tm, K] bf16 x [K, Cout] bf16 -> BN-folded bias + ReLU6.
    y = jnp.dot(x_ref[...], w_ref[...], preferred_element_type=jnp.float32)  # MXU
    o_ref[...] = jnp.clip(y + b_ref[...], 0.0, 6.0).astype(o_ref.dtype)


def _make_dw_pw_kernel(stride, ho, wo):
    # Fused depthwise(3x3, BN folded) + bias + ReLU6 + pointwise(1x1, BN folded)
    # + bias + ReLU6 for ONE image per grid step.
    #   stride 1: x_ref is the zero-padded image  [ho+2, wo+2, C]      (bf16)
    #   stride 2: x_ref holds 4 parity planes     [4, Hp, Wp, C]       (bf16)
    #             plane index = 2*(row_parity) + col_parity
    def kernel(x_ref, wd_ref, bd_ref, wp_ref, bp_ref, o_ref):
        x = x_ref[...]
        acc = None
        for ky in range(3):
            for kx in range(3):
                if stride == 1:
                    tap = x[ky:ky + ho, kx:kx + wo, :]
                else:
                    tap = x[2 * (ky % 2) + (kx % 2),
                            ky // 2:ky // 2 + ho,
                            kx // 2:kx // 2 + wo, :]
                t = tap * wd_ref[3 * ky + kx]            # bf16 VPU MAC
                acc = t if acc is None else acc + t
        y = jnp.clip(acc + bd_ref[...], 0.0, 6.0)        # bf16 epilogue
        z = jnp.dot(y.reshape(ho * wo, y.shape[-1]), wp_ref[...],
                    preferred_element_type=jnp.float32)  # MXU, f32 accumulate
        o_ref[...] = jnp.clip(z + bp_ref[...], 0.0, 6.0).astype(o_ref.dtype)

    return kernel


# ----------------------------------------------------------------------------
# pallas_call wrappers
# ----------------------------------------------------------------------------
def matmul_bias_relu6(x, w, bias):
    n, k = x.shape
    cout = w.shape[1]
    tile_m = min(DEFAULT_TILE_M, _round_up(n, 8))
    grid = (pl.cdiv(n, tile_m),)
    flops = 2 * n * k * cout
    bytes_accessed = (n * k + k * cout + n * cout) * 2 + cout * 4
    return pl.pallas_call(
        _matmul_bias_relu6_kernel,
        out_shape=jax.ShapeDtypeStruct((n, cout), jnp.bfloat16),
        grid=grid,
        in_specs=[
            pl.BlockSpec((tile_m, k), lambda i: (i, 0)),
            pl.BlockSpec((k, cout), lambda i: (0, 0)),
            pl.BlockSpec((1, cout), lambda i: (0, 0)),
        ],
        out_specs=pl.BlockSpec((tile_m, cout), lambda i: (i, 0)),
        compiler_params=_compiler_params(),
        cost_estimate=pl.CostEstimate(flops=flops, transcendentals=0,
                                      bytes_accessed=int(bytes_accessed)),
    )(x, w, bias)


def conv_dw_layer(x, stride, wd, bd, wp, bp):
    # x: [B, H, W, C] bf16 NHWC; wd: [9,1,1,C] bf16 (BN scale folded);
    # bd: [1,1,C] bf16; wp: [C, Cout] bf16 (BN scale folded); bp: [1, Cout] f32.
    b, h, w, c = x.shape
    ho = (h + 2 - 3) // stride + 1
    wo = (w + 2 - 3) // stride + 1
    cout = wp.shape[1]
    xp = jnp.pad(x.astype(jnp.bfloat16), ((0, 0), (1, 1), (1, 1), (0, 0)))

    if stride == 1:
        x_in = xp                                               # [B, H+2, W+2, C]
        in_spec = pl.BlockSpec((None, h + 2, w + 2, c), lambda i: (i, 0, 0, 0))
    else:
        # Parity planes so stride-2 taps become static unit-stride slices in-kernel.
        hpl = (h + 3) // 2          # ceil((H+2)/2)
        wpl = (w + 3) // 2
        planes = []
        for pr in range(2):
            for pc in range(2):
                p = xp[:, pr::2, pc::2, :]
                p = jnp.pad(p, ((0, 0), (0, hpl - p.shape[1]),
                                (0, wpl - p.shape[2]), (0, 0)))
                planes.append(p)
        x_in = jnp.stack(planes, axis=1)                        # [B, 4, Hp, Wp, C]
        in_spec = pl.BlockSpec((None, 4, hpl, wpl, c), lambda i: (i, 0, 0, 0, 0))

    flops = 2 * b * ho * wo * c * (9 + cout)
    bytes_accessed = (x_in.size + wd.size + bd.size + wp.size
                      + b * ho * wo * cout) * 2 + bp.size * 4

    out = pl.pallas_call(
        _make_dw_pw_kernel(stride, ho, wo),
        out_shape=jax.ShapeDtypeStruct((b, ho * wo, cout), jnp.bfloat16),
        grid=(b,),
        in_specs=[
            in_spec,
            pl.BlockSpec((9, 1, 1, c), lambda i: (0, 0, 0, 0)),
            pl.BlockSpec((1, 1, c), lambda i: (0, 0, 0)),
            pl.BlockSpec((c, cout), lambda i: (0, 0)),
            pl.BlockSpec((1, cout), lambda i: (0, 0)),
        ],
        out_specs=pl.BlockSpec((None, ho * wo, cout), lambda i: (i, 0, 0)),
        compiler_params=_compiler_params(),
        cost_estimate=pl.CostEstimate(flops=flops, transcendentals=0,
                                      bytes_accessed=int(bytes_accessed)),
    )(x_in, wd, bd, wp, bp)
    return out.reshape(b, ho, wo, cout)


# ----------------------------------------------------------------------------
# Stem im2col (padding=1, stride 2), done once on the tiny 3-channel input
# ----------------------------------------------------------------------------
def _extract_taps(x, stride):
    b, h, w, c = x.shape
    ho = (h + 2 - 3) // stride + 1
    wo = (w + 2 - 3) // stride + 1
    xp = jnp.pad(x, ((0, 0), (1, 1), (1, 1), (0, 0)))
    taps = []
    for ky in range(3):
        for kx in range(3):
            t = xp[:,
                   ky:ky + (ho - 1) * stride + 1:stride,
                   kx:kx + (wo - 1) * stride + 1:stride,
                   :]
            taps.append(t.reshape(b * ho * wo, c))
    return jnp.stack(taps, 0), (b, ho, wo)


def conv_bn_layer(x, stride, w2, bias):
    # x: [B,H,W,Cin] f32; w2: [K_pad, Cout] bf16 (BN scale folded); bias: [1, Cout] f32.
    b, h, w, cin = x.shape
    cout = w2.shape[1]
    taps, (b, ho, wo) = _extract_taps(x.astype(jnp.float32), stride)   # [9, N, Cin]
    n = b * ho * wo
    k = 9 * cin
    k_pad = w2.shape[0]
    patches = jnp.transpose(taps, (1, 0, 2)).reshape(n, k)
    patches = jnp.pad(patches, ((0, 0), (0, k_pad - k))).astype(jnp.bfloat16)
    y = matmul_bias_relu6(patches, w2, bias)                            # [N, Cout] bf16
    return y.reshape(b, ho, wo, cout)


# ----------------------------------------------------------------------------
# Deterministic parameter construction (shapes from MobileNetV1.__init__, alpha=1)
# ----------------------------------------------------------------------------
_DW_CFG = [
    (32, 64, 1), (64, 128, 2), (128, 128, 1), (128, 256, 2), (256, 256, 1),
    (256, 512, 2), (512, 512, 1), (512, 512, 1), (512, 512, 1), (512, 512, 1),
    (512, 512, 1),
]


def _init_bn(key, c, eps=1e-5):
    k1, k2, k3, k4 = jax.random.split(key, 4)
    gamma = 1.0 + 0.1 * jax.random.normal(k1, (c,), jnp.float32)
    beta = 0.1 * jax.random.normal(k2, (c,), jnp.float32)
    mean = 0.1 * jax.random.normal(k3, (c,), jnp.float32)
    var = 0.5 + 0.1 * jnp.abs(jax.random.normal(k4, (c,), jnp.float32))
    scale = gamma / jnp.sqrt(var + eps)
    bias = beta - mean * scale
    return scale.reshape(1, c), bias.reshape(1, c)


def init_params(key):
    params = []
    key, k1, k2 = jax.random.split(key, 3)
    w = 0.1 * jax.random.normal(k1, (32, 3, 3, 3), jnp.float32)
    params.append(("conv_bn", 2, w, _init_bn(k2, 32)))
    for inp, oup, s in _DW_CFG:
        key, k1, k2, k3, k4 = jax.random.split(key, 5)
        wd = 0.1 * jax.random.normal(k1, (inp, 1, 3, 3), jnp.float32)
        bnd = _init_bn(k2, inp)
        wp = 0.1 * jax.random.normal(k3, (oup, inp, 1, 1), jnp.float32)
        bnp = _init_bn(k4, oup)
        params.append(("conv_dw", s, wd, bnd, wp, bnp))
    return params


def prepare_params(params):
    # Fold BN scales into weights, transpose to kernel layouts, cast to bf16.
    prepped = []
    for layer in params:
        if layer[0] == "conv_bn":
            _, stride, w, (scale, bias) = layer
            cout, cin = w.shape[0], w.shape[1]
            k = 9 * cin
            k_pad = _round_up(k, 8)                                   # 27 -> 32
            w2 = jnp.transpose(w, (2, 3, 1, 0)).reshape(k, cout)      # (ky,kx,cin) x cout
            w2 = w2 * scale.reshape(1, cout)
            w2 = jnp.pad(w2, ((0, k_pad - k), (0, 0))).astype(jnp.bfloat16)
            prepped.append(("conv_bn", stride, w2,
                            bias.reshape(1, cout).astype(jnp.float32)))
        else:
            _, stride, dw_w, (sd, bd), pw_w, (sp, bp) = layer
            c = dw_w.shape[0]
            cout = pw_w.shape[0]
            wd = dw_w.reshape(c, 9).T                                  # (9, c), tap=ky*3+kx
            wd = (wd * sd.reshape(1, c)).reshape(9, 1, 1, c).astype(jnp.bfloat16)
            bdd = bd.reshape(1, 1, c).astype(jnp.bfloat16)
            wp = pw_w.reshape(cout, c).T                               # (c, cout)
            wp = (wp * sp.reshape(1, cout)).astype(jnp.bfloat16)
            bpp = bp.reshape(1, cout).astype(jnp.float32)
            prepped.append(("conv_dw", stride, wd, bdd, wp, bpp))
    return prepped


# ----------------------------------------------------------------------------
# Full forward (NCHW in, NCHW out — matches the PyTorch module)
# ----------------------------------------------------------------------------
def mobilenet_v1_forward(x_nchw, prepped):
    x = jnp.transpose(x_nchw, (0, 2, 3, 1))                           # -> NHWC
    for layer in prepped:
        if layer[0] == "conv_bn":
            _, stride, w2, bias = layer
            x = conv_bn_layer(x, stride, w2, bias)
        else:
            _, stride, wd, bdd, wp, bpp = layer
            x = conv_dw_layer(x, stride, wd, bdd, wp, bpp)
    x = x.astype(jnp.float32)
    return jnp.transpose(x, (0, 3, 1, 2))                             # -> NCHW


if __name__ == "__main__":
    key = jax.random.PRNGKey(0)
    kx, kp = jax.random.split(key)
    # Small input consistent with the conv stack: NCHW [2, 3, 16, 16]
    x = jax.random.normal(kx, (2, 3, 16, 16), jnp.float32)
    params = init_params(kp)
    prepped = prepare_params(params)

    fwd = jax.jit(functools.partial(mobilenet_v1_forward, prepped=prepped))
    out = fwd(x)
    jax.block_until_ready(out)

    assert out.shape == (2, 512, 1, 1), out.shape
    assert bool(jnp.all(jnp.isfinite(out)))
    print("KERNEL_OK")
</pallas_src>

<mosaic_0001>
module attributes {stable_mosaic.version = 11 : i64} {
  func.func @_matmul_bias_relu6_kernel(%arg0: i32, %arg1: memref<128x32xbf16, #tpu.memory_space<vmem>>, %arg2: memref<32x32xbf16, #tpu.memory_space<vmem>>, %arg3: memref<1x32xf32, #tpu.memory_space<vmem>>, %arg4: memref<128x32xbf16, #tpu.memory_space<vmem>>) attributes {dimension_semantics = [#tpu.dimension_semantics<parallel>], iteration_bounds = array<i64: 1>, scalar_prefetch = 0 : i64, scratch_operands = 0 : i64, tpu.core_type = #tpu.core_type<tc>, window_params = [{transform_indices = @transform_0, window_bounds = array<i64: 128, 32>}, {pipeline_mode = #tpu.pipeline_mode<synchronous>, transform_indices = @transform_1, window_bounds = array<i64: 32, 32>}, {pipeline_mode = #tpu.pipeline_mode<synchronous>, transform_indices = @transform_2, window_bounds = array<i64: 1, 32>}, {transform_indices = @transform_3, window_bounds = array<i64: 128, 32>}]} {
    %c0 = arith.constant 0 : index
    %c0_0 = arith.constant 0 : index
    %0 = vector.load %arg1[%c0, %c0_0] : memref<128x32xbf16, #tpu.memory_space<vmem>>, vector<128x32xbf16>
    %c0_1 = arith.constant 0 : index
    %c0_2 = arith.constant 0 : index
    %1 = vector.load %arg2[%c0_1, %c0_2] : memref<32x32xbf16, #tpu.memory_space<vmem>>, vector<32x32xbf16>
    %cst = arith.constant dense<0.000000e+00> : vector<128x32xf32>
    %2 = tpu.matmul %0, %1, %cst {dimension_numbers = #tpu.dot_dimension_numbers<[1], [0], [0], [1], [0, 0, 1, 1], [], []>} : vector<128x32xbf16>, vector<32x32xbf16>, vector<128x32xf32> -> vector<128x32xf32>
    %c0_3 = arith.constant 0 : index
    %c0_4 = arith.constant 0 : index
    %3 = vector.load %arg3[%c0_3, %c0_4] : memref<1x32xf32, #tpu.memory_space<vmem>>, vector<1x32xf32>
    %4 = vector.broadcast %3 : vector<1x32xf32> to vector<128x32xf32>
    %5 = arith.addf %2, %4 : vector<128x32xf32>
    %cst_5 = arith.constant 0.000000e+00 : f32
    %cst_6 = arith.constant 6.000000e+00 : f32
    %6 = vector.broadcast %cst_5 : f32 to vector<128x32xf32>
    %7 = arith.maximumf %6, %5 : vector<128x32xf32>
    %8 = vector.broadcast %cst_6 : f32 to vector<128x32xf32>
    %9 = arith.minimumf %8, %7 : vector<128x32xf32>
    %10 = arith.truncf %9 : vector<128x32xf32> to vector<128x32xbf16>
    %c0_7 = arith.constant 0 : index
    %c0_8 = arith.constant 0 : index
    %11 = vector.load %arg4[%c0_7, %c0_8] : memref<128x32xbf16, #tpu.memory_space<vmem>>, vector<128x32xbf16>
    tpu.vector_store %arg4[%c0_7, %c0_8], %10 {strides = array<i32>} : memref<128x32xbf16, #tpu.memory_space<vmem>>, vector<128x32xbf16>,
    return
  }
  func.func @transform_0(%arg0: i32) -> (i32, i32) {
    %c0_i32 = arith.constant 0 : i32
    %c0_i32_0 = arith.constant 0 : i32
    return %arg0, %c0_i32 : i32, i32
  }
  func.func @transform_1(%arg0: i32) -> (i32, i32) {
    %c0_i32 = arith.constant 0 : i32
    %c0_i32_0 = arith.constant 0 : i32
    %c0_i32_1 = arith.constant 0 : i32
    return %c0_i32, %c0_i32_0 : i32, i32
  }
  func.func @transform_2(%arg0: i32) -> (i32, i32) {
    %c0_i32 = arith.constant 0 : i32
    %c0_i32_0 = arith.constant 0 : i32
    %c0_i32_1 = arith.constant 0 : i32
    return %c0_i32, %c0_i32_0 : i32, i32
  }
  func.func @transform_3(%arg0: i32) -> (i32, i32) {
    %c0_i32 = arith.constant 0 : i32
    %c0_i32_0 = arith.constant 0 : i32
    return %arg0, %c0_i32 : i32, i32
  }
}

module attributes {stable_mosaic.version = 11 : i64} {
  func.func @kernel(%arg0: i32, %arg1: memref<1x10x10x32xbf16, #tpu.memory_space<vmem>>, %arg2: memref<9x1x1x32xbf16, #tpu.memory_space<vmem>>, %arg3: memref<1x1x32xbf16, #tpu.memory_space<vmem>>, %arg4: memref<32x64xbf16, #tpu.memory_space<vmem>>, %arg5: memref<1x64xf32, #tpu.memory_space<vmem>>, %arg6: memref<1x64x64xbf16, #tpu.memory_space<vmem>>) attributes {dimension_semantics = [#tpu.dimension_semantics<parallel>], iteration_bounds = array<i64: 2>, scalar_prefetch = 0 : i64, scratch_operands = 0 : i64, tpu.core_type = #tpu.core_type<tc>, window_params = [{transform_indices = @transform_0, window_bounds = array<i64: 1, 10, 10, 32>}, {pipeline_mode = #tpu.pipeline_mode<synchronous>, transform_indices = @transform_1, window_bounds = array<i64: 9, 1, 1, 32>}, {pipeline_mode = #tpu.pipeline_mode<synchronous>, transform_indices = @transform_2, window_bounds = array<i64: 1, 1, 32>}, {pipeline_mode = #tpu.pipeline_mode<synchronous>, transform_indices = @transform_3, window_bounds = array<i64: 32, 64>}, {pipeline_mode = #tpu.pipeline_mode<synchronous>, transform_indices = @transform_4, window_bounds = array<i64: 1, 64>}, {transform_indices = @transform_5, window_bounds = array<i64: 1, 64, 64>}]} {
    %c0 = arith.constant 0 : index
    %c0_0 = arith.constant 0 : index
    %c0_1 = arith.constant 0 : index
    %c0_2 = arith.constant 0 : index
    %0 = vector.load %arg1[%c0, %c0_0, %c0_1, %c0_2] : memref<1x10x10x32xbf16, #tpu.memory_space<vmem>>, vector<1x10x10x32xbf16>
    %1 = vector.shape_cast %0 : vector<1x10x10x32xbf16> to vector<10x10x32xbf16>
    %2 = vector.extract_strided_slice %1 {offsets = [0, 0, 0], sizes = [8, 8, 32], strides = [1, 1, 1]} : vector<10x10x32xbf16> to vector<8x8x32xbf16>
    %c0_3 = arith.constant 0 : index
    %c0_4 = arith.constant 0 : index
    %c0_5 = arith.constant 0 : index
    %c0_6 = arith.constant 0 : index
    %3 = vector.load %arg2[%c0_3, %c0_4, %c0_5, %c0_6] : memref<9x1x1x32xbf16, #tpu.memory_space<vmem>>, vector<1x1x1x32xbf16>
    %4 = vector.shape_cast %3 : vector<1x1x1x32xbf16> to vector<1x1x32xbf16>
    %5 = vector.broadcast %4 : vector<1x1x32xbf16> to vector<8x8x32xbf16>
    %6 = arith.mulf %2, %5 : vector<8x8x32xbf16>
    %7 = vector.extract_strided_slice %1 {offsets = [0, 1, 0], sizes = [8, 8, 32], strides = [1, 1, 1]} : vector<10x10x32xbf16> to vector<8x8x32xbf16>
    %c1 = arith.constant 1 : index
    %c0_7 = arith.constant 0 : index
    %c0_8 = arith.constant 0 : index
    %c0_9 = arith.constant 0 : index
    %8 = vector.load %arg2[%c1, %c0_7, %c0_8, %c0_9] : memref<9x1x1x32xbf16, #tpu.memory_space<vmem>>, vector<1x1x1x32xbf16>
    %9 = vector.shape_cast %8 : vector<1x1x1x32xbf16> to vector<1x1x32xbf16>
    %10 = vector.broadcast %9 : vector<1x1x32xbf16> to vector<8x8x32xbf16>
    %11 = arith.mulf %7, %10 : vector<8x8x32xbf16>
    %12 = arith.addf %6, %11 : vector<8x8x32xbf16>
    %13 = vector.extract_strided_slice %1 {offsets = [0, 2, 0], sizes = [8, 8, 32], strides = [1, 1, 1]} : vector<10x10x32xbf16> to vector<8x8x32xbf16>
    %c2 = arith.constant 2 : index
    %c0_10 = arith.constant 0 : index
    %c0_11 = arith.constant 0 : index
    %c0_12 = arith.constant 0 : index
    %14 = vector.load %arg2[%c2, %c0_10, %c0_11, %c0_12] : memref<9x1x1x32xbf16, #tpu.memory_space<vmem>>, vector<1x1x1x32xbf16>
    %15 = vector.shape_cast %14 : vector<1x1x1x32xbf16> to vector<1x1x32xbf16>
    %16 = vector.broadcast %15 : vector<1x1x32xbf16> to vector<8x8x32xbf16>
    %17 = arith.mulf %13, %16 : vector<8x8x32xbf16>
    %18 = arith.addf %12, %17 : vector<8x8x32xbf16>
    %19 = vector.extract_strided_slice %1 {offsets = [1, 0, 0], sizes = [8, 8, 32], strides = [1, 1, 1]} : vector<10x10x32xbf16> to vector<8x8x32xbf16>
    %c3 = arith.constant 3 : index
    %c0_13 = arith.constant 0 : index
    %c0_14 = arith.constant 0 : index
    %c0_15 = arith.constant 0 : index
    %20 = vector.load %arg2[%c3, %c0_13, %c0_14, %c0_15] : memref<9x1x1x32xbf16, #tpu.memory_space<vmem>>, vector<1x1x1x32xbf16>
    %21 = vector.shape_cast %20 : vector<1x1x1x32xbf16> to vector<1x1x32xbf16>
    %22 = vector.broadcast %21 : vector<1x1x32xbf16> to vector<8x8x32xbf16>
    %23 = arith.mulf %19, %22 : vector<8x8x32xbf16>
    %24 = arith.addf %18, %23 : vector<8x8x32xbf16>
    %25 = vector.extract_strided_slice %1 {offsets = [1, 1, 0], sizes = [8, 8, 32], strides = [1, 1, 1]} : vector<10x10x32xbf16> to vector<8x8x32xbf16>
    %c4 = arith.constant 4 : index
    %c0_16 = arith.constant 0 : index
    %c0_17 = arith.constant 0 : index
    %c0_18 = arith.constant 0 : index
    %26 = vector.load %arg2[%c4, %c0_16, %c0_17, %c0_18] : memref<9x1x1x32xbf16, #tpu.memory_space<vmem>>, vector<1x1x1x32xbf16>
    %27 = vector.shape_cast %26 : vector<1x1x1x32xbf16> to vector<1x1x32xbf16>
    %28 = vector.broadcast %27 : vector<1x1x32xbf16> to vector<8x8x32xbf16>
    %29 = arith.mulf %25, %28 : vector<8x8x32xbf16>
    %30 = arith.addf %24, %29 : vector<8x8x32xbf16>
    %31 = vector.extract_strided_slice %1 {offsets = [1, 2, 0], sizes = [8, 8, 32], strides = [1, 1, 1]} : vector<10x10x32xbf16> to vector<8x8x32xbf16>
    %c5 = arith.constant 5 : index
    %c0_19 = arith.constant 0 : index
    %c0_20 = arith.constant 0 : index
    %c0_21 = arith.constant 0 : index
    %32 = vector.load %arg2[%c5, %c0_19, %c0_20, %c0_21] : memref<9x1x1x32xbf16, #tpu.memory_space<vmem>>, vector<1x1x1x32xbf16>
    %33 = vector.shape_cast %32 : vector<1x1x1x32xbf16> to vector<1x1x32xbf16>
    %34 = vector.broadcast %33 : vector<1x1x32xbf16> to vector<8x8x32xbf16>
    %35 = arith.mulf %31, %34 : vector<8x8x32xbf16>
    %36 = arith.addf %30, %35 : vector<8x8x32xbf16>
    %37 = vector.extract_strided_slice %1 {offsets = [2, 0, 0], sizes = [8, 8, 32], strides = [1, 1, 1]} : vector<10x10x32xbf16> to vector<8x8x32xbf16>
    %c6 = arith.constant 6 : index
    %c0_22 = arith.constant 0 : index
    %c0_23 = arith.constant 0 : index
    %c0_24 = arith.constant 0 : index
    %38 = vector.load %arg2[%c6, %c0_22, %c0_23, %c0_24] : memref<9x1x1x32xbf16, #tpu.memory_space<vmem>>, vector<1x1x1x32xbf16>
    %39 = vector.shape_cast %38 : vector<1x1x1x32xbf16> to vector<1x1x32xbf16>
    %40 = vector.broadcast %39 : vector<1x1x32xbf16> to vector<8x8x32xbf16>
    %41 = arith.mulf %37, %40 : vector<8x8x32xbf16>
    %42 = arith.addf %36, %41 : vector<8x8x32xbf16>
    %43 = vector.extract_strided_slice %1 {offsets = [2, 1, 0], sizes = [8, 8, 32], strides = [1, 1, 1]} : vector<10x10x32xbf16> to vector<8x8x32xbf16>
    %c7 = arith.constant 7 : index
    %c0_25 = arith.constant 0 : index
    %c0_26 = arith.constant 0 : index
    %c0_27 = arith.constant 0 : index
    %44 = vector.load %arg2[%c7, %c0_25, %c0_26, %c0_27] : memref<9x1x1x32xbf16, #tpu.memory_space<vmem>>, vector<1x1x1x32xbf16>
    %45 = vector.shape_cast %44 : vector<1x1x1x32xbf16> to vector<1x1x32xbf16>
    %46 = vector.broadcast %45 : vector<1x1x32xbf16> to vector<8x8x32xbf16>
    %47 = arith.mulf %43, %46 : vector<8x8x32xbf16>
    %48 = arith.addf %42, %47 : vector<8x8x32xbf16>
    %49 = vector.extract_strided_slice %1 {offsets = [2, 2, 0], sizes = [8, 8, 32], strides = [1, 1, 1]} : vector<10x10x32xbf16> to vector<8x8x32xbf16>
    %c8 = arith.constant 8 : index
    %c0_28 = arith.constant 0 : index
    %c0_29 = arith.constant 0 : index
    %c0_30 = arith.constant 0 : index
    %50 = vector.load %arg2[%c8, %c0_28, %c0_29, %c0_30] : memref<9x1x1x32xbf16, #tpu.memory_space<vmem>>, vector<1x1x1x32xbf16>
    %51 = vector.shape_cast %50 : vector<1x1x1x32xbf16> to vector<1x1x32xbf16>
    %52 = vector.broadcast %51 : vector<1x1x32xbf16> to vector<8x8x32xbf16>
    %53 = arith.mulf %49, %52 : vector<8x8x32xbf16>
    %54 = arith.addf %48, %53 : vector<8x8x32xbf16>
    %c0_31 = arith.constant 0 : index
    %c0_32 = arith.constant 0 : index
    %c0_33 = arith.constant 0 : index
    %55 = vector.load %arg3[%c0_31, %c0_32, %c0_33] : memref<1x1x32xbf16, #tpu.memory_space<vmem>>, vector<1x1x32xbf16>
    %56 = vector.broadcast %55 : vector<1x1x32xbf16> to vector<8x8x32xbf16>
    %57 = arith.addf %54, %56 : vector<8x8x32xbf16>
    %cst = arith.constant 0.000000e+00 : f32
    %cst_34 = arith.constant 6.000000e+00 : f32
    %58 = arith.truncf %cst : f32 to bf16
    %59 = vector.broadcast %58 : bf16 to vector<8x8x32xbf16>
    %60 = arith.maximumf %59, %57 : vector<8x8x32xbf16>
    %61 = arith.truncf %cst_34 : f32 to bf16
    %62 = vector.broadcast %61 : bf16 to vector<8x8x32xbf16>
    %63 = arith.minimumf %62, %60 : vector<8x8x32xbf16>
    %64 = vector.shape_cast %63 : vector<8x8x32xbf16> to vector<64x32xbf16>
    %c0_35 = arith.constant 0 : index
    %c0_36 = arith.constant 0 : index
    %65 = vector.load %arg4[%c0_35, %c0_36] : memref<32x64xbf16, #tpu.memory_space<vmem>>, vector<32x64xbf16>
    %cst_37 = arith.constant dense<0.000000e+00> : vector<64x64xf32>
    %66 = tpu.matmul %64, %65, %cst_37 {dimension_numbers = #tpu.dot_dimension_numbers<[1], [0], [0], [1], [0, 0, 1, 1], [], []>} : vector<64x32xbf16>, vector<32x64xbf16>, vector<64x64xf32> -> vector<64x64xf32>
    %c0_38 = arith.constant 0 : index
    %c0_39 = arith.constant 0 : index
    %67 = vector.load %arg5[%c0_38, %c0_39] : memref<1x64xf32, #tpu.memory_space<vmem>>, vector<1x64xf32>
    %68 = vector.broadcast %67 : vector<1x64xf32> to vector<64x64xf32>
    %69 = arith.addf %66, %68 : vector<64x64xf32>
    %cst_40 = arith.constant 0.000000e+00 : f32
    %cst_41 = arith.constant 6.000000e+00 : f32
    %70 = vector.broadcast %cst_40 : f32 to vector<64x64xf32>
    %71 = arith.maximumf %70, %69 : vector<64x64xf32>
    %72 = vector.broadcast %cst_41 : f32 to vector<64x64xf32>
    %73 = arith.minimumf %72, %71 : vector<64x64xf32>
    %74 = arith.truncf %73 : vector<64x64xf32> to vector<64x64xbf16>
    %c0_42 = arith.constant 0 : index
    %c0_43 = arith.constant 0 : index
    %c0_44 = arith.constant 0 : index
    %75 = vector.load %arg6[%c0_42, %c0_43, %c0_44] : memref<1x64x64xbf16, #tpu.memory_space<vmem>>, vector<1x64x64xbf16>
    %76 = vector.shape_cast %75 : vector<1x64x64xbf16> to vector<64x64xbf16>
    %77 = vector.shape_cast %74 : vector<64x64xbf16> to vector<1x64x64xbf16>
    tpu.vector_store %arg6[%c0_42, %c0_43, %c0_44], %77 {strides = array<i32>} : memref<1x64x64xbf16, #tpu.memory_space<vmem>>, vector<1x64x64xbf16>,
    return
  }
  func.func @transform_0(%arg0: i32) -> (i32, i32, i32, i32) {
    %c0_i32 = arith.constant 0 : i32
    %c0_i32_0 = arith.constant 0 : i32
    %c0_i32_1 = arith.constant 0 : i32
    %c0_i32_2 = arith.constant 0 : i32
    return %arg0, %c0_i32, %c0_i32_0, %c0_i32_1 : i32, i32, i32, i32
  }
  func.func @transform_1(%arg0: i32) -> (i32, i32, i32, i32) {
    %c0_i32 = arith.constant 0 : i32
    %c0_i32_0 = arith.constant 0 : i32
    %c0_i32_1 = arith.constant 0 : i32
    %c0_i32_2 = arith.constant 0 : i32
    %c0_i32_3 = arith.constant 0 : i32
    return %c0_i32, %c0_i32_0, %c0_i32_1, %c0_i32_2 : i32, i32, i32, i32
  }
  func.func @transform_2(%arg0: i32) -> (i32, i32, i32) {
    %c0_i32 = arith.constant 0 : i32
    %c0_i32_0 = arith.constant 0 : i32
    %c0_i32_1 = arith.constant 0 : i32
    %c0_i32_2 = arith.constant 0 : i32
    return %c0_i32, %c0_i32_0, %c0_i32_1 : i32, i32, i32
  }
  func.func @transform_3(%arg0: i32) -> (i32, i32) {
    %c0_i32 = arith.constant 0 : i32
    %c0_i32_0 = arith.constant 0 : i32
    %c0_i32_1 = arith.constant 0 : i32
    return %c0_i32, %c0_i32_0 : i32, i32
  }
  func.func @transform_4(%arg0: i32) -> (i32, i32) {
    %c0_i32 = arith.constant 0 : i32
    %c0_i32_0 = arith.constant 0 : i32
    %c0_i32_1 = arith.constant 0 : i32
    return %c0_i32, %c0_i32_0 : i32, i32
  }
  func.func @transform_5(%arg0: i32) -> (i32, i32, i32) {
    %c0_i32 = arith.constant 0 : i32
    %c0_i32_0 = arith.constant 0 : i32
    %c0_i32_1 = arith.constant 0 : i32
    return %arg0, %c0_i32, %c0_i32_0 : i32, i32, i32
  }
}

module attributes {stable_mosaic.version = 11 : i64} {
  func.func @kernel(%arg0: i32, %arg1: memref<1x4x5x5x64xbf16, #tpu.memory_space<vmem>>, %arg2: memref<9x1x1x64xbf16, #tpu.memory_space<vmem>>, %arg3: memref<1x1x64xbf16, #tpu.memory_space<vmem>>, %arg4: memref<64x128xbf16, #tpu.memory_space<vmem>>, %arg5: memref<1x128xf32, #tpu.memory_space<vmem>>, %arg6: memref<1x16x128xbf16, #tpu.memory_space<vmem>>) attributes {dimension_semantics = [#tpu.dimension_semantics<parallel>], iteration_bounds = array<i64: 2>, scalar_prefetch = 0 : i64, scratch_operands = 0 : i64, tpu.core_type = #tpu.core_type<tc>, window_params = [{transform_indices = @transform_0, window_bounds = array<i64: 1, 4, 5, 5, 64>}, {pipeline_mode = #tpu.pipeline_mode<synchronous>, transform_indices = @transform_1, window_bounds = array<i64: 9, 1, 1, 64>}, {pipeline_mode = #tpu.pipeline_mode<synchronous>, transform_indices = @transform_2, window_bounds = array<i64: 1, 1, 64>}, {pipeline_mode = #tpu.pipeline_mode<synchronous>, transform_indices = @transform_3, window_bounds = array<i64: 64, 128>}, {pipeline_mode = #tpu.pipeline_mode<synchronous>, transform_indices = @transform_4, window_bounds = array<i64: 1, 128>}, {transform_indices = @transform_5, window_bounds = array<i64: 1, 16, 128>}]} {
    %c0 = arith.constant 0 : index
    %c0_0 = arith.constant 0 : index
    %c0_1 = arith.constant 0 : index
    %c0_2 = arith.constant 0 : index
    %c0_3 = arith.constant 0 : index
    %0 = vector.load %arg1[%c0, %c0_0, %c0_1, %c0_2, %c0_3] : memref<1x4x5x5x64xbf16, #tpu.memory_space<vmem>>, vector<1x4x5x5x64xbf16>
    %1 = vector.shape_cast %0 : vector<1x4x5x5x64xbf16> to vector<4x5x5x64xbf16>
    %2 = vector.extract_strided_slice %1 {offsets = [0, 0, 0, 0], sizes = [1, 4, 4, 64], strides = [1, 1, 1, 1]} : vector<4x5x5x64xbf16> to vector<1x4x4x64xbf16>
    %3 = vector.shape_cast %2 : vector<1x4x4x64xbf16> to vector<4x4x64xbf16>
    %c0_4 = arith.constant 0 : index
    %c0_5 = arith.constant 0 : index
    %c0_6 = arith.constant 0 : index
    %c0_7 = arith.constant 0 : index
    %4 = vector.load %arg2[%c0_4, %c0_5, %c0_6, %c0_7] : memref<9x1x1x64xbf16, #tpu.memory_space<vmem>>, vector<1x1x1x64xbf16>
    %5 = vector.shape_cast %4 : vector<1x1x1x64xbf16> to vector<1x1x64xbf16>
    %6 = vector.broadcast %5 : vector<1x1x64xbf16> to vector<4x4x64xbf16>
    %7 = arith.mulf %3, %6 : vector<4x4x64xbf16>
    %8 = vector.extract_strided_slice %1 {offsets = [1, 0, 0, 0], sizes = [1, 4, 4, 64], strides = [1, 1, 1, 1]} : vector<4x5x5x64xbf16> to vector<1x4x4x64xbf16>
    %9 = vector.shape_cast %8 : vector<1x4x4x64xbf16> to vector<4x4x64xbf16>
    %c1 = arith.constant 1 : index
    %c0_8 = arith.constant 0 : index
    %c0_9 = arith.constant 0 : index
    %c0_10 = arith.constant 0 : index
    %10 = vector.load %arg2[%c1, %c0_8, %c0_9, %c0_10] : memref<9x1x1x64xbf16, #tpu.memory_space<vmem>>, vector<1x1x1x64xbf16>
    %11 = vector.shape_cast %10 : vector<1x1x1x64xbf16> to vector<1x1x64xbf16>
    %12 = vector.broadcast %11 : vector<1x1x64xbf16> to vector<4x4x64xbf16>
    %13 = arith.mulf %9, %12 : vector<4x4x64xbf16>
    %14 = arith.addf %7, %13 : vector<4x4x64xbf16>
    %15 = vector.extract_strided_slice %1 {offsets = [0, 0, 1, 0], sizes = [1, 4, 4, 64], strides = [1, 1, 1, 1]} : vector<4x5x5x64xbf16> to vector<1x4x4x64xbf16>
    %16 = vector.shape_cast %15 : vector<1x4x4x64xbf16> to vector<4x4x64xbf16>
    %c2 = arith.constant 2 : index
    %c0_11 = arith.constant 0 : index
    %c0_12 = arith.constant 0 : index
    %c0_13 = arith.constant 0 : index
    %17 = vector.load %arg2[%c2, %c0_11, %c0_12, %c0_13] : memref<9x1x1x64xbf16, #tpu.memory_space<vmem>>, vector<1x1x1x64xbf16>
    %18 = vector.shape_cast %17 : vector<1x1x1x64xbf16> to vector<1x1x64xbf16>
    %19 = vector.broadcast %18 : vector<1x1x64xbf16> to vector<4x4x64xbf16>
    %20 = arith.mulf %16, %19 : vector<4x4x64xbf16>
    %21 = arith.addf %14, %20 : vector<4x4x64xbf16>
    %22 = vector.extract_strided_slice %1 {offsets = [2, 0, 0, 0], sizes = [1, 4, 4, 64], strides = [1, 1, 1, 1]} : vector<4x5x5x64xbf16> to vector<1x4x4x64xbf16>
    %23 = vector.shape_cast %22 : vector<1x4x4x64xbf16> to vector<4x4x64xbf16>
    %c3 = arith.constant 3 : index
    %c0_14 = arith.constant 0 : index
    %c0_15 = arith.constant 0 : index
    %c0_16 = arith.constant 0 : index
    %24 = vector.load %arg2[%c3, %c0_14, %c0_15, %c0_16] : memref<9x1x1x64xbf16, #tpu.memory_space<vmem>>, vector<1x1x1x64xbf16>
    %25 = vector.shape_cast %24 : vector<1x1x1x64xbf16> to vector<1x1x64xbf16>
    %26 = vector.broadcast %25 : vector<1x1x64xbf16> to vector<4x4x64xbf16>
    %27 = arith.mulf %23, %26 : vector<4x4x64xbf16>
    %28 = arith.addf %21, %27 : vector<4x4x64xbf16>
    %29 = vector.extract_strided_slice %1 {offsets = [3, 0, 0, 0], sizes = [1, 4, 4, 64], strides = [1, 1, 1, 1]} : vector<4x5x5x64xbf16> to vector<1x4x4x64xbf16>
    %30 = vector.shape_cast %29 : vector<1x4x4x64xbf16> to vector<4x4x64xbf16>
    %c4 = arith.constant 4 : index
    %c0_17 = arith.constant 0 : index
    %c0_18 = arith.constant 0 : index
    %c0_19 = arith.constant 0 : index
    %31 = vector.load %arg2[%c4, %c0_17, %c0_18, %c0_19] : memref<9x1x1x64xbf16, #tpu.memory_space<vmem>>, vector<1x1x1x64xbf16>
    %32 = vector.shape_cast %31 : vector<1x1x1x64xbf16> to vector<1x1x64xbf16>
    %33 = vector.broadcast %32 : vector<1x1x64xbf16> to vector<4x4x64xbf16>
    %34 = arith.mulf %30, %33 : vector<4x4x64xbf16>
    %35 = arith.addf %28, %34 : vector<4x4x64xbf16>
    %36 = vector.extract_strided_slice %1 {offsets = [2, 0, 1, 0], sizes = [1, 4, 4, 64], strides = [1, 1, 1, 1]} : vector<4x5x5x64xbf16> to vector<1x4x4x64xbf16>
    %37 = vector.shape_cast %36 : vector<1x4x4x64xbf16> to vector<4x4x64xbf16>
    %c5 = arith.constant 5 : index
    %c0_20 = arith.constant 0 : index
    %c0_21 = arith.constant 0 : index
    %c0_22 = arith.constant 0 : index
    %38 = vector.load %arg2[%c5, %c0_20, %c0_21, %c0_22] : memref<9x1x1x64xbf16, #tpu.memory_space<vmem>>, vector<1x1x1x64xbf16>
    %39 = vector.shape_cast %38 : vector<1x1x1x64xbf16> to vector<1x1x64xbf16>
    %40 = vector.broadcast %39 : vector<1x1x64xbf16> to vector<4x4x64xbf16>
    %41 = arith.mulf %37, %40 : vector<4x4x64xbf16>
    %42 = arith.addf %35, %41 : vector<4x4x64xbf16>
    %43 = vector.extract_strided_slice %1 {offsets = [0, 1, 0, 0], sizes = [1, 4, 4, 64], strides = [1, 1, 1, 1]} : vector<4x5x5x64xbf16> to vector<1x4x4x64xbf16>
    %44 = vector.shape_cast %43 : vector<1x4x4x64xbf16> to vector<4x4x64xbf16>
    %c6 = arith.constant 6 : index
    %c0_23 = arith.constant 0 : index
    %c0_24 = arith.constant 0 : index
    %c0_25 = arith.constant 0 : index
    %45 = vector.load %arg2[%c6, %c0_23, %c0_24, %c0_25] : memref<9x1x1x64xbf16, #tpu.memory_space<vmem>>, vector<1x1x1x64xbf16>
    %46 = vector.shape_cast %45 : vector<1x1x1x64xbf16> to vector<1x1x64xbf16>
    %47 = vector.broadcast %46 : vector<1x1x64xbf16> to vector<4x4x64xbf16>
    %48 = arith.mulf %44, %47 : vector<4x4x64xbf16>
    %49 = arith.addf %42, %48 : vector<4x4x64xbf16>
    %50 = vector.extract_strided_slice %1 {offsets = [1, 1, 0, 0], sizes = [1, 4, 4, 64], strides = [1, 1, 1, 1]} : vector<4x5x5x64xbf16> to vector<1x4x4x64xbf16>
    %51 = vector.shape_cast %50 : vector<1x4x4x64xbf16> to vector<4x4x64xbf16>
    %c7 = arith.constant 7 : index
    %c0_26 = arith.constant 0 : index
    %c0_27 = arith.constant 0 : index
    %c0_28 = arith.constant 0 : index
    %52 = vector.load %arg2[%c7, %c0_26, %c0_27, %c0_28] : memref<9x1x1x64xbf16, #tpu.memory_space<vmem>>, vector<1x1x1x64xbf16>
    %53 = vector.shape_cast %52 : vector<1x1x1x64xbf16> to vector<1x1x64xbf16>
    %54 = vector.broadcast %53 : vector<1x1x64xbf16> to vector<4x4x64xbf16>
    %55 = arith.mulf %51, %54 : vector<4x4x64xbf16>
    %56 = arith.addf %49, %55 : vector<4x4x64xbf16>
    %57 = vector.extract_strided_slice %1 {offsets = [0, 1, 1, 0], sizes = [1, 4, 4, 64], strides = [1, 1, 1, 1]} : vector<4x5x5x64xbf16> to vector<1x4x4x64xbf16>
    %58 = vector.shape_cast %57 : vector<1x4x4x64xbf16> to vector<4x4x64xbf16>
    %c8 = arith.constant 8 : index
    %c0_29 = arith.constant 0 : index
    %c0_30 = arith.constant 0 : index
    %c0_31 = arith.constant 0 : index
    %59 = vector.load %arg2[%c8, %c0_29, %c0_30, %c0_31] : memref<9x1x1x64xbf16, #tpu.memory_space<vmem>>, vector<1x1x1x64xbf16>
    %60 = vector.shape_cast %59 : vector<1x1x1x64xbf16> to vector<1x1x64xbf16>
    %61 = vector.broadcast %60 : vector<1x1x64xbf16> to vector<4x4x64xbf16>
    %62 = arith.mulf %58, %61 : vector<4x4x64xbf16>
    %63 = arith.addf %56, %62 : vector<4x4x64xbf16>
    %c0_32 = arith.constant 0 : index
    %c0_33 = arith.constant 0 : index
    %c0_34 = arith.constant 0 : index
    %64 = vector.load %arg3[%c0_32, %c0_33, %c0_34] : memref<1x1x64xbf16, #tpu.memory_space<vmem>>, vector<1x1x64xbf16>
    %65 = vector.broadcast %64 : vector<1x1x64xbf16> to vector<4x4x64xbf16>
    %66 = arith.addf %63, %65 : vector<4x4x64xbf16>
    %cst = arith.constant 0.000000e+00 : f32
    %cst_35 = arith.constant 6.000000e+00 : f32
    %67 = arith.truncf %cst : f32 to bf16
    %68 = vector.broadcast %67 : bf16 to vector<4x4x64xbf16>
    %69 = arith.maximumf %68, %66 : vector<4x4x64xbf16>
    %70 = arith.truncf %cst_35 : f32 to bf16
    %71 = vector.broadcast %70 : bf16 to vector<4x4x64xbf16>
    %72 = arith.minimumf %71, %69 : vector<4x4x64xbf16>
    %73 = vector.shape_cast %72 : vector<4x4x64xbf16> to vector<16x64xbf16>
    %c0_36 = arith.constant 0 : index
    %c0_37 = arith.constant 0 : index
    %74 = vector.load %arg4[%c0_36, %c0_37] : memref<64x128xbf16, #tpu.memory_space<vmem>>, vector<64x128xbf16>
    %cst_38 = arith.constant dense<0.000000e+00> : vector<16x128xf32>
    %75 = tpu.matmul %73, %74, %cst_38 {dimension_numbers = #tpu.dot_dimension_numbers<[1], [0], [0], [1], [0, 0, 1, 1], [], []>} : vector<16x64xbf16>, vector<64x128xbf16>, vector<16x128xf32> -> vector<16x128xf32>
    %c0_39 = arith.constant 0 : index
    %c0_40 = arith.constant 0 : index
    %76 = vector.load %arg5[%c0_39, %c0_40] : memref<1x128xf32, #tpu.memory_space<vmem>>, vector<1x128xf32>
    %77 = vector.broadcast %76 : vector<1x128xf32> to vector<16x128xf32>
    %78 = arith.addf %75, %77 : vector<16x128xf32>
    %cst_41 = arith.constant 0.000000e+00 : f32
    %cst_42 = arith.constant 6.000000e+00 : f32
    %79 = vector.broadcast %cst_41 : f32 to vector<16x128xf32>
    %80 = arith.maximumf %79, %78 : vector<16x128xf32>
    %81 = vector.broadcast %cst_42 : f32 to vector<16x128xf32>
    %82 = arith.minimumf %81, %80 : vector<16x128xf32>
    %83 = arith.truncf %82 : vector<16x128xf32> to vector<16x128xbf16>
    %c0_43 = arith.constant 0 : index
    %c0_44 = arith.constant 0 : index
    %c0_45 = arith.constant 0 : index
    %84 = vector.load %arg6[%c0_43, %c0_44, %c0_45] : memref<1x16x128xbf16, #tpu.memory_space<vmem>>, vector<1x16x128xbf16>
    %85 = vector.shape_cast %84 : vector<1x16x128xbf16> to vector<16x128xbf16>
    %86 = vector.shape_cast %83 : vector<16x128xbf16> to vector<1x16x128xbf16>
    tpu.vector_store %arg6[%c0_43, %c0_44, %c0_45], %86 {strides = array<i32>} : memref<1x16x128xbf16, #tpu.memory_space<vmem>>, vector<1x16x128xbf16>,
    return
  }
  func.func @transform_0(%arg0: i32) -> (i32, i32, i32, i32, i32) {
    %c0_i32 = arith.constant 0 : i32
    %c0_i32_0 = arith.constant 0 : i32
    %c0_i32_1 = arith.constant 0 : i32
    %c0_i32_2 = arith.constant 0 : i32
    %c0_i32_3 = arith.constant 0 : i32
    return %arg0, %c0_i32, %c0_i32_0, %c0_i32_1, %c0_i32_2 : i32, i32, i32, i32, i32
  }
  func.func @transform_1(%arg0: i32) -> (i32, i32, i32, i32) {
    %c0_i32 = arith.constant 0 : i32
    %c0_i32_0 = arith.constant 0 : i32
    %c0_i32_1 = arith.constant 0 : i32
    %c0_i32_2 = arith.constant 0 : i32
    %c0_i32_3 = arith.constant 0 : i32
    return %c0_i32, %c0_i32_0, %c0_i32_1, %c0_i32_2 : i32, i32, i32, i32
  }
  func.func @transform_2(%arg0: i32) -> (i32, i32, i32) {
    %c0_i32 = arith.constant 0 : i32
    %c0_i32_0 = arith.constant 0 : i32
    %c0_i32_1 = arith.constant 0 : i32
    %c0_i32_2 = arith.constant 0 : i32
    return %c0_i32, %c0_i32_0, %c0_i32_1 : i32, i32, i32
  }
  func.func @transform_3(%arg0: i32) -> (i32, i32) {
    %c0_i32 = arith.constant 0 : i32
    %c0_i32_0 = arith.constant 0 : i32
    %c0_i32_1 = arith.constant 0 : i32
    return %c0_i32, %c0_i32_0 : i32, i32
  }
  func.func @transform_4(%arg0: i32) -> (i32, i32) {
    %c0_i32 = arith.constant 0 : i32
    %c0_i32_0 = arith.constant 0 : i32
    %c0_i32_1 = arith.constant 0 : i32
    return %c0_i32, %c0_i32_0 : i32, i32
  }
  func.func @transform_5(%arg0: i32) -> (i32, i32, i32) {
    %c0_i32 = arith.constant 0 : i32
    %c0_i32_0 = arith.constant 0 : i32
    %c0_i32_1 = arith.constant 0 : i32
    return %arg0, %c0_i32, %c0_i32_0 : i32, i32, i32
  }
}

module attributes {stable_mosaic.version = 11 : i64} {
  func.func @kernel(%arg0: i32, %arg1: memref<1x6x6x128xbf16, #tpu.memory_space<vmem>>, %arg2: memref<9x1x1x128xbf16, #tpu.memory_space<vmem>>, %arg3: memref<1x1x128xbf16, #tpu.memory_space<vmem>>, %arg4: memref<128x128xbf16, #tpu.memory_space<vmem>>, %arg5: memref<1x128xf32, #tpu.memory_space<vmem>>, %arg6: memref<1x16x128xbf16, #tpu.memory_space<vmem>>) attributes {dimension_semantics = [#tpu.dimension_semantics<parallel>], iteration_bounds = array<i64: 2>, scalar_prefetch = 0 : i64, scratch_operands = 0 : i64, tpu.core_type = #tpu.core_type<tc>, window_params = [{transform_indices = @transform_0, window_bounds = array<i64: 1, 6, 6, 128>}, {pipeline_mode = #tpu.pipeline_mode<synchronous>, transform_indices = @transform_1, window_bounds = array<i64: 9, 1, 1, 128>}, {pipeline_mode = #tpu.pipeline_mode<synchronous>, transform_indices = @transform_2, window_bounds = array<i64: 1, 1, 128>}, {pipeline_mode = #tpu.pipeline_mode<synchronous>, transform_indices = @transform_3, window_bounds = array<i64: 128, 128>}, {pipeline_mode = #tpu.pipeline_mode<synchronous>, transform_indices = @transform_4, window_bounds = array<i64: 1, 128>}, {transform_indices = @transform_5, window_bounds = array<i64: 1, 16, 128>}]} {
    %c0 = arith.constant 0 : index
    %c0_0 = arith.constant 0 : index
    %c0_1 = arith.constant 0 : index
    %c0_2 = arith.constant 0 : index
    %0 = vector.load %arg1[%c0, %c0_0, %c0_1, %c0_2] : memref<1x6x6x128xbf16, #tpu.memory_space<vmem>>, vector<1x6x6x128xbf16>
    %1 = vector.shape_cast %0 : vector<1x6x6x128xbf16> to vector<6x6x128xbf16>
    %2 = vector.extract_strided_slice %1 {offsets = [0, 0, 0], sizes = [4, 4, 128], strides = [1, 1, 1]} : vector<6x6x128xbf16> to vector<4x4x128xbf16>
    %c0_3 = arith.constant 0 : index
    %c0_4 = arith.constant 0 : index
    %c0_5 = arith.constant 0 : index
    %c0_6 = arith.constant 0 : index
    %3 = vector.load %arg2[%c0_3, %c0_4, %c0_5, %c0_6] : memref<9x1x1x128xbf16, #tpu.memory_space<vmem>>, vector<1x1x1x128xbf16>
    %4 = vector.shape_cast %3 : vector<1x1x1x128xbf16> to vector<1x1x128xbf16>
    %5 = vector.broadcast %4 : vector<1x1x128xbf16> to vector<4x4x128xbf16>
    %6 = arith.mulf %2, %5 : vector<4x4x128xbf16>
    %7 = vector.extract_strided_slice %1 {offsets = [0, 1, 0], sizes = [4, 4, 128], strides = [1, 1, 1]} : vector<6x6x128xbf16> to vector<4x4x128xbf16>
    %c1 = arith.constant 1 : index
    %c0_7 = arith.constant 0 : index
    %c0_8 = arith.constant 0 : index
    %c0_9 = arith.constant 0 : index
    %8 = vector.load %arg2[%c1, %c0_7, %c0_8, %c0_9] : memref<9x1x1x128xbf16, #tpu.memory_space<vmem>>, vector<1x1x1x128xbf16>
    %9 = vector.shape_cast %8 : vector<1x1x1x128xbf16> to vector<1x1x128xbf16>
    %10 = vector.broadcast %9 : vector<1x1x128xbf16> to vector<4x4x128xbf16>
    %11 = arith.mulf %7, %10 : vector<4x4x128xbf16>
    %12 = arith.addf %6, %11 : vector<4x4x128xbf16>
    %13 = vector.extract_strided_slice %1 {offsets = [0, 2, 0], sizes = [4, 4, 128], strides = [1, 1, 1]} : vector<6x6x128xbf16> to vector<4x4x128xbf16>
    %c2 = arith.constant 2 : index
    %c0_10 = arith.constant 0 : index
    %c0_11 = arith.constant 0 : index
    %c0_12 = arith.constant 0 : index
    %14 = vector.load %arg2[%c2, %c0_10, %c0_11, %c0_12] : memref<9x1x1x128xbf16, #tpu.memory_space<vmem>>, vector<1x1x1x128xbf16>
    %15 = vector.shape_cast %14 : vector<1x1x1x128xbf16> to vector<1x1x128xbf16>
    %16 = vector.broadcast %15 : vector<1x1x128xbf16> to vector<4x4x128xbf16>
    %17 = arith.mulf %13, %16 : vector<4x4x128xbf16>
    %18 = arith.addf %12, %17 : vector<4x4x128xbf16>
    %19 = vector.extract_strided_slice %1 {offsets = [1, 0, 0], sizes = [4, 4, 128], strides = [1, 1, 1]} : vector<6x6x128xbf16> to vector<4x4x128xbf16>
    %c3 = arith.constant 3 : index
    %c0_13 = arith.constant 0 : index
    %c0_14 = arith.constant 0 : index
    %c0_15 = arith.constant 0 : index
    %20 = vector.load %arg2[%c3, %c0_13, %c0_14, %c0_15] : memref<9x1x1x128xbf16, #tpu.memory_space<vmem>>, vector<1x1x1x128xbf16>
    %21 = vector.shape_cast %20 : vector<1x1x1x128xbf16> to vector<1x1x128xbf16>
    %22 = vector.broadcast %21 : vector<1x1x128xbf16> to vector<4x4x128xbf16>
    %23 = arith.mulf %19, %22 : vector<4x4x128xbf16>
    %24 = arith.addf %18, %23 : vector<4x4x128xbf16>
    %25 = vector.extract_strided_slice %1 {offsets = [1, 1, 0], sizes = [4, 4, 128], strides = [1, 1, 1]} : vector<6x6x128xbf16> to vector<4x4x128xbf16>
    %c4 = arith.constant 4 : index
    %c0_16 = arith.constant 0 : index
    %c0_17 = arith.constant 0 : index
    %c0_18 = arith.constant 0 : index
    %26 = vector.load %arg2[%c4, %c0_16, %c0_17, %c0_18] : memref<9x1x1x128xbf16, #tpu.memory_space<vmem>>, vector<1x1x1x128xbf16>
    %27 = vector.shape_cast %26 : vector<1x1x1x128xbf16> to vector<1x1x128xbf16>
    %28 = vector.broadcast %27 : vector<1x1x128xbf16> to vector<4x4x128xbf16>
    %29 = arith.mulf %25, %28 : vector<4x4x128xbf16>
    %30 = arith.addf %24, %29 : vector<4x4x128xbf16>
    %31 = vector.extract_strided_slice %1 {offsets = [1, 2, 0], sizes = [4, 4, 128], strides = [1, 1, 1]} : vector<6x6x128xbf16> to vector<4x4x128xbf16>
    %c5 = arith.constant 5 : index
    %c0_19 = arith.constant 0 : index
    %c0_20 = arith.constant 0 : index
    %c0_21 = arith.constant 0 : index
    %32 = vector.load %arg2[%c5, %c0_19, %c0_20, %c0_21] : memref<9x1x1x128xbf16, #tpu.memory_space<vmem>>, vector<1x1x1x128xbf16>
    %33 = vector.shape_cast %32 : vector<1x1x1x128xbf16> to vector<1x1x128xbf16>
    %34 = vector.broadcast %33 : vector<1x1x128xbf16> to vector<4x4x128xbf16>
    %35 = arith.mulf %31, %34 : vector<4x4x128xbf16>
    %36 = arith.addf %30, %35 : vector<4x4x128xbf16>
    %37 = vector.extract_strided_slice %1 {offsets = [2, 0, 0], sizes = [4, 4, 128], strides = [1, 1, 1]} : vector<6x6x128xbf16> to vector<4x4x128xbf16>
    %c6 = arith.constant 6 : index
    %c0_22 = arith.constant 0 : index
    %c0_23 = arith.constant 0 : index
    %c0_24 = arith.constant 0 : index
    %38 = vector.load %arg2[%c6, %c0_22, %c0_23, %c0_24] : memref<9x1x1x128xbf16, #tpu.memory_space<vmem>>, vector<1x1x1x128xbf16>
    %39 = vector.shape_cast %38 : vector<1x1x1x128xbf16> to vector<1x1x128xbf16>
    %40 = vector.broadcast %39 : vector<1x1x128xbf16> to vector<4x4x128xbf16>
    %41 = arith.mulf %37, %40 : vector<4x4x128xbf16>
    %42 = arith.addf %36, %41 : vector<4x4x128xbf16>
    %43 = vector.extract_strided_slice %1 {offsets = [2, 1, 0], sizes = [4, 4, 128], strides = [1, 1, 1]} : vector<6x6x128xbf16> to vector<4x4x128xbf16>
    %c7 = arith.constant 7 : index
    %c0_25 = arith.constant 0 : index
    %c0_26 = arith.constant 0 : index
    %c0_27 = arith.constant 0 : index
    %44 = vector.load %arg2[%c7, %c0_25, %c0_26, %c0_27] : memref<9x1x1x128xbf16, #tpu.memory_space<vmem>>, vector<1x1x1x128xbf16>
    %45 = vector.shape_cast %44 : vector<1x1x1x128xbf16> to vector<1x1x128xbf16>
    %46 = vector.broadcast %45 : vector<1x1x128xbf16> to vector<4x4x128xbf16>
    %47 = arith.mulf %43, %46 : vector<4x4x128xbf16>
    %48 = arith.addf %42, %47 : vector<4x4x128xbf16>
    %49 = vector.extract_strided_slice %1 {offsets = [2, 2, 0], sizes = [4, 4, 128], strides = [1, 1, 1]} : vector<6x6x128xbf16> to vector<4x4x128xbf16>
    %c8 = arith.constant 8 : index
    %c0_28 = arith.constant 0 : index
    %c0_29 = arith.constant 0 : index
    %c0_30 = arith.constant 0 : index
    %50 = vector.load %arg2[%c8, %c0_28, %c0_29, %c0_30] : memref<9x1x1x128xbf16, #tpu.memory_space<vmem>>, vector<1x1x1x128xbf16>
    %51 = vector.shape_cast %50 : vector<1x1x1x128xbf16> to vector<1x1x128xbf16>
    %52 = vector.broadcast %51 : vector<1x1x128xbf16> to vector<4x4x128xbf16>
    %53 = arith.mulf %49, %52 : vector<4x4x128xbf16>
    %54 = arith.addf %48, %53 : vector<4x4x128xbf16>
    %c0_31 = arith.constant 0 : index
    %c0_32 = arith.constant 0 : index
    %c0_33 = arith.constant 0 : index
    %55 = vector.load %arg3[%c0_31, %c0_32, %c0_33] : memref<1x1x128xbf16, #tpu.memory_space<vmem>>, vector<1x1x128xbf16>
    %56 = vector.broadcast %55 : vector<1x1x128xbf16> to vector<4x4x128xbf16>
    %57 = arith.addf %54, %56 : vector<4x4x128xbf16>
    %cst = arith.constant 0.000000e+00 : f32
    %cst_34 = arith.constant 6.000000e+00 : f32
    %58 = arith.truncf %cst : f32 to bf16
    %59 = vector.broadcast %58 : bf16 to vector<4x4x128xbf16>
    %60 = arith.maximumf %59, %57 : vector<4x4x128xbf16>
    %61 = arith.truncf %cst_34 : f32 to bf16
    %62 = vector.broadcast %61 : bf16 to vector<4x4x128xbf16>
    %63 = arith.minimumf %62, %60 : vector<4x4x128xbf16>
    %64 = vector.shape_cast %63 : vector<4x4x128xbf16> to vector<16x128xbf16>
    %c0_35 = arith.constant 0 : index
    %c0_36 = arith.constant 0 : index
    %65 = vector.load %arg4[%c0_35, %c0_36] : memref<128x128xbf16, #tpu.memory_space<vmem>>, vector<128x128xbf16>
    %cst_37 = arith.constant dense<0.000000e+00> : vector<16x128xf32>
    %66 = tpu.matmul %64, %65, %cst_37 {dimension_numbers = #tpu.dot_dimension_numbers<[1], [0], [0], [1], [0, 0, 1, 1], [], []>} : vector<16x128xbf16>, vector<128x128xbf16>, vector<16x128xf32> -> vector<16x128xf32>
    %c0_38 = arith.constant 0 : index
    %c0_39 = arith.constant 0 : index
    %67 = vector.load %arg5[%c0_38, %c0_39] : memref<1x128xf32, #tpu.memory_space<vmem>>, vector<1x128xf32>
    %68 = vector.broadcast %67 : vector<1x128xf32> to vector<16x128xf32>
    %69 = arith.addf %66, %68 : vector<16x128xf32>
    %cst_40 = arith.constant 0.000000e+00 : f32
    %cst_41 = arith.constant 6.000000e+00 : f32
    %70 = vector.broadcast %cst_40 : f32 to vector<16x128xf32>
    %71 = arith.maximumf %70, %69 : vector<16x128xf32>
    %72 = vector.broadcast %cst_41 : f32 to vector<16x128xf32>
    %73 = arith.minimumf %72, %71 : vector<16x128xf32>
    %74 = arith.truncf %73 : vector<16x128xf32> to vector<16x128xbf16>
    %c0_42 = arith.constant 0 : index
    %c0_43 = arith.constant 0 : index
    %c0_44 = arith.constant 0 : index
    %75 = vector.load %arg6[%c0_42, %c0_43, %c0_44] : memref<1x16x128xbf16, #tpu.memory_space<vmem>>, vector<1x16x128xbf16>
    %76 = vector.shape_cast %75 : vector<1x16x128xbf16> to vector<16x128xbf16>
    %77 = vector.shape_cast %74 : vector<16x128xbf16> to vector<1x16x128xbf16>
    tpu.vector_store %arg6[%c0_42, %c0_43, %c0_44], %77 {strides = array<i32>} : memref<1x16x128xbf16, #tpu.memory_space<vmem>>, vector<1x16x128xbf16>,
    return
  }
  func.func @transform_0(%arg0: i32) -> (i32, i32, i32, i32) {
    %c0_i32 = arith.constant 0 : i32
    %c0_i32_0 = arith.constant 0 : i32
    %c0_i32_1 = arith.constant 0 : i32
    %c0_i32_2 = arith.constant 0 : i32
    return %arg0, %c0_i32, %c0_i32_0, %c0_i32_1 : i32, i32, i32, i32
  }
  func.func @transform_1(%arg0: i32) -> (i32, i32, i32, i32) {
    %c0_i32 = arith.constant 0 : i32
    %c0_i32_0 = arith.constant 0 : i32
    %c0_i32_1 = arith.constant 0 : i32
    %c0_i32_2 = arith.constant 0 : i32
    %c0_i32_3 = arith.constant 0 : i32
    return %c0_i32, %c0_i32_0, %c0_i32_1, %c0_i32_2 : i32, i32, i32, i32
  }
  func.func @transform_2(%arg0: i32) -> (i32, i32, i32) {
    %c0_i32 = arith.constant 0 : i32
    %c0_i32_0 = arith.constant 0 : i32
    %c0_i32_1 = arith.constant 0 : i32
    %c0_i32_2 = arith.constant 0 : i32
    return %c0_i32, %c0_i32_0, %c0_i32_1 : i32, i32, i32
  }
  func.func @transform_3(%arg0: i32) -> (i32, i32) {
    %c0_i32 = arith.constant 0 : i32
    %c0_i32_0 = arith.constant 0 : i32
    %c0_i32_1 = arith.constant 0 : i32
    return %c0_i32, %c0_i32_0 : i32, i32
  }
  func.func @transform_4(%arg0: i32) -> (i32, i32) {
    %c0_i32 = arith.constant 0 : i32
    %c0_i32_0 = arith.constant 0 : i32
    %c0_i32_1 = arith.constant 0 : i32
    return %c0_i32, %c0_i32_0 : i32, i32
  }
  func.func @transform_5(%arg0: i32) -> (i32, i32, i32) {
    %c0_i32 = arith.constant 0 : i32
    %c0_i32_0 = arith.constant 0 : i32
    %c0_i32_1 = arith.constant 0 : i32
    return %arg0, %c0_i32, %c0_i32_0 : i32, i32, i32
  }
}

module attributes {stable_mosaic.version = 11 : i64} {
  func.func @kernel(%arg0: i32, %arg1: memref<1x4x3x3x128xbf16, #tpu.memory_space<vmem>>, %arg2: memref<9x1x1x128xbf16, #tpu.memory_space<vmem>>, %arg3: memref<1x1x128xbf16, #tpu.memory_space<vmem>>, %arg4: memref<128x256xbf16, #tpu.memory_space<vmem>>, %arg5: memref<1x256xf32, #tpu.memory_space<vmem>>, %arg6: memref<1x4x256xbf16, #tpu.memory_space<vmem>>) attributes {dimension_semantics = [#tpu.dimension_semantics<parallel>], iteration_bounds = array<i64: 2>, scalar_prefetch = 0 : i64, scratch_operands = 0 : i64, tpu.core_type = #tpu.core_type<tc>, window_params = [{transform_indices = @transform_0, window_bounds = array<i64: 1, 4, 3, 3, 128>}, {pipeline_mode = #tpu.pipeline_mode<synchronous>, transform_indices = @transform_1, window_bounds = array<i64: 9, 1, 1, 128>}, {pipeline_mode = #tpu.pipeline_mode<synchronous>, transform_indices = @transform_2, window_bounds = array<i64: 1, 1, 128>}, {pipeline_mode = #tpu.pipeline_mode<synchronous>, transform_indices = @transform_3, window_bounds = array<i64: 128, 256>}, {pipeline_mode = #tpu.pipeline_mode<synchronous>, transform_indices = @transform_4, window_bounds = array<i64: 1, 256>}, {transform_indices = @transform_5, window_bounds = array<i64: 1, 4, 256>}]} {
    %c0 = arith.constant 0 : index
    %c0_0 = arith.constant 0 : index
    %c0_1 = arith.constant 0 : index
    %c0_2 = arith.constant 0 : index
    %c0_3 = arith.constant 0 : index
    %0 = vector.load %arg1[%c0, %c0_0, %c0_1, %c0_2, %c0_3] : memref<1x4x3x3x128xbf16, #tpu.memory_space<vmem>>, vector<1x4x3x3x128xbf16>
    %1 = vector.shape_cast %0 : vector<1x4x3x3x128xbf16> to vector<4x3x3x128xbf16>
    %2 = vector.extract_strided_slice %1 {offsets = [0, 0, 0, 0], sizes = [1, 2, 2, 128], strides = [1, 1, 1, 1]} : vector<4x3x3x128xbf16> to vector<1x2x2x128xbf16>
    %3 = vector.shape_cast %2 : vector<1x2x2x128xbf16> to vector<2x2x128xbf16>
    %c0_4 = arith.constant 0 : index
    %c0_5 = arith.constant 0 : index
    %c0_6 = arith.constant 0 : index
    %c0_7 = arith.constant 0 : index
    %4 = vector.load %arg2[%c0_4, %c0_5, %c0_6, %c0_7] : memref<9x1x1x128xbf16, #tpu.memory_space<vmem>>, vector<1x1x1x128xbf16>
    %5 = vector.shape_cast %4 : vector<1x1x1x128xbf16> to vector<1x1x128xbf16>
    %6 = vector.broadcast %5 : vector<1x1x128xbf16> to vector<2x2x128xbf16>
    %7 = arith.mulf %3, %6 : vector<2x2x128xbf16>
    %8 = vector.extract_strided_slice %1 {offsets = [1, 0, 0, 0], sizes = [1, 2, 2, 128], strides = [1, 1, 1, 1]} : vector<4x3x3x128xbf16> to vector<1x2x2x128xbf16>
    %9 = vector.shape_cast %8 : vector<1x2x2x128xbf16> to vector<2x2x128xbf16>
    %c1 = arith.constant 1 : index
    %c0_8 = arith.constant 0 : index
    %c0_9 = arith.constant 0 : index
    %c0_10 = arith.constant 0 : index
    %10 = vector.load %arg2[%c1, %c0_8, %c0_9, %c0_10] : memref<9x1x1x128xbf16, #tpu.memory_space<vmem>>, vector<1x1x1x128xbf16>
    %11 = vector.shape_cast %10 : vector<1x1x1x128xbf16> to vector<1x1x128xbf16>
    %12 = vector.broadcast %11 : vector<1x1x128xbf16> to vector<2x2x128xbf16>
    %13 = arith.mulf %9, %12 : vector<2x2x128xbf16>
    %14 = arith.addf %7, %13 : vector<2x2x128xbf16>
    %15 = vector.extract_strided_slice %1 {offsets = [0, 0, 1, 0], sizes = [1, 2, 2, 128], strides = [1, 1, 1, 1]} : vector<4x3x3x128xbf16> to vector<1x2x2x128xbf16>
    %16 = vector.shape_cast %15 : vector<1x2x2x128xbf16> to vector<2x2x128xbf16>
    %c2 = arith.constant 2 : index
    %c0_11 = arith.constant 0 : index
    %c0_12 = arith.constant 0 : index
    %c0_13 = arith.constant 0 : index
    %17 = vector.load %arg2[%c2, %c0_11, %c0_12, %c0_13] : memref<9x1x1x128xbf16, #tpu.memory_space<vmem>>, vector<1x1x1x128xbf16>
    %18 = vector.shape_cast %17 : vector<1x1x1x128xbf16> to vector<1x1x128xbf16>
    %19 = vector.broadcast %18 : vector<1x1x128xbf16> to vector<2x2x128xbf16>
    %20 = arith.mulf %16, %19 : vector<2x2x128xbf16>
    %21 = arith.addf %14, %20 : vector<2x2x128xbf16>
    %22 = vector.extract_strided_slice %1 {offsets = [2, 0, 0, 0], sizes = [1, 2, 2, 128], strides = [1, 1, 1, 1]} : vector<4x3x3x128xbf16> to vector<1x2x2x128xbf16>
    %23 = vector.shape_cast %22 : vector<1x2x2x128xbf16> to vector<2x2x128xbf16>
    %c3 = arith.constant 3 : index
    %c0_14 = arith.constant 0 : index
    %c0_15 = arith.constant 0 : index
    %c0_16 = arith.constant 0 : index
    %24 = vector.load %arg2[%c3, %c0_14, %c0_15, %c0_16] : memref<9x1x1x128xbf16, #tpu.memory_space<vmem>>, vector<1x1x1x128xbf16>
    %25 = vector.shape_cast %24 : vector<1x1x1x128xbf16> to vector<1x1x128xbf16>
    %26 = vector.broadcast %25 : vector<1x1x128xbf16> to vector<2x2x128xbf16>
    %27 = arith.mulf %23, %26 : vector<2x2x128xbf16>
    %28 = arith.addf %21, %27 : vector<2x2x128xbf16>
    %29 = vector.extract_strided_slice %1 {offsets = [3, 0, 0, 0], sizes = [1, 2, 2, 128], strides = [1, 1, 1, 1]} : vector<4x3x3x128xbf16> to vector<1x2x2x128xbf16>
    %30 = vector.shape_cast %29 : vector<1x2x2x128xbf16> to vector<2x2x128xbf16>
    %c4 = arith.constant 4 : index
    %c0_17 = arith.constant 0 : index
    %c0_18 = arith.constant 0 : index
    %c0_19 = arith.constant 0 : index
    %31 = vector.load %arg2[%c4, %c0_17, %c0_18, %c0_19] : memref<9x1x1x128xbf16, #tpu.memory_space<vmem>>, vector<1x1x1x128xbf16>
    %32 = vector.shape_cast %31 : vector<1x1x1x128xbf16> to vector<1x1x128xbf16>
    %33 = vector.broadcast %32 : vector<1x1x128xbf16> to vector<2x2x128xbf16>
    %34 = arith.mulf %30, %33 : vector<2x2x128xbf16>
    %35 = arith.addf %28, %34 : vector<2x2x128xbf16>
    %36 = vector.extract_strided_slice %1 {offsets = [2, 0, 1, 0], sizes = [1, 2, 2, 128], strides = [1, 1, 1, 1]} : vector<4x3x3x128xbf16> to vector<1x2x2x128xbf16>
    %37 = vector.shape_cast %36 : vector<1x2x2x128xbf16> to vector<2x2x128xbf16>
    %c5 = arith.constant 5 : index
    %c0_20 = arith.constant 0 : index
    %c0_21 = arith.constant 0 : index
    %c0_22 = arith.constant 0 : index
    %38 = vector.load %arg2[%c5, %c0_20, %c0_21, %c0_22] : memref<9x1x1x128xbf16, #tpu.memory_space<vmem>>, vector<1x1x1x128xbf16>
    %39 = vector.shape_cast %38 : vector<1x1x1x128xbf16> to vector<1x1x128xbf16>
    %40 = vector.broadcast %39 : vector<1x1x128xbf16> to vector<2x2x128xbf16>
    %41 = arith.mulf %37, %40 : vector<2x2x128xbf16>
    %42 = arith.addf %35, %41 : vector<2x2x128xbf16>
    %43 = vector.extract_strided_slice %1 {offsets = [0, 1, 0, 0], sizes = [1, 2, 2, 128], strides = [1, 1, 1, 1]} : vector<4x3x3x128xbf16> to vector<1x2x2x128xbf16>
    %44 = vector.shape_cast %43 : vector<1x2x2x128xbf16> to vector<2x2x128xbf16>
    %c6 = arith.constant 6 : index
    %c0_23 = arith.constant 0 : index
    %c0_24 = arith.constant 0 : index
    %c0_25 = arith.constant 0 : index
    %45 = vector.load %arg2[%c6, %c0_23, %c0_24, %c0_25] : memref<9x1x1x128xbf16, #tpu.memory_space<vmem>>, vector<1x1x1x128xbf16>
    %46 = vector.shape_cast %45 : vector<1x1x1x128xbf16> to vector<1x1x128xbf16>
    %47 = vector.broadcast %46 : vector<1x1x128xbf16> to vector<2x2x128xbf16>
    %48 = arith.mulf %44, %47 : vector<2x2x128xbf16>
    %49 = arith.addf %42, %48 : vector<2x2x128xbf16>
    %50 = vector.extract_strided_slice %1 {offsets = [1, 1, 0, 0], sizes = [1, 2, 2, 128], strides = [1, 1, 1, 1]} : vector<4x3x3x128xbf16> to vector<1x2x2x128xbf16>
    %51 = vector.shape_cast %50 : vector<1x2x2x128xbf16> to vector<2x2x128xbf16>
    %c7 = arith.constant 7 : index
    %c0_26 = arith.constant 0 : index
    %c0_27 = arith.constant 0 : index
    %c0_28 = arith.constant 0 : index
    %52 = vector.load %arg2[%c7, %c0_26, %c0_27, %c0_28] : memref<9x1x1x128xbf16, #tpu.memory_space<vmem>>, vector<1x1x1x128xbf16>
    %53 = vector.shape_cast %52 : vector<1x1x1x128xbf16> to vector<1x1x128xbf16>
    %54 = vector.broadcast %53 : vector<1x1x128xbf16> to vector<2x2x128xbf16>
    %55 = arith.mulf %51, %54 : vector<2x2x128xbf16>
    %56 = arith.addf %49, %55 : vector<2x2x128xbf16>
    %57 = vector.extract_strided_slice %1 {offsets = [0, 1, 1, 0], sizes = [1, 2, 2, 128], strides = [1, 1, 1, 1]} : vector<4x3x3x128xbf16> to vector<1x2x2x128xbf16>
    %58 = vector.shape_cast %57 : vector<1x2x2x128xbf16> to vector<2x2x128xbf16>
    %c8 = arith.constant 8 : index
    %c0_29 = arith.constant 0 : index
    %c0_30 = arith.constant 0 : index
    %c0_31 = arith.constant 0 : index
    %59 = vector.load %arg2[%c8, %c0_29, %c0_30, %c0_31] : memref<9x1x1x128xbf16, #tpu.memory_space<vmem>>, vector<1x1x1x128xbf16>
    %60 = vector.shape_cast %59 : vector<1x1x1x128xbf16> to vector<1x1x128xbf16>
    %61 = vector.broadcast %60 : vector<1x1x128xbf16> to vector<2x2x128xbf16>
    %62 = arith.mulf %58, %61 : vector<2x2x128xbf16>
    %63 = arith.addf %56, %62 : vector<2x2x128xbf16>
    %c0_32 = arith.constant 0 : index
    %c0_33 = arith.constant 0 : index
    %c0_34 = arith.constant 0 : index
    %64 = vector.load %arg3[%c0_32, %c0_33, %c0_34] : memref<1x1x128xbf16, #tpu.memory_space<vmem>>, vector<1x1x128xbf16>
    %65 = vector.broadcast %64 : vector<1x1x128xbf16> to vector<2x2x128xbf16>
    %66 = arith.addf %63, %65 : vector<2x2x128xbf16>
    %cst = arith.constant 0.000000e+00 : f32
    %cst_35 = arith.constant 6.000000e+00 : f32
    %67 = arith.truncf %cst : f32 to bf16
    %68 = vector.broadcast %67 : bf16 to vector<2x2x128xbf16>
    %69 = arith.maximumf %68, %66 : vector<2x2x128xbf16>
    %70 = arith.truncf %cst_35 : f32 to bf16
    %71 = vector.broadcast %70 : bf16 to vector<2x2x128xbf16>
    %72 = arith.minimumf %71, %69 : vector<2x2x128xbf16>
    %73 = vector.shape_cast %72 : vector<2x2x128xbf16> to vector<4x128xbf16>
    %c0_36 = arith.constant 0 : index
    %c0_37 = arith.constant 0 : index
    %74 = vector.load %arg4[%c0_36, %c0_37] : memref<128x256xbf16, #tpu.memory_space<vmem>>, vector<128x256xbf16>
    %cst_38 = arith.constant dense<0.000000e+00> : vector<4x256xf32>
    %75 = tpu.matmul %73, %74, %cst_38 {dimension_numbers = #tpu.dot_dimension_numbers<[1], [0], [0], [1], [0, 0, 1, 1], [], []>} : vector<4x128xbf16>, vector<128x256xbf16>, vector<4x256xf32> -> vector<4x256xf32>
    %c0_39 = arith.constant 0 : index
    %c0_40 = arith.constant 0 : index
    %76 = vector.load %arg5[%c0_39, %c0_40] : memref<1x256xf32, #tpu.memory_space<vmem>>, vector<1x256xf32>
    %77 = vector.broadcast %76 : vector<1x256xf32> to vector<4x256xf32>
    %78 = arith.addf %75, %77 : vector<4x256xf32>
    %cst_41 = arith.constant 0.000000e+00 : f32
    %cst_42 = arith.constant 6.000000e+00 : f32
    %79 = vector.broadcast %cst_41 : f32 to vector<4x256xf32>
    %80 = arith.maximumf %79, %78 : vector<4x256xf32>
    %81 = vector.broadcast %cst_42 : f32 to vector<4x256xf32>
    %82 = arith.minimumf %81, %80 : vector<4x256xf32>
    %83 = arith.truncf %82 : vector<4x256xf32> to vector<4x256xbf16>
    %c0_43 = arith.constant 0 : index
    %c0_44 = arith.constant 0 : index
    %c0_45 = arith.constant 0 : index
    %84 = vector.load %arg6[%c0_43, %c0_44, %c0_45] : memref<1x4x256xbf16, #tpu.memory_space<vmem>>, vector<1x4x256xbf16>
    %85 = vector.shape_cast %84 : vector<1x4x256xbf16> to vector<4x256xbf16>
    %86 = vector.shape_cast %83 : vector<4x256xbf16> to vector<1x4x256xbf16>
    tpu.vector_store %arg6[%c0_43, %c0_44, %c0_45], %86 {strides = array<i32>} : memref<1x4x256xbf16, #tpu.memory_space<vmem>>, vector<1x4x256xbf16>,
    return
  }
  func.func @transform_0(%arg0: i32) -> (i32, i32, i32, i32, i32) {
    %c0_i32 = arith.constant 0 : i32
    %c0_i32_0 = arith.constant 0 : i32
    %c0_i32_1 = arith.constant 0 : i32
    %c0_i32_2 = arith.constant 0 : i32
    %c0_i32_3 = arith.constant 0 : i32
    return %arg0, %c0_i32, %c0_i32_0, %c0_i32_1, %c0_i32_2 : i32, i32, i32, i32, i32
  }
  func.func @transform_1(%arg0: i32) -> (i32, i32, i32, i32) {
    %c0_i32 = arith.constant 0 : i32
    %c0_i32_0 = arith.constant 0 : i32
    %c0_i32_1 = arith.constant 0 : i32
    %c0_i32_2 = arith.constant 0 : i32
    %c0_i32_3 = arith.constant 0 : i32
    return %c0_i32, %c0_i32_0, %c0_i32_1, %c0_i32_2 : i32, i32, i32, i32
  }
  func.func @transform_2(%arg0: i32) -> (i32, i32, i32) {
    %c0_i32 = arith.constant 0 : i32
    %c0_i32_0 = arith.constant 0 : i32
    %c0_i32_1 = arith.constant 0 : i32
    %c0_i32_2 = arith.constant 0 : i32
    return %c0_i32, %c0_i32_0, %c0_i32_1 : i32, i32, i32
  }
  func.func @transform_3(%arg0: i32) -> (i32, i32) {
    %c0_i32 = arith.constant 0 : i32
    %c0_i32_0 = arith.constant 0 : i32
    %c0_i32_1 = arith.constant 0 : i32
    return %c0_i32, %c0_i32_0 : i32, i32
  }
  func.func @transform_4(%arg0: i32) -> (i32, i32) {
    %c0_i32 = arith.constant 0 : i32
    %c0_i32_0 = arith.constant 0 : i32
    %c0_i32_1 = arith.constant 0 : i32
    return %c0_i32, %c0_i32_0 : i32, i32
  }
  func.func @transform_5(%arg0: i32) -> (i32, i32, i32) {
    %c0_i32 = arith.constant 0 : i32
    %c0_i32_0 = arith.constant 0 : i32
    %c0_i32_1 = arith.constant 0 : i32
    return %arg0, %c0_i32, %c0_i32_0 : i32, i32, i32
  }
}

module attributes {stable_mosaic.version = 11 : i64} {
  func.func @kernel(%arg0: i32, %arg1: memref<1x4x4x256xbf16, #tpu.memory_space<vmem>>, %arg2: memref<9x1x1x256xbf16, #tpu.memory_space<vmem>>, %arg3: memref<1x1x256xbf16, #tpu.memory_space<vmem>>, %arg4: memref<256x256xbf16, #tpu.memory_space<vmem>>, %arg5: memref<1x256xf32, #tpu.memory_space<vmem>>, %arg6: memref<1x4x256xbf16, #tpu.memory_space<vmem>>) attributes {dimension_semantics = [#tpu.dimension_semantics<parallel>], iteration_bounds = array<i64: 2>, scalar_prefetch = 0 : i64, scratch_operands = 0 : i64, tpu.core_type = #tpu.core_type<tc>, window_params = [{transform_indices = @transform_0, window_bounds = array<i64: 1, 4, 4, 256>}, {pipeline_mode = #tpu.pipeline_mode<synchronous>, transform_indices = @transform_1, window_bounds = array<i64: 9, 1, 1, 256>}, {pipeline_mode = #tpu.pipeline_mode<synchronous>, transform_indices = @transform_2, window_bounds = array<i64: 1, 1, 256>}, {pipeline_mode = #tpu.pipeline_mode<synchronous>, transform_indices = @transform_3, window_bounds = array<i64: 256, 256>}, {pipeline_mode = #tpu.pipeline_mode<synchronous>, transform_indices = @transform_4, window_bounds = array<i64: 1, 256>}, {transform_indices = @transform_5, window_bounds = array<i64: 1, 4, 256>}]} {
    %c0 = arith.constant 0 : index
    %c0_0 = arith.constant 0 : index
    %c0_1 = arith.constant 0 : index
    %c0_2 = arith.constant 0 : index
    %0 = vector.load %arg1[%c0, %c0_0, %c0_1, %c0_2] : memref<1x4x4x256xbf16, #tpu.memory_space<vmem>>, vector<1x4x4x256xbf16>
    %1 = vector.shape_cast %0 : vector<1x4x4x256xbf16> to vector<4x4x256xbf16>
    %2 = vector.extract_strided_slice %1 {offsets = [0, 0, 0], sizes = [2, 2, 256], strides = [1, 1, 1]} : vector<4x4x256xbf16> to vector<2x2x256xbf16>
    %c0_3 = arith.constant 0 : index
    %c0_4 = arith.constant 0 : index
    %c0_5 = arith.constant 0 : index
    %c0_6 = arith.constant 0 : index
    %3 = vector.load %arg2[%c0_3, %c0_4, %c0_5, %c0_6] : memref<9x1x1x256xbf16, #tpu.memory_space<vmem>>, vector<1x1x1x256xbf16>
    %4 = vector.shape_cast %3 : vector<1x1x1x256xbf16> to vector<1x1x256xbf16>
    %5 = vector.broadcast %4 : vector<1x1x256xbf16> to vector<2x2x256xbf16>
    %6 = arith.mulf %2, %5 : vector<2x2x256xbf16>
    %7 = vector.extract_strided_slice %1 {offsets = [0, 1, 0], sizes = [2, 2, 256], strides = [1, 1, 1]} : vector<4x4x256xbf16> to vector<2x2x256xbf16>
    %c1 = arith.constant 1 : index
    %c0_7 = arith.constant 0 : index
    %c0_8 = arith.constant 0 : index
    %c0_9 = arith.constant 0 : index
    %8 = vector.load %arg2[%c1, %c0_7, %c0_8, %c0_9] : memref<9x1x1x256xbf16, #tpu.memory_space<vmem>>, vector<1x1x1x256xbf16>
    %9 = vector.shape_cast %8 : vector<1x1x1x256xbf16> to vector<1x1x256xbf16>
    %10 = vector.broadcast %9 : vector<1x1x256xbf16> to vector<2x2x256xbf16>
    %11 = arith.mulf %7, %10 : vector<2x2x256xbf16>
    %12 = arith.addf %6, %11 : vector<2x2x256xbf16>
    %13 = vector.extract_strided_slice %1 {offsets = [0, 2, 0], sizes = [2, 2, 256], strides = [1, 1, 1]} : vector<4x4x256xbf16> to vector<2x2x256xbf16>
    %c2 = arith.constant 2 : index
    %c0_10 = arith.constant 0 : index
    %c0_11 = arith.constant 0 : index
    %c0_12 = arith.constant 0 : index
    %14 = vector.load %arg2[%c2, %c0_10, %c0_11, %c0_12] : memref<9x1x1x256xbf16, #tpu.memory_space<vmem>>, vector<1x1x1x256xbf16>
    %15 = vector.shape_cast %14 : vector<1x1x1x256xbf16> to vector<1x1x256xbf16>
    %16 = vector.broadcast %15 : vector<1x1x256xbf16> to vector<2x2x256xbf16>
    %17 = arith.mulf %13, %16 : vector<2x2x256xbf16>
    %18 = arith.addf %12, %17 : vector<2x2x256xbf16>
    %19 = vector.extract_strided_slice %1 {offsets = [1, 0, 0], sizes = [2, 2, 256], strides = [1, 1, 1]} : vector<4x4x256xbf16> to vector<2x2x256xbf16>
    %c3 = arith.constant 3 : index
    %c0_13 = arith.constant 0 : index
    %c0_14 = arith.constant 0 : index
    %c0_15 = arith.constant 0 : index
    %20 = vector.load %arg2[%c3, %c0_13, %c0_14, %c0_15] : memref<9x1x1x256xbf16, #tpu.memory_space<vmem>>, vector<1x1x1x256xbf16>
    %21 = vector.shape_cast %20 : vector<1x1x1x256xbf16> to vector<1x1x256xbf16>
    %22 = vector.broadcast %21 : vector<1x1x256xbf16> to vector<2x2x256xbf16>
    %23 = arith.mulf %19, %22 : vector<2x2x256xbf16>
    %24 = arith.addf %18, %23 : vector<2x2x256xbf16>
    %25 = vector.extract_strided_slice %1 {offsets = [1, 1, 0], sizes = [2, 2, 256], strides = [1, 1, 1]} : vector<4x4x256xbf16> to vector<2x2x256xbf16>
    %c4 = arith.constant 4 : index
    %c0_16 = arith.constant 0 : index
    %c0_17 = arith.constant 0 : index
    %c0_18 = arith.constant 0 : index
    %26 = vector.load %arg2[%c4, %c0_16, %c0_17, %c0_18] : memref<9x1x1x256xbf16, #tpu.memory_space<vmem>>, vector<1x1x1x256xbf16>
    %27 = vector.shape_cast %26 : vector<1x1x1x256xbf16> to vector<1x1x256xbf16>
    %28 = vector.broadcast %27 : vector<1x1x256xbf16> to vector<2x2x256xbf16>
    %29 = arith.mulf %25, %28 : vector<2x2x256xbf16>
    %30 = arith.addf %24, %29 : vector<2x2x256xbf16>
    %31 = vector.extract_strided_slice %1 {offsets = [1, 2, 0], sizes = [2, 2, 256], strides = [1, 1, 1]} : vector<4x4x256xbf16> to vector<2x2x256xbf16>
    %c5 = arith.constant 5 : index
    %c0_19 = arith.constant 0 : index
    %c0_20 = arith.constant 0 : index
    %c0_21 = arith.constant 0 : index
    %32 = vector.load %arg2[%c5, %c0_19, %c0_20, %c0_21] : memref<9x1x1x256xbf16, #tpu.memory_space<vmem>>, vector<1x1x1x256xbf16>
    %33 = vector.shape_cast %32 : vector<1x1x1x256xbf16> to vector<1x1x256xbf16>
    %34 = vector.broadcast %33 : vector<1x1x256xbf16> to vector<2x2x256xbf16>
    %35 = arith.mulf %31, %34 : vector<2x2x256xbf16>
    %36 = arith.addf %30, %35 : vector<2x2x256xbf16>
    %37 = vector.extract_strided_slice %1 {offsets = [2, 0, 0], sizes = [2, 2, 256], strides = [1, 1, 1]} : vector<4x4x256xbf16> to vector<2x2x256xbf16>
    %c6 = arith.constant 6 : index
    %c0_22 = arith.constant 0 : index
    %c0_23 = arith.constant 0 : index
    %c0_24 = arith.constant 0 : index
    %38 = vector.load %arg2[%c6, %c0_22, %c0_23, %c0_24] : memref<9x1x1x256xbf16, #tpu.memory_space<vmem>>, vector<1x1x1x256xbf16>
    %39 = vector.shape_cast %38 : vector<1x1x1x256xbf16> to vector<1x1x256xbf16>
    %40 = vector.broadcast %39 : vector<1x1x256xbf16> to vector<2x2x256xbf16>
    %41 = arith.mulf %37, %40 : vector<2x2x256xbf16>
    %42 = arith.addf %36, %41 : vector<2x2x256xbf16>
    %43 = vector.extract_strided_slice %1 {offsets = [2, 1, 0], sizes = [2, 2, 256], strides = [1, 1, 1]} : vector<4x4x256xbf16> to vector<2x2x256xbf16>
    %c7 = arith.constant 7 : index
    %c0_25 = arith.constant 0 : index
    %c0_26 = arith.constant 0 : index
    %c0_27 = arith.constant 0 : index
    %44 = vector.load %arg2[%c7, %c0_25, %c0_26, %c0_27] : memref<9x1x1x256xbf16, #tpu.memory_space<vmem>>, vector<1x1x1x256xbf16>
    %45 = vector.shape_cast %44 : vector<1x1x1x256xbf16> to vector<1x1x256xbf16>
    %46 = vector.broadcast %45 : vector<1x1x256xbf16> to vector<2x2x256xbf16>
    %47 = arith.mulf %43, %46 : vector<2x2x256xbf16>
    %48 = arith.addf %42, %47 : vector<2x2x256xbf16>
    %49 = vector.extract_strided_slice %1 {offsets = [2, 2, 0], sizes = [2, 2, 256], strides = [1, 1, 1]} : vector<4x4x256xbf16> to vector<2x2x256xbf16>
    %c8 = arith.constant 8 : index
    %c0_28 = arith.constant 0 : index
    %c0_29 = arith.constant 0 : index
    %c0_30 = arith.constant 0 : index
    %50 = vector.load %arg2[%c8, %c0_28, %c0_29, %c0_30] : memref<9x1x1x256xbf16, #tpu.memory_space<vmem>>, vector<1x1x1x256xbf16>
    %51 = vector.shape_cast %50 : vector<1x1x1x256xbf16> to vector<1x1x256xbf16>
    %52 = vector.broadcast %51 : vector<1x1x256xbf16> to vector<2x2x256xbf16>
    %53 = arith.mulf %49, %52 : vector<2x2x256xbf16>
    %54 = arith.addf %48, %53 : vector<2x2x256xbf16>
    %c0_31 = arith.constant 0 : index
    %c0_32 = arith.constant 0 : index
    %c0_33 = arith.constant 0 : index
    %55 = vector.load %arg3[%c0_31, %c0_32, %c0_33] : memref<1x1x256xbf16, #tpu.memory_space<vmem>>, vector<1x1x256xbf16>
    %56 = vector.broadcast %55 : vector<1x1x256xbf16> to vector<2x2x256xbf16>
    %57 = arith.addf %54, %56 : vector<2x2x256xbf16>
    %cst = arith.constant 0.000000e+00 : f32
    %cst_34 = arith.constant 6.000000e+00 : f32
    %58 = arith.truncf %cst : f32 to bf16
    %59 = vector.broadcast %58 : bf16 to vector<2x2x256xbf16>
    %60 = arith.maximumf %59, %57 : vector<2x2x256xbf16>
    %61 = arith.truncf %cst_34 : f32 to bf16
    %62 = vector.broadcast %61 : bf16 to vector<2x2x256xbf16>
    %63 = arith.minimumf %62, %60 : vector<2x2x256xbf16>
    %64 = vector.shape_cast %63 : vector<2x2x256xbf16> to vector<4x256xbf16>
    %c0_35 = arith.constant 0 : index
    %c0_36 = arith.constant 0 : index
    %65 = vector.load %arg4[%c0_35, %c0_36] : memref<256x256xbf16, #tpu.memory_space<vmem>>, vector<256x256xbf16>
    %cst_37 = arith.constant dense<0.000000e+00> : vector<4x256xf32>
    %66 = tpu.matmul %64, %65, %cst_37 {dimension_numbers = #tpu.dot_dimension_numbers<[1], [0], [0], [1], [0, 0, 1, 1], [], []>} : vector<4x256xbf16>, vector<256x256xbf16>, vector<4x256xf32> -> vector<4x256xf32>
    %c0_38 = arith.constant 0 : index
    %c0_39 = arith.constant 0 : index
    %67 = vector.load %arg5[%c0_38, %c0_39] : memref<1x256xf32, #tpu.memory_space<vmem>>, vector<1x256xf32>
    %68 = vector.broadcast %67 : vector<1x256xf32> to vector<4x256xf32>
    %69 = arith.addf %66, %68 : vector<4x256xf32>
    %cst_40 = arith.constant 0.000000e+00 : f32
    %cst_41 = arith.constant 6.000000e+00 : f32
    %70 = vector.broadcast %cst_40 : f32 to vector<4x256xf32>
    %71 = arith.maximumf %70, %69 : vector<4x256xf32>
    %72 = vector.broadcast %cst_41 : f32 to vector<4x256xf32>
    %73 = arith.minimumf %72, %71 : vector<4x256xf32>
    %74 = arith.truncf %73 : vector<4x256xf32> to vector<4x256xbf16>
    %c0_42 = arith.constant 0 : index
    %c0_43 = arith.constant 0 : index
    %c0_44 = arith.constant 0 : index
    %75 = vector.load %arg6[%c0_42, %c0_43, %c0_44] : memref<1x4x256xbf16, #tpu.memory_space<vmem>>, vector<1x4x256xbf16>
    %76 = vector.shape_cast %75 : vector<1x4x256xbf16> to vector<4x256xbf16>
    %77 = vector.shape_cast %74 : vector<4x256xbf16> to vector<1x4x256xbf16>
    tpu.vector_store %arg6[%c0_42, %c0_43, %c0_44], %77 {strides = array<i32>} : memref<1x4x256xbf16, #tpu.memory_space<vmem>>, vector<1x4x256xbf16>,
    return
  }
  func.func @transform_0(%arg0: i32) -> (i32, i32, i32, i32) {
    %c0_i32 = arith.constant 0 : i32
    %c0_i32_0 = arith.constant 0 : i32
    %c0_i32_1 = arith.constant 0 : i32
    %c0_i32_2 = arith.constant 0 : i32
    return %arg0, %c0_i32, %c0_i32_0, %c0_i32_1 : i32, i32, i32, i32
  }
  func.func @transform_1(%arg0: i32) -> (i32, i32, i32, i32) {
    %c0_i32 = arith.constant 0 : i32
    %c0_i32_0 = arith.constant 0 : i32
    %c0_i32_1 = arith.constant 0 : i32
    %c0_i32_2 = arith.constant 0 : i32
    %c0_i32_3 = arith.constant 0 : i32
    return %c0_i32, %c0_i32_0, %c0_i32_1, %c0_i32_2 : i32, i32, i32, i32
  }
  func.func @transform_2(%arg0: i32) -> (i32, i32, i32) {
    %c0_i32 = arith.constant 0 : i32
    %c0_i32_0 = arith.constant 0 : i32
    %c0_i32_1 = arith.constant 0 : i32
    %c0_i32_2 = arith.constant 0 : i32
    return %c0_i32, %c0_i32_0, %c0_i32_1 : i32, i32, i32
  }
  func.func @transform_3(%arg0: i32) -> (i32, i32) {
    %c0_i32 = arith.constant 0 : i32
    %c0_i32_0 = arith.constant 0 : i32
    %c0_i32_1 = arith.constant 0 : i32
    return %c0_i32, %c0_i32_0 : i32, i32
  }
  func.func @transform_4(%arg0: i32) -> (i32, i32) {
    %c0_i32 = arith.constant 0 : i32
    %c0_i32_0 = arith.constant 0 : i32
    %c0_i32_1 = arith.constant 0 : i32
    return %c0_i32, %c0_i32_0 : i32, i32
  }
  func.func @transform_5(%arg0: i32) -> (i32, i32, i32) {
    %c0_i32 = arith.constant 0 : i32
    %c0_i32_0 = arith.constant 0 : i32
    %c0_i32_1 = arith.constant 0 : i32
    return %arg0, %c0_i32, %c0_i32_0 : i32, i32, i32
  }
}

module attributes {stable_mosaic.version = 11 : i64} {
  func.func @kernel(%arg0: i32, %arg1: memref<1x4x2x2x256xbf16, #tpu.memory_space<vmem>>, %arg2: memref<9x1x1x256xbf16, #tpu.memory_space<vmem>>, %arg3: memref<1x1x256xbf16, #tpu.memory_space<vmem>>, %arg4: memref<256x512xbf16, #tpu.memory_space<vmem>>, %arg5: memref<1x512xf32, #tpu.memory_space<vmem>>, %arg6: memref<1x1x512xbf16, #tpu.memory_space<vmem>>) attributes {dimension_semantics = [#tpu.dimension_semantics<parallel>], iteration_bounds = array<i64: 2>, scalar_prefetch = 0 : i64, scratch_operands = 0 : i64, tpu.core_type = #tpu.core_type<tc>, window_params = [{transform_indices = @transform_0, window_bounds = array<i64: 1, 4, 2, 2, 256>}, {pipeline_mode = #tpu.pipeline_mode<synchronous>, transform_indices = @transform_1, window_bounds = array<i64: 9, 1, 1, 256>}, {pipeline_mode = #tpu.pipeline_mode<synchronous>, transform_indices = @transform_2, window_bounds = array<i64: 1, 1, 256>}, {pipeline_mode = #tpu.pipeline_mode<synchronous>, transform_indices = @transform_3, window_bounds = array<i64: 256, 512>}, {pipeline_mode = #tpu.pipeline_mode<synchronous>, transform_indices = @transform_4, window_bounds = array<i64: 1, 512>}, {transform_indices = @transform_5, window_bounds = array<i64: 1, 1, 512>}]} {
    %c0 = arith.constant 0 : index
    %c0_0 = arith.constant 0 : index
    %c0_1 = arith.constant 0 : index
    %c0_2 = arith.constant 0 : index
    %c0_3 = arith.constant 0 : index
    %0 = vector.load %arg1[%c0, %c0_0, %c0_1, %c0_2, %c0_3] : memref<1x4x2x2x256xbf16, #tpu.memory_space<vmem>>, vector<1x4x2x2x256xbf16>
    %1 = vector.shape_cast %0 : vector<1x4x2x2x256xbf16> to vector<4x2x2x256xbf16>
    %2 = vector.extract_strided_slice %1 {offsets = [0, 0, 0, 0], sizes = [1, 1, 1, 256], strides = [1, 1, 1, 1]} : vector<4x2x2x256xbf16> to vector<1x1x1x256xbf16>
    %3 = vector.shape_cast %2 : vector<1x1x1x256xbf16> to vector<1x1x256xbf16>
    %c0_4 = arith.constant 0 : index
    %c0_5 = arith.constant 0 : index
    %c0_6 = arith.constant 0 : index
    %c0_7 = arith.constant 0 : index
    %4 = vector.load %arg2[%c0_4, %c0_5, %c0_6, %c0_7] : memref<9x1x1x256xbf16, #tpu.memory_space<vmem>>, vector<1x1x1x256xbf16>
    %5 = vector.shape_cast %4 : vector<1x1x1x256xbf16> to vector<1x1x256xbf16>
    %6 = arith.mulf %3, %5 : vector<1x1x256xbf16>
    %7 = vector.extract_strided_slice %1 {offsets = [1, 0, 0, 0], sizes = [1, 1, 1, 256], strides = [1, 1, 1, 1]} : vector<4x2x2x256xbf16> to vector<1x1x1x256xbf16>
    %8 = vector.shape_cast %7 : vector<1x1x1x256xbf16> to vector<1x1x256xbf16>
    %c1 = arith.constant 1 : index
    %c0_8 = arith.constant 0 : index
    %c0_9 = arith.constant 0 : index
    %c0_10 = arith.constant 0 : index
    %9 = vector.load %arg2[%c1, %c0_8, %c0_9, %c0_10] : memref<9x1x1x256xbf16, #tpu.memory_space<vmem>>, vector<1x1x1x256xbf16>
    %10 = vector.shape_cast %9 : vector<1x1x1x256xbf16> to vector<1x1x256xbf16>
    %11 = arith.mulf %8, %10 : vector<1x1x256xbf16>
    %12 = arith.addf %6, %11 : vector<1x1x256xbf16>
    %13 = vector.extract_strided_slice %1 {offsets = [0, 0, 1, 0], sizes = [1, 1, 1, 256], strides = [1, 1, 1, 1]} : vector<4x2x2x256xbf16> to vector<1x1x1x256xbf16>
    %14 = vector.shape_cast %13 : vector<1x1x1x256xbf16> to vector<1x1x256xbf16>
    %c2 = arith.constant 2 : index
    %c0_11 = arith.constant 0 : index
    %c0_12 = arith.constant 0 : index
    %c0_13 = arith.constant 0 : index
    %15 = vector.load %arg2[%c2, %c0_11, %c0_12, %c0_13] : memref<9x1x1x256xbf16, #tpu.memory_space<vmem>>, vector<1x1x1x256xbf16>
    %16 = vector.shape_cast %15 : vector<1x1x1x256xbf16> to vector<1x1x256xbf16>
    %17 = arith.mulf %14, %16 : vector<1x1x256xbf16>
    %18 = arith.addf %12, %17 : vector<1x1x256xbf16>
    %19 = vector.extract_strided_slice %1 {offsets = [2, 0, 0, 0], sizes = [1, 1, 1, 256], strides = [1, 1, 1, 1]} : vector<4x2x2x256xbf16> to vector<1x1x1x256xbf16>
    %20 = vector.shape_cast %19 : vector<1x1x1x256xbf16> to vector<1x1x256xbf16>
    %c3 = arith.constant 3 : index
    %c0_14 = arith.constant 0 : index
    %c0_15 = arith.constant 0 : index
    %c0_16 = arith.constant 0 : index
    %21 = vector.load %arg2[%c3, %c0_14, %c0_15, %c0_16] : memref<9x1x1x256xbf16, #tpu.memory_space<vmem>>, vector<1x1x1x256xbf16>
    %22 = vector.shape_cast %21 : vector<1x1x1x256xbf16> to vector<1x1x256xbf16>
    %23 = arith.mulf %20, %22 : vector<1x1x256xbf16>
    %24 = arith.addf %18, %23 : vector<1x1x256xbf16>
    %25 = vector.extract_strided_slice %1 {offsets = [3, 0, 0, 0], sizes = [1, 1, 1, 256], strides = [1, 1, 1, 1]} : vector<4x2x2x256xbf16> to vector<1x1x1x256xbf16>
    %26 = vector.shape_cast %25 : vector<1x1x1x256xbf16> to vector<1x1x256xbf16>
    %c4 = arith.constant 4 : index
    %c0_17 = arith.constant 0 : index
    %c0_18 = arith.constant 0 : index
    %c0_19 = arith.constant 0 : index
    %27 = vector.load %arg2[%c4, %c0_17, %c0_18, %c0_19] : memref<9x1x1x256xbf16, #tpu.memory_space<vmem>>, vector<1x1x1x256xbf16>
    %28 = vector.shape_cast %27 : vector<1x1x1x256xbf16> to vector<1x1x256xbf16>
    %29 = arith.mulf %26, %28 : vector<1x1x256xbf16>
    %30 = arith.addf %24, %29 : vector<1x1x256xbf16>
    %31 = vector.extract_strided_slice %1 {offsets = [2, 0, 1, 0], sizes = [1, 1, 1, 256], strides = [1, 1, 1, 1]} : vector<4x2x2x256xbf16> to vector<1x1x1x256xbf16>
    %32 = vector.shape_cast %31 : vector<1x1x1x256xbf16> to vector<1x1x256xbf16>
    %c5 = arith.constant 5 : index
    %c0_20 = arith.constant 0 : index
    %c0_21 = arith.constant 0 : index
    %c0_22 = arith.constant 0 : index
    %33 = vector.load %arg2[%c5, %c0_20, %c0_21, %c0_22] : memref<9x1x1x256xbf16, #tpu.memory_space<vmem>>, vector<1x1x1x256xbf16>
    %34 = vector.shape_cast %33 : vector<1x1x1x256xbf16> to vector<1x1x256xbf16>
    %35 = arith.mulf %32, %34 : vector<1x1x256xbf16>
    %36 = arith.addf %30, %35 : vector<1x1x256xbf16>
    %37 = vector.extract_strided_slice %1 {offsets = [0, 1, 0, 0], sizes = [1, 1, 1, 256], strides = [1, 1, 1, 1]} : vector<4x2x2x256xbf16> to vector<1x1x1x256xbf16>
    %38 = vector.shape_cast %37 : vector<1x1x1x256xbf16> to vector<1x1x256xbf16>
    %c6 = arith.constant 6 : index
    %c0_23 = arith.constant 0 : index
    %c0_24 = arith.constant 0 : index
    %c0_25 = arith.constant 0 : index
    %39 = vector.load %arg2[%c6, %c0_23, %c0_24, %c0_25] : memref<9x1x1x256xbf16, #tpu.memory_space<vmem>>, vector<1x1x1x256xbf16>
    %40 = vector.shape_cast %39 : vector<1x1x1x256xbf16> to vector<1x1x256xbf16>
    %41 = arith.mulf %38, %40 : vector<1x1x256xbf16>
    %42 = arith.addf %36, %41 : vector<1x1x256xbf16>
    %43 = vector.extract_strided_slice %1 {offsets = [1, 1, 0, 0], sizes = [1, 1, 1, 256], strides = [1, 1, 1, 1]} : vector<4x2x2x256xbf16> to vector<1x1x1x256xbf16>
    %44 = vector.shape_cast %43 : vector<1x1x1x256xbf16> to vector<1x1x256xbf16>
    %c7 = arith.constant 7 : index
    %c0_26 = arith.constant 0 : index
    %c0_27 = arith.constant 0 : index
    %c0_28 = arith.constant 0 : index
    %45 = vector.load %arg2[%c7, %c0_26, %c0_27, %c0_28] : memref<9x1x1x256xbf16, #tpu.memory_space<vmem>>, vector<1x1x1x256xbf16>
    %46 = vector.shape_cast %45 : vector<1x1x1x256xbf16> to vector<1x1x256xbf16>
    %47 = arith.mulf %44, %46 : vector<1x1x256xbf16>
    %48 = arith.addf %42, %47 : vector<1x1x256xbf16>
    %49 = vector.extract_strided_slice %1 {offsets = [0, 1, 1, 0], sizes = [1, 1, 1, 256], strides = [1, 1, 1, 1]} : vector<4x2x2x256xbf16> to vector<1x1x1x256xbf16>
    %50 = vector.shape_cast %49 : vector<1x1x1x256xbf16> to vector<1x1x256xbf16>
    %c8 = arith.constant 8 : index
    %c0_29 = arith.constant 0 : index
    %c0_30 = arith.constant 0 : index
    %c0_31 = arith.constant 0 : index
    %51 = vector.load %arg2[%c8, %c0_29, %c0_30, %c0_31] : memref<9x1x1x256xbf16, #tpu.memory_space<vmem>>, vector<1x1x1x256xbf16>
    %52 = vector.shape_cast %51 : vector<1x1x1x256xbf16> to vector<1x1x256xbf16>
    %53 = arith.mulf %50, %52 : vector<1x1x256xbf16>
    %54 = arith.addf %48, %53 : vector<1x1x256xbf16>
    %c0_32 = arith.constant 0 : index
    %c0_33 = arith.constant 0 : index
    %c0_34 = arith.constant 0 : index
    %55 = vector.load %arg3[%c0_32, %c0_33, %c0_34] : memref<1x1x256xbf16, #tpu.memory_space<vmem>>, vector<1x1x256xbf16>
    %56 = arith.addf %54, %55 : vector<1x1x256xbf16>
    %cst = arith.constant 0.000000e+00 : f32
    %cst_35 = arith.constant 6.000000e+00 : f32
    %57 = arith.truncf %cst : f32 to bf16
    %58 = vector.broadcast %57 : bf16 to vector<1x1x256xbf16>
    %59 = arith.maximumf %58, %56 : vector<1x1x256xbf16>
    %60 = arith.truncf %cst_35 : f32 to bf16
    %61 = vector.broadcast %60 : bf16 to vector<1x1x256xbf16>
    %62 = arith.minimumf %61, %59 : vector<1x1x256xbf16>
    %63 = vector.shape_cast %62 : vector<1x1x256xbf16> to vector<1x256xbf16>
    %c0_36 = arith.constant 0 : index
    %c0_37 = arith.constant 0 : index
    %64 = vector.load %arg4[%c0_36, %c0_37] : memref<256x512xbf16, #tpu.memory_space<vmem>>, vector<256x512xbf16>
    %cst_38 = arith.constant dense<0.000000e+00> : vector<1x512xf32>
    %65 = tpu.matmul %63, %64, %cst_38 {dimension_numbers = #tpu.dot_dimension_numbers<[1], [0], [0], [1], [0, 0, 1, 1], [], []>} : vector<1x256xbf16>, vector<256x512xbf16>, vector<1x512xf32> -> vector<1x512xf32>
    %c0_39 = arith.constant 0 : index
    %c0_40 = arith.constant 0 : index
    %66 = vector.load %arg5[%c0_39, %c0_40] : memref<1x512xf32, #tpu.memory_space<vmem>>, vector<1x512xf32>
    %67 = arith.addf %65, %66 : vector<1x512xf32>
    %cst_41 = arith.constant 0.000000e+00 : f32
    %cst_42 = arith.constant 6.000000e+00 : f32
    %68 = vector.broadcast %cst_41 : f32 to vector<1x512xf32>
    %69 = arith.maximumf %68, %67 : vector<1x512xf32>
    %70 = vector.broadcast %cst_42 : f32 to vector<1x512xf32>
    %71 = arith.minimumf %70, %69 : vector<1x512xf32>
    %72 = arith.truncf %71 : vector<1x512xf32> to vector<1x512xbf16>
    %c0_43 = arith.constant 0 : index
    %c0_44 = arith.constant 0 : index
    %c0_45 = arith.constant 0 : index
    %73 = vector.load %arg6[%c0_43, %c0_44, %c0_45] : memref<1x1x512xbf16, #tpu.memory_space<vmem>>, vector<1x1x512xbf16>
    %74 = vector.shape_cast %73 : vector<1x1x512xbf16> to vector<1x512xbf16>
    %75 = vector.shape_cast %72 : vector<1x512xbf16> to vector<1x1x512xbf16>
    tpu.vector_store %arg6[%c0_43, %c0_44, %c0_45], %75 {strides = array<i32>} : memref<1x1x512xbf16, #tpu.memory_space<vmem>>, vector<1x1x512xbf16>,
    return
  }
  func.func @transform_0(%arg0: i32) -> (i32, i32, i32, i32, i32) {
    %c0_i32 = arith.constant 0 : i32
    %c0_i32_0 = arith.constant 0 : i32
    %c0_i32_1 = arith.constant 0 : i32
    %c0_i32_2 = arith.constant 0 : i32
    %c0_i32_3 = arith.constant 0 : i32
    return %arg0, %c0_i32, %c0_i32_0, %c0_i32_1, %c0_i32_2 : i32, i32, i32, i32, i32
  }
  func.func @transform_1(%arg0: i32) -> (i32, i32, i32, i32) {
    %c0_i32 = arith.constant 0 : i32
    %c0_i32_0 = arith.constant 0 : i32
    %c0_i32_1 = arith.constant 0 : i32
    %c0_i32_2 = arith.constant 0 : i32
    %c0_i32_3 = arith.constant 0 : i32
    return %c0_i32, %c0_i32_0, %c0_i32_1, %c0_i32_2 : i32, i32, i32, i32
  }
  func.func @transform_2(%arg0: i32) -> (i32, i32, i32) {
    %c0_i32 = arith.constant 0 : i32
    %c0_i32_0 = arith.constant 0 : i32
    %c0_i32_1 = arith.constant 0 : i32
    %c0_i32_2 = arith.constant 0 : i32
    return %c0_i32, %c0_i32_0, %c0_i32_1 : i32, i32, i32
  }
  func.func @transform_3(%arg0: i32) -> (i32, i32) {
    %c0_i32 = arith.constant 0 : i32
    %c0_i32_0 = arith.constant 0 : i32
    %c0_i32_1 = arith.constant 0 : i32
    return %c0_i32, %c0_i32_0 : i32, i32
  }
  func.func @transform_4(%arg0: i32) -> (i32, i32) {
    %c0_i32 = arith.constant 0 : i32
    %c0_i32_0 = arith.constant 0 : i32
    %c0_i32_1 = arith.constant 0 : i32
    return %c0_i32, %c0_i32_0 : i32, i32
  }
  func.func @transform_5(%arg0: i32) -> (i32, i32, i32) {
    %c0_i32 = arith.constant 0 : i32
    %c0_i32_0 = arith.constant 0 : i32
    %c0_i32_1 = arith.constant 0 : i32
    return %arg0, %c0_i32, %c0_i32_0 : i32, i32, i32
  }
}

module attributes {stable_mosaic.version = 11 : i64} {
  func.func @kernel(%arg0: i32, %arg1: memref<1x3x3x512xbf16, #tpu.memory_space<vmem>>, %arg2: memref<9x1x1x512xbf16, #tpu.memory_space<vmem>>, %arg3: memref<1x1x512xbf16, #tpu.memory_space<vmem>>, %arg4: memref<512x512xbf16, #tpu.memory_space<vmem>>, %arg5: memref<1x512xf32, #tpu.memory_space<vmem>>, %arg6: memref<1x1x512xbf16, #tpu.memory_space<vmem>>) attributes {dimension_semantics = [#tpu.dimension_semantics<parallel>], iteration_bounds = array<i64: 2>, scalar_prefetch = 0 : i64, scratch_operands = 0 : i64, tpu.core_type = #tpu.core_type<tc>, window_params = [{transform_indices = @transform_0, window_bounds = array<i64: 1, 3, 3, 512>}, {pipeline_mode = #tpu.pipeline_mode<synchronous>, transform_indices = @transform_1, window_bounds = array<i64: 9, 1, 1, 512>}, {pipeline_mode = #tpu.pipeline_mode<synchronous>, transform_indices = @transform_2, window_bounds = array<i64: 1, 1, 512>}, {pipeline_mode = #tpu.pipeline_mode<synchronous>, transform_indices = @transform_3, window_bounds = array<i64: 512, 512>}, {pipeline_mode = #tpu.pipeline_mode<synchronous>, transform_indices = @transform_4, window_bounds = array<i64: 1, 512>}, {transform_indices = @transform_5, window_bounds = array<i64: 1, 1, 512>}]} {
    %c0 = arith.constant 0 : index
    %c0_0 = arith.constant 0 : index
    %c0_1 = arith.constant 0 : index
    %c0_2 = arith.constant 0 : index
    %0 = vector.load %arg1[%c0, %c0_0, %c0_1, %c0_2] : memref<1x3x3x512xbf16, #tpu.memory_space<vmem>>, vector<1x3x3x512xbf16>
    %1 = vector.shape_cast %0 : vector<1x3x3x512xbf16> to vector<3x3x512xbf16>
    %2 = vector.extract_strided_slice %1 {offsets = [0, 0, 0], sizes = [1, 1, 512], strides = [1, 1, 1]} : vector<3x3x512xbf16> to vector<1x1x512xbf16>
    %c0_3 = arith.constant 0 : index
    %c0_4 = arith.constant 0 : index
    %c0_5 = arith.constant 0 : index
    %c0_6 = arith.constant 0 : index
    %3 = vector.load %arg2[%c0_3, %c0_4, %c0_5, %c0_6] : memref<9x1x1x512xbf16, #tpu.memory_space<vmem>>, vector<1x1x1x512xbf16>
    %4 = vector.shape_cast %3 : vector<1x1x1x512xbf16> to vector<1x1x512xbf16>
    %5 = arith.mulf %2, %4 : vector<1x1x512xbf16>
    %6 = vector.extract_strided_slice %1 {offsets = [0, 1, 0], sizes = [1, 1, 512], strides = [1, 1, 1]} : vector<3x3x512xbf16> to vector<1x1x512xbf16>
    %c1 = arith.constant 1 : index
    %c0_7 = arith.constant 0 : index
    %c0_8 = arith.constant 0 : index
    %c0_9 = arith.constant 0 : index
    %7 = vector.load %arg2[%c1, %c0_7, %c0_8, %c0_9] : memref<9x1x1x512xbf16, #tpu.memory_space<vmem>>, vector<1x1x1x512xbf16>
    %8 = vector.shape_cast %7 : vector<1x1x1x512xbf16> to vector<1x1x512xbf16>
    %9 = arith.mulf %6, %8 : vector<1x1x512xbf16>
    %10 = arith.addf %5, %9 : vector<1x1x512xbf16>
    %11 = vector.extract_strided_slice %1 {offsets = [0, 2, 0], sizes = [1, 1, 512], strides = [1, 1, 1]} : vector<3x3x512xbf16> to vector<1x1x512xbf16>
    %c2 = arith.constant 2 : index
    %c0_10 = arith.constant 0 : index
    %c0_11 = arith.constant 0 : index
    %c0_12 = arith.constant 0 : index
    %12 = vector.load %arg2[%c2, %c0_10, %c0_11, %c0_12] : memref<9x1x1x512xbf16, #tpu.memory_space<vmem>>, vector<1x1x1x512xbf16>
    %13 = vector.shape_cast %12 : vector<1x1x1x512xbf16> to vector<1x1x512xbf16>
    %14 = arith.mulf %11, %13 : vector<1x1x512xbf16>
    %15 = arith.addf %10, %14 : vector<1x1x512xbf16>
    %16 = vector.extract_strided_slice %1 {offsets = [1, 0, 0], sizes = [1, 1, 512], strides = [1, 1, 1]} : vector<3x3x512xbf16> to vector<1x1x512xbf16>
    %c3 = arith.constant 3 : index
    %c0_13 = arith.constant 0 : index
    %c0_14 = arith.constant 0 : index
    %c0_15 = arith.constant 0 : index
    %17 = vector.load %arg2[%c3, %c0_13, %c0_14, %c0_15] : memref<9x1x1x512xbf16, #tpu.memory_space<vmem>>, vector<1x1x1x512xbf16>
    %18 = vector.shape_cast %17 : vector<1x1x1x512xbf16> to vector<1x1x512xbf16>
    %19 = arith.mulf %16, %18 : vector<1x1x512xbf16>
    %20 = arith.addf %15, %19 : vector<1x1x512xbf16>
    %21 = vector.extract_strided_slice %1 {offsets = [1, 1, 0], sizes = [1, 1, 512], strides = [1, 1, 1]} : vector<3x3x512xbf16> to vector<1x1x512xbf16>
    %c4 = arith.constant 4 : index
    %c0_16 = arith.constant 0 : index
    %c0_17 = arith.constant 0 : index
    %c0_18 = arith.constant 0 : index
    %22 = vector.load %arg2[%c4, %c0_16, %c0_17, %c0_18] : memref<9x1x1x512xbf16, #tpu.memory_space<vmem>>, vector<1x1x1x512xbf16>
    %23 = vector.shape_cast %22 : vector<1x1x1x512xbf16> to vector<1x1x512xbf16>
    %24 = arith.mulf %21, %23 : vector<1x1x512xbf16>
    %25 = arith.addf %20, %24 : vector<1x1x512xbf16>
    %26 = vector.extract_strided_slice %1 {offsets = [1, 2, 0], sizes = [1, 1, 512], strides = [1, 1, 1]} : vector<3x3x512xbf16> to vector<1x1x512xbf16>
    %c5 = arith.constant 5 : index
    %c0_19 = arith.constant 0 : index
    %c0_20 = arith.constant 0 : index
    %c0_21 = arith.constant 0 : index
    %27 = vector.load %arg2[%c5, %c0_19, %c0_20, %c0_21] : memref<9x1x1x512xbf16, #tpu.memory_space<vmem>>, vector<1x1x1x512xbf16>
    %28 = vector.shape_cast %27 : vector<1x1x1x512xbf16> to vector<1x1x512xbf16>
    %29 = arith.mulf %26, %28 : vector<1x1x512xbf16>
    %30 = arith.addf %25, %29 : vector<1x1x512xbf16>
    %31 = vector.extract_strided_slice %1 {offsets = [2, 0, 0], sizes = [1, 1, 512], strides = [1, 1, 1]} : vector<3x3x512xbf16> to vector<1x1x512xbf16>
    %c6 = arith.constant 6 : index
    %c0_22 = arith.constant 0 : index
    %c0_23 = arith.constant 0 : index
    %c0_24 = arith.constant 0 : index
    %32 = vector.load %arg2[%c6, %c0_22, %c0_23, %c0_24] : memref<9x1x1x512xbf16, #tpu.memory_space<vmem>>, vector<1x1x1x512xbf16>
    %33 = vector.shape_cast %32 : vector<1x1x1x512xbf16> to vector<1x1x512xbf16>
    %34 = arith.mulf %31, %33 : vector<1x1x512xbf16>
    %35 = arith.addf %30, %34 : vector<1x1x512xbf16>
    %36 = vector.extract_strided_slice %1 {offsets = [2, 1, 0], sizes = [1, 1, 512], strides = [1, 1, 1]} : vector<3x3x512xbf16> to vector<1x1x512xbf16>
    %c7 = arith.constant 7 : index
    %c0_25 = arith.constant 0 : index
    %c0_26 = arith.constant 0 : index
    %c0_27 = arith.constant 0 : index
    %37 = vector.load %arg2[%c7, %c0_25, %c0_26, %c0_27] : memref<9x1x1x512xbf16, #tpu.memory_space<vmem>>, vector<1x1x1x512xbf16>
    %38 = vector.shape_cast %37 : vector<1x1x1x512xbf16> to vector<1x1x512xbf16>
    %39 = arith.mulf %36, %38 : vector<1x1x512xbf16>
    %40 = arith.addf %35, %39 : vector<1x1x512xbf16>
    %41 = vector.extract_strided_slice %1 {offsets = [2, 2, 0], sizes = [1, 1, 512], strides = [1, 1, 1]} : vector<3x3x512xbf16> to vector<1x1x512xbf16>
    %c8 = arith.constant 8 : index
    %c0_28 = arith.constant 0 : index
    %c0_29 = arith.constant 0 : index
    %c0_30 = arith.constant 0 : index
    %42 = vector.load %arg2[%c8, %c0_28, %c0_29, %c0_30] : memref<9x1x1x512xbf16, #tpu.memory_space<vmem>>, vector<1x1x1x512xbf16>
    %43 = vector.shape_cast %42 : vector<1x1x1x512xbf16> to vector<1x1x512xbf16>
    %44 = arith.mulf %41, %43 : vector<1x1x512xbf16>
    %45 = arith.addf %40, %44 : vector<1x1x512xbf16>
    %c0_31 = arith.constant 0 : index
    %c0_32 = arith.constant 0 : index
    %c0_33 = arith.constant 0 : index
    %46 = vector.load %arg3[%c0_31, %c0_32, %c0_33] : memref<1x1x512xbf16, #tpu.memory_space<vmem>>, vector<1x1x512xbf16>
    %47 = arith.addf %45, %46 : vector<1x1x512xbf16>
    %cst = arith.constant 0.000000e+00 : f32
    %cst_34 = arith.constant 6.000000e+00 : f32
    %48 = arith.truncf %cst : f32 to bf16
    %49 = vector.broadcast %48 : bf16 to vector<1x1x512xbf16>
    %50 = arith.maximumf %49, %47 : vector<1x1x512xbf16>
    %51 = arith.truncf %cst_34 : f32 to bf16
    %52 = vector.broadcast %51 : bf16 to vector<1x1x512xbf16>
    %53 = arith.minimumf %52, %50 : vector<1x1x512xbf16>
    %54 = vector.shape_cast %53 : vector<1x1x512xbf16> to vector<1x512xbf16>
    %c0_35 = arith.constant 0 : index
    %c0_36 = arith.constant 0 : index
    %55 = vector.load %arg4[%c0_35, %c0_36] : memref<512x512xbf16, #tpu.memory_space<vmem>>, vector<512x512xbf16>
    %cst_37 = arith.constant dense<0.000000e+00> : vector<1x512xf32>
    %56 = tpu.matmul %54, %55, %cst_37 {dimension_numbers = #tpu.dot_dimension_numbers<[1], [0], [0], [1], [0, 0, 1, 1], [], []>} : vector<1x512xbf16>, vector<512x512xbf16>, vector<1x512xf32> -> vector<1x512xf32>
    %c0_38 = arith.constant 0 : index
    %c0_39 = arith.constant 0 : index
    %57 = vector.load %arg5[%c0_38, %c0_39] : memref<1x512xf32, #tpu.memory_space<vmem>>, vector<1x512xf32>
    %58 = arith.addf %56, %57 : vector<1x512xf32>
    %cst_40 = arith.constant 0.000000e+00 : f32
    %cst_41 = arith.constant 6.000000e+00 : f32
    %59 = vector.broadcast %cst_40 : f32 to vector<1x512xf32>
    %60 = arith.maximumf %59, %58 : vector<1x512xf32>
    %61 = vector.broadcast %cst_41 : f32 to vector<1x512xf32>
    %62 = arith.minimumf %61, %60 : vector<1x512xf32>
    %63 = arith.truncf %62 : vector<1x512xf32> to vector<1x512xbf16>
    %c0_42 = arith.constant 0 : index
    %c0_43 = arith.constant 0 : index
    %c0_44 = arith.constant 0 : index
    %64 = vector.load %arg6[%c0_42, %c0_43, %c0_44] : memref<1x1x512xbf16, #tpu.memory_space<vmem>>, vector<1x1x512xbf16>
    %65 = vector.shape_cast %64 : vector<1x1x512xbf16> to vector<1x512xbf16>
    %66 = vector.shape_cast %63 : vector<1x512xbf16> to vector<1x1x512xbf16>
    tpu.vector_store %arg6[%c0_42, %c0_43, %c0_44], %66 {strides = array<i32>} : memref<1x1x512xbf16, #tpu.memory_space<vmem>>, vector<1x1x512xbf16>,
    return
  }
  func.func @transform_0(%arg0: i32) -> (i32, i32, i32, i32) {
    %c0_i32 = arith.constant 0 : i32
    %c0_i32_0 = arith.constant 0 : i32
    %c0_i32_1 = arith.constant 0 : i32
    %c0_i32_2 = arith.constant 0 : i32
    return %arg0, %c0_i32, %c0_i32_0, %c0_i32_1 : i32, i32, i32, i32
  }
  func.func @transform_1(%arg0: i32) -> (i32, i32, i32, i32) {
    %c0_i32 = arith.constant 0 : i32
    %c0_i32_0 = arith.constant 0 : i32
    %c0_i32_1 = arith.constant 0 : i32
    %c0_i32_2 = arith.constant 0 : i32
    %c0_i32_3 = arith.constant 0 : i32
    return %c0_i32, %c0_i32_0, %c0_i32_1, %c0_i32_2 : i32, i32, i32, i32
  }
  func.func @transform_2(%arg0: i32) -> (i32, i32, i32) {
    %c0_i32 = arith.constant 0 : i32
    %c0_i32_0 = arith.constant 0 : i32
    %c0_i32_1 = arith.constant 0 : i32
    %c0_i32_2 = arith.constant 0 : i32
    return %c0_i32, %c0_i32_0, %c0_i32_1 : i32, i32, i32
  }
  func.func @transform_3(%arg0: i32) -> (i32, i32) {
    %c0_i32 = arith.constant 0 : i32
    %c0_i32_0 = arith.constant 0 : i32
    %c0_i32_1 = arith.constant 0 : i32
    return %c0_i32, %c0_i32_0 : i32, i32
  }
  func.func @transform_4(%arg0: i32) -> (i32, i32) {
    %c0_i32 = arith.constant 0 : i32
    %c0_i32_0 = arith.constant 0 : i32
    %c0_i32_1 = arith.constant 0 : i32
    return %c0_i32, %c0_i32_0 : i32, i32
  }
  func.func @transform_5(%arg0: i32) -> (i32, i32, i32) {
    %c0_i32 = arith.constant 0 : i32
    %c0_i32_0 = arith.constant 0 : i32
    %c0_i32_1 = arith.constant 0 : i32
    return %arg0, %c0_i32, %c0_i32_0 : i32, i32, i32
  }
}

</mosaic_0001>

<llo_original>
// kernel: mobilenet_v1_forward.12
$region0: #{mobilenet_v1_forward.12}
  #allocation0 [shape = 'u32[]', space=smem, size = 0x4, offset = 0x4, fixed_abs, tag = 'smem constant byte address 0x4 - core index']
  #allocation1 [shape = 'u32[144,128]{1,0:T(1,128)}', space=vmem, size = 0x12000, scoped, tag = 'internal scratch']
  %s0 = inlined_call_operand.vmem [shape: bf16[128,32], index: 0, kind: input, shape index: {}]
  %s1 = inlined_call_operand.vmem [shape: bf16[32,32], index: 1, kind: input, shape index: {}]
  %s2 = inlined_call_operand.vmem [shape: f32[1,32], index: 2, kind: input, shape index: {}]
  %s3 = inlined_call_operand.vmem [shape: bf16[128,32], index: 3, kind: output, shape index: {}]
  %s4 = sld [smem:[#allocation0]]
  $region22: #{mobilenet_v1_forward.12} parent=0
    _
  %s6 = ssub.s32 1, %s4
  %s7 = scalar_select 0, %s6, %s4
  // Predicated region
  $region2: #{mobilenet_v1_forward.12} parent=0 // pred_check
    _
  $region3: #{mobilenet_v1_forward.12} parent=0 // pred_check_branch
    %9 = sbr.rel (0) target = $region5
  $region4: #{mobilenet_v1_forward.12} parent=0 // pred_region
    _
  $region5: #{mobilenet_v1_forward.12} parent=0 // pred_fallthru
    _
  // Predicated region
  $region6: #{mobilenet_v1_forward.12} parent=0 // pred_check
    _
  $region7: #{mobilenet_v1_forward.12} parent=0 // pred_check_branch
    %11 = sbr.rel (0) target = $region9
  $region8: #{mobilenet_v1_forward.12} parent=0 // pred_region
    _
  $region9: #{mobilenet_v1_forward.12} parent=0 // pred_fallthru
    _
  // Predicated region
  $region10: #{mobilenet_v1_forward.12} parent=0 // pred_check
    _
  $region11: #{mobilenet_v1_forward.12} parent=0 // pred_check_branch
    %13 = sbr.rel (0) target = $region13
  $region12: #{mobilenet_v1_forward.12} parent=0 // pred_region
    _
  $region13: #{mobilenet_v1_forward.12} parent=0 // pred_fallthru
    _
  %v15 = vld [vmem:[%s0] sm:$0xf]
  %v16 = vld [vmem:[%s0 + $0x4] sm:$0xf]
  %v17 = vld [vmem:[%s0 + $0x8] sm:$0xf]
  %v18 = vld [vmem:[%s0 + $0xc] sm:$0xf]
  %v19 = vld [vmem:[%s0 + $0x10] sm:$0xf]
  %v20 = vld [vmem:[%s0 + $0x14] sm:$0xf]
  %v21 = vld [vmem:[%s0 + $0x18] sm:$0xf]
  %v22 = vld [vmem:[%s0 + $0x1c] sm:$0xf]
  %v23 = vld [vmem:[%s0 + $0x20] sm:$0xf]
  %v24 = vld [vmem:[%s0 + $0x24] sm:$0xf]
  %v25 = vld [vmem:[%s0 + $0x28] sm:$0xf]
  %v26 = vld [vmem:[%s0 + $0x2c] sm:$0xf]
  %v27 = vld [vmem:[%s0 + $0x30] sm:$0xf]
  %v28 = vld [vmem:[%s0 + $0x34] sm:$0xf]
  %v29 = vld [vmem:[%s0 + $0x38] sm:$0xf]
  %v30 = vld [vmem:[%s0 + $0x3c] sm:$0xf]
  %v31 = vld [vmem:[%s1] sm:$0xf]
  %v32 = vld [vmem:[%s1 + $0x4] sm:$0xf]
  %v33 = vld [vmem:[%s1 + $0x8] sm:$0xf]
  %v34 = vld [vmem:[%s1 + $0xc] sm:$0xf]
  %v35 = vld [vmem:[%s2] sm:$0x1]
  %v37 = vlaneseq
  %v38 = vshrl.u32 %v37, 7
  %v39 = vsub.s32 0, %v38
  %v40 = vrot.slane %v35, %v39
  %v58 = vunpack.c.l.b16 %v15
  %v59 = vunpack.c.l.b16 %v16
  %v60 = vunpack.c.l.b16 %v17
  %v61 = vunpack.c.l.b16 %v18
  %v62 = vunpack.c.l.b16 %v19
  %v63 = vunpack.c.l.b16 %v20
  %v64 = vunpack.c.l.b16 %v21
  %v65 = vunpack.c.l.b16 %v22
  %v66 = vunpack.c.l.b16 %v23
  %v67 = vunpack.c.l.b16 %v24
  %v68 = vunpack.c.l.b16 %v25
  %v69 = vunpack.c.l.b16 %v26
  %v70 = vunpack.c.l.b16 %v27
  %v71 = vunpack.c.l.b16 %v28
  %v72 = vunpack.c.l.b16 %v29
  %v73 = vunpack.c.l.b16 %v30
  %v74 = vpack.c.b16 %v59, %v58
  %v75 = vpack.c.b16 %v61, %v60
  %v76 = vpack.c.b16 %v63, %v62
  %v77 = vpack.c.b16 %v65, %v64
  %v78 = vpack.c.b16 %v67, %v66
  %v79 = vpack.c.b16 %v69, %v68
  %v80 = vpack.c.b16 %v71, %v70
  %v81 = vpack.c.b16 %v73, %v72
  %v86 = vunpack.c.l.b16 %v31
  %v87 = vunpack.c.l.b16 %v32
  %v88 = vunpack.c.l.b16 %v33
  %v89 = vunpack.c.l.b16 %v34
  %v90 = vpack.c.b16 %v87, %v86
  %v91 = vpack.c.b16 %v89, %v88
  %vm94 = vcmask 261120
  %v96 = vsel %vm94, %v74, 0
  %v99 = vsel %vm94, %v75, 0
  %v102 = vsel %vm94, %v76, 0
  %v105 = vsel %vm94, %v77, 0
  %v108 = vsel %vm94, %v78, 0
  %v111 = vsel %vm94, %v79, 0
  %v114 = vsel %vm94, %v80, 0
  %v117 = vsel %vm94, %v81, 0
  %119 = vmatprep.subr.bf16.mxu0 0
  %120 = vmatpush1.bf16.msra.mxu0 %v90
  %121 = vmatprep.subr.bf16.mxu0 0
  %122 = vmatpush1.bf16.msra.mxu0 %v91
  %123 = vmatprep.subr.bf16.mxu0 0
  %124 = vmatpush1.bf16.msra.mxu0 0
  %125 = vmatprep.subr.bf16.mxu0 0
  %126 = vmatpush1.bf16.msra.mxu0 0
  %127 = vmatprep.subr.bf16.mxu0 0
  %128 = vmatpush1.bf16.msra.mxu0 0
  %129 = vmatprep.subr.bf16.mxu0 0
  %130 = vmatpush1.bf16.msra.mxu0 0
  %131 = vmatprep.subr.bf16.mxu0 0
  %132 = vmatpush1.bf16.msra.mxu0 0
  %133 = vmatprep.subr.bf16.mxu0 0
  %134 = vmatpush1.bf16.msra.mxu0 0
  %135 = vmatprep.subr.bf16.mxu0 0
  %136 = vmatpush1.bf16.msra.mxu0 0
  %137 = vmatprep.subr.bf16.mxu0 0
  %138 = vmatpush1.bf16.msra.mxu0 0
  %139 = vmatprep.subr.bf16.mxu0 0
  %140 = vmatpush1.bf16.msra.mxu0 0
  %141 = vmatprep.subr.bf16.mxu0 0
  %142 = vmatpush1.bf16.msra.mxu0 0
  %143 = vmatprep.subr.bf16.mxu0 0
  %144 = vmatpush1.bf16.msra.mxu0 0
  %145 = vmatprep.subr.bf16.mxu0 0
  %146 = vmatpush1.bf16.msra.mxu0 0
  %147 = vmatprep.subr.bf16.mxu0 0
  %148 = vmatpush1.bf16.msra.mxu0 0
  %149 = vmatprep.subr.bf16.mxu0 0
  %150 = vmatpush1.bf16.msra.mxu0 0
  %151 = vmatprep.mubr.bf16.mxu0 0
  %152 = vmatmul.mubr.bf16.gmra.mrb[0].mxu0 %v96
  %v153 = vpop.f32.mrb[0].mxu0
  %v154 = vadd.f32 %v40, %v153
  %v155 = vpop.f32.mrb[0].mxu0
  %v156 = vpop.f32.mrb[0].mxu0
  %v157 = vadd.f32 %v40, %v156
  %v158 = vpop.f32.mrb[0].mxu0
  %159 = vmatprep.mubr.bf16.mxu0 0
  %160 = vmatmul.mubr.bf16.gmra.mrb[0].mxu0 %v99
  %v161 = vpop.f32.mrb[0].mxu0
  %v162 = vadd.f32 %v40, %v161
  %v163 = vpop.f32.mrb[0].mxu0
  %v164 = vpop.f32.mrb[0].mxu0
  %v165 = vadd.f32 %v40, %v164
  %v166 = vpop.f32.mrb[0].mxu0
  %167 = vmatprep.mubr.bf16.mxu0 0
  %168 = vmatmul.mubr.bf16.gmra.mrb[0].mxu0 %v102
  %v169 = vpop.f32.mrb[0].mxu0
  %v170 = vadd.f32 %v40, %v169
  %v171 = vpop.f32.mrb[0].mxu0
  %v172 = vpop.f32.mrb[0].mxu0
  %v173 = vadd.f32 %v40, %v172
  %v174 = vpop.f32.mrb[0].mxu0
  %175 = vmatprep.mubr.bf16.mxu0 0
  %176 = vmatmul.mubr.bf16.gmra.mrb[0].mxu0 %v105
  %v177 = vpop.f32.mrb[0].mxu0
  %v178 = vadd.f32 %v40, %v177
  %v179 = vpop.f32.mrb[0].mxu0
  %v180 = vpop.f32.mrb[0].mxu0
  %v181 = vadd.f32 %v40, %v180
  %v182 = vpop.f32.mrb[0].mxu0
  %183 = vmatprep.mubr.bf16.mxu0 0
  %184 = vmatmul.mubr.bf16.gmra.mrb[0].mxu0 %v108
  %v185 = vpop.f32.mrb[0].mxu0
  %v186 = vadd.f32 %v40, %v185
  %v187 = vpop.f32.mrb[0].mxu0
  %v188 = vpop.f32.mrb[0].mxu0
  %v189 = vadd.f32 %v40, %v188
  %v190 = vpop.f32.mrb[0].mxu0
  %191 = vmatprep.mubr.bf16.mxu0 0
  %192 = vmatmul.mubr.bf16.gmra.mrb[0].mxu0 %v111
  %v193 = vpop.f32.mrb[0].mxu0
  %v194 = vadd.f32 %v40, %v193
  %v195 = vpop.f32.mrb[0].mxu0
  %v196 = vpop.f32.mrb[0].mxu0
  %v197 = vadd.f32 %v40, %v196
  %v198 = vpop.f32.mrb[0].mxu0
  %199 = vmatprep.mubr.bf16.mxu0 0
  %200 = vmatmul.mubr.bf16.gmra.mrb[0].mxu0 %v114
  %v201 = vpop.f32.mrb[0].mxu0
  %v202 = vadd.f32 %v40, %v201
  %v203 = vpop.f32.mrb[0].mxu0
  %v204 = vpop.f32.mrb[0].mxu0
  %v205 = vadd.f32 %v40, %v204
  %v206 = vpop.f32.mrb[0].mxu0
  %207 = vmatprep.mubr.bf16.mxu0 0
  %208 = vmatmul.mubr.bf16.gmra.mrb[0].mxu0 %v117
  %v209 = vpop.f32.mrb[0].mxu0
  %v210 = vadd.f32 %v40, %v209
  %v211 = vpop.f32.mrb[0].mxu0
  %v212 = vpop.f32.mrb[0].mxu0
  %v213 = vadd.f32 %v40, %v212
  %v214 = vpop.f32.mrb[0].mxu0
  %215 = vdwg.mxu0
  %v216 = vmax.f32 %v154, 0.0
  %v217 = vmax.f32 %v157, 0.0
  %v218 = vmax.f32 %v162, 0.0
  %v219 = vmax.f32 %v165, 0.0
  %v220 = vmax.f32 %v170, 0.0
  %v221 = vmax.f32 %v173, 0.0
  %v222 = vmax.f32 %v178, 0.0
  %v223 = vmax.f32 %v181, 0.0
  %v224 = vmax.f32 %v186, 0.0
  %v225 = vmax.f32 %v189, 0.0
  %v226 = vmax.f32 %v194, 0.0
  %v227 = vmax.f32 %v197, 0.0
  %v228 = vmax.f32 %v202, 0.0
  %v229 = vmax.f32 %v205, 0.0
  %v230 = vmax.f32 %v210, 0.0
  %v231 = vmax.f32 %v213, 0.0
  %v232 = vmin.f32 %v216, 6.0
  %v233 = vmin.f32 %v217, 6.0
  %v234 = vmin.f32 %v218, 6.0
  %v235 = vmin.f32 %v219, 6.0
  %v236 = vmin.f32 %v220, 6.0
  %v237 = vmin.f32 %v221, 6.0
  %v238 = vmin.f32 %v222, 6.0
  %v239 = vmin.f32 %v223, 6.0
  %v240 = vmin.f32 %v224, 6.0
  %v241 = vmin.f32 %v225, 6.0
  %v242 = vmin.f32 %v226, 6.0
  %v243 = vmin.f32 %v227, 6.0
  %v244 = vmin.f32 %v228, 6.0
  %v245 = vmin.f32 %v229, 6.0
  %v246 = vmin.f32 %v230, 6.0
  %v247 = vmin.f32 %v231, 6.0
  %v248 = vpack.c.bf16 %v233, %v232
  %v249 = vpack.c.bf16 %v235, %v234
  %v250 = vpack.c.bf16 %v237, %v236
  %v251 = vpack.c.bf16 %v239, %v238
  %v252 = vpack.c.bf16 %v241, %v240
  %v253 = vpack.c.bf16 %v243, %v242
  %v254 = vpack.c.bf16 %v245, %v244
  %v255 = vpack.c.bf16 %v247, %v246
  %v264 = vunpack.c.l.b16 %v248
  %v265 = vunpack.c.h.b16 %v248
  %v266 = vunpack.c.l.b16 %v249
  %v267 = vunpack.c.h.b16 %v249
  %v268 = vunpack.c.l.b16 %v250
  %v269 = vunpack.c.h.b16 %v250
  %v270 = vunpack.c.l.b16 %v251
  %v271 = vunpack.c.h.b16 %v251
  %v272 = vunpack.c.l.b16 %v252
  %v273 = vunpack.c.h.b16 %v252
  %v274 = vunpack.c.l.b16 %v253
  %v275 = vunpack.c.h.b16 %v253
  %v276 = vunpack.c.l.b16 %v254
  %v277 = vunpack.c.h.b16 %v254
  %v278 = vunpack.c.l.b16 %v255
  %v279 = vunpack.c.h.b16 %v255
  %v280 = vpack.c.b16 %v264, %v264
  %v281 = vpack.c.b16 %v265, %v265
  %v282 = vpack.c.b16 %v266, %v266
  %v283 = vpack.c.b16 %v267, %v267
  %v284 = vpack.c.b16 %v268, %v268
  %v285 = vpack.c.b16 %v269, %v269
  %v286 = vpack.c.b16 %v270, %v270
  %v287 = vpack.c.b16 %v271, %v271
  %v288 = vpack.c.b16 %v272, %v272
  %v289 = vpack.c.b16 %v273, %v273
  %v290 = vpack.c.b16 %v274, %v274
  %v291 = vpack.c.b16 %v275, %v275
  %v292 = vpack.c.b16 %v276, %v276
  %v293 = vpack.c.b16 %v277, %v277
  %v294 = vpack.c.b16 %v278, %v278
  %v295 = vpack.c.b16 %v279, %v279
  %vm312 = vcmask 257024
  %313 = vst.msk [vmem:[%s3] sm:$0xf] %vm312, %v280
  %314 = vst.msk [vmem:[%s3 + $0x4] sm:$0xf] %vm312, %v281
  %315 = vst.msk [vmem:[%s3 + $0x8] sm:$0xf] %vm312, %v282
  %316 = vst.msk [vmem:[%s3 + $0xc] sm:$0xf] %vm312, %v283
  %317 = vst.msk [vmem:[%s3 + $0x10] sm:$0xf] %vm312, %v284
  %318 = vst.msk [vmem:[%s3 + $0x14] sm:$0xf] %vm312, %v285
  %319 = vst.msk [vmem:[%s3 + $0x18] sm:$0xf] %vm312, %v286
  %320 = vst.msk [vmem:[%s3 + $0x1c] sm:$0xf] %vm312, %v287
  %321 = vst.msk [vmem:[%s3 + $0x20] sm:$0xf] %vm312, %v288
  %322 = vst.msk [vmem:[%s3 + $0x24] sm:$0xf] %vm312, %v289
  %323 = vst.msk [vmem:[%s3 + $0x28] sm:$0xf] %vm312, %v290
  %324 = vst.msk [vmem:[%s3 + $0x2c] sm:$0xf] %vm312, %v291
  %325 = vst.msk [vmem:[%s3 + $0x30] sm:$0xf] %vm312, %v292
  %326 = vst.msk [vmem:[%s3 + $0x34] sm:$0xf] %vm312, %v293
  %327 = vst.msk [vmem:[%s3 + $0x38] sm:$0xf] %vm312, %v294
  %328 = vst.msk [vmem:[%s3 + $0x3c] sm:$0xf] %vm312, %v295
  // Predicated region
  $region14: #{mobilenet_v1_forward.12} parent=0 // pred_check
    _
  $region15: #{mobilenet_v1_forward.12} parent=0 // pred_check_branch
    %330 = sbr.rel (0) target = $region17
  $region16: #{mobilenet_v1_forward.12} parent=0 // pred_region
    _
  $region17: #{mobilenet_v1_forward.12} parent=0 // pred_fallthru
    _
  // Predicated region
  $region18: #{mobilenet_v1_forward.12} parent=0 // pred_check
    _
  $region19: #{mobilenet_v1_forward.12} parent=0 // pred_check_branch
    %332 = sbr.rel (0) target = $region21
  $region20: #{mobilenet_v1_forward.12} parent=0 // pred_region
    _
  $region21: #{mobilenet_v1_forward.12} parent=0 // pred_fallthru
    _

// kernel: mobilenet_v1_forward.14
$region0: #{mobilenet_v1_forward.14}
  #allocation0 [shape = 'u32[]', space=smem, size = 0x4, offset = 0x4, fixed_abs, tag = 'smem constant byte address 0x4 - core index']
  #allocation1 [shape = 'u32[144,128]{1,0:T(1,128)}', space=vmem, size = 0x12000, scoped, tag = 'internal scratch']
  %s0 = inlined_call_operand.vmem [shape: bf16[2,4,5,5,64], index: 0, kind: input, shape index: {}]
  %s1 = inlined_call_operand.vmem [shape: bf16[9,1,1,64], index: 1, kind: input, shape index: {}]
  %s2 = inlined_call_operand.vmem [shape: bf16[1,1,64], index: 2, kind: input, shape index: {}]
  %s3 = inlined_call_operand.vmem [shape: bf16[64,128], index: 3, kind: input, shape index: {}]
  %s4 = inlined_call_operand.vmem [shape: f32[1,128], index: 4, kind: input, shape index: {}]
  %s5 = inlined_call_operand.vmem [shape: bf16[2,16,128], index: 5, kind: output, shape index: {}]
  %s6 = sld [smem:[#allocation0]]
  $region53: #{mobilenet_v1_forward.14} parent=0
    _
  %s8 = ssub.s32 1, %s6
  %s9 = scalar_select 0, %s8, %s6
  loop: start=0, step=1, limit=4
  $region2: #{mobilenet_v1_forward.14} parent=0 // loop_pre_header
    _
  $region3: #{mobilenet_v1_forward.14} parent=0 // loop_header
    %s11 = sphi 0, %s15
    %p12 = scmp.ge.s32.totalorder %s11, 4
    %s21 = sphi 0, %s23
    %s24 = sphi 0, %s21
    %s25 = sphi 0, %s24
    %s41 = sphi 0, %s25
    %s45 = sphi 0, %s45
    %s47 = sphi 0, %s45
    %s48 = sphi 0, %s47
    %s62 = sphi 0, %s48
    %s66 = sphi 0, %s66
    %s68 = sphi 0, %s66
    %s69 = sphi 0, %s68
    %s83 = sphi 0, %s69
    %s87 = sphi 0, %s87
    %s89 = sphi 0, %s87
    %s90 = sphi 0, %s89
    %s104 = sphi 0, %s90
    %s108 = sphi 0, %s108
    %s110 = sphi 0, %s108
    %s111 = sphi 0, %s110
    %s125 = sphi 0, %s111
    %s131 = sphi 0, %s133
    %s134 = sphi 0, %s131
    %s135 = sphi 0, %s134
    %s151 = sphi 0, %s135
  $region4: #{mobilenet_v1_forward.14} parent=0 // loop_header_branch
    %14 = sbr.rel (%p12) target = $region8
  $region5: #{mobilenet_v1_forward.14} parent=0 // loop_body
    %s16 = ssub.s32 %s11, 1
    %s17 = ssub.s32 %s11, 2
    %s18 = sadd.s32 %s11, 1
    %s19 = ssub.s32 %s11, %s18
    %p20 = scmp.eq.s32.totalorder %s19, 0
    %s22 = sadd.s32 %s21, 1
    %s23 = scalar_select %p20, %s21, %s22
    %p26 = pneg %p20
    %p27 = scmp.eq.s32.totalorder %s11, 1
    %p28 = por %p26, %p27
    %p29 = scmp.ne.s32.totalorder %s21, %s24
    %p30 = scmp.eq.s32.totalorder %s11, 0
    %p31 = por %p29, %p30
    %p32 = scmp.ne.s32.totalorder %s21, %s24
    %p33 = scmp.eq.s32.totalorder %s16, 1
    %p34 = por %p32, %p33
    %p35 = scmp.ne.s32.totalorder %s24, %s25
    %p36 = scmp.eq.s32.totalorder %s16, 0
    %p37 = por %p35, %p36
    %p38 = scmp.ne.s32.totalorder %s24, %s25
    %p39 = scmp.eq.s32.totalorder %s17, 1
    %p40 = por %p38, %p39
    %p42 = scmp.ne.s32.totalorder %s25, %s41
    %p43 = scmp.eq.s32.totalorder %s17, 0
    %p44 = por %p42, %p43
    %s46 = sadd.s32 %s45, 1
    %p49 = scmp.eq.s32.totalorder %s11, 1
    %p50 = scmp.ne.s32.totalorder %s45, %s47
    %p51 = scmp.eq.s32.totalorder %s11, 0
    %p52 = por %p50, %p51
    %p53 = scmp.ne.s32.totalorder %s45, %s47
    %p54 = scmp.eq.s32.totalorder %s16, 1
    %p55 = por %p53, %p54
    %p56 = scmp.ne.s32.totalorder %s47, %s48
    %p57 = scmp.eq.s32.totalorder %s16, 0
    %p58 = por %p56, %p57
    %p59 = scmp.ne.s32.totalorder %s47, %s48
    %p60 = scmp.eq.s32.totalorder %s17, 1
    %p61 = por %p59, %p60
    %p63 = scmp.ne.s32.totalorder %s48, %s62
    %p64 = scmp.eq.s32.totalorder %s17, 0
    %p65 = por %p63, %p64
    %s67 = sadd.s32 %s66, 1
    %p70 = scmp.eq.s32.totalorder %s11, 1
    %p71 = scmp.ne.s32.totalorder %s66, %s68
    %p72 = scmp.eq.s32.totalorder %s11, 0
    %p73 = por %p71, %p72
    %p74 = scmp.ne.s32.totalorder %s66, %s68
    %p75 = scmp.eq.s32.totalorder %s16, 1
    %p76 = por %p74, %p75
    %p77 = scmp.ne.s32.totalorder %s68, %s69
    %p78 = scmp.eq.s32.totalorder %s16, 0
    %p79 = por %p77, %p78
    %p80 = scmp.ne.s32.totalorder %s68, %s69
    %p81 = scmp.eq.s32.totalorder %s17, 1
    %p82 = por %p80, %p81
    %p84 = scmp.ne.s32.totalorder %s69, %s83
    %p85 = scmp.eq.s32.totalorder %s17, 0
    %p86 = por %p84, %p85
    %s88 = sadd.s32 %s87, 1
    %p91 = scmp.eq.s32.totalorder %s11, 1
    %p92 = scmp.ne.s32.totalorder %s87, %s89
    %p93 = scmp.eq.s32.totalorder %s11, 0
    %p94 = por %p92, %p93
    %p95 = scmp.ne.s32.totalorder %s87, %s89
    %p96 = scmp.eq.s32.totalorder %s16, 1
    %p97 = por %p95, %p96
    %p98 = scmp.ne.s32.totalorder %s89, %s90
    %p99 = scmp.eq.s32.totalorder %s16, 0
    %p100 = por %p98, %p99
    %p101 = scmp.ne.s32.totalorder %s89, %s90
    %p102 = scmp.eq.s32.totalorder %s17, 1
    %p103 = por %p101, %p102
    %p105 = scmp.ne.s32.totalorder %s90, %s104
    %p106 = scmp.eq.s32.totalorder %s17, 0
    %p107 = por %p105, %p106
    %s109 = sadd.s32 %s108, 1
    %p112 = scmp.eq.s32.totalorder %s11, 1
    %p113 = scmp.ne.s32.totalorder %s108, %s110
    %p114 = scmp.eq.s32.totalorder %s11, 0
    %p115 = por %p113, %p114
    %p116 = scmp.ne.s32.totalorder %s108, %s110
    %p117 = scmp.eq.s32.totalorder %s16, 1
    %p118 = por %p116, %p117
    %p119 = scmp.ne.s32.totalorder %s110, %s111
    %p120 = scmp.eq.s32.totalorder %s16, 0
    %p121 = por %p119, %p120
    %p122 = scmp.ne.s32.totalorder %s110, %s111
    %p123 = scmp.eq.s32.totalorder %s17, 1
    %p124 = por %p122, %p123
    %p126 = scmp.ne.s32.totalorder %s111, %s125
    %p127 = scmp.eq.s32.totalorder %s17, 0
    %p128 = por %p126, %p127
    %s129 = ssub.s32 %s11, %s18
    %p130 = scmp.eq.s32.totalorder %s129, 0
    %s132 = sadd.s32 %s131, 1
    %s133 = scalar_select %p130, %s131, %s132
    %p136 = pneg %p130
    %p137 = scmp.eq.s32.totalorder %s11, 1
    %p138 = por %p136, %p137
    %p139 = scmp.ne.s32.totalorder %s131, %s134
    %p140 = scmp.eq.s32.totalorder %s11, 0
    %p141 = por %p139, %p140
    %p142 = scmp.ne.s32.totalorder %s131, %s134
    %p143 = scmp.eq.s32.totalorder %s16, 1
    %p144 = por %p142, %p143
    %p145 = scmp.ne.s32.totalorder %s134, %s135
    %p146 = scmp.eq.s32.totalorder %s16, 0
    %p147 = por %p145, %p146
    %p148 = scmp.ne.s32.totalorder %s134, %s135
    %p149 = scmp.eq.s32.totalorder %s17, 1
    %p150 = por %p148, %p149
    %p152 = scmp.ne.s32.totalorder %s135, %s151
    %p153 = scmp.eq.s32.totalorder %s17, 0
    %p154 = por %p152, %p153
    %p155 = scmp.le.s32.totalorder 1, %s11
    %p156 = scmp.lt.s32.totalorder %s11, 3
    %p157 = pnand %p155, %p156
    %p158 = pneg %p157
    // Predicated region
    $region9: #{mobilenet_v1_forward.14} parent=5 // pred_check
      _
    $region10: #{mobilenet_v1_forward.14} parent=5 // pred_check_branch
      %160 = sbr.rel (%p157) target = $region12
    $region11: #{mobilenet_v1_forward.14} parent=5 // pred_region
      %s161 = ssub.s32 %s11, 1
      // Predicated region
      $region13: #{mobilenet_v1_forward.14} parent=11 // pred_check
        %p162 = pneg %p58
      $region14: #{mobilenet_v1_forward.14} parent=11 // pred_check_branch
        %164 = sbr.rel (%p162) target = $region16
      $region15: #{mobilenet_v1_forward.14} parent=11 // pred_region
        _
      $region16: #{mobilenet_v1_forward.14} parent=11 // pred_fallthru
        _
      // Predicated region
      $region17: #{mobilenet_v1_forward.14} parent=11 // pred_check
        %p165 = pneg %p79
      $region18: #{mobilenet_v1_forward.14} parent=11 // pred_check_branch
        %167 = sbr.rel (%p165) target = $region20
      $region19: #{mobilenet_v1_forward.14} parent=11 // pred_region
        _
      $region20: #{mobilenet_v1_forward.14} parent=11 // pred_fallthru
        _
      // Predicated region
      $region21: #{mobilenet_v1_forward.14} parent=11 // pred_check
        %p168 = pneg %p100
      $region22: #{mobilenet_v1_forward.14} parent=11 // pred_check_branch
        %170 = sbr.rel (%p168) target = $region24
      $region23: #{mobilenet_v1_forward.14} parent=11 // pred_region
        _
      $region24: #{mobilenet_v1_forward.14} parent=11 // pred_fallthru
        _
      // Predicated region
      $region25: #{mobilenet_v1_forward.14} parent=11 // pred_check
        %p171 = pneg %p121
      $region26: #{mobilenet_v1_forward.14} parent=11 // pred_check_branch
        %173 = sbr.rel (%p171) target = $region28
      $region27: #{mobilenet_v1_forward.14} parent=11 // pred_region
        _
      $region28: #{mobilenet_v1_forward.14} parent=11 // pred_fallthru
        _
    $region12: #{mobilenet_v1_forward.14} parent=5 // pred_fallthru
      _
    %p174 = scmp.lt.s32.totalorder %s11, 2
    // Predicated region
    $region29: #{mobilenet_v1_forward.14} parent=5 // pred_check
      %p175 = pneg %p174
    $region30: #{mobilenet_v1_forward.14} parent=5 // pred_check_branch
      %177 = sbr.rel (%p175) target = $region32
    $region31: #{mobilenet_v1_forward.14} parent=5 // pred_region
      // Predicated region
      $region33: #{mobilenet_v1_forward.14} parent=31 // pred_check
        %p178 = pneg %p31
      $region34: #{mobilenet_v1_forward.14} parent=31 // pred_check_branch
        %180 = sbr.rel (%p178) target = $region36
      $region35: #{mobilenet_v1_forward.14} parent=31 // pred_region
        %p181 = scmp.lt.s32.totalorder %s11, 1
        %s182 = scalar_select %p181, %s11, 1
        %s183 = smul.addr %s182, 20
        %s184 = smul.addr %s183, 4
        %s185 = scalar_lea.vmem %s0, %s184
      $region36: #{mobilenet_v1_forward.14} parent=31 // pred_fallthru
        _
    $region32: #{mobilenet_v1_forward.14} parent=5 // pred_fallthru
      _
    %p186 = scmp.le.s32.totalorder 1, %s11
    %p187 = scmp.lt.s32.totalorder %s11, 3
    %p188 = pnand %p186, %p187
    %p189 = pneg %p188
    // Predicated region
    $region37: #{mobilenet_v1_forward.14} parent=5 // pred_check
      _
    $region38: #{mobilenet_v1_forward.14} parent=5 // pred_check_branch
      %191 = sbr.rel (%p188) target = $region40
    $region39: #{mobilenet_v1_forward.14} parent=5 // pred_region
      %s192 = ssub.s32 %s11, 1
      %p193 = scmp.lt.s32.totalorder %s16, 1
      %s194 = scalar_select %p193, %s16, 1
      %s195 = smul.addr %s194, 20
      %s196 = smul.addr %s195, 4
      %s197 = scalar_lea.vmem %s0, %s196
      %p198 = pneg %p37
      %p199 = pneg %p34
      %p200 = pneg %p58
      %p201 = pneg %p55
      %p202 = pneg %p79
      %p203 = pneg %p76
      %p204 = pneg %p100
      %p205 = pneg %p97
      %p206 = pneg %p121
      %p207 = pneg %p118
      %p208 = pneg %p147
      %p209 = pneg %p144
      %p210 = scmp.lt.s32.totalorder %s16, 1
      %s211 = scalar_select %p210, %s16, 1
      %s212 = smul.addr %s211, 2
      %s213 = smul.addr %s212, 4
      %s214 = scalar_lea.vmem %s5, %s213
      %p215 = scmp.lt.s32.totalorder %s16, 1
      %s216 = scalar_select %p215, %s16, 1
      %s217 = smul.addr %s216, 20
      %s218 = smul.addr %s217, 4
      %s219 = scalar_lea.vmem %s0, %s218
      %p220 = scmp.lt.s32.totalorder %s16, 1
      %s221 = scalar_select %p220, %s16, 1
      %s222 = smul.addr %s221, 2
      %s223 = smul.addr %s222, 4
      %s224 = scalar_lea.vmem %s5, %s223
      %v227 = vld [vmem:[%s219] sm:$0x7]
      %v228 = vld [vmem:[%s219 + $0x4] sm:$0x7]
      %v229 = vld [vmem:[%s219 + $0x8] sm:$0x7]
      %v230 = vld [vmem:[%s219 + $0xc] sm:$0x7]
      %v231 = vld [vmem:[%s219 + $0x10] sm:$0x7]
      %v232 = vld [vmem:[%s219 + $0x14] sm:$0x7]
      %v233 = vld [vmem:[%s219 + $0x18] sm:$0x7]
      %v234 = vld [vmem:[%s219 + $0x1c] sm:$0x7]
      %v235 = vld [vmem:[%s219 + $0x20] sm:$0x7]
      %v236 = vld [vmem:[%s219 + $0x24] sm:$0x7]
      %v237 = vld [vmem:[%s219 + $0x28] sm:$0x7]
      %v238 = vld [vmem:[%s219 + $0x2c] sm:$0x7]
      %v239 = vld [vmem:[%s219 + $0x30] sm:$0x7]
      %v240 = vld [vmem:[%s219 + $0x34] sm:$0x7]
      %v241 = vld [vmem:[%s219 + $0x3c] sm:$0x7]
      %v242 = vld [vmem:[%s219 + $0x40] sm:$0x7]
      %v243 = vld [vmem:[%s219 + $0x44] sm:$0x7]
      %v244 = vld [vmem:[%s219 + $0x48] sm:$0x7]
      %v245 = vld [vmem:[%s1] sm:$0x1]
      %v247 = vpack.i.b16 %v245, %v245
      %v249 = vlaneseq
      %v250 = vshrl.u32 %v249, 7
      %v251 = vsub.s32 0, %v250
      %v252 = vrot.slane %v247, %v251
      %v253 = vmul.bf16 %v227, %v252
      %v254 = vmul.bf16 %v228, %v252
      %v255 = vmul.bf16 %v229, %v252
      %v256 = vmul.bf16 %v230, %v252
      %s257 = scalar_lea.vmem %s1, 1
      %v258 = vld [vmem:[%s257] sm:$0x1]
      %v260 = vpack.i.b16 %v258, %v258
      %v262 = vlaneseq
      %v263 = vshrl.u32 %v262, 7
      %v264 = vsub.s32 0, %v263
      %v265 = vrot.slane %v260, %v264
      %v266 = vmul.bf16 %v232, %v265
      %v267 = vmul.bf16 %v233, %v265
      %v268 = vmul.bf16 %v234, %v265
      %v269 = vmul.bf16 %v235, %v265
      %v270 = vadd.bf16 %v253, %v266
      %v271 = vadd.bf16 %v254, %v267
      %v272 = vadd.bf16 %v255, %v268
      %v273 = vadd.bf16 %v256, %v269
      %s274 = scalar_lea.vmem %s1, 2
      %v275 = vld [vmem:[%s274] sm:$0x1]
      %v277 = vpack.i.b16 %v275, %v275
      %v279 = vlaneseq
      %v280 = vshrl.u32 %v279, 7
      %v281 = vsub.s32 0, %v280
      %v282 = vrot.slane %v277, %v281
      %v283 = vmul.bf16 %v227, %v282
      %v284 = vmul.bf16 %v228, %v282
      %v285 = vmul.bf16 %v229, %v282
      %v286 = vmul.bf16 %v230, %v282
      %v288 = vshrl.u32 %v283, 16
      %v290 = vrot.slane %v288, 4
      %v291 = vshll.u32 %v283, 16
      %v293 = vrot.slane %v291, 5
      %v294 = vor.u32 %v290, %v293
      %v295 = vrot.slane %v294, 4
      %v297 = vshrl.u32 %v284, 16
      %v299 = vrot.slane %v297, 4
      %v300 = vshll.u32 %v284, 16
      %v302 = vrot.slane %v300, 5
      %v303 = vor.u32 %v299, %v302
      %v304 = vrot.slane %v303, 4
      %v306 = vshrl.u32 %v285, 16
      %v308 = vrot.slane %v306, 4
      %v309 = vshll.u32 %v285, 16
      %v311 = vrot.slane %v309, 5
      %v312 = vor.u32 %v308, %v311
      %v313 = vrot.slane %v312, 4
      %v315 = vshrl.u32 %v286, 16
      %v317 = vrot.slane %v315, 4
      %v318 = vshll.u32 %v286, 16
      %v320 = vrot.slane %v318, 5
      %v321 = vor.u32 %v317, %v320
      %v322 = vrot.slane %v321, 4
      %v327 = vadd.bf16 %v270, %v295
      %v328 = vadd.bf16 %v271, %v304
      %v329 = vadd.bf16 %v272, %v313
      %v330 = vadd.bf16 %v273, %v322
      %s331 = scalar_lea.vmem %s1, 3
      %v332 = vld [vmem:[%s331] sm:$0x1]
      %v334 = vpack.i.b16 %v332, %v332
      %v336 = vlaneseq
      %v337 = vshrl.u32 %v336, 7
      %v338 = vsub.s32 0, %v337
      %v339 = vrot.slane %v334, %v338
      %v340 = vmul.bf16 %v237, %v339
      %v341 = vmul.bf16 %v238, %v339
      %v342 = vmul.bf16 %v239, %v339
      %v343 = vmul.bf16 %v240, %v339
      %v344 = vadd.bf16 %v327, %v340
      %v345 = vadd.bf16 %v328, %v341
      %v346 = vadd.bf16 %v329, %v342
      %v347 = vadd.bf16 %v330, %v343
      %s348 = scalar_lea.vmem %s1, 4
      %v349 = vld [vmem:[%s348] sm:$0x1]
      %v351 = vpack.i.b16 %v349, %v349
      %v353 = vlaneseq
      %v354 = vshrl.u32 %v353, 7
      %v355 = vsub.s32 0, %v354
      %v356 = vrot.slane %v351, %v355
      %v357 = vmul.bf16 %v241, %v356
      %v358 = vmul.bf16 %v242, %v356
      %v359 = vmul.bf16 %v243, %v356
      %v360 = vmul.bf16 %v244, %v356
      %v361 = vadd.bf16 %v344, %v357
      %v362 = vadd.bf16 %v345, %v358
      %v363 = vadd.bf16 %v346, %v359
      %v364 = vadd.bf16 %v347, %v360
      %s365 = scalar_lea.vmem %s1, 5
      %v366 = vld [vmem:[%s365] sm:$0x1]
      %v368 = vpack.i.b16 %v366, %v366
      %v370 = vlaneseq
      %v371 = vshrl.u32 %v370, 7
      %v372 = vsub.s32 0, %v371
      %v373 = vrot.slane %v368, %v372
      %v374 = vmul.bf16 %v237, %v373
      %v375 = vmul.bf16 %v238, %v373
      %v376 = vmul.bf16 %v239, %v373
      %v377 = vmul.bf16 %v240, %v373
      %v379 = vshrl.u32 %v374, 16
      %v381 = vrot.slane %v379, 4
      %v382 = vshll.u32 %v374, 16
      %v384 = vrot.slane %v382, 5
      %v385 = vor.u32 %v381, %v384
      %v386 = vrot.slane %v385, 4
      %v388 = vshrl.u32 %v375, 16
      %v390 = vrot.slane %v388, 4
      %v391 = vshll.u32 %v375, 16
      %v393 = vrot.slane %v391, 5
      %v394 = vor.u32 %v390, %v393
      %v395 = vrot.slane %v394, 4
      %v397 = vshrl.u32 %v376, 16
      %v399 = vrot.slane %v397, 4
      %v400 = vshll.u32 %v376, 16
      %v402 = vrot.slane %v400, 5
      %v403 = vor.u32 %v399, %v402
      %v404 = vrot.slane %v403, 4
      %v406 = vshrl.u32 %v377, 16
      %v408 = vrot.slane %v406, 4
      %v409 = vshll.u32 %v377, 16
      %v411 = vrot.slane %v409, 5
      %v412 = vor.u32 %v408, %v411
      %v413 = vrot.slane %v412, 4
      %v418 = vadd.bf16 %v361, %v386
      %v419 = vadd.bf16 %v362, %v395
      %v420 = vadd.bf16 %v363, %v404
      %v421 = vadd.bf16 %v364, %v413
      %s422 = scalar_lea.vmem %s1, 6
      %v423 = vld [vmem:[%s422] sm:$0x1]
      %v425 = vpack.i.b16 %v423, %v423
      %v427 = vlaneseq
      %v428 = vshrl.u32 %v427, 7
      %v429 = vsub.s32 0, %v428
      %v430 = vrot.slane %v425, %v429
      %v431 = vmul.bf16 %v228, %v430
      %v432 = vmul.bf16 %v229, %v430
      %v433 = vmul.bf16 %v230, %v430
      %v434 = vmul.bf16 %v231, %v430
      %v435 = vadd.bf16 %v418, %v431
      %v436 = vadd.bf16 %v419, %v432
      %v437 = vadd.bf16 %v420, %v433
      %v438 = vadd.bf16 %v421, %v434
      %s439 = scalar_lea.vmem %s1, 7
      %v440 = vld [vmem:[%s439] sm:$0x1]
      %v442 = vpack.i.b16 %v440, %v440
      %v444 = vlaneseq
      %v445 = vshrl.u32 %v444, 7
      %v446 = vsub.s32 0, %v445
      %v447 = vrot.slane %v442, %v446
      %v448 = vmul.bf16 %v233, %v447
      %v449 = vmul.bf16 %v234, %v447
      %v450 = vmul.bf16 %v235, %v447
      %v451 = vmul.bf16 %v236, %v447
      %v452 = vadd.bf16 %v435, %v448
      %v453 = vadd.bf16 %v436, %v449
      %v454 = vadd.bf16 %v437, %v450
      %v455 = vadd.bf16 %v438, %v451
      %s456 = scalar_lea.vmem %s1, 8
      %v457 = vld [vmem:[%s456] sm:$0x1]
      %v459 = vpack.i.b16 %v457, %v457
      %v461 = vlaneseq
      %v462 = vshrl.u32 %v461, 7
      %v463 = vsub.s32 0, %v462
      %v464 = vrot.slane %v459, %v463
      %v465 = vmul.bf16 %v228, %v464
      %v466 = vmul.bf16 %v229, %v464
      %v467 = vmul.bf16 %v230, %v464
      %v468 = vmul.bf16 %v231, %v464
      %v470 = vshrl.u32 %v465, 16
      %v472 = vrot.slane %v470, 4
      %v473 = vshll.u32 %v465, 16
      %v475 = vrot.slane %v473, 5
      %v476 = vor.u32 %v472, %v475
      %v477 = vrot.slane %v476, 4
      %v479 = vshrl.u32 %v466, 16
      %v481 = vrot.slane %v479, 4
      %v482 = vshll.u32 %v466, 16
      %v484 = vrot.slane %v482, 5
      %v485 = vor.u32 %v481, %v484
      %v486 = vrot.slane %v485, 4
      %v488 = vshrl.u32 %v467, 16
      %v490 = vrot.slane %v488, 4
      %v491 = vshll.u32 %v467, 16
      %v493 = vrot.slane %v491, 5
      %v494 = vor.u32 %v490, %v493
      %v495 = vrot.slane %v494, 4
      %v497 = vshrl.u32 %v468, 16
      %v499 = vrot.slane %v497, 4
      %v500 = vshll.u32 %v468, 16
      %v502 = vrot.slane %v500, 5
      %v503 = vor.u32 %v499, %v502
      %v504 = vrot.slane %v503, 4
      %v509 = vadd.bf16 %v452, %v477
      %v510 = vadd.bf16 %v453, %v486
      %v511 = vadd.bf16 %v454, %v495
      %v512 = vadd.bf16 %v455, %v504
      %v513 = vld [vmem:[%s2] sm:$0x1]
      %v515 = vpack.i.b16 %v513, %v513
      %v517 = vlaneseq
      %v518 = vshrl.u32 %v517, 7
      %v519 = vsub.s32 0, %v518
      %v520 = vrot.slane %v515, %v519
      %v521 = vadd.bf16 %v509, %v520
      %v522 = vadd.bf16 %v510, %v520
      %v523 = vadd.bf16 %v511, %v520
      %v524 = vadd.bf16 %v512, %v520
      %v525 = vmax.bf16 %v521, 0
      %v526 = vmax.bf16 %v522, 0
      %v527 = vmax.bf16 %v523, 0
      %v528 = vmax.bf16 %v524, 0
      %v529 = vmin.bf16 %v525, 1086341312
      %v530 = vmin.bf16 %v526, 1086341312
      %v531 = vmin.bf16 %v527, 1086341312
      %v532 = vmin.bf16 %v528, 1086341312
      %v533 = vld [vmem:[%s3] sm:$0xf]
      %v534 = vld [vmem:[%s3 + $0x4] sm:$0xf]
      %v535 = vld [vmem:[%s3 + $0x8] sm:$0xf]
      %v536 = vld [vmem:[%s3 + $0xc] sm:$0xf]
      %v537 = vld [vmem:[%s3 + $0x10] sm:$0xf]
      %v538 = vld [vmem:[%s3 + $0x14] sm:$0xf]
      %v539 = vld [vmem:[%s3 + $0x18] sm:$0xf]
      %v540 = vld [vmem:[%s3 + $0x1c] sm:$0xf]
      %v541 = vld [vmem:[%s4] sm:$0x1]
      %v543 = vlaneseq
      %v544 = vshrl.u32 %v543, 7
      %v545 = vsub.s32 0, %v544
      %v546 = vrot.slane %v541, %v545
      %v552 = vcombine.low %v529, %v530
      %v553 = vcombine.low %v531, %v532
      %v555 = vunpack.c.l.s4 1983009808
      %v556 = vunpack.c.0.s8 %v555
      %v557 = vlaneseq
      %v558 = vshrl.u32 %v557, 7
      %v559 = vsub.s32 %v556, %v558
      %v560 = vrot.slane %v552, %v559
      %v562 = vunpack.c.l.s4 1983009808
      %v563 = vunpack.c.0.s8 %v562
      %v564 = vlaneseq
      %v565 = vshrl.u32 %v564, 7
      %v566 = vsub.s32 %v563, %v565
      %v567 = vrot.slane %v553, %v566
      %v568 = vcombine.low %v560, %v567
      %v577 = vunpack.c.l.b16 %v533
      %v578 = vunpack.c.l.b16 %v534
      %v579 = vunpack.c.l.b16 %v535
      %v580 = vunpack.c.l.b16 %v536
      %v581 = vunpack.c.l.b16 %v537
      %v582 = vunpack.c.l.b16 %v538
      %v583 = vunpack.c.l.b16 %v539
      %v584 = vunpack.c.l.b16 %v540
      %v585 = vpack.c.b16 %v578, %v577
      %v586 = vpack.c.b16 %v580, %v579
      %v587 = vpack.c.b16 %v582, %v581
      %v588 = vpack.c.b16 %v584, %v583
      %vm593 = vcmask 523264
      %v595 = vsel %vm593, %v568, 0
      %597 = vmatprep.subr.bf16.mxu0 0
      %598 = vmatpush1.bf16.msra.mxu0 %v585
      %599 = vmatprep.subr.bf16.mxu0 0
      %600 = vmatpush1.bf16.msra.mxu0 %v586
      %601 = vmatprep.subr.bf16.mxu0 0
      %602 = vmatpush1.bf16.msra.mxu0 %v587
      %603 = vmatprep.subr.bf16.mxu0 0
      %604 = vmatpush1.bf16.msra.mxu0 %v588
      %605 = vmatprep.subr.bf16.mxu0 0
      %606 = vmatpush1.bf16.msra.mxu0 0
      %607 = vmatprep.subr.bf16.mxu0 0
      %608 = vmatpush1.bf16.msra.mxu0 0
      %609 = vmatprep.subr.bf16.mxu0 0
      %610 = vmatpush1.bf16.msra.mxu0 0
      %611 = vmatprep.subr.bf16.mxu0 0
      %612 = vmatpush1.bf16.msra.mxu0 0
      %613 = vmatprep.subr.bf16.mxu0 0
      %614 = vmatpush1.bf16.msra.mxu0 0
      %615 = vmatprep.subr.bf16.mxu0 0
      %616 = vmatpush1.bf16.msra.mxu0 0
      %617 = vmatprep.subr.bf16.mxu0 0
      %618 = vmatpush1.bf16.msra.mxu0 0
      %619 = vmatprep.subr.bf16.mxu0 0
      %620 = vmatpush1.bf16.msra.mxu0 0
      %621 = vmatprep.subr.bf16.mxu0 0
      %622 = vmatpush1.bf16.msra.mxu0 0
      %623 = vmatprep.subr.bf16.mxu0 0
      %624 = vmatpush1.bf16.msra.mxu0 0
      %625 = vmatprep.subr.bf16.mxu0 0
      %626 = vmatpush1.bf16.msra.mxu0 0
      %627 = vmatprep.subr.bf16.mxu0 0
      %628 = vmatpush1.bf16.msra.mxu0 0
      %629 = vmatprep.mubr.bf16.mxu0 0
      %630 = vmatmul.mubr.bf16.gmra.mrb[0].mxu0 %v595
      %v631 = vpop.f32.mrb[0].mxu0
      %v632 = vadd.f32 %v546, %v631
      %v633 = vpop.f32.mrb[0].mxu0
      %v634 = vpop.f32.mrb[0].mxu0
      %v635 = vadd.f32 %v546, %v634
      %v636 = vpop.f32.mrb[0].mxu0
      %637 = vdwg.mxu0
      %v638 = vmax.f32 %v632, 0.0
      %v639 = vmax.f32 %v635, 0.0
      %v640 = vmin.f32 %v638, 6.0
      %v641 = vmin.f32 %v639, 6.0
      %v642 = vpack.c.bf16 %v641, %v640
      %v644 = vunpack.c.l.b16 %v642
      %v645 = vunpack.c.h.b16 %v642
      %v646 = vpack.c.b16 %v644, %v644
      %v647 = vpack.c.b16 %v645, %v645
      %650 = vst [vmem:[%s224] sm:$0xf] %v646
      %651 = vst [vmem:[%s224 + $0x4] sm:$0xf] %v647
      %p652 = scmp.lt.s32.totalorder %s16, 1
      %s653 = scalar_select %p652, %s16, 1
      %s654 = smul.addr %s653, 2
      %s655 = smul.addr %s654, 4
      %s656 = scalar_lea.vmem %s5, %s655
      // Predicated region
      $region41: #{mobilenet_v1_forward.14} parent=39 // pred_check
        %p657 = pneg %p144
      $region42: #{mobilenet_v1_forward.14} parent=39 // pred_check_branch
        %659 = sbr.rel (%p657) target = $region44
      $region43: #{mobilenet_v1_forward.14} parent=39 // pred_region
        _
      $region44: #{mobilenet_v1_forward.14} parent=39 // pred_fallthru
        _
    $region40: #{mobilenet_v1_forward.14} parent=5 // pred_fallthru
      _
    %p660 = scmp.le.s32.totalorder 2, %s11
    // Predicated region
    $region45: #{mobilenet_v1_forward.14} parent=5 // pred_check
      %p661 = pneg %p660
    $region46: #{mobilenet_v1_forward.14} parent=5 // pred_check_branch
      %663 = sbr.rel (%p661) target = $region48
    $region47: #{mobilenet_v1_forward.14} parent=5 // pred_region
      %s664 = ssub.s32 %s11, 2
      // Predicated region
      $region49: #{mobilenet_v1_forward.14} parent=47 // pred_check
        %p665 = pneg %p150
      $region50: #{mobilenet_v1_forward.14} parent=47 // pred_check_branch
        %667 = sbr.rel (%p665) target = $region52
      $region51: #{mobilenet_v1_forward.14} parent=47 // pred_region
        %p668 = scmp.lt.s32.totalorder %s17, 1
        %s669 = scalar_select %p668, %s17, 1
        %s670 = smul.addr %s669, 2
        %s671 = smul.addr %s670, 4
        %s672 = scalar_lea.vmem %s5, %s671
      $region52: #{mobilenet_v1_forward.14} parent=47 // pred_fallthru
        _
    $region48: #{mobilenet_v1_forward.14} parent=5 // pred_fallthru
      _
  $region6: #{mobilenet_v1_forward.14} parent=0 // loop_footer
    %s15 = sadd.s32 1, %s11
  $region7: #{mobilenet_v1_forward.14} parent=0 // loop_footer_branch
    %10 = sbr.rel target = $region3
  $region8: #{mobilenet_v1_forward.14} parent=0 // loop_exit
    _

// kernel: mobilenet_v1_forward.13
$region0: #{mobilenet_v1_forward.13}
  #allocation0 [shape = 'u32[]', space=smem, size = 0x4, offset = 0x4, fixed_abs, tag = 'smem constant byte address 0x4 - core index']
  #allocation1 [shape = 'u32[144,128]{1,0:T(1,128)}', space=vmem, size = 0x12000, scoped, tag = 'internal scratch']
  %s0 = inlined_call_operand.vmem [shape: bf16[2,10,10,32], index: 0, kind: input, shape index: {}]
  %s1 = inlined_call_operand.vmem [shape: bf16[9,1,1,32], index: 1, kind: input, shape index: {}]
  %s2 = inlined_call_operand.vmem [shape: bf16[1,1,32], index: 2, kind: input, shape index: {}]
  %s3 = inlined_call_operand.vmem [shape: bf16[32,64], index: 3, kind: input, shape index: {}]
  %s4 = inlined_call_operand.vmem [shape: f32[1,64], index: 4, kind: input, shape index: {}]
  %s5 = inlined_call_operand.vmem [shape: bf16[2,64,64], index: 5, kind: output, shape index: {}]
  %s6 = sld [smem:[#allocation0]]
  $region53: #{mobilenet_v1_forward.13} parent=0
    _
  %s8 = ssub.s32 1, %s6
  %s9 = scalar_select 0, %s8, %s6
  loop: start=0, step=1, limit=4
  $region2: #{mobilenet_v1_forward.13} parent=0 // loop_pre_header
    _
  $region3: #{mobilenet_v1_forward.13} parent=0 // loop_header
    %s11 = sphi 0, %s15
    %p12 = scmp.ge.s32.totalorder %s11, 4
    %s21 = sphi 0, %s23
    %s24 = sphi 0, %s21
    %s25 = sphi 0, %s24
    %s41 = sphi 0, %s25
    %s45 = sphi 0, %s45
    %s47 = sphi 0, %s45
    %s48 = sphi 0, %s47
    %s62 = sphi 0, %s48
    %s66 = sphi 0, %s66
    %s68 = sphi 0, %s66
    %s69 = sphi 0, %s68
    %s83 = sphi 0, %s69
    %s87 = sphi 0, %s87
    %s89 = sphi 0, %s87
    %s90 = sphi 0, %s89
    %s104 = sphi 0, %s90
    %s108 = sphi 0, %s108
    %s110 = sphi 0, %s108
    %s111 = sphi 0, %s110
    %s125 = sphi 0, %s111
    %s131 = sphi 0, %s133
    %s134 = sphi 0, %s131
    %s135 = sphi 0, %s134
    %s151 = sphi 0, %s135
  $region4: #{mobilenet_v1_forward.13} parent=0 // loop_header_branch
    %14 = sbr.rel (%p12) target = $region8
  $region5: #{mobilenet_v1_forward.13} parent=0 // loop_body
    %s16 = ssub.s32 %s11, 1
    %s17 = ssub.s32 %s11, 2
    %s18 = sadd.s32 %s11, 1
    %s19 = ssub.s32 %s11, %s18
    %p20 = scmp.eq.s32.totalorder %s19, 0
    %s22 = sadd.s32 %s21, 1
    %s23 = scalar_select %p20, %s21, %s22
    %p26 = pneg %p20
    %p27 = scmp.eq.s32.totalorder %s11, 1
    %p28 = por %p26, %p27
    %p29 = scmp.ne.s32.totalorder %s21, %s24
    %p30 = scmp.eq.s32.totalorder %s11, 0
    %p31 = por %p29, %p30
    %p32 = scmp.ne.s32.totalorder %s21, %s24
    %p33 = scmp.eq.s32.totalorder %s16, 1
    %p34 = por %p32, %p33
    %p35 = scmp.ne.s32.totalorder %s24, %s25
    %p36 = scmp.eq.s32.totalorder %s16, 0
    %p37 = por %p35, %p36
    %p38 = scmp.ne.s32.totalorder %s24, %s25
    %p39 = scmp.eq.s32.totalorder %s17, 1
    %p40 = por %p38, %p39
    %p42 = scmp.ne.s32.totalorder %s25, %s41
    %p43 = scmp.eq.s32.totalorder %s17, 0
    %p44 = por %p42, %p43
    %s46 = sadd.s32 %s45, 1
    %p49 = scmp.eq.s32.totalorder %s11, 1
    %p50 = scmp.ne.s32.totalorder %s45, %s47
    %p51 = scmp.eq.s32.totalorder %s11, 0
    %p52 = por %p50, %p51
    %p53 = scmp.ne.s32.totalorder %s45, %s47
    %p54 = scmp.eq.s32.totalorder %s16, 1
    %p55 = por %p53, %p54
    %p56 = scmp.ne.s32.totalorder %s47, %s48
    %p57 = scmp.eq.s32.totalorder %s16, 0
    %p58 = por %p56, %p57
    %p59 = scmp.ne.s32.totalorder %s47, %s48
    %p60 = scmp.eq.s32.totalorder %s17, 1
    %p61 = por %p59, %p60
    %p63 = scmp.ne.s32.totalorder %s48, %s62
    %p64 = scmp.eq.s32.totalorder %s17, 0
    %p65 = por %p63, %p64
    %s67 = sadd.s32 %s66, 1
    %p70 = scmp.eq.s32.totalorder %s11, 1
    %p71 = scmp.ne.s32.totalorder %s66, %s68
    %p72 = scmp.eq.s32.totalorder %s11, 0
    %p73 = por %p71, %p72
    %p74 = scmp.ne.s32.totalorder %s66, %s68
    %p75 = scmp.eq.s32.totalorder %s16, 1
    %p76 = por %p74, %p75
    %p77 = scmp.ne.s32.totalorder %s68, %s69
    %p78 = scmp.eq.s32.totalorder %s16, 0
    %p79 = por %p77, %p78
    %p80 = scmp.ne.s32.totalorder %s68, %s69
    %p81 = scmp.eq.s32.totalorder %s17, 1
    %p82 = por %p80, %p81
    %p84 = scmp.ne.s32.totalorder %s69, %s83
    %p85 = scmp.eq.s32.totalorder %s17, 0
    %p86 = por %p84, %p85
    %s88 = sadd.s32 %s87, 1
    %p91 = scmp.eq.s32.totalorder %s11, 1
    %p92 = scmp.ne.s32.totalorder %s87, %s89
    %p93 = scmp.eq.s32.totalorder %s11, 0
    %p94 = por %p92, %p93
    %p95 = scmp.ne.s32.totalorder %s87, %s89
    %p96 = scmp.eq.s32.totalorder %s16, 1
    %p97 = por %p95, %p96
    %p98 = scmp.ne.s32.totalorder %s89, %s90
    %p99 = scmp.eq.s32.totalorder %s16, 0
    %p100 = por %p98, %p99
    %p101 = scmp.ne.s32.totalorder %s89, %s90
    %p102 = scmp.eq.s32.totalorder %s17, 1
    %p103 = por %p101, %p102
    %p105 = scmp.ne.s32.totalorder %s90, %s104
    %p106 = scmp.eq.s32.totalorder %s17, 0
    %p107 = por %p105, %p106
    %s109 = sadd.s32 %s108, 1
    %p112 = scmp.eq.s32.totalorder %s11, 1
    %p113 = scmp.ne.s32.totalorder %s108, %s110
    %p114 = scmp.eq.s32.totalorder %s11, 0
    %p115 = por %p113, %p114
    %p116 = scmp.ne.s32.totalorder %s108, %s110
    %p117 = scmp.eq.s32.totalorder %s16, 1
    %p118 = por %p116, %p117
    %p119 = scmp.ne.s32.totalorder %s110, %s111
    %p120 = scmp.eq.s32.totalorder %s16, 0
    %p121 = por %p119, %p120
    %p122 = scmp.ne.s32.totalorder %s110, %s111
    %p123 = scmp.eq.s32.totalorder %s17, 1
    %p124 = por %p122, %p123
    %p126 = scmp.ne.s32.totalorder %s111, %s125
    %p127 = scmp.eq.s32.totalorder %s17, 0
    %p128 = por %p126, %p127
    %s129 = ssub.s32 %s11, %s18
    %p130 = scmp.eq.s32.totalorder %s129, 0
    %s132 = sadd.s32 %s131, 1
    %s133 = scalar_select %p130, %s131, %s132
    %p136 = pneg %p130
    %p137 = scmp.eq.s32.totalorder %s11, 1
    %p138 = por %p136, %p137
    %p139 = scmp.ne.s32.totalorder %s131, %s134
    %p140 = scmp.eq.s32.totalorder %s11, 0
    %p141 = por %p139, %p140
    %p142 = scmp.ne.s32.totalorder %s131, %s134
    %p143 = scmp.eq.s32.totalorder %s16, 1
    %p144 = por %p142, %p143
    %p145 = scmp.ne.s32.totalorder %s134, %s135
    %p146 = scmp.eq.s32.totalorder %s16, 0
    %p147 = por %p145, %p146
    %p148 = scmp.ne.s32.totalorder %s134, %s135
    %p149 = scmp.eq.s32.totalorder %s17, 1
    %p150 = por %p148, %p149
    %p152 = scmp.ne.s32.totalorder %s135, %s151
    %p153 = scmp.eq.s32.totalorder %s17, 0
    %p154 = por %p152, %p153
    %p155 = scmp.le.s32.totalorder 1, %s11
    %p156 = scmp.lt.s32.totalorder %s11, 3
    %p157 = pnand %p155, %p156
    %p158 = pneg %p157
    // Predicated region
    $region9: #{mobilenet_v1_forward.13} parent=5 // pred_check
      _
    $region10: #{mobilenet_v1_forward.13} parent=5 // pred_check_branch
      %160 = sbr.rel (%p157) target = $region12
    $region11: #{mobilenet_v1_forward.13} parent=5 // pred_region
      %s161 = ssub.s32 %s11, 1
      // Predicated region
      $region13: #{mobilenet_v1_forward.13} parent=11 // pred_check
        %p162 = pneg %p58
      $region14: #{mobilenet_v1_forward.13} parent=11 // pred_check_branch
        %164 = sbr.rel (%p162) target = $region16
      $region15: #{mobilenet_v1_forward.13} parent=11 // pred_region
        _
      $region16: #{mobilenet_v1_forward.13} parent=11 // pred_fallthru
        _
      // Predicated region
      $region17: #{mobilenet_v1_forward.13} parent=11 // pred_check
        %p165 = pneg %p79
      $region18: #{mobilenet_v1_forward.13} parent=11 // pred_check_branch
        %167 = sbr.rel (%p165) target = $region20
      $region19: #{mobilenet_v1_forward.13} parent=11 // pred_region
        _
      $region20: #{mobilenet_v1_forward.13} parent=11 // pred_fallthru
        _
      // Predicated region
      $region21: #{mobilenet_v1_forward.13} parent=11 // pred_check
        %p168 = pneg %p100
      $region22: #{mobilenet_v1_forward.13} parent=11 // pred_check_branch
        %170 = sbr.rel (%p168) target = $region24
      $region23: #{mobilenet_v1_forward.13} parent=11 // pred_region
        _
      $region24: #{mobilenet_v1_forward.13} parent=11 // pred_fallthru
        _
      // Predicated region
      $region25: #{mobilenet_v1_forward.13} parent=11 // pred_check
        %p171 = pneg %p121
      $region26: #{mobilenet_v1_forward.13} parent=11 // pred_check_branch
        %173 = sbr.rel (%p171) target = $region28
      $region27: #{mobilenet_v1_forward.13} parent=11 // pred_region
        _
      $region28: #{mobilenet_v1_forward.13} parent=11 // pred_fallthru
        _
    $region12: #{mobilenet_v1_forward.13} parent=5 // pred_fallthru
      _
    %p174 = scmp.lt.s32.totalorder %s11, 2
    // Predicated region
    $region29: #{mobilenet_v1_forward.13} parent=5 // pred_check
      %p175 = pneg %p174
    $region30: #{mobilenet_v1_forward.13} parent=5 // pred_check_branch
      %177 = sbr.rel (%p175) target = $region32
    $region31: #{mobilenet_v1_forward.13} parent=5 // pred_region
      // Predicated region
      $region33: #{mobilenet_v1_forward.13} parent=31 // pred_check
        %p178 = pneg %p31
      $region34: #{mobilenet_v1_forward.13} parent=31 // pred_check_branch
        %180 = sbr.rel (%p178) target = $region36
      $region35: #{mobilenet_v1_forward.13} parent=31 // pred_region
        %p181 = scmp.lt.s32.totalorder %s11, 1
        %s182 = scalar_select %p181, %s11, 1
        %s183 = smul.addr %s182, 20
        %s184 = smul.addr %s183, 4
        %s185 = scalar_lea.vmem %s0, %s184
      $region36: #{mobilenet_v1_forward.13} parent=31 // pred_fallthru
        _
    $region32: #{mobilenet_v1_forward.13} parent=5 // pred_fallthru
      _
    %p186 = scmp.le.s32.totalorder 1, %s11
    %p187 = scmp.lt.s32.totalorder %s11, 3
    %p188 = pnand %p186, %p187
    %p189 = pneg %p188
    // Predicated region
    $region37: #{mobilenet_v1_forward.13} parent=5 // pred_check
      _
    $region38: #{mobilenet_v1_forward.13} parent=5 // pred_check_branch
      %191 = sbr.rel (%p188) target = $region40
    $region39: #{mobilenet_v1_forward.13} parent=5 // pred_region
      %s192 = ssub.s32 %s11, 1
      %p193 = scmp.lt.s32.totalorder %s16, 1
      %s194 = scalar_select %p193, %s16, 1
      %s195 = smul.addr %s194, 20
      %s196 = smul.addr %s195, 4
      %s197 = scalar_lea.vmem %s0, %s196
      %p198 = pneg %p37
      %p199 = pneg %p34
      %p200 = pneg %p58
      %p201 = pneg %p55
      %p202 = pneg %p79
      %p203 = pneg %p76
      %p204 = pneg %p100
      %p205 = pneg %p97
      %p206 = pneg %p121
      %p207 = pneg %p118
      %p208 = pneg %p147
      %p209 = pneg %p144
      %p210 = scmp.lt.s32.totalorder %s16, 1
      %s211 = scalar_select %p210, %s16, 1
      %s212 = smul.addr %s211, 8
      %s213 = smul.addr %s212, 4
      %s214 = scalar_lea.vmem %s5, %s213
      %p215 = scmp.lt.s32.totalorder %s16, 1
      %s216 = scalar_select %p215, %s16, 1
      %s217 = smul.addr %s216, 20
      %s218 = smul.addr %s217, 4
      %s219 = scalar_lea.vmem %s0, %s218
      %p220 = scmp.lt.s32.totalorder %s16, 1
      %s221 = scalar_select %p220, %s16, 1
      %s222 = smul.addr %s221, 8
      %s223 = smul.addr %s222, 4
      %s224 = scalar_lea.vmem %s5, %s223
      %v227 = vld [vmem:[%s219] sm:$0xf]
      %v228 = vld [vmem:[%s219 + $0x4] sm:$0x1]
      %v229 = vld [vmem:[%s219 + $0x8] sm:$0xf]
      %v230 = vld [vmem:[%s219 + $0xc] sm:$0x1]
      %v231 = vld [vmem:[%s219 + $0x10] sm:$0xf]
      %v232 = vld [vmem:[%s219 + $0x14] sm:$0x1]
      %v233 = vld [vmem:[%s219 + $0x18] sm:$0xf]
      %v234 = vld [vmem:[%s219 + $0x1c] sm:$0x1]
      %v235 = vld [vmem:[%s219 + $0x20] sm:$0xf]
      %v236 = vld [vmem:[%s219 + $0x24] sm:$0x1]
      %v237 = vld [vmem:[%s219 + $0x28] sm:$0xf]
      %v238 = vld [vmem:[%s219 + $0x2c] sm:$0x1]
      %v239 = vld [vmem:[%s219 + $0x30] sm:$0xf]
      %v240 = vld [vmem:[%s219 + $0x34] sm:$0x1]
      %v241 = vld [vmem:[%s219 + $0x38] sm:$0xf]
      %v242 = vld [vmem:[%s219 + $0x3c] sm:$0x1]
      %v243 = vld [vmem:[%s219 + $0x40] sm:$0xf]
      %v244 = vld [vmem:[%s219 + $0x44] sm:$0x1]
      %v245 = vld [vmem:[%s219 + $0x48] sm:$0xf]
      %v246 = vld [vmem:[%s219 + $0x4c] sm:$0x1]
      %v247 = vld [vmem:[%s1] sm:$0x1]
      %v249 = vpack.i.b16 %v247, %v247
      %v251 = vlaneseq
      %v252 = vshrl.u32 %v251, 7
      %v253 = vsub.s32 0, %v252
      %v254 = vrot.slane %v249, %v253
      %v255 = vmul.bf16 %v227, %v254
      %v256 = vmul.bf16 %v229, %v254
      %v257 = vmul.bf16 %v231, %v254
      %v258 = vmul.bf16 %v233, %v254
      %v259 = vmul.bf16 %v235, %v254
      %v260 = vmul.bf16 %v237, %v254
      %v261 = vmul.bf16 %v239, %v254
      %v262 = vmul.bf16 %v241, %v254
      %s263 = scalar_lea.vmem %s1, 1
      %v264 = vld [vmem:[%s263] sm:$0x1]
      %v266 = vpack.i.b16 %v264, %v264
      %v268 = vlaneseq
      %v269 = vshrl.u32 %v268, 7
      %v270 = vsub.s32 0, %v269
      %v271 = vrot.slane %v266, %v270
      %v273 = vunpack.c.l.b16 %v271
      %v274 = vpack.c.b16 %v273, %v273
      %v276 = vmul.bf16 %v227, %v274
      %v277 = vmul.bf16 %v228, %v274
      %v278 = vmul.bf16 %v229, %v274
      %v279 = vmul.bf16 %v230, %v274
      %v280 = vmul.bf16 %v231, %v274
      %v281 = vmul.bf16 %v232, %v274
      %v282 = vmul.bf16 %v233, %v274
      %v283 = vmul.bf16 %v234, %v274
      %v284 = vmul.bf16 %v235, %v274
      %v285 = vmul.bf16 %v236, %v274
      %v286 = vmul.bf16 %v237, %v274
      %v287 = vmul.bf16 %v238, %v274
      %v288 = vmul.bf16 %v239, %v274
      %v289 = vmul.bf16 %v240, %v274
      %v290 = vmul.bf16 %v241, %v274
      %v291 = vmul.bf16 %v242, %v274
      %vm292 = vsmask.f32 3328
      %vm293 = vsmask.f32 7440
      %vm294 = vmor %vm292, %vm293
      %v296 = vshrl.u32 %v276, 16
      %v298 = vrot.slane %v296, 4
      %v299 = vshll.u32 %v276, 16
      %v301 = vrot.slane %v299, 5
      %v302 = vor.u32 %v298, %v301
      %v303 = vrot.slane %v302, 4
      %v305 = vshll.u32 %v277, 16
      %v307 = vrot.slane %v305, 5
      %v308 = vsel %vm294, %v303, %v307
      %v310 = vshrl.u32 %v278, 16
      %v312 = vrot.slane %v310, 4
      %v313 = vshll.u32 %v278, 16
      %v315 = vrot.slane %v313, 5
      %v316 = vor.u32 %v312, %v315
      %v317 = vrot.slane %v316, 4
      %v319 = vshll.u32 %v279, 16
      %v321 = vrot.slane %v319, 5
      %v322 = vsel %vm294, %v317, %v321
      %v324 = vshrl.u32 %v280, 16
      %v326 = vrot.slane %v324, 4
      %v327 = vshll.u32 %v280, 16
      %v329 = vrot.slane %v327, 5
      %v330 = vor.u32 %v326, %v329
      %v331 = vrot.slane %v330, 4
      %v333 = vshll.u32 %v281, 16
      %v335 = vrot.slane %v333, 5
      %v336 = vsel %vm294, %v331, %v335
      %v338 = vshrl.u32 %v282, 16
      %v340 = vrot.slane %v338, 4
      %v341 = vshll.u32 %v282, 16
      %v343 = vrot.slane %v341, 5
      %v344 = vor.u32 %v340, %v343
      %v345 = vrot.slane %v344, 4
      %v347 = vshll.u32 %v283, 16
      %v349 = vrot.slane %v347, 5
      %v350 = vsel %vm294, %v345, %v349
      %v352 = vshrl.u32 %v284, 16
      %v354 = vrot.slane %v352, 4
      %v355 = vshll.u32 %v284, 16
      %v357 = vrot.slane %v355, 5
      %v358 = vor.u32 %v354, %v357
      %v359 = vrot.slane %v358, 4
      %v361 = vshll.u32 %v285, 16
      %v363 = vrot.slane %v361, 5
      %v364 = vsel %vm294, %v359, %v363
      %v366 = vshrl.u32 %v286, 16
      %v368 = vrot.slane %v366, 4
      %v369 = vshll.u32 %v286, 16
      %v371 = vrot.slane %v369, 5
      %v372 = vor.u32 %v368, %v371
      %v373 = vrot.slane %v372, 4
      %v375 = vshll.u32 %v287, 16
      %v377 = vrot.slane %v375, 5
      %v378 = vsel %vm294, %v373, %v377
      %v380 = vshrl.u32 %v288, 16
      %v382 = vrot.slane %v380, 4
      %v383 = vshll.u32 %v288, 16
      %v385 = vrot.slane %v383, 5
      %v386 = vor.u32 %v382, %v385
      %v387 = vrot.slane %v386, 4
      %v389 = vshll.u32 %v289, 16
      %v391 = vrot.slane %v389, 5
      %v392 = vsel %vm294, %v387, %v391
      %v394 = vshrl.u32 %v290, 16
      %v396 = vrot.slane %v394, 4
      %v397 = vshll.u32 %v290, 16
      %v399 = vrot.slane %v397, 5
      %v400 = vor.u32 %v396, %v399
      %v401 = vrot.slane %v400, 4
      %v403 = vshll.u32 %v291, 16
      %v405 = vrot.slane %v403, 5
      %v406 = vsel %vm294, %v401, %v405
      %v415 = vadd.bf16 %v255, %v308
      %v416 = vadd.bf16 %v256, %v322
      %v417 = vadd.bf16 %v257, %v336
      %v418 = vadd.bf16 %v258, %v350
      %v419 = vadd.bf16 %v259, %v364
      %v420 = vadd.bf16 %v260, %v378
      %v421 = vadd.bf16 %v261, %v392
      %v422 = vadd.bf16 %v262, %v406
      %s423 = scalar_lea.vmem %s1, 2
      %v424 = vld [vmem:[%s423] sm:$0x1]
      %v426 = vpack.i.b16 %v424, %v424
      %v428 = vlaneseq
      %v429 = vshrl.u32 %v428, 7
      %v430 = vsub.s32 0, %v429
      %v431 = vrot.slane %v426, %v430
      %v433 = vunpack.c.l.b16 %v431
      %v434 = vpack.c.b16 %v433, %v433
      %v436 = vmul.bf16 %v227, %v434
      %v437 = vmul.bf16 %v228, %v434
      %v438 = vmul.bf16 %v229, %v434
      %v439 = vmul.bf16 %v230, %v434
      %v440 = vmul.bf16 %v231, %v434
      %v441 = vmul.bf16 %v232, %v434
      %v442 = vmul.bf16 %v233, %v434
      %v443 = vmul.bf16 %v234, %v434
      %v444 = vmul.bf16 %v235, %v434
      %v445 = vmul.bf16 %v236, %v434
      %v446 = vmul.bf16 %v237, %v434
      %v447 = vmul.bf16 %v238, %v434
      %v448 = vmul.bf16 %v239, %v434
      %v449 = vmul.bf16 %v240, %v434
      %v450 = vmul.bf16 %v241, %v434
      %v451 = vmul.bf16 %v242, %v434
      %vm468 = vcmask 1042432
      %vm469 = vcmask 1046532
      %vm470 = vmor %vm468, %vm469
      %v471 = vrot.slane %v436, 5
      %v472 = vrot.slane %v471, 4
      %v473 = vrot.slane %v437, 5
      %v474 = vsel %vm470, %v472, %v473
      %v475 = vrot.slane %v438, 5
      %v476 = vrot.slane %v475, 4
      %v477 = vrot.slane %v439, 5
      %v478 = vsel %vm470, %v476, %v477
      %v479 = vrot.slane %v440, 5
      %v480 = vrot.slane %v479, 4
      %v481 = vrot.slane %v441, 5
      %v482 = vsel %vm470, %v480, %v481
      %v483 = vrot.slane %v442, 5
      %v484 = vrot.slane %v483, 4
      %v485 = vrot.slane %v443, 5
      %v486 = vsel %vm470, %v484, %v485
      %v487 = vrot.slane %v444, 5
      %v488 = vrot.slane %v487, 4
      %v489 = vrot.slane %v445, 5
      %v490 = vsel %vm470, %v488, %v489
      %v491 = vrot.slane %v446, 5
      %v492 = vrot.slane %v491, 4
      %v493 = vrot.slane %v447, 5
      %v494 = vsel %vm470, %v492, %v493
      %v495 = vrot.slane %v448, 5
      %v496 = vrot.slane %v495, 4
      %v497 = vrot.slane %v449, 5
      %v498 = vsel %vm470, %v496, %v497
      %v499 = vrot.slane %v450, 5
      %v500 = vrot.slane %v499, 4
      %v501 = vrot.slane %v451, 5
      %v502 = vsel %vm470, %v500, %v501
      %v511 = vadd.bf16 %v415, %v474
      %v512 = vadd.bf16 %v416, %v478
      %v513 = vadd.bf16 %v417, %v482
      %v514 = vadd.bf16 %v418, %v486
      %v515 = vadd.bf16 %v419, %v490
      %v516 = vadd.bf16 %v420, %v494
      %v517 = vadd.bf16 %v421, %v498
      %v518 = vadd.bf16 %v422, %v502
      %s519 = scalar_lea.vmem %s1, 3
      %v520 = vld [vmem:[%s519] sm:$0x1]
      %v522 = vpack.i.b16 %v520, %v520
      %v524 = vlaneseq
      %v525 = vshrl.u32 %v524, 7
      %v526 = vsub.s32 0, %v525
      %v527 = vrot.slane %v522, %v526
      %v528 = vmul.bf16 %v229, %v527
      %v529 = vmul.bf16 %v231, %v527
      %v530 = vmul.bf16 %v233, %v527
      %v531 = vmul.bf16 %v235, %v527
      %v532 = vmul.bf16 %v237, %v527
      %v533 = vmul.bf16 %v239, %v527
      %v534 = vmul.bf16 %v241, %v527
      %v535 = vmul.bf16 %v243, %v527
      %v536 = vadd.bf16 %v511, %v528
      %v537 = vadd.bf16 %v512, %v529
      %v538 = vadd.bf16 %v513, %v530
      %v539 = vadd.bf16 %v514, %v531
      %v540 = vadd.bf16 %v515, %v532
      %v541 = vadd.bf16 %v516, %v533
      %v542 = vadd.bf16 %v517, %v534
      %v543 = vadd.bf16 %v518, %v535
      %s544 = scalar_lea.vmem %s1, 4
      %v545 = vld [vmem:[%s544] sm:$0x1]
      %v547 = vpack.i.b16 %v545, %v545
      %v549 = vlaneseq
      %v550 = vshrl.u32 %v549, 7
      %v551 = vsub.s32 0, %v550
      %v552 = vrot.slane %v547, %v551
      %v554 = vunpack.c.l.b16 %v552
      %v555 = vpack.c.b16 %v554, %v554
      %v557 = vmul.bf16 %v229, %v555
      %v558 = vmul.bf16 %v230, %v555
      %v559 = vmul.bf16 %v231, %v555
      %v560 = vmul.bf16 %v232, %v555
      %v561 = vmul.bf16 %v233, %v555
      %v562 = vmul.bf16 %v234, %v555
      %v563 = vmul.bf16 %v235, %v555
      %v564 = vmul.bf16 %v236, %v555
      %v565 = vmul.bf16 %v237, %v555
      %v566 = vmul.bf16 %v238, %v555
      %v567 = vmul.bf16 %v239, %v555
      %v568 = vmul.bf16 %v240, %v555
      %v569 = vmul.bf16 %v241, %v555
      %v570 = vmul.bf16 %v242, %v555
      %v571 = vmul.bf16 %v243, %v555
      %v572 = vmul.bf16 %v244, %v555
      %v574 = vshrl.u32 %v557, 16
      %v576 = vrot.slane %v574, 4
      %v577 = vshll.u32 %v557, 16
      %v579 = vrot.slane %v577, 5
      %v580 = vor.u32 %v576, %v579
      %v581 = vrot.slane %v580, 4
      %v583 = vshll.u32 %v558, 16
      %v585 = vrot.slane %v583, 5
      %v586 = vsel %vm294, %v581, %v585
      %v588 = vshrl.u32 %v559, 16
      %v590 = vrot.slane %v588, 4
      %v591 = vshll.u32 %v559, 16
      %v593 = vrot.slane %v591, 5
      %v594 = vor.u32 %v590, %v593
      %v595 = vrot.slane %v594, 4
      %v597 = vshll.u32 %v560, 16
      %v599 = vrot.slane %v597, 5
      %v600 = vsel %vm294, %v595, %v599
      %v602 = vshrl.u32 %v561, 16
      %v604 = vrot.slane %v602, 4
      %v605 = vshll.u32 %v561, 16
      %v607 = vrot.slane %v605, 5
      %v608 = vor.u32 %v604, %v607
      %v609 = vrot.slane %v608, 4
      %v611 = vshll.u32 %v562, 16
      %v613 = vrot.slane %v611, 5
      %v614 = vsel %vm294, %v609, %v613
      %v616 = vshrl.u32 %v563, 16
      %v618 = vrot.slane %v616, 4
      %v619 = vshll.u32 %v563, 16
      %v621 = vrot.slane %v619, 5
      %v622 = vor.u32 %v618, %v621
      %v623 = vrot.slane %v622, 4
      %v625 = vshll.u32 %v564, 16
      %v627 = vrot.slane %v625, 5
      %v628 = vsel %vm294, %v623, %v627
      %v630 = vshrl.u32 %v565, 16
      %v632 = vrot.slane %v630, 4
      %v633 = vshll.u32 %v565, 16
      %v635 = vrot.slane %v633, 5
      %v636 = vor.u32 %v632, %v635
      %v637 = vrot.slane %v636, 4
      %v639 = vshll.u32 %v566, 16
      %v641 = vrot.slane %v639, 5
      %v642 = vsel %vm294, %v637, %v641
      %v644 = vshrl.u32 %v567, 16
      %v646 = vrot.slane %v644, 4
      %v647 = vshll.u32 %v567, 16
      %v649 = vrot.slane %v647, 5
      %v650 = vor.u32 %v646, %v649
      %v651 = vrot.slane %v650, 4
      %v653 = vshll.u32 %v568, 16
      %v655 = vrot.slane %v653, 5
      %v656 = vsel %vm294, %v651, %v655
      %v658 = vshrl.u32 %v569, 16
      %v660 = vrot.slane %v658, 4
      %v661 = vshll.u32 %v569, 16
      %v663 = vrot.slane %v661, 5
      %v664 = vor.u32 %v660, %v663
      %v665 = vrot.slane %v664, 4
      %v667 = vshll.u32 %v570, 16
      %v669 = vrot.slane %v667, 5
      %v670 = vsel %vm294, %v665, %v669
      %v672 = vshrl.u32 %v571, 16
      %v674 = vrot.slane %v672, 4
      %v675 = vshll.u32 %v571, 16
      %v677 = vrot.slane %v675, 5
      %v678 = vor.u32 %v674, %v677
      %v679 = vrot.slane %v678, 4
      %v681 = vshll.u32 %v572, 16
      %v683 = vrot.slane %v681, 5
      %v684 = vsel %vm294, %v679, %v683
      %v693 = vadd.bf16 %v536, %v586
      %v694 = vadd.bf16 %v537, %v600
      %v695 = vadd.bf16 %v538, %v614
      %v696 = vadd.bf16 %v539, %v628
      %v697 = vadd.bf16 %v540, %v642
      %v698 = vadd.bf16 %v541, %v656
      %v699 = vadd.bf16 %v542, %v670
      %v700 = vadd.bf16 %v543, %v684
      %s701 = scalar_lea.vmem %s1, 5
      %v702 = vld [vmem:[%s701] sm:$0x1]
      %v704 = vpack.i.b16 %v702, %v702
      %v706 = vlaneseq
      %v707 = vshrl.u32 %v706, 7
      %v708 = vsub.s32 0, %v707
      %v709 = vrot.slane %v704, %v708
      %v711 = vunpack.c.l.b16 %v709
      %v712 = vpack.c.b16 %v711, %v711
      %v714 = vmul.bf16 %v229, %v712
      %v715 = vmul.bf16 %v230, %v712
      %v716 = vmul.bf16 %v231, %v712
      %v717 = vmul.bf16 %v232, %v712
      %v718 = vmul.bf16 %v233, %v712
      %v719 = vmul.bf16 %v234, %v712
      %v720 = vmul.bf16 %v235, %v712
      %v721 = vmul.bf16 %v236, %v712
      %v722 = vmul.bf16 %v237, %v712
      %v723 = vmul.bf16 %v238, %v712
      %v724 = vmul.bf16 %v239, %v712
      %v725 = vmul.bf16 %v240, %v712
      %v726 = vmul.bf16 %v241, %v712
      %v727 = vmul.bf16 %v242, %v712
      %v728 = vmul.bf16 %v243, %v712
      %v729 = vmul.bf16 %v244, %v712
      %v746 = vrot.slane %v714, 5
      %v747 = vrot.slane %v746, 4
      %v748 = vrot.slane %v715, 5
      %v749 = vsel %vm470, %v747, %v748
      %v750 = vrot.slane %v716, 5
      %v751 = vrot.slane %v750, 4
      %v752 = vrot.slane %v717, 5
      %v753 = vsel %vm470, %v751, %v752
      %v754 = vrot.slane %v718, 5
      %v755 = vrot.slane %v754, 4
      %v756 = vrot.slane %v719, 5
      %v757 = vsel %vm470, %v755, %v756
      %v758 = vrot.slane %v720, 5
      %v759 = vrot.slane %v758, 4
      %v760 = vrot.slane %v721, 5
      %v761 = vsel %vm470, %v759, %v760
      %v762 = vrot.slane %v722, 5
      %v763 = vrot.slane %v762, 4
      %v764 = vrot.slane %v723, 5
      %v765 = vsel %vm470, %v763, %v764
      %v766 = vrot.slane %v724, 5
      %v767 = vrot.slane %v766, 4
      %v768 = vrot.slane %v725, 5
      %v769 = vsel %vm470, %v767, %v768
      %v770 = vrot.slane %v726, 5
      %v771 = vrot.slane %v770, 4
      %v772 = vrot.slane %v727, 5
      %v773 = vsel %vm470, %v771, %v772
      %v774 = vrot.slane %v728, 5
      %v775 = vrot.slane %v774, 4
      %v776 = vrot.slane %v729, 5
      %v777 = vsel %vm470, %v775, %v776
      %v786 = vadd.bf16 %v693, %v749
      %v787 = vadd.bf16 %v694, %v753
      %v788 = vadd.bf16 %v695, %v757
      %v789 = vadd.bf16 %v696, %v761
      %v790 = vadd.bf16 %v697, %v765
      %v791 = vadd.bf16 %v698, %v769
      %v792 = vadd.bf16 %v699, %v773
      %v793 = vadd.bf16 %v700, %v777
      %s794 = scalar_lea.vmem %s1, 6
      %v795 = vld [vmem:[%s794] sm:$0x1]
      %v797 = vpack.i.b16 %v795, %v795
      %v799 = vlaneseq
      %v800 = vshrl.u32 %v799, 7
      %v801 = vsub.s32 0, %v800
      %v802 = vrot.slane %v797, %v801
      %v803 = vmul.bf16 %v231, %v802
      %v804 = vmul.bf16 %v233, %v802
      %v805 = vmul.bf16 %v235, %v802
      %v806 = vmul.bf16 %v237, %v802
      %v807 = vmul.bf16 %v239, %v802
      %v808 = vmul.bf16 %v241, %v802
      %v809 = vmul.bf16 %v243, %v802
      %v810 = vmul.bf16 %v245, %v802
      %v811 = vadd.bf16 %v786, %v803
      %v812 = vadd.bf16 %v787, %v804
      %v813 = vadd.bf16 %v788, %v805
      %v814 = vadd.bf16 %v789, %v806
      %v815 = vadd.bf16 %v790, %v807
      %v816 = vadd.bf16 %v791, %v808
      %v817 = vadd.bf16 %v792, %v809
      %v818 = vadd.bf16 %v793, %v810
      %s819 = scalar_lea.vmem %s1, 7
      %v820 = vld [vmem:[%s819] sm:$0x1]
      %v822 = vpack.i.b16 %v820, %v820
      %v824 = vlaneseq
      %v825 = vshrl.u32 %v824, 7
      %v826 = vsub.s32 0, %v825
      %v827 = vrot.slane %v822, %v826
      %v829 = vunpack.c.l.b16 %v827
      %v830 = vpack.c.b16 %v829, %v829
      %v832 = vmul.bf16 %v231, %v830
      %v833 = vmul.bf16 %v232, %v830
      %v834 = vmul.bf16 %v233, %v830
      %v835 = vmul.bf16 %v234, %v830
      %v836 = vmul.bf16 %v235, %v830
      %v837 = vmul.bf16 %v236, %v830
      %v838 = vmul.bf16 %v237, %v830
      %v839 = vmul.bf16 %v238, %v830
      %v840 = vmul.bf16 %v239, %v830
      %v841 = vmul.bf16 %v240, %v830
      %v842 = vmul.bf16 %v241, %v830
      %v843 = vmul.bf16 %v242, %v830
      %v844 = vmul.bf16 %v243, %v830
      %v845 = vmul.bf16 %v244, %v830
      %v846 = vmul.bf16 %v245, %v830
      %v847 = vmul.bf16 %v246, %v830
      %v849 = vshrl.u32 %v832, 16
      %v851 = vrot.slane %v849, 4
      %v852 = vshll.u32 %v832, 16
      %v854 = vrot.slane %v852, 5
      %v855 = vor.u32 %v851, %v854
      %v856 = vrot.slane %v855, 4
      %v858 = vshll.u32 %v833, 16
      %v860 = vrot.slane %v858, 5
      %v861 = vsel %vm294, %v856, %v860
      %v863 = vshrl.u32 %v834, 16
      %v865 = vrot.slane %v863, 4
      %v866 = vshll.u32 %v834, 16
      %v868 = vrot.slane %v866, 5
      %v869 = vor.u32 %v865, %v868
      %v870 = vrot.slane %v869, 4
      %v872 = vshll.u32 %v835, 16
      %v874 = vrot.slane %v872, 5
      %v875 = vsel %vm294, %v870, %v874
      %v877 = vshrl.u32 %v836, 16
      %v879 = vrot.slane %v877, 4
      %v880 = vshll.u32 %v836, 16
      %v882 = vrot.slane %v880, 5
      %v883 = vor.u32 %v879, %v882
      %v884 = vrot.slane %v883, 4
      %v886 = vshll.u32 %v837, 16
      %v888 = vrot.slane %v886, 5
      %v889 = vsel %vm294, %v884, %v888
      %v891 = vshrl.u32 %v838, 16
      %v893 = vrot.slane %v891, 4
      %v894 = vshll.u32 %v838, 16
      %v896 = vrot.slane %v894, 5
      %v897 = vor.u32 %v893, %v896
      %v898 = vrot.slane %v897, 4
      %v900 = vshll.u32 %v839, 16
      %v902 = vrot.slane %v900, 5
      %v903 = vsel %vm294, %v898, %v902
      %v905 = vshrl.u32 %v840, 16
      %v907 = vrot.slane %v905, 4
      %v908 = vshll.u32 %v840, 16
      %v910 = vrot.slane %v908, 5
      %v911 = vor.u32 %v907, %v910
      %v912 = vrot.slane %v911, 4
      %v914 = vshll.u32 %v841, 16
      %v916 = vrot.slane %v914, 5
      %v917 = vsel %vm294, %v912, %v916
      %v919 = vshrl.u32 %v842, 16
      %v921 = vrot.slane %v919, 4
      %v922 = vshll.u32 %v842, 16
      %v924 = vrot.slane %v922, 5
      %v925 = vor.u32 %v921, %v924
      %v926 = vrot.slane %v925, 4
      %v928 = vshll.u32 %v843, 16
      %v930 = vrot.slane %v928, 5
      %v931 = vsel %vm294, %v926, %v930
      %v933 = vshrl.u32 %v844, 16
      %v935 = vrot.slane %v933, 4
      %v936 = vshll.u32 %v844, 16
      %v938 = vrot.slane %v936, 5
      %v939 = vor.u32 %v935, %v938
      %v940 = vrot.slane %v939, 4
      %v942 = vshll.u32 %v845, 16
      %v944 = vrot.slane %v942, 5
      %v945 = vsel %vm294, %v940, %v944
      %v947 = vshrl.u32 %v846, 16
      %v949 = vrot.slane %v947, 4
      %v950 = vshll.u32 %v846, 16
      %v952 = vrot.slane %v950, 5
      %v953 = vor.u32 %v949, %v952
      %v954 = vrot.slane %v953, 4
      %v956 = vshll.u32 %v847, 16
      %v958 = vrot.slane %v956, 5
      %v959 = vsel %vm294, %v954, %v958
      %v968 = vadd.bf16 %v811, %v861
      %v969 = vadd.bf16 %v812, %v875
      %v970 = vadd.bf16 %v813, %v889
      %v971 = vadd.bf16 %v814, %v903
      %v972 = vadd.bf16 %v815, %v917
      %v973 = vadd.bf16 %v816, %v931
      %v974 = vadd.bf16 %v817, %v945
      %v975 = vadd.bf16 %v818, %v959
      %s976 = scalar_lea.vmem %s1, 8
      %v977 = vld [vmem:[%s976] sm:$0x1]
      %v979 = vpack.i.b16 %v977, %v977
      %v981 = vlaneseq
      %v982 = vshrl.u32 %v981, 7
      %v983 = vsub.s32 0, %v982
      %v984 = vrot.slane %v979, %v983
      %v986 = vunpack.c.l.b16 %v984
      %v987 = vpack.c.b16 %v986, %v986
      %v989 = vmul.bf16 %v231, %v987
      %v990 = vmul.bf16 %v232, %v987
      %v991 = vmul.bf16 %v233, %v987
      %v992 = vmul.bf16 %v234, %v987
      %v993 = vmul.bf16 %v235, %v987
      %v994 = vmul.bf16 %v236, %v987
      %v995 = vmul.bf16 %v237, %v987
      %v996 = vmul.bf16 %v238, %v987
      %v997 = vmul.bf16 %v239, %v987
      %v998 = vmul.bf16 %v240, %v987
      %v999 = vmul.bf16 %v241, %v987
      %v1000 = vmul.bf16 %v242, %v987
      %v1001 = vmul.bf16 %v243, %v987
      %v1002 = vmul.bf16 %v244, %v987
      %v1003 = vmul.bf16 %v245, %v987
      %v1004 = vmul.bf16 %v246, %v987
      %v1021 = vrot.slane %v989, 5
      %v1022 = vrot.slane %v1021, 4
      %v1023 = vrot.slane %v990, 5
      %v1024 = vsel %vm470, %v1022, %v1023
      %v1025 = vrot.slane %v991, 5
      %v1026 = vrot.slane %v1025, 4
      %v1027 = vrot.slane %v992, 5
      %v1028 = vsel %vm470, %v1026, %v1027
      %v1029 = vrot.slane %v993, 5
      %v1030 = vrot.slane %v1029, 4
      %v1031 = vrot.slane %v994, 5
      %v1032 = vsel %vm470, %v1030, %v1031
      %v1033 = vrot.slane %v995, 5
      %v1034 = vrot.slane %v1033, 4
      %v1035 = vrot.slane %v996, 5
      %v1036 = vsel %vm470, %v1034, %v1035
      %v1037 = vrot.slane %v997, 5
      %v1038 = vrot.slane %v1037, 4
      %v1039 = vrot.slane %v998, 5
      %v1040 = vsel %vm470, %v1038, %v1039
      %v1041 = vrot.slane %v999, 5
      %v1042 = vrot.slane %v1041, 4
      %v1043 = vrot.slane %v1000, 5
      %v1044 = vsel %vm470, %v1042, %v1043
      %v1045 = vrot.slane %v1001, 5
      %v1046 = vrot.slane %v1045, 4
      %v1047 = vrot.slane %v1002, 5
      %v1048 = vsel %vm470, %v1046, %v1047
      %v1049 = vrot.slane %v1003, 5
      %v1050 = vrot.slane %v1049, 4
      %v1051 = vrot.slane %v1004, 5
      %v1052 = vsel %vm470, %v1050, %v1051
      %v1061 = vadd.bf16 %v968, %v1024
      %v1062 = vadd.bf16 %v969, %v1028
      %v1063 = vadd.bf16 %v970, %v1032
      %v1064 = vadd.bf16 %v971, %v1036
      %v1065 = vadd.bf16 %v972, %v1040
      %v1066 = vadd.bf16 %v973, %v1044
      %v1067 = vadd.bf16 %v974, %v1048
      %v1068 = vadd.bf16 %v975, %v1052
      %v1069 = vld [vmem:[%s2] sm:$0x1]
      %v1071 = vpack.i.b16 %v1069, %v1069
      %v1073 = vlaneseq
      %v1074 = vshrl.u32 %v1073, 7
      %v1075 = vsub.s32 0, %v1074
      %v1076 = vrot.slane %v1071, %v1075
      %v1077 = vadd.bf16 %v1061, %v1076
      %v1078 = vadd.bf16 %v1062, %v1076
      %v1079 = vadd.bf16 %v1063, %v1076
      %v1080 = vadd.bf16 %v1064, %v1076
      %v1081 = vadd.bf16 %v1065, %v1076
      %v1082 = vadd.bf16 %v1066, %v1076
      %v1083 = vadd.bf16 %v1067, %v1076
      %v1084 = vadd.bf16 %v1068, %v1076
      %v1085 = vmax.bf16 %v1077, 0
      %v1086 = vmax.bf16 %v1078, 0
      %v1087 = vmax.bf16 %v1079, 0
      %v1088 = vmax.bf16 %v1080, 0
      %v1089 = vmax.bf16 %v1081, 0
      %v1090 = vmax.bf16 %v1082, 0
      %v1091 = vmax.bf16 %v1083, 0
      %v1092 = vmax.bf16 %v1084, 0
      %v1093 = vmin.bf16 %v1085, 1086341312
      %v1094 = vmin.bf16 %v1086, 1086341312
      %v1095 = vmin.bf16 %v1087, 1086341312
      %v1096 = vmin.bf16 %v1088, 1086341312
      %v1097 = vmin.bf16 %v1089, 1086341312
      %v1098 = vmin.bf16 %v1090, 1086341312
      %v1099 = vmin.bf16 %v1091, 1086341312
      %v1100 = vmin.bf16 %v1092, 1086341312
      %v1101 = vld [vmem:[%s3] sm:$0xf]
      %v1102 = vld [vmem:[%s3 + $0x4] sm:$0xf]
      %v1103 = vld [vmem:[%s3 + $0x8] sm:$0xf]
      %v1104 = vld [vmem:[%s3 + $0xc] sm:$0xf]
      %v1105 = vld [vmem:[%s4] sm:$0x1]
      %v1107 = vlaneseq
      %v1108 = vshrl.u32 %v1107, 7
      %v1109 = vsub.s32 0, %v1108
      %v1110 = vrot.slane %v1105, %v1109
      %v1120 = vunpack.c.l.b16 %v1093
      %v1121 = vunpack.c.l.b16 %v1094
      %v1122 = vunpack.c.l.b16 %v1095
      %v1123 = vunpack.c.l.b16 %v1096
      %v1124 = vunpack.c.l.b16 %v1097
      %v1125 = vunpack.c.l.b16 %v1098
      %v1126 = vunpack.c.l.b16 %v1099
      %v1127 = vunpack.c.l.b16 %v1100
      %v1128 = vpack.c.b16 %v1121, %v1120
      %v1129 = vpack.c.b16 %v1123, %v1122
      %v1130 = vpack.c.b16 %v1125, %v1124
      %v1131 = vpack.c.b16 %v1127, %v1126
      %v1136 = vunpack.c.l.b16 %v1101
      %v1137 = vunpack.c.l.b16 %v1102
      %v1138 = vunpack.c.l.b16 %v1103
      %v1139 = vunpack.c.l.b16 %v1104
      %v1140 = vpack.c.b16 %v1137, %v1136
      %v1141 = vpack.c.b16 %v1139, %v1138
      %vm1144 = vcmask 261120
      %v1146 = vsel %vm1144, %v1128, 0
      %v1149 = vsel %vm1144, %v1129, 0
      %v1152 = vsel %vm1144, %v1130, 0
      %v1155 = vsel %vm1144, %v1131, 0
      %1157 = vmatprep.subr.bf16.mxu0 0
      %1158 = vmatpush1.bf16.msra.mxu0 %v1140
      %1159 = vmatprep.subr.bf16.mxu0 0
      %1160 = vmatpush1.bf16.msra.mxu0 %v1141
      %1161 = vmatprep.subr.bf16.mxu0 0
      %1162 = vmatpush1.bf16.msra.mxu0 0
      %1163 = vmatprep.subr.bf16.mxu0 0
      %1164 = vmatpush1.bf16.msra.mxu0 0
      %1165 = vmatprep.subr.bf16.mxu0 0
      %1166 = vmatpush1.bf16.msra.mxu0 0
      %1167 = vmatprep.subr.bf16.mxu0 0
      %1168 = vmatpush1.bf16.msra.mxu0 0
      %1169 = vmatprep.subr.bf16.mxu0 0
      %1170 = vmatpush1.bf16.msra.mxu0 0
      %1171 = vmatprep.subr.bf16.mxu0 0
      %1172 = vmatpush1.bf16.msra.mxu0 0
      %1173 = vmatprep.subr.bf16.mxu0 0
      %1174 = vmatpush1.bf16.msra.mxu0 0
      %1175 = vmatprep.subr.bf16.mxu0 0
      %1176 = vmatpush1.bf16.msra.mxu0 0
      %1177 = vmatprep.subr.bf16.mxu0 0
      %1178 = vmatpush1.bf16.msra.mxu0 0
      %1179 = vmatprep.subr.bf16.mxu0 0
      %1180 = vmatpush1.bf16.msra.mxu0 0
      %1181 = vmatprep.subr.bf16.mxu0 0
      %1182 = vmatpush1.bf16.msra.mxu0 0
      %1183 = vmatprep.subr.bf16.mxu0 0
      %1184 = vmatpush1.bf16.msra.mxu0 0
      %1185 = vmatprep.subr.bf16.mxu0 0
      %1186 = vmatpush1.bf16.msra.mxu0 0
      %1187 = vmatprep.subr.bf16.mxu0 0
      %1188 = vmatpush1.bf16.msra.mxu0 0
      %1189 = vmatprep.mubr.bf16.mxu0 0
      %1190 = vmatmul.mubr.bf16.gmra.mrb[0].mxu0 %v1146
      %v1191 = vpop.f32.mrb[0].mxu0
      %v1192 = vadd.f32 %v1110, %v1191
      %v1193 = vpop.f32.mrb[0].mxu0
      %v1194 = vpop.f32.mrb[0].mxu0
      %v1195 = vadd.f32 %v1110, %v1194
      %v1196 = vpop.f32.mrb[0].mxu0
      %1197 = vmatprep.mubr.bf16.mxu0 0
      %1198 = vmatmul.mubr.bf16.gmra.mrb[0].mxu0 %v1149
      %v1199 = vpop.f32.mrb[0].mxu0
      %v1200 = vadd.f32 %v1110, %v1199
      %v1201 = vpop.f32.mrb[0].mxu0
      %v1202 = vpop.f32.mrb[0].mxu0
      %v1203 = vadd.f32 %v1110, %v1202
      %v1204 = vpop.f32.mrb[0].mxu0
      %1205 = vmatprep.mubr.bf16.mxu0 0
      %1206 = vmatmul.mubr.bf16.gmra.mrb[0].mxu0 %v1152
      %v1207 = vpop.f32.mrb[0].mxu0
      %v1208 = vadd.f32 %v1110, %v1207
      %v1209 = vpop.f32.mrb[0].mxu0
      %v1210 = vpop.f32.mrb[0].mxu0
      %v1211 = vadd.f32 %v1110, %v1210
      %v1212 = vpop.f32.mrb[0].mxu0
      %1213 = vmatprep.mubr.bf16.mxu0 0
      %1214 = vmatmul.mubr.bf16.gmra.mrb[0].mxu0 %v1155
      %v1215 = vpop.f32.mrb[0].mxu0
      %v1216 = vadd.f32 %v1110, %v1215
      %v1217 = vpop.f32.mrb[0].mxu0
      %v1218 = vpop.f32.mrb[0].mxu0
      %v1219 = vadd.f32 %v1110, %v1218
      %v1220 = vpop.f32.mrb[0].mxu0
      %1221 = vdwg.mxu0
      %v1222 = vmax.f32 %v1192, 0.0
      %v1223 = vmax.f32 %v1195, 0.0
      %v1224 = vmax.f32 %v1200, 0.0
      %v1225 = vmax.f32 %v1203, 0.0
      %v1226 = vmax.f32 %v1208, 0.0
      %v1227 = vmax.f32 %v1211, 0.0
      %v1228 = vmax.f32 %v1216, 0.0
      %v1229 = vmax.f32 %v1219, 0.0
      %v1230 = vmin.f32 %v1222, 6.0
      %v1231 = vmin.f32 %v1223, 6.0
      %v1232 = vmin.f32 %v1224, 6.0
      %v1233 = vmin.f32 %v1225, 6.0
      %v1234 = vmin.f32 %v1226, 6.0
      %v1235 = vmin.f32 %v1227, 6.0
      %v1236 = vmin.f32 %v1228, 6.0
      %v1237 = vmin.f32 %v1229, 6.0
      %v1238 = vpack.c.bf16 %v1231, %v1230
      %v1239 = vpack.c.bf16 %v1233, %v1232
      %v1240 = vpack.c.bf16 %v1235, %v1234
      %v1241 = vpack.c.bf16 %v1237, %v1236
      %v1246 = vunpack.c.l.b16 %v1238
      %v1247 = vunpack.c.h.b16 %v1238
      %v1248 = vunpack.c.l.b16 %v1239
      %v1249 = vunpack.c.h.b16 %v1239
      %v1250 = vunpack.c.l.b16 %v1240
      %v1251 = vunpack.c.h.b16 %v1240
      %v1252 = vunpack.c.l.b16 %v1241
      %v1253 = vunpack.c.h.b16 %v1241
      %v1254 = vpack.c.b16 %v1246, %v1246
      %v1255 = vpack.c.b16 %v1247, %v1247
      %v1256 = vpack.c.b16 %v1248, %v1248
      %v1257 = vpack.c.b16 %v1249, %v1249
      %v1258 = vpack.c.b16 %v1250, %v1250
      %v1259 = vpack.c.b16 %v1251, %v1251
      %v1260 = vpack.c.b16 %v1252, %v1252
      %v1261 = vpack.c.b16 %v1253, %v1253
      %vm1270 = vcmask 519168
      %1271 = vst.msk [vmem:[%s224] sm:$0xf] %vm1270, %v1254
      %1272 = vst.msk [vmem:[%s224 + $0x4] sm:$0xf] %vm1270, %v1255
      %1273 = vst.msk [vmem:[%s224 + $0x8] sm:$0xf] %vm1270, %v1256
      %1274 = vst.msk [vmem:[%s224 + $0xc] sm:$0xf] %vm1270, %v1257
      %1275 = vst.msk [vmem:[%s224 + $0x10] sm:$0xf] %vm1270, %v1258
      %1276 = vst.msk [vmem:[%s224 + $0x14] sm:$0xf] %vm1270, %v1259
      %1277 = vst.msk [vmem:[%s224 + $0x18] sm:$0xf] %vm1270, %v1260
      %1278 = vst.msk [vmem:[%s224 + $0x1c] sm:$0xf] %vm1270, %v1261
      %p1279 = scmp.lt.s32.totalorder %s16, 1
      %s1280 = scalar_select %p1279, %s16, 1
      %s1281 = smul.addr %s1280, 8
      %s1282 = smul.addr %s1281, 4
      %s1283 = scalar_lea.vmem %s5, %s1282
      // Predicated region
      $region41: #{mobilenet_v1_forward.13} parent=39 // pred_check
        %p1284 = pneg %p144
      $region42: #{mobilenet_v1_forward.13} parent=39 // pred_check_branch
        %1286 = sbr.rel (%p1284) target = $region44
      $region43: #{mobilenet_v1_forward.13} parent=39 // pred_region
        _
      $region44: #{mobilenet_v1_forward.13} parent=39 // pred_fallthru
        _
    $region40: #{mobilenet_v1_forward.13} parent=5 // pred_fallthru
      _
    %p1287 = scmp.le.s32.totalorder 2, %s11
    // Predicated region
    $region45: #{mobilenet_v1_forward.13} parent=5 // pred_check
      %p1288 = pneg %p1287
    $region46: #{mobilenet_v1_forward.13} parent=5 // pred_check_branch
      %1290 = sbr.rel (%p1288) target = $region48
    $region47: #{mobilenet_v1_forward.13} parent=5 // pred_region
      %s1291 = ssub.s32 %s11, 2
      // Predicated region
      $region49: #{mobilenet_v1_forward.13} parent=47 // pred_check
        %p1292 = pneg %p150
      $region50: #{mobilenet_v1_forward.13} parent=47 // pred_check_branch
        %1294 = sbr.rel (%p1292) target = $region52
      $region51: #{mobilenet_v1_forward.13} parent=47 // pred_region
        %p1295 = scmp.lt.s32.totalorder %s17, 1
        %s1296 = scalar_select %p1295, %s17, 1
        %s1297 = smul.addr %s1296, 8
        %s1298 = smul.addr %s1297, 4
        %s1299 = scalar_lea.vmem %s5, %s1298
      $region52: #{mobilenet_v1_forward.13} parent=47 // pred_fallthru
        _
    $region48: #{mobilenet_v1_forward.13} parent=5 // pred_fallthru
      _
  $region6: #{mobilenet_v1_forward.13} parent=0 // loop_footer
    %s15 = sadd.s32 1, %s11
  $region7: #{mobilenet_v1_forward.13} parent=0 // loop_footer_branch
    %10 = sbr.rel target = $region3
  $region8: #{mobilenet_v1_forward.13} parent=0 // loop_exit
    _

// kernel: mobilenet_v1_forward.15
$region0: #{mobilenet_v1_forward.15}
  #allocation0 [shape = 'u32[]', space=smem, size = 0x4, offset = 0x4, fixed_abs, tag = 'smem constant byte address 0x4 - core index']
  #allocation1 [shape = 'u32[144,128]{1,0:T(1,128)}', space=vmem, size = 0x12000, scoped, tag = 'internal scratch']
  %s0 = inlined_call_operand.vmem [shape: bf16[2,6,6,128], index: 0, kind: input, shape index: {}]
  %s1 = inlined_call_operand.vmem [shape: bf16[9,1,1,128], index: 1, kind: input, shape index: {}]
  %s2 = inlined_call_operand.vmem [shape: bf16[1,1,128], index: 2, kind: input, shape index: {}]
  %s3 = inlined_call_operand.vmem [shape: bf16[128,128], index: 3, kind: input, shape index: {}]
  %s4 = inlined_call_operand.vmem [shape: f32[1,128], index: 4, kind: input, shape index: {}]
  %s5 = inlined_call_operand.vmem [shape: bf16[2,16,128], index: 5, kind: output, shape index: {}]
  %s6 = sld [smem:[#allocation0]]
  $region53: #{mobilenet_v1_forward.15} parent=0
    _
  %s8 = ssub.s32 1, %s6
  %s9 = scalar_select 0, %s8, %s6
  loop: start=0, step=1, limit=4
  $region2: #{mobilenet_v1_forward.15} parent=0 // loop_pre_header
    _
  $region3: #{mobilenet_v1_forward.15} parent=0 // loop_header
    %s11 = sphi 0, %s15
    %p12 = scmp.ge.s32.totalorder %s11, 4
    %s21 = sphi 0, %s23
    %s24 = sphi 0, %s21
    %s25 = sphi 0, %s24
    %s41 = sphi 0, %s25
    %s45 = sphi 0, %s45
    %s47 = sphi 0, %s45
    %s48 = sphi 0, %s47
    %s62 = sphi 0, %s48
    %s66 = sphi 0, %s66
    %s68 = sphi 0, %s66
    %s69 = sphi 0, %s68
    %s83 = sphi 0, %s69
    %s87 = sphi 0, %s87
    %s89 = sphi 0, %s87
    %s90 = sphi 0, %s89
    %s104 = sphi 0, %s90
    %s108 = sphi 0, %s108
    %s110 = sphi 0, %s108
    %s111 = sphi 0, %s110
    %s125 = sphi 0, %s111
    %s131 = sphi 0, %s133
    %s134 = sphi 0, %s131
    %s135 = sphi 0, %s134
    %s151 = sphi 0, %s135
  $region4: #{mobilenet_v1_forward.15} parent=0 // loop_header_branch
    %14 = sbr.rel (%p12) target = $region8
  $region5: #{mobilenet_v1_forward.15} parent=0 // loop_body
    %s16 = ssub.s32 %s11, 1
    %s17 = ssub.s32 %s11, 2
    %s18 = sadd.s32 %s11, 1
    %s19 = ssub.s32 %s11, %s18
    %p20 = scmp.eq.s32.totalorder %s19, 0
    %s22 = sadd.s32 %s21, 1
    %s23 = scalar_select %p20, %s21, %s22
    %p26 = pneg %p20
    %p27 = scmp.eq.s32.totalorder %s11, 1
    %p28 = por %p26, %p27
    %p29 = scmp.ne.s32.totalorder %s21, %s24
    %p30 = scmp.eq.s32.totalorder %s11, 0
    %p31 = por %p29, %p30
    %p32 = scmp.ne.s32.totalorder %s21, %s24
    %p33 = scmp.eq.s32.totalorder %s16, 1
    %p34 = por %p32, %p33
    %p35 = scmp.ne.s32.totalorder %s24, %s25
    %p36 = scmp.eq.s32.totalorder %s16, 0
    %p37 = por %p35, %p36
    %p38 = scmp.ne.s32.totalorder %s24, %s25
    %p39 = scmp.eq.s32.totalorder %s17, 1
    %p40 = por %p38, %p39
    %p42 = scmp.ne.s32.totalorder %s25, %s41
    %p43 = scmp.eq.s32.totalorder %s17, 0
    %p44 = por %p42, %p43
    %s46 = sadd.s32 %s45, 1
    %p49 = scmp.eq.s32.totalorder %s11, 1
    %p50 = scmp.ne.s32.totalorder %s45, %s47
    %p51 = scmp.eq.s32.totalorder %s11, 0
    %p52 = por %p50, %p51
    %p53 = scmp.ne.s32.totalorder %s45, %s47
    %p54 = scmp.eq.s32.totalorder %s16, 1
    %p55 = por %p53, %p54
    %p56 = scmp.ne.s32.totalorder %s47, %s48
    %p57 = scmp.eq.s32.totalorder %s16, 0
    %p58 = por %p56, %p57
    %p59 = scmp.ne.s32.totalorder %s47, %s48
    %p60 = scmp.eq.s32.totalorder %s17, 1
    %p61 = por %p59, %p60
    %p63 = scmp.ne.s32.totalorder %s48, %s62
    %p64 = scmp.eq.s32.totalorder %s17, 0
    %p65 = por %p63, %p64
    %s67 = sadd.s32 %s66, 1
    %p70 = scmp.eq.s32.totalorder %s11, 1
    %p71 = scmp.ne.s32.totalorder %s66, %s68
    %p72 = scmp.eq.s32.totalorder %s11, 0
    %p73 = por %p71, %p72
    %p74 = scmp.ne.s32.totalorder %s66, %s68
    %p75 = scmp.eq.s32.totalorder %s16, 1
    %p76 = por %p74, %p75
    %p77 = scmp.ne.s32.totalorder %s68, %s69
    %p78 = scmp.eq.s32.totalorder %s16, 0
    %p79 = por %p77, %p78
    %p80 = scmp.ne.s32.totalorder %s68, %s69
    %p81 = scmp.eq.s32.totalorder %s17, 1
    %p82 = por %p80, %p81
    %p84 = scmp.ne.s32.totalorder %s69, %s83
    %p85 = scmp.eq.s32.totalorder %s17, 0
    %p86 = por %p84, %p85
    %s88 = sadd.s32 %s87, 1
    %p91 = scmp.eq.s32.totalorder %s11, 1
    %p92 = scmp.ne.s32.totalorder %s87, %s89
    %p93 = scmp.eq.s32.totalorder %s11, 0
    %p94 = por %p92, %p93
    %p95 = scmp.ne.s32.totalorder %s87, %s89
    %p96 = scmp.eq.s32.totalorder %s16, 1
    %p97 = por %p95, %p96
    %p98 = scmp.ne.s32.totalorder %s89, %s90
    %p99 = scmp.eq.s32.totalorder %s16, 0
    %p100 = por %p98, %p99
    %p101 = scmp.ne.s32.totalorder %s89, %s90
    %p102 = scmp.eq.s32.totalorder %s17, 1
    %p103 = por %p101, %p102
    %p105 = scmp.ne.s32.totalorder %s90, %s104
    %p106 = scmp.eq.s32.totalorder %s17, 0
    %p107 = por %p105, %p106
    %s109 = sadd.s32 %s108, 1
    %p112 = scmp.eq.s32.totalorder %s11, 1
    %p113 = scmp.ne.s32.totalorder %s108, %s110
    %p114 = scmp.eq.s32.totalorder %s11, 0
    %p115 = por %p113, %p114
    %p116 = scmp.ne.s32.totalorder %s108, %s110
    %p117 = scmp.eq.s32.totalorder %s16, 1
    %p118 = por %p116, %p117
    %p119 = scmp.ne.s32.totalorder %s110, %s111
    %p120 = scmp.eq.s32.totalorder %s16, 0
    %p121 = por %p119, %p120
    %p122 = scmp.ne.s32.totalorder %s110, %s111
    %p123 = scmp.eq.s32.totalorder %s17, 1
    %p124 = por %p122, %p123
    %p126 = scmp.ne.s32.totalorder %s111, %s125
    %p127 = scmp.eq.s32.totalorder %s17, 0
    %p128 = por %p126, %p127
    %s129 = ssub.s32 %s11, %s18
    %p130 = scmp.eq.s32.totalorder %s129, 0
    %s132 = sadd.s32 %s131, 1
    %s133 = scalar_select %p130, %s131, %s132
    %p136 = pneg %p130
    %p137 = scmp.eq.s32.totalorder %s11, 1
    %p138 = por %p136, %p137
    %p139 = scmp.ne.s32.totalorder %s131, %s134
    %p140 = scmp.eq.s32.totalorder %s11, 0
    %p141 = por %p139, %p140
    %p142 = scmp.ne.s32.totalorder %s131, %s134
    %p143 = scmp.eq.s32.totalorder %s16, 1
    %p144 = por %p142, %p143
    %p145 = scmp.ne.s32.totalorder %s134, %s135
    %p146 = scmp.eq.s32.totalorder %s16, 0
    %p147 = por %p145, %p146
    %p148 = scmp.ne.s32.totalorder %s134, %s135
    %p149 = scmp.eq.s32.totalorder %s17, 1
    %p150 = por %p148, %p149
    %p152 = scmp.ne.s32.totalorder %s135, %s151
    %p153 = scmp.eq.s32.totalorder %s17, 0
    %p154 = por %p152, %p153
    %p155 = scmp.le.s32.totalorder 1, %s11
    %p156 = scmp.lt.s32.totalorder %s11, 3
    %p157 = pnand %p155, %p156
    %p158 = pneg %p157
    // Predicated region
    $region9: #{mobilenet_v1_forward.15} parent=5 // pred_check
      _
    $region10: #{mobilenet_v1_forward.15} parent=5 // pred_check_branch
      %160 = sbr.rel (%p157) target = $region12
    $region11: #{mobilenet_v1_forward.15} parent=5 // pred_region
      %s161 = ssub.s32 %s11, 1
      // Predicated region
      $region13: #{mobilenet_v1_forward.15} parent=11 // pred_check
        %p162 = pneg %p58
      $region14: #{mobilenet_v1_forward.15} parent=11 // pred_check_branch
        %164 = sbr.rel (%p162) target = $region16
      $region15: #{mobilenet_v1_forward.15} parent=11 // pred_region
        _
      $region16: #{mobilenet_v1_forward.15} parent=11 // pred_fallthru
        _
      // Predicated region
      $region17: #{mobilenet_v1_forward.15} parent=11 // pred_check
        %p165 = pneg %p79
      $region18: #{mobilenet_v1_forward.15} parent=11 // pred_check_branch
        %167 = sbr.rel (%p165) target = $region20
      $region19: #{mobilenet_v1_forward.15} parent=11 // pred_region
        _
      $region20: #{mobilenet_v1_forward.15} parent=11 // pred_fallthru
        _
      // Predicated region
      $region21: #{mobilenet_v1_forward.15} parent=11 // pred_check
        %p168 = pneg %p100
      $region22: #{mobilenet_v1_forward.15} parent=11 // pred_check_branch
        %170 = sbr.rel (%p168) target = $region24
      $region23: #{mobilenet_v1_forward.15} parent=11 // pred_region
        _
      $region24: #{mobilenet_v1_forward.15} parent=11 // pred_fallthru
        _
      // Predicated region
      $region25: #{mobilenet_v1_forward.15} parent=11 // pred_check
        %p171 = pneg %p121
      $region26: #{mobilenet_v1_forward.15} parent=11 // pred_check_branch
        %173 = sbr.rel (%p171) target = $region28
      $region27: #{mobilenet_v1_forward.15} parent=11 // pred_region
        _
      $region28: #{mobilenet_v1_forward.15} parent=11 // pred_fallthru
        _
    $region12: #{mobilenet_v1_forward.15} parent=5 // pred_fallthru
      _
    %p174 = scmp.lt.s32.totalorder %s11, 2
    // Predicated region
    $region29: #{mobilenet_v1_forward.15} parent=5 // pred_check
      %p175 = pneg %p174
    $region30: #{mobilenet_v1_forward.15} parent=5 // pred_check_branch
      %177 = sbr.rel (%p175) target = $region32
    $region31: #{mobilenet_v1_forward.15} parent=5 // pred_region
      // Predicated region
      $region33: #{mobilenet_v1_forward.15} parent=31 // pred_check
        %p178 = pneg %p31
      $region34: #{mobilenet_v1_forward.15} parent=31 // pred_check_branch
        %180 = sbr.rel (%p178) target = $region36
      $region35: #{mobilenet_v1_forward.15} parent=31 // pred_region
        %p181 = scmp.lt.s32.totalorder %s11, 1
        %s182 = scalar_select %p181, %s11, 1
        %s183 = smul.addr %s182, 6
        %s184 = smul.addr %s183, 4
        %s185 = scalar_lea.vmem %s0, %s184
      $region36: #{mobilenet_v1_forward.15} parent=31 // pred_fallthru
        _
    $region32: #{mobilenet_v1_forward.15} parent=5 // pred_fallthru
      _
    %p186 = scmp.le.s32.totalorder 1, %s11
    %p187 = scmp.lt.s32.totalorder %s11, 3
    %p188 = pnand %p186, %p187
    %p189 = pneg %p188
    // Predicated region
    $region37: #{mobilenet_v1_forward.15} parent=5 // pred_check
      _
    $region38: #{mobilenet_v1_forward.15} parent=5 // pred_check_branch
      %191 = sbr.rel (%p188) target = $region40
    $region39: #{mobilenet_v1_forward.15} parent=5 // pred_region
      %s192 = ssub.s32 %s11, 1
      %p193 = scmp.lt.s32.totalorder %s16, 1
      %s194 = scalar_select %p193, %s16, 1
      %s195 = smul.addr %s194, 6
      %s196 = smul.addr %s195, 4
      %s197 = scalar_lea.vmem %s0, %s196
      %p198 = pneg %p37
      %p199 = pneg %p34
      %p200 = pneg %p58
      %p201 = pneg %p55
      %p202 = pneg %p79
      %p203 = pneg %p76
      %p204 = pneg %p100
      %p205 = pneg %p97
      %p206 = pneg %p121
      %p207 = pneg %p118
      %p208 = pneg %p147
      %p209 = pneg %p144
      %p210 = scmp.lt.s32.totalorder %s16, 1
      %s211 = scalar_select %p210, %s16, 1
      %s212 = smul.addr %s211, 2
      %s213 = smul.addr %s212, 4
      %s214 = scalar_lea.vmem %s5, %s213
      %p215 = scmp.lt.s32.totalorder %s16, 1
      %s216 = scalar_select %p215, %s16, 1
      %s217 = smul.addr %s216, 6
      %s218 = smul.addr %s217, 4
      %s219 = scalar_lea.vmem %s0, %s218
      %p220 = scmp.lt.s32.totalorder %s16, 1
      %s221 = scalar_select %p220, %s16, 1
      %s222 = smul.addr %s221, 2
      %s223 = smul.addr %s222, 4
      %s224 = scalar_lea.vmem %s5, %s223
      %v227 = vld [vmem:[%s219] sm:$0x7]
      %v228 = vld [vmem:[%s219 + $0x4] sm:$0x7]
      %v229 = vld [vmem:[%s219 + $0x8] sm:$0x7]
      %v230 = vld [vmem:[%s219 + $0xc] sm:$0x7]
      %v231 = vld [vmem:[%s219 + $0x10] sm:$0x7]
      %v232 = vld [vmem:[%s219 + $0x14] sm:$0x7]
      %v233 = vld [vmem:[%s1] sm:$0x1]
      %v235 = vpack.i.b16 %v233, %v233
      %v237 = vlaneseq
      %v238 = vshrl.u32 %v237, 7
      %v239 = vsub.s32 0, %v238
      %v240 = vrot.slane %v235, %v239
      %v241 = vmul.bf16 %v227, %v240
      %v242 = vmul.bf16 %v228, %v240
      %v243 = vmul.bf16 %v229, %v240
      %v244 = vmul.bf16 %v230, %v240
      %s245 = scalar_lea.vmem %s1, 1
      %v246 = vld [vmem:[%s245] sm:$0x1]
      %v248 = vpack.i.b16 %v246, %v246
      %v250 = vlaneseq
      %v251 = vshrl.u32 %v250, 7
      %v252 = vsub.s32 0, %v251
      %v253 = vrot.slane %v248, %v252
      %v254 = vmul.bf16 %v227, %v253
      %v255 = vmul.bf16 %v228, %v253
      %v256 = vmul.bf16 %v229, %v253
      %v257 = vmul.bf16 %v230, %v253
      %v259 = vshrl.u32 %v254, 16
      %v261 = vrot.slane %v259, 4
      %v262 = vshll.u32 %v254, 16
      %v264 = vrot.slane %v262, 5
      %v265 = vor.u32 %v261, %v264
      %v266 = vrot.slane %v265, 4
      %v268 = vshrl.u32 %v255, 16
      %v270 = vrot.slane %v268, 4
      %v271 = vshll.u32 %v255, 16
      %v273 = vrot.slane %v271, 5
      %v274 = vor.u32 %v270, %v273
      %v275 = vrot.slane %v274, 4
      %v277 = vshrl.u32 %v256, 16
      %v279 = vrot.slane %v277, 4
      %v280 = vshll.u32 %v256, 16
      %v282 = vrot.slane %v280, 5
      %v283 = vor.u32 %v279, %v282
      %v284 = vrot.slane %v283, 4
      %v286 = vshrl.u32 %v257, 16
      %v288 = vrot.slane %v286, 4
      %v289 = vshll.u32 %v257, 16
      %v291 = vrot.slane %v289, 5
      %v292 = vor.u32 %v288, %v291
      %v293 = vrot.slane %v292, 4
      %v298 = vadd.bf16 %v241, %v266
      %v299 = vadd.bf16 %v242, %v275
      %v300 = vadd.bf16 %v243, %v284
      %v301 = vadd.bf16 %v244, %v293
      %s302 = scalar_lea.vmem %s1, 2
      %v303 = vld [vmem:[%s302] sm:$0x1]
      %v305 = vpack.i.b16 %v303, %v303
      %v307 = vlaneseq
      %v308 = vshrl.u32 %v307, 7
      %v309 = vsub.s32 0, %v308
      %v310 = vrot.slane %v305, %v309
      %v311 = vmul.bf16 %v227, %v310
      %v312 = vmul.bf16 %v228, %v310
      %v313 = vmul.bf16 %v229, %v310
      %v314 = vmul.bf16 %v230, %v310
      %v319 = vrot.slane %v311, 5
      %v320 = vrot.slane %v319, 4
      %v321 = vrot.slane %v312, 5
      %v322 = vrot.slane %v321, 4
      %v323 = vrot.slane %v313, 5
      %v324 = vrot.slane %v323, 4
      %v325 = vrot.slane %v314, 5
      %v326 = vrot.slane %v325, 4
      %v331 = vadd.bf16 %v298, %v320
      %v332 = vadd.bf16 %v299, %v322
      %v333 = vadd.bf16 %v300, %v324
      %v334 = vadd.bf16 %v301, %v326
      %s335 = scalar_lea.vmem %s1, 3
      %v336 = vld [vmem:[%s335] sm:$0x1]
      %v338 = vpack.i.b16 %v336, %v336
      %v340 = vlaneseq
      %v341 = vshrl.u32 %v340, 7
      %v342 = vsub.s32 0, %v341
      %v343 = vrot.slane %v338, %v342
      %v344 = vmul.bf16 %v228, %v343
      %v345 = vmul.bf16 %v229, %v343
      %v346 = vmul.bf16 %v230, %v343
      %v347 = vmul.bf16 %v231, %v343
      %v348 = vadd.bf16 %v331, %v344
      %v349 = vadd.bf16 %v332, %v345
      %v350 = vadd.bf16 %v333, %v346
      %v351 = vadd.bf16 %v334, %v347
      %s352 = scalar_lea.vmem %s1, 4
      %v353 = vld [vmem:[%s352] sm:$0x1]
      %v355 = vpack.i.b16 %v353, %v353
      %v357 = vlaneseq
      %v358 = vshrl.u32 %v357, 7
      %v359 = vsub.s32 0, %v358
      %v360 = vrot.slane %v355, %v359
      %v361 = vmul.bf16 %v228, %v360
      %v362 = vmul.bf16 %v229, %v360
      %v363 = vmul.bf16 %v230, %v360
      %v364 = vmul.bf16 %v231, %v360
      %v366 = vshrl.u32 %v361, 16
      %v368 = vrot.slane %v366, 4
      %v369 = vshll.u32 %v361, 16
      %v371 = vrot.slane %v369, 5
      %v372 = vor.u32 %v368, %v371
      %v373 = vrot.slane %v372, 4
      %v375 = vshrl.u32 %v362, 16
      %v377 = vrot.slane %v375, 4
      %v378 = vshll.u32 %v362, 16
      %v380 = vrot.slane %v378, 5
      %v381 = vor.u32 %v377, %v380
      %v382 = vrot.slane %v381, 4
      %v384 = vshrl.u32 %v363, 16
      %v386 = vrot.slane %v384, 4
      %v387 = vshll.u32 %v363, 16
      %v389 = vrot.slane %v387, 5
      %v390 = vor.u32 %v386, %v389
      %v391 = vrot.slane %v390, 4
      %v393 = vshrl.u32 %v364, 16
      %v395 = vrot.slane %v393, 4
      %v396 = vshll.u32 %v364, 16
      %v398 = vrot.slane %v396, 5
      %v399 = vor.u32 %v395, %v398
      %v400 = vrot.slane %v399, 4
      %v405 = vadd.bf16 %v348, %v373
      %v406 = vadd.bf16 %v349, %v382
      %v407 = vadd.bf16 %v350, %v391
      %v408 = vadd.bf16 %v351, %v400
      %s409 = scalar_lea.vmem %s1, 5
      %v410 = vld [vmem:[%s409] sm:$0x1]
      %v412 = vpack.i.b16 %v410, %v410
      %v414 = vlaneseq
      %v415 = vshrl.u32 %v414, 7
      %v416 = vsub.s32 0, %v415
      %v417 = vrot.slane %v412, %v416
      %v418 = vmul.bf16 %v228, %v417
      %v419 = vmul.bf16 %v229, %v417
      %v420 = vmul.bf16 %v230, %v417
      %v421 = vmul.bf16 %v231, %v417
      %v426 = vrot.slane %v418, 5
      %v427 = vrot.slane %v426, 4
      %v428 = vrot.slane %v419, 5
      %v429 = vrot.slane %v428, 4
      %v430 = vrot.slane %v420, 5
      %v431 = vrot.slane %v430, 4
      %v432 = vrot.slane %v421, 5
      %v433 = vrot.slane %v432, 4
      %v438 = vadd.bf16 %v405, %v427
      %v439 = vadd.bf16 %v406, %v429
      %v440 = vadd.bf16 %v407, %v431
      %v441 = vadd.bf16 %v408, %v433
      %s442 = scalar_lea.vmem %s1, 6
      %v443 = vld [vmem:[%s442] sm:$0x1]
      %v445 = vpack.i.b16 %v443, %v443
      %v447 = vlaneseq
      %v448 = vshrl.u32 %v447, 7
      %v449 = vsub.s32 0, %v448
      %v450 = vrot.slane %v445, %v449
      %v451 = vmul.bf16 %v229, %v450
      %v452 = vmul.bf16 %v230, %v450
      %v453 = vmul.bf16 %v231, %v450
      %v454 = vmul.bf16 %v232, %v450
      %v455 = vadd.bf16 %v438, %v451
      %v456 = vadd.bf16 %v439, %v452
      %v457 = vadd.bf16 %v440, %v453
      %v458 = vadd.bf16 %v441, %v454
      %s459 = scalar_lea.vmem %s1, 7
      %v460 = vld [vmem:[%s459] sm:$0x1]
      %v462 = vpack.i.b16 %v460, %v460
      %v464 = vlaneseq
      %v465 = vshrl.u32 %v464, 7
      %v466 = vsub.s32 0, %v465
      %v467 = vrot.slane %v462, %v466
      %v468 = vmul.bf16 %v229, %v467
      %v469 = vmul.bf16 %v230, %v467
      %v470 = vmul.bf16 %v231, %v467
      %v471 = vmul.bf16 %v232, %v467
      %v473 = vshrl.u32 %v468, 16
      %v475 = vrot.slane %v473, 4
      %v476 = vshll.u32 %v468, 16
      %v478 = vrot.slane %v476, 5
      %v479 = vor.u32 %v475, %v478
      %v480 = vrot.slane %v479, 4
      %v482 = vshrl.u32 %v469, 16
      %v484 = vrot.slane %v482, 4
      %v485 = vshll.u32 %v469, 16
      %v487 = vrot.slane %v485, 5
      %v488 = vor.u32 %v484, %v487
      %v489 = vrot.slane %v488, 4
      %v491 = vshrl.u32 %v470, 16
      %v493 = vrot.slane %v491, 4
      %v494 = vshll.u32 %v470, 16
      %v496 = vrot.slane %v494, 5
      %v497 = vor.u32 %v493, %v496
      %v498 = vrot.slane %v497, 4
      %v500 = vshrl.u32 %v471, 16
      %v502 = vrot.slane %v500, 4
      %v503 = vshll.u32 %v471, 16
      %v505 = vrot.slane %v503, 5
      %v506 = vor.u32 %v502, %v505
      %v507 = vrot.slane %v506, 4
      %v512 = vadd.bf16 %v455, %v480
      %v513 = vadd.bf16 %v456, %v489
      %v514 = vadd.bf16 %v457, %v498
      %v515 = vadd.bf16 %v458, %v507
      %s516 = scalar_lea.vmem %s1, 8
      %v517 = vld [vmem:[%s516] sm:$0x1]
      %v519 = vpack.i.b16 %v517, %v517
      %v521 = vlaneseq
      %v522 = vshrl.u32 %v521, 7
      %v523 = vsub.s32 0, %v522
      %v524 = vrot.slane %v519, %v523
      %v525 = vmul.bf16 %v229, %v524
      %v526 = vmul.bf16 %v230, %v524
      %v527 = vmul.bf16 %v231, %v524
      %v528 = vmul.bf16 %v232, %v524
      %v533 = vrot.slane %v525, 5
      %v534 = vrot.slane %v533, 4
      %v535 = vrot.slane %v526, 5
      %v536 = vrot.slane %v535, 4
      %v537 = vrot.slane %v527, 5
      %v538 = vrot.slane %v537, 4
      %v539 = vrot.slane %v528, 5
      %v540 = vrot.slane %v539, 4
      %v545 = vadd.bf16 %v512, %v534
      %v546 = vadd.bf16 %v513, %v536
      %v547 = vadd.bf16 %v514, %v538
      %v548 = vadd.bf16 %v515, %v540
      %v549 = vld [vmem:[%s2] sm:$0x1]
      %v551 = vpack.i.b16 %v549, %v549
      %v553 = vlaneseq
      %v554 = vshrl.u32 %v553, 7
      %v555 = vsub.s32 0, %v554
      %v556 = vrot.slane %v551, %v555
      %v557 = vadd.bf16 %v545, %v556
      %v558 = vadd.bf16 %v546, %v556
      %v559 = vadd.bf16 %v547, %v556
      %v560 = vadd.bf16 %v548, %v556
      %v561 = vmax.bf16 %v557, 0
      %v562 = vmax.bf16 %v558, 0
      %v563 = vmax.bf16 %v559, 0
      %v564 = vmax.bf16 %v560, 0
      %v565 = vmin.bf16 %v561, 1086341312
      %v566 = vmin.bf16 %v562, 1086341312
      %v567 = vmin.bf16 %v563, 1086341312
      %v568 = vmin.bf16 %v564, 1086341312
      %v569 = vld [vmem:[%s3] sm:$0xf]
      %v570 = vld [vmem:[%s3 + $0x4] sm:$0xf]
      %v571 = vld [vmem:[%s3 + $0x8] sm:$0xf]
      %v572 = vld [vmem:[%s3 + $0xc] sm:$0xf]
      %v573 = vld [vmem:[%s3 + $0x10] sm:$0xf]
      %v574 = vld [vmem:[%s3 + $0x14] sm:$0xf]
      %v575 = vld [vmem:[%s3 + $0x18] sm:$0xf]
      %v576 = vld [vmem:[%s3 + $0x1c] sm:$0xf]
      %v577 = vld [vmem:[%s3 + $0x20] sm:$0xf]
      %v578 = vld [vmem:[%s3 + $0x24] sm:$0xf]
      %v579 = vld [vmem:[%s3 + $0x28] sm:$0xf]
      %v580 = vld [vmem:[%s3 + $0x2c] sm:$0xf]
      %v581 = vld [vmem:[%s3 + $0x30] sm:$0xf]
      %v582 = vld [vmem:[%s3 + $0x34] sm:$0xf]
      %v583 = vld [vmem:[%s3 + $0x38] sm:$0xf]
      %v584 = vld [vmem:[%s3 + $0x3c] sm:$0xf]
      %v585 = vld [vmem:[%s4] sm:$0x1]
      %v587 = vlaneseq
      %v588 = vshrl.u32 %v587, 7
      %v589 = vsub.s32 0, %v588
      %v590 = vrot.slane %v585, %v589
      %v596 = vcombine.low %v565, %v566
      %v597 = vcombine.low %v567, %v568
      %v599 = vunpack.c.l.s4 1983009808
      %v600 = vunpack.c.0.s8 %v599
      %v601 = vlaneseq
      %v602 = vshrl.u32 %v601, 7
      %v603 = vsub.s32 %v600, %v602
      %v604 = vrot.slane %v596, %v603
      %v606 = vunpack.c.l.s4 1983009808
      %v607 = vunpack.c.0.s8 %v606
      %v608 = vlaneseq
      %v609 = vshrl.u32 %v608, 7
      %v610 = vsub.s32 %v607, %v609
      %v611 = vrot.slane %v597, %v610
      %v612 = vcombine.low %v604, %v611
      %v630 = vunpack.c.l.b16 %v569
      %v631 = vunpack.c.l.b16 %v570
      %v632 = vunpack.c.l.b16 %v571
      %v633 = vunpack.c.l.b16 %v572
      %v634 = vunpack.c.l.b16 %v573
      %v635 = vunpack.c.l.b16 %v574
      %v636 = vunpack.c.l.b16 %v575
      %v637 = vunpack.c.l.b16 %v576
      %v638 = vunpack.c.l.b16 %v577
      %v639 = vunpack.c.l.b16 %v578
      %v640 = vunpack.c.l.b16 %v579
      %v641 = vunpack.c.l.b16 %v580
      %v642 = vunpack.c.l.b16 %v581
      %v643 = vunpack.c.l.b16 %v582
      %v644 = vunpack.c.l.b16 %v583
      %v645 = vunpack.c.l.b16 %v584
      %v646 = vpack.c.b16 %v631, %v630
      %v647 = vpack.c.b16 %v633, %v632
      %v648 = vpack.c.b16 %v635, %v634
      %v649 = vpack.c.b16 %v637, %v636
      %v650 = vpack.c.b16 %v639, %v638
      %v651 = vpack.c.b16 %v641, %v640
      %v652 = vpack.c.b16 %v643, %v642
      %v653 = vpack.c.b16 %v645, %v644
      %662 = vmatprep.subr.bf16.mxu0 0
      %663 = vmatpush1.bf16.msra.mxu0 %v646
      %664 = vmatprep.subr.bf16.mxu0 0
      %665 = vmatpush1.bf16.msra.mxu0 %v647
      %666 = vmatprep.subr.bf16.mxu0 0
      %667 = vmatpush1.bf16.msra.mxu0 %v648
      %668 = vmatprep.subr.bf16.mxu0 0
      %669 = vmatpush1.bf16.msra.mxu0 %v649
      %670 = vmatprep.subr.bf16.mxu0 0
      %671 = vmatpush1.bf16.msra.mxu0 %v650
      %672 = vmatprep.subr.bf16.mxu0 0
      %673 = vmatpush1.bf16.msra.mxu0 %v651
      %674 = vmatprep.subr.bf16.mxu0 0
      %675 = vmatpush1.bf16.msra.mxu0 %v652
      %676 = vmatprep.subr.bf16.mxu0 0
      %677 = vmatpush1.bf16.msra.mxu0 %v653
      %678 = vmatprep.subr.bf16.mxu0 0
      %679 = vmatpush1.bf16.msra.mxu0 0
      %680 = vmatprep.subr.bf16.mxu0 0
      %681 = vmatpush1.bf16.msra.mxu0 0
      %682 = vmatprep.subr.bf16.mxu0 0
      %683 = vmatpush1.bf16.msra.mxu0 0
      %684 = vmatprep.subr.bf16.mxu0 0
      %685 = vmatpush1.bf16.msra.mxu0 0
      %686 = vmatprep.subr.bf16.mxu0 0
      %687 = vmatpush1.bf16.msra.mxu0 0
      %688 = vmatprep.subr.bf16.mxu0 0
      %689 = vmatpush1.bf16.msra.mxu0 0
      %690 = vmatprep.subr.bf16.mxu0 0
      %691 = vmatpush1.bf16.msra.mxu0 0
      %692 = vmatprep.subr.bf16.mxu0 0
      %693 = vmatpush1.bf16.msra.mxu0 0
      %694 = vmatprep.mubr.bf16.mxu0 0
      %695 = vmatmul.mubr.bf16.gmra.mrb[0].mxu0 %v612
      %v696 = vpop.f32.mrb[0].mxu0
      %v697 = vadd.f32 %v590, %v696
      %v698 = vpop.f32.mrb[0].mxu0
      %v699 = vpop.f32.mrb[0].mxu0
      %v700 = vadd.f32 %v590, %v699
      %v701 = vpop.f32.mrb[0].mxu0
      %702 = vdwg.mxu0
      %v703 = vmax.f32 %v697, 0.0
      %v704 = vmax.f32 %v700, 0.0
      %v705 = vmin.f32 %v703, 6.0
      %v706 = vmin.f32 %v704, 6.0
      %v707 = vpack.c.bf16 %v706, %v705
      %v709 = vunpack.c.l.b16 %v707
      %v710 = vunpack.c.h.b16 %v707
      %v711 = vpack.c.b16 %v709, %v709
      %v712 = vpack.c.b16 %v710, %v710
      %715 = vst [vmem:[%s224] sm:$0xf] %v711
      %716 = vst [vmem:[%s224 + $0x4] sm:$0xf] %v712
      %p717 = scmp.lt.s32.totalorder %s16, 1
      %s718 = scalar_select %p717, %s16, 1
      %s719 = smul.addr %s718, 2
      %s720 = smul.addr %s719, 4
      %s721 = scalar_lea.vmem %s5, %s720
      // Predicated region
      $region41: #{mobilenet_v1_forward.15} parent=39 // pred_check
        %p722 = pneg %p144
      $region42: #{mobilenet_v1_forward.15} parent=39 // pred_check_branch
        %724 = sbr.rel (%p722) target = $region44
      $region43: #{mobilenet_v1_forward.15} parent=39 // pred_region
        _
      $region44: #{mobilenet_v1_forward.15} parent=39 // pred_fallthru
        _
    $region40: #{mobilenet_v1_forward.15} parent=5 // pred_fallthru
      _
    %p725 = scmp.le.s32.totalorder 2, %s11
    // Predicated region
    $region45: #{mobilenet_v1_forward.15} parent=5 // pred_check
      %p726 = pneg %p725
    $region46: #{mobilenet_v1_forward.15} parent=5 // pred_check_branch
      %728 = sbr.rel (%p726) target = $region48
    $region47: #{mobilenet_v1_forward.15} parent=5 // pred_region
      %s729 = ssub.s32 %s11, 2
      // Predicated region
      $region49: #{mobilenet_v1_forward.15} parent=47 // pred_check
        %p730 = pneg %p150
      $region50: #{mobilenet_v1_forward.15} parent=47 // pred_check_branch
        %732 = sbr.rel (%p730) target = $region52
      $region51: #{mobilenet_v1_forward.15} parent=47 // pred_region
        %p733 = scmp.lt.s32.totalorder %s17, 1
        %s734 = scalar_select %p733, %s17, 1
        %s735 = smul.addr %s734, 2
        %s736 = smul.addr %s735, 4
        %s737 = scalar_lea.vmem %s5, %s736
      $region52: #{mobilenet_v1_forward.15} parent=47 // pred_fallthru
        _
    $region48: #{mobilenet_v1_forward.15} parent=5 // pred_fallthru
      _
  $region6: #{mobilenet_v1_forward.15} parent=0 // loop_footer
    %s15 = sadd.s32 1, %s11
  $region7: #{mobilenet_v1_forward.15} parent=0 // loop_footer_branch
    %10 = sbr.rel target = $region3
  $region8: #{mobilenet_v1_forward.15} parent=0 // loop_exit
    _

// kernel: mobilenet_v1_forward.16
$region0: #{mobilenet_v1_forward.16}
  #allocation0 [shape = 'u32[]', space=smem, size = 0x4, offset = 0x4, fixed_abs, tag = 'smem constant byte address 0x4 - core index']
  #allocation1 [shape = 'u32[144,128]{1,0:T(1,128)}', space=vmem, size = 0x12000, scoped, tag = 'internal scratch']
  %s0 = inlined_call_operand.vmem [shape: bf16[2,4,3,3,128], index: 0, kind: input, shape index: {}]
  %s1 = inlined_call_operand.vmem [shape: bf16[9,1,1,128], index: 1, kind: input, shape index: {}]
  %s2 = inlined_call_operand.vmem [shape: bf16[1,1,128], index: 2, kind: input, shape index: {}]
  %s3 = inlined_call_operand.vmem [shape: bf16[128,256], index: 3, kind: input, shape index: {}]
  %s4 = inlined_call_operand.vmem [shape: f32[1,256], index: 4, kind: input, shape index: {}]
  %s5 = inlined_call_operand.vmem [shape: bf16[2,4,256], index: 5, kind: output, shape index: {}]
  %s6 = sld [smem:[#allocation0]]
  $region53: #{mobilenet_v1_forward.16} parent=0
    _
  %s8 = ssub.s32 1, %s6
  %s9 = scalar_select 0, %s8, %s6
  loop: start=0, step=1, limit=4
  $region2: #{mobilenet_v1_forward.16} parent=0 // loop_pre_header
    _
  $region3: #{mobilenet_v1_forward.16} parent=0 // loop_header
    %s11 = sphi 0, %s15
    %p12 = scmp.ge.s32.totalorder %s11, 4
    %s21 = sphi 0, %s23
    %s24 = sphi 0, %s21
    %s25 = sphi 0, %s24
    %s41 = sphi 0, %s25
    %s45 = sphi 0, %s45
    %s47 = sphi 0, %s45
    %s48 = sphi 0, %s47
    %s62 = sphi 0, %s48
    %s66 = sphi 0, %s66
    %s68 = sphi 0, %s66
    %s69 = sphi 0, %s68
    %s83 = sphi 0, %s69
    %s87 = sphi 0, %s87
    %s89 = sphi 0, %s87
    %s90 = sphi 0, %s89
    %s104 = sphi 0, %s90
    %s108 = sphi 0, %s108
    %s110 = sphi 0, %s108
    %s111 = sphi 0, %s110
    %s125 = sphi 0, %s111
    %s131 = sphi 0, %s133
    %s134 = sphi 0, %s131
    %s135 = sphi 0, %s134
    %s151 = sphi 0, %s135
  $region4: #{mobilenet_v1_forward.16} parent=0 // loop_header_branch
    %14 = sbr.rel (%p12) target = $region8
  $region5: #{mobilenet_v1_forward.16} parent=0 // loop_body
    %s16 = ssub.s32 %s11, 1
    %s17 = ssub.s32 %s11, 2
    %s18 = sadd.s32 %s11, 1
    %s19 = ssub.s32 %s11, %s18
    %p20 = scmp.eq.s32.totalorder %s19, 0
    %s22 = sadd.s32 %s21, 1
    %s23 = scalar_select %p20, %s21, %s22
    %p26 = pneg %p20
    %p27 = scmp.eq.s32.totalorder %s11, 1
    %p28 = por %p26, %p27
    %p29 = scmp.ne.s32.totalorder %s21, %s24
    %p30 = scmp.eq.s32.totalorder %s11, 0
    %p31 = por %p29, %p30
    %p32 = scmp.ne.s32.totalorder %s21, %s24
    %p33 = scmp.eq.s32.totalorder %s16, 1
    %p34 = por %p32, %p33
    %p35 = scmp.ne.s32.totalorder %s24, %s25
    %p36 = scmp.eq.s32.totalorder %s16, 0
    %p37 = por %p35, %p36
    %p38 = scmp.ne.s32.totalorder %s24, %s25
    %p39 = scmp.eq.s32.totalorder %s17, 1
    %p40 = por %p38, %p39
    %p42 = scmp.ne.s32.totalorder %s25, %s41
    %p43 = scmp.eq.s32.totalorder %s17, 0
    %p44 = por %p42, %p43
    %s46 = sadd.s32 %s45, 1
    %p49 = scmp.eq.s32.totalorder %s11, 1
    %p50 = scmp.ne.s32.totalorder %s45, %s47
    %p51 = scmp.eq.s32.totalorder %s11, 0
    %p52 = por %p50, %p51
    %p53 = scmp.ne.s32.totalorder %s45, %s47
    %p54 = scmp.eq.s32.totalorder %s16, 1
    %p55 = por %p53, %p54
    %p56 = scmp.ne.s32.totalorder %s47, %s48
    %p57 = scmp.eq.s32.totalorder %s16, 0
    %p58 = por %p56, %p57
    %p59 = scmp.ne.s32.totalorder %s47, %s48
    %p60 = scmp.eq.s32.totalorder %s17, 1
    %p61 = por %p59, %p60
    %p63 = scmp.ne.s32.totalorder %s48, %s62
    %p64 = scmp.eq.s32.totalorder %s17, 0
    %p65 = por %p63, %p64
    %s67 = sadd.s32 %s66, 1
    %p70 = scmp.eq.s32.totalorder %s11, 1
    %p71 = scmp.ne.s32.totalorder %s66, %s68
    %p72 = scmp.eq.s32.totalorder %s11, 0
    %p73 = por %p71, %p72
    %p74 = scmp.ne.s32.totalorder %s66, %s68
    %p75 = scmp.eq.s32.totalorder %s16, 1
    %p76 = por %p74, %p75
    %p77 = scmp.ne.s32.totalorder %s68, %s69
    %p78 = scmp.eq.s32.totalorder %s16, 0
    %p79 = por %p77, %p78
    %p80 = scmp.ne.s32.totalorder %s68, %s69
    %p81 = scmp.eq.s32.totalorder %s17, 1
    %p82 = por %p80, %p81
    %p84 = scmp.ne.s32.totalorder %s69, %s83
    %p85 = scmp.eq.s32.totalorder %s17, 0
    %p86 = por %p84, %p85
    %s88 = sadd.s32 %s87, 1
    %p91 = scmp.eq.s32.totalorder %s11, 1
    %p92 = scmp.ne.s32.totalorder %s87, %s89
    %p93 = scmp.eq.s32.totalorder %s11, 0
    %p94 = por %p92, %p93
    %p95 = scmp.ne.s32.totalorder %s87, %s89
    %p96 = scmp.eq.s32.totalorder %s16, 1
    %p97 = por %p95, %p96
    %p98 = scmp.ne.s32.totalorder %s89, %s90
    %p99 = scmp.eq.s32.totalorder %s16, 0
    %p100 = por %p98, %p99
    %p101 = scmp.ne.s32.totalorder %s89, %s90
    %p102 = scmp.eq.s32.totalorder %s17, 1
    %p103 = por %p101, %p102
    %p105 = scmp.ne.s32.totalorder %s90, %s104
    %p106 = scmp.eq.s32.totalorder %s17, 0
    %p107 = por %p105, %p106
    %s109 = sadd.s32 %s108, 1
    %p112 = scmp.eq.s32.totalorder %s11, 1
    %p113 = scmp.ne.s32.totalorder %s108, %s110
    %p114 = scmp.eq.s32.totalorder %s11, 0
    %p115 = por %p113, %p114
    %p116 = scmp.ne.s32.totalorder %s108, %s110
    %p117 = scmp.eq.s32.totalorder %s16, 1
    %p118 = por %p116, %p117
    %p119 = scmp.ne.s32.totalorder %s110, %s111
    %p120 = scmp.eq.s32.totalorder %s16, 0
    %p121 = por %p119, %p120
    %p122 = scmp.ne.s32.totalorder %s110, %s111
    %p123 = scmp.eq.s32.totalorder %s17, 1
    %p124 = por %p122, %p123
    %p126 = scmp.ne.s32.totalorder %s111, %s125
    %p127 = scmp.eq.s32.totalorder %s17, 0
    %p128 = por %p126, %p127
    %s129 = ssub.s32 %s11, %s18
    %p130 = scmp.eq.s32.totalorder %s129, 0
    %s132 = sadd.s32 %s131, 1
    %s133 = scalar_select %p130, %s131, %s132
    %p136 = pneg %p130
    %p137 = scmp.eq.s32.totalorder %s11, 1
    %p138 = por %p136, %p137
    %p139 = scmp.ne.s32.totalorder %s131, %s134
    %p140 = scmp.eq.s32.totalorder %s11, 0
    %p141 = por %p139, %p140
    %p142 = scmp.ne.s32.totalorder %s131, %s134
    %p143 = scmp.eq.s32.totalorder %s16, 1
    %p144 = por %p142, %p143
    %p145 = scmp.ne.s32.totalorder %s134, %s135
    %p146 = scmp.eq.s32.totalorder %s16, 0
    %p147 = por %p145, %p146
    %p148 = scmp.ne.s32.totalorder %s134, %s135
    %p149 = scmp.eq.s32.totalorder %s17, 1
    %p150 = por %p148, %p149
    %p152 = scmp.ne.s32.totalorder %s135, %s151
    %p153 = scmp.eq.s32.totalorder %s17, 0
    %p154 = por %p152, %p153
    %p155 = scmp.le.s32.totalorder 1, %s11
    %p156 = scmp.lt.s32.totalorder %s11, 3
    %p157 = pnand %p155, %p156
    %p158 = pneg %p157
    // Predicated region
    $region9: #{mobilenet_v1_forward.16} parent=5 // pred_check
      _
    $region10: #{mobilenet_v1_forward.16} parent=5 // pred_check_branch
      %160 = sbr.rel (%p157) target = $region12
    $region11: #{mobilenet_v1_forward.16} parent=5 // pred_region
      %s161 = ssub.s32 %s11, 1
      // Predicated region
      $region13: #{mobilenet_v1_forward.16} parent=11 // pred_check
        %p162 = pneg %p58
      $region14: #{mobilenet_v1_forward.16} parent=11 // pred_check_branch
        %164 = sbr.rel (%p162) target = $region16
      $region15: #{mobilenet_v1_forward.16} parent=11 // pred_region
        _
      $region16: #{mobilenet_v1_forward.16} parent=11 // pred_fallthru
        _
      // Predicated region
      $region17: #{mobilenet_v1_forward.16} parent=11 // pred_check
        %p165 = pneg %p79
      $region18: #{mobilenet_v1_forward.16} parent=11 // pred_check_branch
        %167 = sbr.rel (%p165) target = $region20
      $region19: #{mobilenet_v1_forward.16} parent=11 // pred_region
        _
      $region20: #{mobilenet_v1_forward.16} parent=11 // pred_fallthru
        _
      // Predicated region
      $region21: #{mobilenet_v1_forward.16} parent=11 // pred_check
        %p168 = pneg %p100
      $region22: #{mobilenet_v1_forward.16} parent=11 // pred_check_branch
        %170 = sbr.rel (%p168) target = $region24
      $region23: #{mobilenet_v1_forward.16} parent=11 // pred_region
        _
      $region24: #{mobilenet_v1_forward.16} parent=11 // pred_fallthru
        _
      // Predicated region
      $region25: #{mobilenet_v1_forward.16} parent=11 // pred_check
        %p171 = pneg %p121
      $region26: #{mobilenet_v1_forward.16} parent=11 // pred_check_branch
        %173 = sbr.rel (%p171) target = $region28
      $region27: #{mobilenet_v1_forward.16} parent=11 // pred_region
        _
      $region28: #{mobilenet_v1_forward.16} parent=11 // pred_fallthru
        _
    $region12: #{mobilenet_v1_forward.16} parent=5 // pred_fallthru
      _
    %p174 = scmp.lt.s32.totalorder %s11, 2
    // Predicated region
    $region29: #{mobilenet_v1_forward.16} parent=5 // pred_check
      %p175 = pneg %p174
    $region30: #{mobilenet_v1_forward.16} parent=5 // pred_check_branch
      %177 = sbr.rel (%p175) target = $region32
    $region31: #{mobilenet_v1_forward.16} parent=5 // pred_region
      // Predicated region
      $region33: #{mobilenet_v1_forward.16} parent=31 // pred_check
        %p178 = pneg %p31
      $region34: #{mobilenet_v1_forward.16} parent=31 // pred_check_branch
        %180 = sbr.rel (%p178) target = $region36
      $region35: #{mobilenet_v1_forward.16} parent=31 // pred_region
        %p181 = scmp.lt.s32.totalorder %s11, 1
        %s182 = scalar_select %p181, %s11, 1
        %s183 = smul.addr %s182, 12
        %s184 = smul.addr %s183, 2
        %s185 = scalar_lea.vmem %s0, %s184
      $region36: #{mobilenet_v1_forward.16} parent=31 // pred_fallthru
        _
    $region32: #{mobilenet_v1_forward.16} parent=5 // pred_fallthru
      _
    %p186 = scmp.le.s32.totalorder 1, %s11
    %p187 = scmp.lt.s32.totalorder %s11, 3
    %p188 = pnand %p186, %p187
    %p189 = pneg %p188
    // Predicated region
    $region37: #{mobilenet_v1_forward.16} parent=5 // pred_check
      _
    $region38: #{mobilenet_v1_forward.16} parent=5 // pred_check_branch
      %191 = sbr.rel (%p188) target = $region40
    $region39: #{mobilenet_v1_forward.16} parent=5 // pred_region
      %s192 = ssub.s32 %s11, 1
      %p193 = scmp.lt.s32.totalorder %s16, 1
      %s194 = scalar_select %p193, %s16, 1
      %s195 = smul.addr %s194, 12
      %s196 = smul.addr %s195, 2
      %s197 = scalar_lea.vmem %s0, %s196
      %p198 = pneg %p37
      %p199 = pneg %p34
      %p200 = pneg %p58
      %p201 = pneg %p55
      %p202 = pneg %p79
      %p203 = pneg %p76
      %p204 = pneg %p100
      %p205 = pneg %p97
      %p206 = pneg %p121
      %p207 = pneg %p118
      %p208 = pneg %p147
      %p209 = pneg %p144
      %p210 = scmp.lt.s32.totalorder %s16, 1
      %s211 = scalar_select %p210, %s16, 1
      %s212 = smul.addr %s211, 2
      %s213 = smul.addr %s212, 2
      %s214 = scalar_lea.vmem %s5, %s213
      %p215 = scmp.lt.s32.totalorder %s16, 1
      %s216 = scalar_select %p215, %s16, 1
      %s217 = smul.addr %s216, 12
      %s218 = smul.addr %s217, 2
      %s219 = scalar_lea.vmem %s0, %s218
      %p220 = scmp.lt.s32.totalorder %s16, 1
      %s221 = scalar_select %p220, %s16, 1
      %s222 = smul.addr %s221, 2
      %s223 = smul.addr %s222, 2
      %s224 = scalar_lea.vmem %s5, %s223
      %v227 = vld [vmem:[%s219] sm:$0x3]
      %v228 = vld [vmem:[%s219 + $0x2] sm:$0x3]
      %v229 = vld [vmem:[%s219 + $0x4] sm:$0x3]
      %v230 = vld [vmem:[%s219 + $0x6] sm:$0x3]
      %v231 = vld [vmem:[%s219 + $0x8] sm:$0x3]
      %v232 = vld [vmem:[%s219 + $0xa] sm:$0x3]
      %v233 = vld [vmem:[%s219 + $0xc] sm:$0x3]
      %v234 = vld [vmem:[%s219 + $0xe] sm:$0x3]
      %v235 = vld [vmem:[%s219 + $0x12] sm:$0x3]
      %v236 = vld [vmem:[%s219 + $0x14] sm:$0x3]
      %v237 = vld [vmem:[%s1] sm:$0x1]
      %v239 = vpack.i.b16 %v237, %v237
      %v241 = vlaneseq
      %v242 = vshrl.u32 %v241, 7
      %v243 = vsub.s32 0, %v242
      %v244 = vrot.slane %v239, %v243
      %v245 = vmul.bf16 %v227, %v244
      %v246 = vmul.bf16 %v228, %v244
      %s247 = scalar_lea.vmem %s1, 1
      %v248 = vld [vmem:[%s247] sm:$0x1]
      %v250 = vpack.i.b16 %v248, %v248
      %v252 = vlaneseq
      %v253 = vshrl.u32 %v252, 7
      %v254 = vsub.s32 0, %v253
      %v255 = vrot.slane %v250, %v254
      %v256 = vmul.bf16 %v230, %v255
      %v257 = vmul.bf16 %v231, %v255
      %v258 = vadd.bf16 %v245, %v256
      %v259 = vadd.bf16 %v246, %v257
      %s260 = scalar_lea.vmem %s1, 2
      %v261 = vld [vmem:[%s260] sm:$0x1]
      %v263 = vpack.i.b16 %v261, %v261
      %v265 = vlaneseq
      %v266 = vshrl.u32 %v265, 7
      %v267 = vsub.s32 0, %v266
      %v268 = vrot.slane %v263, %v267
      %v269 = vmul.bf16 %v227, %v268
      %v270 = vmul.bf16 %v228, %v268
      %v272 = vshrl.u32 %v269, 16
      %v274 = vrot.slane %v272, 6
      %v275 = vshll.u32 %v269, 16
      %v277 = vrot.slane %v275, 7
      %v278 = vor.u32 %v274, %v277
      %v279 = vrot.slane %v278, 2
      %v281 = vshrl.u32 %v270, 16
      %v283 = vrot.slane %v281, 6
      %v284 = vshll.u32 %v270, 16
      %v286 = vrot.slane %v284, 7
      %v287 = vor.u32 %v283, %v286
      %v288 = vrot.slane %v287, 2
      %v291 = vadd.bf16 %v258, %v279
      %v292 = vadd.bf16 %v259, %v288
      %s293 = scalar_lea.vmem %s1, 3
      %v294 = vld [vmem:[%s293] sm:$0x1]
      %v296 = vpack.i.b16 %v294, %v294
      %v298 = vlaneseq
      %v299 = vshrl.u32 %v298, 7
      %v300 = vsub.s32 0, %v299
      %v301 = vrot.slane %v296, %v300
      %v302 = vmul.bf16 %v233, %v301
      %v303 = vmul.bf16 %v234, %v301
      %v304 = vadd.bf16 %v291, %v302
      %v305 = vadd.bf16 %v292, %v303
      %s306 = scalar_lea.vmem %s1, 4
      %v307 = vld [vmem:[%s306] sm:$0x1]
      %v309 = vpack.i.b16 %v307, %v307
      %v311 = vlaneseq
      %v312 = vshrl.u32 %v311, 7
      %v313 = vsub.s32 0, %v312
      %v314 = vrot.slane %v309, %v313
      %v315 = vmul.bf16 %v235, %v314
      %v316 = vmul.bf16 %v236, %v314
      %v317 = vadd.bf16 %v304, %v315
      %v318 = vadd.bf16 %v305, %v316
      %s319 = scalar_lea.vmem %s1, 5
      %v320 = vld [vmem:[%s319] sm:$0x1]
      %v322 = vpack.i.b16 %v320, %v320
      %v324 = vlaneseq
      %v325 = vshrl.u32 %v324, 7
      %v326 = vsub.s32 0, %v325
      %v327 = vrot.slane %v322, %v326
      %v328 = vmul.bf16 %v233, %v327
      %v329 = vmul.bf16 %v234, %v327
      %v331 = vshrl.u32 %v328, 16
      %v333 = vrot.slane %v331, 6
      %v334 = vshll.u32 %v328, 16
      %v336 = vrot.slane %v334, 7
      %v337 = vor.u32 %v333, %v336
      %v338 = vrot.slane %v337, 2
      %v340 = vshrl.u32 %v329, 16
      %v342 = vrot.slane %v340, 6
      %v343 = vshll.u32 %v329, 16
      %v345 = vrot.slane %v343, 7
      %v346 = vor.u32 %v342, %v345
      %v347 = vrot.slane %v346, 2
      %v350 = vadd.bf16 %v317, %v338
      %v351 = vadd.bf16 %v318, %v347
      %s352 = scalar_lea.vmem %s1, 6
      %v353 = vld [vmem:[%s352] sm:$0x1]
      %v355 = vpack.i.b16 %v353, %v353
      %v357 = vlaneseq
      %v358 = vshrl.u32 %v357, 7
      %v359 = vsub.s32 0, %v358
      %v360 = vrot.slane %v355, %v359
      %v361 = vmul.bf16 %v228, %v360
      %v362 = vmul.bf16 %v229, %v360
      %v363 = vadd.bf16 %v350, %v361
      %v364 = vadd.bf16 %v351, %v362
      %s365 = scalar_lea.vmem %s1, 7
      %v366 = vld [vmem:[%s365] sm:$0x1]
      %v368 = vpack.i.b16 %v366, %v366
      %v370 = vlaneseq
      %v371 = vshrl.u32 %v370, 7
      %v372 = vsub.s32 0, %v371
      %v373 = vrot.slane %v368, %v372
      %v374 = vmul.bf16 %v231, %v373
      %v375 = vmul.bf16 %v232, %v373
      %v376 = vadd.bf16 %v363, %v374
      %v377 = vadd.bf16 %v364, %v375
      %s378 = scalar_lea.vmem %s1, 8
      %v379 = vld [vmem:[%s378] sm:$0x1]
      %v381 = vpack.i.b16 %v379, %v379
      %v383 = vlaneseq
      %v384 = vshrl.u32 %v383, 7
      %v385 = vsub.s32 0, %v384
      %v386 = vrot.slane %v381, %v385
      %v387 = vmul.bf16 %v228, %v386
      %v388 = vmul.bf16 %v229, %v386
      %v390 = vshrl.u32 %v387, 16
      %v392 = vrot.slane %v390, 6
      %v393 = vshll.u32 %v387, 16
      %v395 = vrot.slane %v393, 7
      %v396 = vor.u32 %v392, %v395
      %v397 = vrot.slane %v396, 2
      %v399 = vshrl.u32 %v388, 16
      %v401 = vrot.slane %v399, 6
      %v402 = vshll.u32 %v388, 16
      %v404 = vrot.slane %v402, 7
      %v405 = vor.u32 %v401, %v404
      %v406 = vrot.slane %v405, 2
      %v409 = vadd.bf16 %v376, %v397
      %v410 = vadd.bf16 %v377, %v406
      %v411 = vld [vmem:[%s2] sm:$0x1]
      %v413 = vpack.i.b16 %v411, %v411
      %v415 = vlaneseq
      %v416 = vshrl.u32 %v415, 7
      %v417 = vsub.s32 0, %v416
      %v418 = vrot.slane %v413, %v417
      %v419 = vadd.bf16 %v409, %v418
      %v420 = vadd.bf16 %v410, %v418
      %v421 = vmax.bf16 %v419, 0
      %v422 = vmax.bf16 %v420, 0
      %v423 = vmin.bf16 %v421, 1086341312
      %v424 = vmin.bf16 %v422, 1086341312
      %v425 = vld [vmem:[%s3] sm:$0xff]
      %v426 = vld [vmem:[%s3 + $0x8] sm:$0xff]
      %v427 = vld [vmem:[%s3 + $0x10] sm:$0xff]
      %v428 = vld [vmem:[%s3 + $0x18] sm:$0xff]
      %v429 = vld [vmem:[%s3 + $0x20] sm:$0xff]
      %v430 = vld [vmem:[%s3 + $0x28] sm:$0xff]
      %v431 = vld [vmem:[%s3 + $0x30] sm:$0xff]
      %v432 = vld [vmem:[%s3 + $0x38] sm:$0xff]
      %v433 = vld [vmem:[%s3 + $0x40] sm:$0xff]
      %v434 = vld [vmem:[%s3 + $0x48] sm:$0xff]
      %v435 = vld [vmem:[%s3 + $0x50] sm:$0xff]
      %v436 = vld [vmem:[%s3 + $0x58] sm:$0xff]
      %v437 = vld [vmem:[%s3 + $0x60] sm:$0xff]
      %v438 = vld [vmem:[%s3 + $0x68] sm:$0xff]
      %v439 = vld [vmem:[%s3 + $0x70] sm:$0xff]
      %v440 = vld [vmem:[%s3 + $0x78] sm:$0xff]
      %v441 = vld [vmem:[%s4] sm:$0x3]
      %v443 = vlaneseq
      %v444 = vshrl.u32 %v443, 7
      %v445 = vsub.s32 0, %v444
      %v446 = vrot.slane %v441, %v445
      %v447 = vlaneseq
      %v448 = vshrl.u32 %v447, 7
      %v449 = vsub.s32 1, %v448
      %v450 = vrot.slane %v441, %v449
      %v455 = vcombine.low %v423, %v424
      %v457 = vunpack.c.l.s4 1966171168
      %v458 = vunpack.c.0.s8 %v457
      %v459 = vlaneseq
      %v460 = vshrl.u32 %v459, 7
      %v461 = vsub.s32 %v458, %v460
      %v462 = vrot.slane %v455, %v461
      %v464 = vunpack.c.l.s4 1966171168
      %v465 = vunpack.c.0.s8 %v464
      %v466 = vlaneseq
      %v467 = vshrl.u32 %v466, 7
      %v468 = vsub.s32 %v465, %v467
      %v469 = vrot.slane %v462, %v468
      %v487 = vunpack.c.l.b16 %v425
      %v488 = vunpack.c.h.b16 %v425
      %v489 = vunpack.c.l.b16 %v426
      %v490 = vunpack.c.h.b16 %v426
      %v491 = vunpack.c.l.b16 %v427
      %v492 = vunpack.c.h.b16 %v427
      %v493 = vunpack.c.l.b16 %v428
      %v494 = vunpack.c.h.b16 %v428
      %v495 = vunpack.c.l.b16 %v429
      %v496 = vunpack.c.h.b16 %v429
      %v497 = vunpack.c.l.b16 %v430
      %v498 = vunpack.c.h.b16 %v430
      %v499 = vunpack.c.l.b16 %v431
      %v500 = vunpack.c.h.b16 %v431
      %v501 = vunpack.c.l.b16 %v432
      %v502 = vunpack.c.h.b16 %v432
      %v503 = vunpack.c.l.b16 %v433
      %v504 = vunpack.c.h.b16 %v433
      %v505 = vunpack.c.l.b16 %v434
      %v506 = vunpack.c.h.b16 %v434
      %v507 = vunpack.c.l.b16 %v435
      %v508 = vunpack.c.h.b16 %v435
      %v509 = vunpack.c.l.b16 %v436
      %v510 = vunpack.c.h.b16 %v436
      %v511 = vunpack.c.l.b16 %v437
      %v512 = vunpack.c.h.b16 %v437
      %v513 = vunpack.c.l.b16 %v438
      %v514 = vunpack.c.h.b16 %v438
      %v515 = vunpack.c.l.b16 %v439
      %v516 = vunpack.c.h.b16 %v439
      %v517 = vunpack.c.l.b16 %v440
      %v518 = vunpack.c.h.b16 %v440
      %v519 = vpack.c.b16 %v489, %v487
      %v520 = vpack.c.b16 %v490, %v488
      %v521 = vpack.c.b16 %v493, %v491
      %v522 = vpack.c.b16 %v494, %v492
      %v523 = vpack.c.b16 %v497, %v495
      %v524 = vpack.c.b16 %v498, %v496
      %v525 = vpack.c.b16 %v501, %v499
      %v526 = vpack.c.b16 %v502, %v500
      %v527 = vpack.c.b16 %v505, %v503
      %v528 = vpack.c.b16 %v506, %v504
      %v529 = vpack.c.b16 %v509, %v507
      %v530 = vpack.c.b16 %v510, %v508
      %v531 = vpack.c.b16 %v513, %v511
      %v532 = vpack.c.b16 %v514, %v512
      %v533 = vpack.c.b16 %v517, %v515
      %v534 = vpack.c.b16 %v518, %v516
      %551 = vmatprep.subr.bf16.mxu0 %v520
      %552 = vmatpush1.bf16.msra.mxu0 %v519
      %553 = vmatprep.subr.bf16.mxu0 %v522
      %554 = vmatpush1.bf16.msra.mxu0 %v521
      %555 = vmatprep.subr.bf16.mxu0 %v524
      %556 = vmatpush1.bf16.msra.mxu0 %v523
      %557 = vmatprep.subr.bf16.mxu0 %v526
      %558 = vmatpush1.bf16.msra.mxu0 %v525
      %559 = vmatprep.subr.bf16.mxu0 %v528
      %560 = vmatpush1.bf16.msra.mxu0 %v527
      %561 = vmatprep.subr.bf16.mxu0 %v530
      %562 = vmatpush1.bf16.msra.mxu0 %v529
      %563 = vmatprep.subr.bf16.mxu0 %v532
      %564 = vmatpush1.bf16.msra.mxu0 %v531
      %565 = vmatprep.subr.bf16.mxu0 %v534
      %566 = vmatpush1.bf16.msra.mxu0 %v533
      %567 = vmatprep.subr.bf16.mxu0 0
      %568 = vmatpush1.bf16.msra.mxu0 0
      %569 = vmatprep.subr.bf16.mxu0 0
      %570 = vmatpush1.bf16.msra.mxu0 0
      %571 = vmatprep.subr.bf16.mxu0 0
      %572 = vmatpush1.bf16.msra.mxu0 0
      %573 = vmatprep.subr.bf16.mxu0 0
      %574 = vmatpush1.bf16.msra.mxu0 0
      %575 = vmatprep.subr.bf16.mxu0 0
      %576 = vmatpush1.bf16.msra.mxu0 0
      %577 = vmatprep.subr.bf16.mxu0 0
      %578 = vmatpush1.bf16.msra.mxu0 0
      %579 = vmatprep.subr.bf16.mxu0 0
      %580 = vmatpush1.bf16.msra.mxu0 0
      %581 = vmatprep.subr.bf16.mxu0 0
      %582 = vmatpush1.bf16.msra.mxu0 0
      %583 = vmatprep.mubr.bf16.mxu0 0
      %584 = vmatmul.mubr.bf16.gmra.mrb[0].mxu0 %v469
      %v585 = vpop.f32.mrb[0].mxu0
      %v586 = vadd.f32 %v446, %v585
      %v587 = vpop.f32.mrb[0].mxu0
      %v588 = vadd.f32 %v450, %v587
      %v589 = vpop.f32.mrb[0].mxu0
      %v590 = vpop.f32.mrb[0].mxu0
      %591 = vdwg.mxu0
      %v592 = vmax.f32 %v586, 0.0
      %v593 = vmax.f32 %v588, 0.0
      %v594 = vmin.f32 %v592, 6.0
      %v595 = vmin.f32 %v593, 6.0
      %v596 = vpack.c.bf16 %v594, %v594
      %v597 = vpack.c.bf16 %v595, %v595
      %v600 = vcombine.low %v596, %v597
      %v602 = vunpack.c.l.s4 1983009808
      %v603 = vunpack.c.0.s8 %v602
      %v604 = vlaneseq
      %v605 = vshrl.u32 %v604, 7
      %v606 = vsub.s32 %v603, %v605
      %v607 = vrot.slane %v600, %v606
      %609 = vst [vmem:[%s224] sm:$0xf] %v607
      %p610 = scmp.lt.s32.totalorder %s16, 1
      %s611 = scalar_select %p610, %s16, 1
      %s612 = smul.addr %s611, 2
      %s613 = smul.addr %s612, 2
      %s614 = scalar_lea.vmem %s5, %s613
      // Predicated region
      $region41: #{mobilenet_v1_forward.16} parent=39 // pred_check
        %p615 = pneg %p144
      $region42: #{mobilenet_v1_forward.16} parent=39 // pred_check_branch
        %617 = sbr.rel (%p615) target = $region44
      $region43: #{mobilenet_v1_forward.16} parent=39 // pred_region
        _
      $region44: #{mobilenet_v1_forward.16} parent=39 // pred_fallthru
        _
    $region40: #{mobilenet_v1_forward.16} parent=5 // pred_fallthru
      _
    %p618 = scmp.le.s32.totalorder 2, %s11
    // Predicated region
    $region45: #{mobilenet_v1_forward.16} parent=5 // pred_check
      %p619 = pneg %p618
    $region46: #{mobilenet_v1_forward.16} parent=5 // pred_check_branch
      %621 = sbr.rel (%p619) target = $region48
    $region47: #{mobilenet_v1_forward.16} parent=5 // pred_region
      %s622 = ssub.s32 %s11, 2
      // Predicated region
      $region49: #{mobilenet_v1_forward.16} parent=47 // pred_check
        %p623 = pneg %p150
      $region50: #{mobilenet_v1_forward.16} parent=47 // pred_check_branch
        %625 = sbr.rel (%p623) target = $region52
      $region51: #{mobilenet_v1_forward.16} parent=47 // pred_region
        %p626 = scmp.lt.s32.totalorder %s17, 1
        %s627 = scalar_select %p626, %s17, 1
        %s628 = smul.addr %s627, 2
        %s629 = smul.addr %s628, 2
        %s630 = scalar_lea.vmem %s5, %s629
      $region52: #{mobilenet_v1_forward.16} parent=47 // pred_fallthru
        _
    $region48: #{mobilenet_v1_forward.16} parent=5 // pred_fallthru
      _
  $region6: #{mobilenet_v1_forward.16} parent=0 // loop_footer
    %s15 = sadd.s32 1, %s11
  $region7: #{mobilenet_v1_forward.16} parent=0 // loop_footer_branch
    %10 = sbr.rel target = $region3
  $region8: #{mobilenet_v1_forward.16} parent=0 // loop_exit
    _

// kernel: mobilenet_v1_forward.17
$region0: #{mobilenet_v1_forward.17}
  #allocation0 [shape = 'u32[]', space=smem, size = 0x4, offset = 0x4, fixed_abs, tag = 'smem constant byte address 0x4 - core index']
  #allocation1 [shape = 'u32[144,128]{1,0:T(1,128)}', space=vmem, size = 0x12000, scoped, tag = 'internal scratch']
  %s0 = inlined_call_operand.vmem [shape: bf16[2,4,4,256], index: 0, kind: input, shape index: {}]
  %s1 = inlined_call_operand.vmem [shape: bf16[9,1,1,256], index: 1, kind: input, shape index: {}]
  %s2 = inlined_call_operand.vmem [shape: bf16[1,1,256], index: 2, kind: input, shape index: {}]
  %s3 = inlined_call_operand.vmem [shape: bf16[256,256], index: 3, kind: input, shape index: {}]
  %s4 = inlined_call_operand.vmem [shape: f32[1,256], index: 4, kind: input, shape index: {}]
  %s5 = inlined_call_operand.vmem [shape: bf16[2,4,256], index: 5, kind: output, shape index: {}]
  %s6 = sld [smem:[#allocation0]]
  $region53: #{mobilenet_v1_forward.17} parent=0
    _
  %s8 = ssub.s32 1, %s6
  %s9 = scalar_select 0, %s8, %s6
  loop: start=0, step=1, limit=4
  $region2: #{mobilenet_v1_forward.17} parent=0 // loop_pre_header
    _
  $region3: #{mobilenet_v1_forward.17} parent=0 // loop_header
    %s11 = sphi 0, %s15
    %p12 = scmp.ge.s32.totalorder %s11, 4
    %s21 = sphi 0, %s23
    %s24 = sphi 0, %s21
    %s25 = sphi 0, %s24
    %s41 = sphi 0, %s25
    %s45 = sphi 0, %s45
    %s47 = sphi 0, %s45
    %s48 = sphi 0, %s47
    %s62 = sphi 0, %s48
    %s66 = sphi 0, %s66
    %s68 = sphi 0, %s66
    %s69 = sphi 0, %s68
    %s83 = sphi 0, %s69
    %s87 = sphi 0, %s87
    %s89 = sphi 0, %s87
    %s90 = sphi 0, %s89
    %s104 = sphi 0, %s90
    %s108 = sphi 0, %s108
    %s110 = sphi 0, %s108
    %s111 = sphi 0, %s110
    %s125 = sphi 0, %s111
    %s131 = sphi 0, %s133
    %s134 = sphi 0, %s131
    %s135 = sphi 0, %s134
    %s151 = sphi 0, %s135
  $region4: #{mobilenet_v1_forward.17} parent=0 // loop_header_branch
    %14 = sbr.rel (%p12) target = $region8
  $region5: #{mobilenet_v1_forward.17} parent=0 // loop_body
    %s16 = ssub.s32 %s11, 1
    %s17 = ssub.s32 %s11, 2
    %s18 = sadd.s32 %s11, 1
    %s19 = ssub.s32 %s11, %s18
    %p20 = scmp.eq.s32.totalorder %s19, 0
    %s22 = sadd.s32 %s21, 1
    %s23 = scalar_select %p20, %s21, %s22
    %p26 = pneg %p20
    %p27 = scmp.eq.s32.totalorder %s11, 1
    %p28 = por %p26, %p27
    %p29 = scmp.ne.s32.totalorder %s21, %s24
    %p30 = scmp.eq.s32.totalorder %s11, 0
    %p31 = por %p29, %p30
    %p32 = scmp.ne.s32.totalorder %s21, %s24
    %p33 = scmp.eq.s32.totalorder %s16, 1
    %p34 = por %p32, %p33
    %p35 = scmp.ne.s32.totalorder %s24, %s25
    %p36 = scmp.eq.s32.totalorder %s16, 0
    %p37 = por %p35, %p36
    %p38 = scmp.ne.s32.totalorder %s24, %s25
    %p39 = scmp.eq.s32.totalorder %s17, 1
    %p40 = por %p38, %p39
    %p42 = scmp.ne.s32.totalorder %s25, %s41
    %p43 = scmp.eq.s32.totalorder %s17, 0
    %p44 = por %p42, %p43
    %s46 = sadd.s32 %s45, 1
    %p49 = scmp.eq.s32.totalorder %s11, 1
    %p50 = scmp.ne.s32.totalorder %s45, %s47
    %p51 = scmp.eq.s32.totalorder %s11, 0
    %p52 = por %p50, %p51
    %p53 = scmp.ne.s32.totalorder %s45, %s47
    %p54 = scmp.eq.s32.totalorder %s16, 1
    %p55 = por %p53, %p54
    %p56 = scmp.ne.s32.totalorder %s47, %s48
    %p57 = scmp.eq.s32.totalorder %s16, 0
    %p58 = por %p56, %p57
    %p59 = scmp.ne.s32.totalorder %s47, %s48
    %p60 = scmp.eq.s32.totalorder %s17, 1
    %p61 = por %p59, %p60
    %p63 = scmp.ne.s32.totalorder %s48, %s62
    %p64 = scmp.eq.s32.totalorder %s17, 0
    %p65 = por %p63, %p64
    %s67 = sadd.s32 %s66, 1
    %p70 = scmp.eq.s32.totalorder %s11, 1
    %p71 = scmp.ne.s32.totalorder %s66, %s68
    %p72 = scmp.eq.s32.totalorder %s11, 0
    %p73 = por %p71, %p72
    %p74 = scmp.ne.s32.totalorder %s66, %s68
    %p75 = scmp.eq.s32.totalorder %s16, 1
    %p76 = por %p74, %p75
    %p77 = scmp.ne.s32.totalorder %s68, %s69
    %p78 = scmp.eq.s32.totalorder %s16, 0
    %p79 = por %p77, %p78
    %p80 = scmp.ne.s32.totalorder %s68, %s69
    %p81 = scmp.eq.s32.totalorder %s17, 1
    %p82 = por %p80, %p81
    %p84 = scmp.ne.s32.totalorder %s69, %s83
    %p85 = scmp.eq.s32.totalorder %s17, 0
    %p86 = por %p84, %p85
    %s88 = sadd.s32 %s87, 1
    %p91 = scmp.eq.s32.totalorder %s11, 1
    %p92 = scmp.ne.s32.totalorder %s87, %s89
    %p93 = scmp.eq.s32.totalorder %s11, 0
    %p94 = por %p92, %p93
    %p95 = scmp.ne.s32.totalorder %s87, %s89
    %p96 = scmp.eq.s32.totalorder %s16, 1
    %p97 = por %p95, %p96
    %p98 = scmp.ne.s32.totalorder %s89, %s90
    %p99 = scmp.eq.s32.totalorder %s16, 0
    %p100 = por %p98, %p99
    %p101 = scmp.ne.s32.totalorder %s89, %s90
    %p102 = scmp.eq.s32.totalorder %s17, 1
    %p103 = por %p101, %p102
    %p105 = scmp.ne.s32.totalorder %s90, %s104
    %p106 = scmp.eq.s32.totalorder %s17, 0
    %p107 = por %p105, %p106
    %s109 = sadd.s32 %s108, 1
    %p112 = scmp.eq.s32.totalorder %s11, 1
    %p113 = scmp.ne.s32.totalorder %s108, %s110
    %p114 = scmp.eq.s32.totalorder %s11, 0
    %p115 = por %p113, %p114
    %p116 = scmp.ne.s32.totalorder %s108, %s110
    %p117 = scmp.eq.s32.totalorder %s16, 1
    %p118 = por %p116, %p117
    %p119 = scmp.ne.s32.totalorder %s110, %s111
    %p120 = scmp.eq.s32.totalorder %s16, 0
    %p121 = por %p119, %p120
    %p122 = scmp.ne.s32.totalorder %s110, %s111
    %p123 = scmp.eq.s32.totalorder %s17, 1
    %p124 = por %p122, %p123
    %p126 = scmp.ne.s32.totalorder %s111, %s125
    %p127 = scmp.eq.s32.totalorder %s17, 0
    %p128 = por %p126, %p127
    %s129 = ssub.s32 %s11, %s18
    %p130 = scmp.eq.s32.totalorder %s129, 0
    %s132 = sadd.s32 %s131, 1
    %s133 = scalar_select %p130, %s131, %s132
    %p136 = pneg %p130
    %p137 = scmp.eq.s32.totalorder %s11, 1
    %p138 = por %p136, %p137
    %p139 = scmp.ne.s32.totalorder %s131, %s134
    %p140 = scmp.eq.s32.totalorder %s11, 0
    %p141 = por %p139, %p140
    %p142 = scmp.ne.s32.totalorder %s131, %s134
    %p143 = scmp.eq.s32.totalorder %s16, 1
    %p144 = por %p142, %p143
    %p145 = scmp.ne.s32.totalorder %s134, %s135
    %p146 = scmp.eq.s32.totalorder %s16, 0
    %p147 = por %p145, %p146
    %p148 = scmp.ne.s32.totalorder %s134, %s135
    %p149 = scmp.eq.s32.totalorder %s17, 1
    %p150 = por %p148, %p149
    %p152 = scmp.ne.s32.totalorder %s135, %s151
    %p153 = scmp.eq.s32.totalorder %s17, 0
    %p154 = por %p152, %p153
    %p155 = scmp.le.s32.totalorder 1, %s11
    %p156 = scmp.lt.s32.totalorder %s11, 3
    %p157 = pnand %p155, %p156
    %p158 = pneg %p157
    // Predicated region
    $region9: #{mobilenet_v1_forward.17} parent=5 // pred_check
      _
    $region10: #{mobilenet_v1_forward.17} parent=5 // pred_check_branch
      %160 = sbr.rel (%p157) target = $region12
    $region11: #{mobilenet_v1_forward.17} parent=5 // pred_region
      %s161 = ssub.s32 %s11, 1
      // Predicated region
      $region13: #{mobilenet_v1_forward.17} parent=11 // pred_check
        %p162 = pneg %p58
      $region14: #{mobilenet_v1_forward.17} parent=11 // pred_check_branch
        %164 = sbr.rel (%p162) target = $region16
      $region15: #{mobilenet_v1_forward.17} parent=11 // pred_region
        _
      $region16: #{mobilenet_v1_forward.17} parent=11 // pred_fallthru
        _
      // Predicated region
      $region17: #{mobilenet_v1_forward.17} parent=11 // pred_check
        %p165 = pneg %p79
      $region18: #{mobilenet_v1_forward.17} parent=11 // pred_check_branch
        %167 = sbr.rel (%p165) target = $region20
      $region19: #{mobilenet_v1_forward.17} parent=11 // pred_region
        _
      $region20: #{mobilenet_v1_forward.17} parent=11 // pred_fallthru
        _
      // Predicated region
      $region21: #{mobilenet_v1_forward.17} parent=11 // pred_check
        %p168 = pneg %p100
      $region22: #{mobilenet_v1_forward.17} parent=11 // pred_check_branch
        %170 = sbr.rel (%p168) target = $region24
      $region23: #{mobilenet_v1_forward.17} parent=11 // pred_region
        _
      $region24: #{mobilenet_v1_forward.17} parent=11 // pred_fallthru
        _
      // Predicated region
      $region25: #{mobilenet_v1_forward.17} parent=11 // pred_check
        %p171 = pneg %p121
      $region26: #{mobilenet_v1_forward.17} parent=11 // pred_check_branch
        %173 = sbr.rel (%p171) target = $region28
      $region27: #{mobilenet_v1_forward.17} parent=11 // pred_region
        _
      $region28: #{mobilenet_v1_forward.17} parent=11 // pred_fallthru
        _
    $region12: #{mobilenet_v1_forward.17} parent=5 // pred_fallthru
      _
    %p174 = scmp.lt.s32.totalorder %s11, 2
    // Predicated region
    $region29: #{mobilenet_v1_forward.17} parent=5 // pred_check
      %p175 = pneg %p174
    $region30: #{mobilenet_v1_forward.17} parent=5 // pred_check_branch
      %177 = sbr.rel (%p175) target = $region32
    $region31: #{mobilenet_v1_forward.17} parent=5 // pred_region
      // Predicated region
      $region33: #{mobilenet_v1_forward.17} parent=31 // pred_check
        %p178 = pneg %p31
      $region34: #{mobilenet_v1_forward.17} parent=31 // pred_check_branch
        %180 = sbr.rel (%p178) target = $region36
      $region35: #{mobilenet_v1_forward.17} parent=31 // pred_region
        %p181 = scmp.lt.s32.totalorder %s11, 1
        %s182 = scalar_select %p181, %s11, 1
        %s183 = smul.addr %s182, 8
        %s184 = smul.addr %s183, 2
        %s185 = scalar_lea.vmem %s0, %s184
      $region36: #{mobilenet_v1_forward.17} parent=31 // pred_fallthru
        _
    $region32: #{mobilenet_v1_forward.17} parent=5 // pred_fallthru
      _
    %p186 = scmp.le.s32.totalorder 1, %s11
    %p187 = scmp.lt.s32.totalorder %s11, 3
    %p188 = pnand %p186, %p187
    %p189 = pneg %p188
    // Predicated region
    $region37: #{mobilenet_v1_forward.17} parent=5 // pred_check
      _
    $region38: #{mobilenet_v1_forward.17} parent=5 // pred_check_branch
      %191 = sbr.rel (%p188) target = $region40
    $region39: #{mobilenet_v1_forward.17} parent=5 // pred_region
      %s192 = ssub.s32 %s11, 1
      %p193 = scmp.lt.s32.totalorder %s16, 1
      %s194 = scalar_select %p193, %s16, 1
      %s195 = smul.addr %s194, 8
      %s196 = smul.addr %s195, 2
      %s197 = scalar_lea.vmem %s0, %s196
      %p198 = pneg %p37
      %p199 = pneg %p34
      %p200 = pneg %p58
      %p201 = pneg %p55
      %p202 = pneg %p79
      %p203 = pneg %p76
      %p204 = pneg %p100
      %p205 = pneg %p97
      %p206 = pneg %p121
      %p207 = pneg %p118
      %p208 = pneg %p147
      %p209 = pneg %p144
      %p210 = scmp.lt.s32.totalorder %s16, 1
      %s211 = scalar_select %p210, %s16, 1
      %s212 = smul.addr %s211, 2
      %s213 = smul.addr %s212, 2
      %s214 = scalar_lea.vmem %s5, %s213
      %p215 = scmp.lt.s32.totalorder %s16, 1
      %s216 = scalar_select %p215, %s16, 1
      %s217 = smul.addr %s216, 8
      %s218 = smul.addr %s217, 2
      %s219 = scalar_lea.vmem %s0, %s218
      %p220 = scmp.lt.s32.totalorder %s16, 1
      %s221 = scalar_select %p220, %s16, 1
      %s222 = smul.addr %s221, 2
      %s223 = smul.addr %s222, 2
      %s224 = scalar_lea.vmem %s5, %s223
      %v227 = vld [vmem:[%s219] sm:$0xf]
      %v228 = vld [vmem:[%s219 + $0x4] sm:$0xf]
      %v229 = vld [vmem:[%s219 + $0x8] sm:$0xf]
      %v230 = vld [vmem:[%s219 + $0xc] sm:$0xf]
      %v231 = vld [vmem:[%s1] sm:$0x3]
      %v234 = vunpack.c.l.s4 1966171168
      %v235 = vunpack.c.0.s8 %v234
      %v236 = vlaneseq
      %v237 = vshrl.u32 %v236, 7
      %v238 = vsub.s32 %v235, %v237
      %v239 = vrot.slane %v231, %v238
      %v240 = vcombine.high %v239, %v239
      %v242 = vunpack.c.l.s4 1966171168
      %v243 = vunpack.c.0.s8 %v242
      %v244 = vlaneseq
      %v245 = vshrl.u32 %v244, 7
      %v246 = vsub.s32 %v243, %v245
      %v247 = vrot.slane %v239, %v246
      %v249 = vunpack.c.l.s4 1966171168
      %v250 = vunpack.c.0.s8 %v249
      %v251 = vlaneseq
      %v252 = vshrl.u32 %v251, 7
      %v253 = vsub.s32 %v250, %v252
      %v254 = vrot.slane %v240, %v253
      %v256 = vpack.i.b16 %v247, %v247
      %v258 = vlaneseq
      %v259 = vshrl.u32 %v258, 7
      %v260 = vsub.s32 0, %v259
      %v261 = vrot.slane %v256, %v260
      %v263 = vpack.i.b16 %v254, %v254
      %v265 = vlaneseq
      %v266 = vshrl.u32 %v265, 7
      %v267 = vsub.s32 0, %v266
      %v268 = vrot.slane %v263, %v267
      %v271 = vcombine.low %v261, %v268
      %v273 = vunpack.c.l.s4 1983009808
      %v274 = vunpack.c.0.s8 %v273
      %v275 = vlaneseq
      %v276 = vshrl.u32 %v275, 7
      %v277 = vsub.s32 %v274, %v276
      %v278 = vrot.slane %v271, %v277
      %v280 = vmul.bf16 %v227, %v278
      %v281 = vmul.bf16 %v228, %v278
      %s282 = scalar_lea.vmem %s1, 2
      %v283 = vld [vmem:[%s282] sm:$0x3]
      %v286 = vunpack.c.l.s4 1966171168
      %v287 = vunpack.c.0.s8 %v286
      %v288 = vlaneseq
      %v289 = vshrl.u32 %v288, 7
      %v290 = vsub.s32 %v287, %v289
      %v291 = vrot.slane %v283, %v290
      %v292 = vcombine.high %v291, %v291
      %v294 = vunpack.c.l.s4 1966171168
      %v295 = vunpack.c.0.s8 %v294
      %v296 = vlaneseq
      %v297 = vshrl.u32 %v296, 7
      %v298 = vsub.s32 %v295, %v297
      %v299 = vrot.slane %v291, %v298
      %v301 = vunpack.c.l.s4 1966171168
      %v302 = vunpack.c.0.s8 %v301
      %v303 = vlaneseq
      %v304 = vshrl.u32 %v303, 7
      %v305 = vsub.s32 %v302, %v304
      %v306 = vrot.slane %v292, %v305
      %v308 = vpack.i.b16 %v299, %v299
      %v310 = vlaneseq
      %v311 = vshrl.u32 %v310, 7
      %v312 = vsub.s32 0, %v311
      %v313 = vrot.slane %v308, %v312
      %v315 = vpack.i.b16 %v306, %v306
      %v317 = vlaneseq
      %v318 = vshrl.u32 %v317, 7
      %v319 = vsub.s32 0, %v318
      %v320 = vrot.slane %v315, %v319
      %v323 = vcombine.low %v313, %v320
      %v325 = vunpack.c.l.s4 1983009808
      %v326 = vunpack.c.0.s8 %v325
      %v327 = vlaneseq
      %v328 = vshrl.u32 %v327, 7
      %v329 = vsub.s32 %v326, %v328
      %v330 = vrot.slane %v323, %v329
      %v332 = vshrl.u32 %v330, 16
      %v334 = vrot.slane %v332, 7
      %v335 = vshll.u32 %v330, 16
      %v337 = vor.u32 %v334, %v335
      %v339 = vmul.bf16 %v227, %v337
      %v340 = vmul.bf16 %v228, %v337
      %v342 = vshrl.u32 %v339, 16
      %v344 = vrot.slane %v342, 6
      %v345 = vshll.u32 %v339, 16
      %v347 = vrot.slane %v345, 7
      %v348 = vor.u32 %v344, %v347
      %v349 = vrot.slane %v348, 2
      %v351 = vshrl.u32 %v340, 16
      %v353 = vrot.slane %v351, 6
      %v354 = vshll.u32 %v340, 16
      %v356 = vrot.slane %v354, 7
      %v357 = vor.u32 %v353, %v356
      %v358 = vrot.slane %v357, 2
      %v361 = vadd.bf16 %v280, %v349
      %v362 = vadd.bf16 %v281, %v358
      %s363 = scalar_lea.vmem %s1, 4
      %v364 = vld [vmem:[%s363] sm:$0x3]
      %v367 = vunpack.c.l.s4 1966171168
      %v368 = vunpack.c.0.s8 %v367
      %v369 = vlaneseq
      %v370 = vshrl.u32 %v369, 7
      %v371 = vsub.s32 %v368, %v370
      %v372 = vrot.slane %v364, %v371
      %v373 = vcombine.high %v372, %v372
      %v375 = vunpack.c.l.s4 1966171168
      %v376 = vunpack.c.0.s8 %v375
      %v377 = vlaneseq
      %v378 = vshrl.u32 %v377, 7
      %v379 = vsub.s32 %v376, %v378
      %v380 = vrot.slane %v372, %v379
      %v382 = vunpack.c.l.s4 1966171168
      %v383 = vunpack.c.0.s8 %v382
      %v384 = vlaneseq
      %v385 = vshrl.u32 %v384, 7
      %v386 = vsub.s32 %v383, %v385
      %v387 = vrot.slane %v373, %v386
      %v389 = vpack.i.b16 %v380, %v380
      %v391 = vlaneseq
      %v392 = vshrl.u32 %v391, 7
      %v393 = vsub.s32 0, %v392
      %v394 = vrot.slane %v389, %v393
      %v396 = vpack.i.b16 %v387, %v387
      %v398 = vlaneseq
      %v399 = vshrl.u32 %v398, 7
      %v400 = vsub.s32 0, %v399
      %v401 = vrot.slane %v396, %v400
      %v404 = vcombine.low %v394, %v401
      %v406 = vunpack.c.l.s4 1983009808
      %v407 = vunpack.c.0.s8 %v406
      %v408 = vlaneseq
      %v409 = vshrl.u32 %v408, 7
      %v410 = vsub.s32 %v407, %v409
      %v411 = vrot.slane %v404, %v410
      %v412 = vrot.slane %v411, 7
      %v414 = vmul.bf16 %v227, %v412
      %v415 = vmul.bf16 %v228, %v412
      %v418 = vrot.slane %v414, 7
      %v419 = vrot.slane %v418, 2
      %v420 = vrot.slane %v415, 7
      %v421 = vrot.slane %v420, 2
      %v424 = vadd.bf16 %v361, %v419
      %v425 = vadd.bf16 %v362, %v421
      %s426 = scalar_lea.vmem %s1, 6
      %v427 = vld [vmem:[%s426] sm:$0x3]
      %v430 = vunpack.c.l.s4 1966171168
      %v431 = vunpack.c.0.s8 %v430
      %v432 = vlaneseq
      %v433 = vshrl.u32 %v432, 7
      %v434 = vsub.s32 %v431, %v433
      %v435 = vrot.slane %v427, %v434
      %v436 = vcombine.high %v435, %v435
      %v438 = vunpack.c.l.s4 1966171168
      %v439 = vunpack.c.0.s8 %v438
      %v440 = vlaneseq
      %v441 = vshrl.u32 %v440, 7
      %v442 = vsub.s32 %v439, %v441
      %v443 = vrot.slane %v435, %v442
      %v445 = vunpack.c.l.s4 1966171168
      %v446 = vunpack.c.0.s8 %v445
      %v447 = vlaneseq
      %v448 = vshrl.u32 %v447, 7
      %v449 = vsub.s32 %v446, %v448
      %v450 = vrot.slane %v436, %v449
      %v452 = vpack.i.b16 %v443, %v443
      %v454 = vlaneseq
      %v455 = vshrl.u32 %v454, 7
      %v456 = vsub.s32 0, %v455
      %v457 = vrot.slane %v452, %v456
      %v459 = vpack.i.b16 %v450, %v450
      %v461 = vlaneseq
      %v462 = vshrl.u32 %v461, 7
      %v463 = vsub.s32 0, %v462
      %v464 = vrot.slane %v459, %v463
      %v467 = vcombine.low %v457, %v464
      %v469 = vunpack.c.l.s4 1983009808
      %v470 = vunpack.c.0.s8 %v469
      %v471 = vlaneseq
      %v472 = vshrl.u32 %v471, 7
      %v473 = vsub.s32 %v470, %v472
      %v474 = vrot.slane %v467, %v473
      %v476 = vmul.bf16 %v228, %v474
      %v477 = vmul.bf16 %v229, %v474
      %v478 = vadd.bf16 %v424, %v476
      %v479 = vadd.bf16 %v425, %v477
      %s480 = scalar_lea.vmem %s1, 8
      %v481 = vld [vmem:[%s480] sm:$0x3]
      %v484 = vunpack.c.l.s4 1966171168
      %v485 = vunpack.c.0.s8 %v484
      %v486 = vlaneseq
      %v487 = vshrl.u32 %v486, 7
      %v488 = vsub.s32 %v485, %v487
      %v489 = vrot.slane %v481, %v488
      %v490 = vcombine.high %v489, %v489
      %v492 = vunpack.c.l.s4 1966171168
      %v493 = vunpack.c.0.s8 %v492
      %v494 = vlaneseq
      %v495 = vshrl.u32 %v494, 7
      %v496 = vsub.s32 %v493, %v495
      %v497 = vrot.slane %v489, %v496
      %v499 = vunpack.c.l.s4 1966171168
      %v500 = vunpack.c.0.s8 %v499
      %v501 = vlaneseq
      %v502 = vshrl.u32 %v501, 7
      %v503 = vsub.s32 %v500, %v502
      %v504 = vrot.slane %v490, %v503
      %v506 = vpack.i.b16 %v497, %v497
      %v508 = vlaneseq
      %v509 = vshrl.u32 %v508, 7
      %v510 = vsub.s32 0, %v509
      %v511 = vrot.slane %v506, %v510
      %v513 = vpack.i.b16 %v504, %v504
      %v515 = vlaneseq
      %v516 = vshrl.u32 %v515, 7
      %v517 = vsub.s32 0, %v516
      %v518 = vrot.slane %v513, %v517
      %v521 = vcombine.low %v511, %v518
      %v523 = vunpack.c.l.s4 1983009808
      %v524 = vunpack.c.0.s8 %v523
      %v525 = vlaneseq
      %v526 = vshrl.u32 %v525, 7
      %v527 = vsub.s32 %v524, %v526
      %v528 = vrot.slane %v521, %v527
      %v530 = vshrl.u32 %v528, 16
      %v532 = vrot.slane %v530, 7
      %v533 = vshll.u32 %v528, 16
      %v535 = vor.u32 %v532, %v533
      %v537 = vmul.bf16 %v228, %v535
      %v538 = vmul.bf16 %v229, %v535
      %v540 = vshrl.u32 %v537, 16
      %v542 = vrot.slane %v540, 6
      %v543 = vshll.u32 %v537, 16
      %v545 = vrot.slane %v543, 7
      %v546 = vor.u32 %v542, %v545
      %v547 = vrot.slane %v546, 2
      %v549 = vshrl.u32 %v538, 16
      %v551 = vrot.slane %v549, 6
      %v552 = vshll.u32 %v538, 16
      %v554 = vrot.slane %v552, 7
      %v555 = vor.u32 %v551, %v554
      %v556 = vrot.slane %v555, 2
      %v559 = vadd.bf16 %v478, %v547
      %v560 = vadd.bf16 %v479, %v556
      %s561 = scalar_lea.vmem %s1, 10
      %v562 = vld [vmem:[%s561] sm:$0x3]
      %v565 = vunpack.c.l.s4 1966171168
      %v566 = vunpack.c.0.s8 %v565
      %v567 = vlaneseq
      %v568 = vshrl.u32 %v567, 7
      %v569 = vsub.s32 %v566, %v568
      %v570 = vrot.slane %v562, %v569
      %v571 = vcombine.high %v570, %v570
      %v573 = vunpack.c.l.s4 1966171168
      %v574 = vunpack.c.0.s8 %v573
      %v575 = vlaneseq
      %v576 = vshrl.u32 %v575, 7
      %v577 = vsub.s32 %v574, %v576
      %v578 = vrot.slane %v570, %v577
      %v580 = vunpack.c.l.s4 1966171168
      %v581 = vunpack.c.0.s8 %v580
      %v582 = vlaneseq
      %v583 = vshrl.u32 %v582, 7
      %v584 = vsub.s32 %v581, %v583
      %v585 = vrot.slane %v571, %v584
      %v587 = vpack.i.b16 %v578, %v578
      %v589 = vlaneseq
      %v590 = vshrl.u32 %v589, 7
      %v591 = vsub.s32 0, %v590
      %v592 = vrot.slane %v587, %v591
      %v594 = vpack.i.b16 %v585, %v585
      %v596 = vlaneseq
      %v597 = vshrl.u32 %v596, 7
      %v598 = vsub.s32 0, %v597
      %v599 = vrot.slane %v594, %v598
      %v602 = vcombine.low %v592, %v599
      %v604 = vunpack.c.l.s4 1983009808
      %v605 = vunpack.c.0.s8 %v604
      %v606 = vlaneseq
      %v607 = vshrl.u32 %v606, 7
      %v608 = vsub.s32 %v605, %v607
      %v609 = vrot.slane %v602, %v608
      %v610 = vrot.slane %v609, 7
      %v612 = vmul.bf16 %v228, %v610
      %v613 = vmul.bf16 %v229, %v610
      %v616 = vrot.slane %v612, 7
      %v617 = vrot.slane %v616, 2
      %v618 = vrot.slane %v613, 7
      %v619 = vrot.slane %v618, 2
      %v622 = vadd.bf16 %v559, %v617
      %v623 = vadd.bf16 %v560, %v619
      %s624 = scalar_lea.vmem %s1, 12
      %v625 = vld [vmem:[%s624] sm:$0x3]
      %v628 = vunpack.c.l.s4 1966171168
      %v629 = vunpack.c.0.s8 %v628
      %v630 = vlaneseq
      %v631 = vshrl.u32 %v630, 7
      %v632 = vsub.s32 %v629, %v631
      %v633 = vrot.slane %v625, %v632
      %v634 = vcombine.high %v633, %v633
      %v636 = vunpack.c.l.s4 1966171168
      %v637 = vunpack.c.0.s8 %v636
      %v638 = vlaneseq
      %v639 = vshrl.u32 %v638, 7
      %v640 = vsub.s32 %v637, %v639
      %v641 = vrot.slane %v633, %v640
      %v643 = vunpack.c.l.s4 1966171168
      %v644 = vunpack.c.0.s8 %v643
      %v645 = vlaneseq
      %v646 = vshrl.u32 %v645, 7
      %v647 = vsub.s32 %v644, %v646
      %v648 = vrot.slane %v634, %v647
      %v650 = vpack.i.b16 %v641, %v641
      %v652 = vlaneseq
      %v653 = vshrl.u32 %v652, 7
      %v654 = vsub.s32 0, %v653
      %v655 = vrot.slane %v650, %v654
      %v657 = vpack.i.b16 %v648, %v648
      %v659 = vlaneseq
      %v660 = vshrl.u32 %v659, 7
      %v661 = vsub.s32 0, %v660
      %v662 = vrot.slane %v657, %v661
      %v665 = vcombine.low %v655, %v662
      %v667 = vunpack.c.l.s4 1983009808
      %v668 = vunpack.c.0.s8 %v667
      %v669 = vlaneseq
      %v670 = vshrl.u32 %v669, 7
      %v671 = vsub.s32 %v668, %v670
      %v672 = vrot.slane %v665, %v671
      %v674 = vmul.bf16 %v229, %v672
      %v675 = vmul.bf16 %v230, %v672
      %v676 = vadd.bf16 %v622, %v674
      %v677 = vadd.bf16 %v623, %v675
      %s678 = scalar_lea.vmem %s1, 14
      %v679 = vld [vmem:[%s678] sm:$0x3]
      %v682 = vunpack.c.l.s4 1966171168
      %v683 = vunpack.c.0.s8 %v682
      %v684 = vlaneseq
      %v685 = vshrl.u32 %v684, 7
      %v686 = vsub.s32 %v683, %v685
      %v687 = vrot.slane %v679, %v686
      %v688 = vcombine.high %v687, %v687
      %v690 = vunpack.c.l.s4 1966171168
      %v691 = vunpack.c.0.s8 %v690
      %v692 = vlaneseq
      %v693 = vshrl.u32 %v692, 7
      %v694 = vsub.s32 %v691, %v693
      %v695 = vrot.slane %v687, %v694
      %v697 = vunpack.c.l.s4 1966171168
      %v698 = vunpack.c.0.s8 %v697
      %v699 = vlaneseq
      %v700 = vshrl.u32 %v699, 7
      %v701 = vsub.s32 %v698, %v700
      %v702 = vrot.slane %v688, %v701
      %v704 = vpack.i.b16 %v695, %v695
      %v706 = vlaneseq
      %v707 = vshrl.u32 %v706, 7
      %v708 = vsub.s32 0, %v707
      %v709 = vrot.slane %v704, %v708
      %v711 = vpack.i.b16 %v702, %v702
      %v713 = vlaneseq
      %v714 = vshrl.u32 %v713, 7
      %v715 = vsub.s32 0, %v714
      %v716 = vrot.slane %v711, %v715
      %v719 = vcombine.low %v709, %v716
      %v721 = vunpack.c.l.s4 1983009808
      %v722 = vunpack.c.0.s8 %v721
      %v723 = vlaneseq
      %v724 = vshrl.u32 %v723, 7
      %v725 = vsub.s32 %v722, %v724
      %v726 = vrot.slane %v719, %v725
      %v728 = vshrl.u32 %v726, 16
      %v730 = vrot.slane %v728, 7
      %v731 = vshll.u32 %v726, 16
      %v733 = vor.u32 %v730, %v731
      %v735 = vmul.bf16 %v229, %v733
      %v736 = vmul.bf16 %v230, %v733
      %v738 = vshrl.u32 %v735, 16
      %v740 = vrot.slane %v738, 6
      %v741 = vshll.u32 %v735, 16
      %v743 = vrot.slane %v741, 7
      %v744 = vor.u32 %v740, %v743
      %v745 = vrot.slane %v744, 2
      %v747 = vshrl.u32 %v736, 16
      %v749 = vrot.slane %v747, 6
      %v750 = vshll.u32 %v736, 16
      %v752 = vrot.slane %v750, 7
      %v753 = vor.u32 %v749, %v752
      %v754 = vrot.slane %v753, 2
      %v757 = vadd.bf16 %v676, %v745
      %v758 = vadd.bf16 %v677, %v754
      %s759 = scalar_lea.vmem %s1, 16
      %v760 = vld [vmem:[%s759] sm:$0x3]
      %v763 = vunpack.c.l.s4 1966171168
      %v764 = vunpack.c.0.s8 %v763
      %v765 = vlaneseq
      %v766 = vshrl.u32 %v765, 7
      %v767 = vsub.s32 %v764, %v766
      %v768 = vrot.slane %v760, %v767
      %v769 = vcombine.high %v768, %v768
      %v771 = vunpack.c.l.s4 1966171168
      %v772 = vunpack.c.0.s8 %v771
      %v773 = vlaneseq
      %v774 = vshrl.u32 %v773, 7
      %v775 = vsub.s32 %v772, %v774
      %v776 = vrot.slane %v768, %v775
      %v778 = vunpack.c.l.s4 1966171168
      %v779 = vunpack.c.0.s8 %v778
      %v780 = vlaneseq
      %v781 = vshrl.u32 %v780, 7
      %v782 = vsub.s32 %v779, %v781
      %v783 = vrot.slane %v769, %v782
      %v785 = vpack.i.b16 %v776, %v776
      %v787 = vlaneseq
      %v788 = vshrl.u32 %v787, 7
      %v789 = vsub.s32 0, %v788
      %v790 = vrot.slane %v785, %v789
      %v792 = vpack.i.b16 %v783, %v783
      %v794 = vlaneseq
      %v795 = vshrl.u32 %v794, 7
      %v796 = vsub.s32 0, %v795
      %v797 = vrot.slane %v792, %v796
      %v800 = vcombine.low %v790, %v797
      %v802 = vunpack.c.l.s4 1983009808
      %v803 = vunpack.c.0.s8 %v802
      %v804 = vlaneseq
      %v805 = vshrl.u32 %v804, 7
      %v806 = vsub.s32 %v803, %v805
      %v807 = vrot.slane %v800, %v806
      %v808 = vrot.slane %v807, 7
      %v810 = vmul.bf16 %v229, %v808
      %v811 = vmul.bf16 %v230, %v808
      %v814 = vrot.slane %v810, 7
      %v815 = vrot.slane %v814, 2
      %v816 = vrot.slane %v811, 7
      %v817 = vrot.slane %v816, 2
      %v820 = vadd.bf16 %v757, %v815
      %v821 = vadd.bf16 %v758, %v817
      %v822 = vld [vmem:[%s2] sm:$0x3]
      %v825 = vunpack.c.l.s4 1966171168
      %v826 = vunpack.c.0.s8 %v825
      %v827 = vlaneseq
      %v828 = vshrl.u32 %v827, 7
      %v829 = vsub.s32 %v826, %v828
      %v830 = vrot.slane %v822, %v829
      %v831 = vcombine.high %v830, %v830
      %v833 = vunpack.c.l.s4 1966171168
      %v834 = vunpack.c.0.s8 %v833
      %v835 = vlaneseq
      %v836 = vshrl.u32 %v835, 7
      %v837 = vsub.s32 %v834, %v836
      %v838 = vrot.slane %v830, %v837
      %v840 = vunpack.c.l.s4 1966171168
      %v841 = vunpack.c.0.s8 %v840
      %v842 = vlaneseq
      %v843 = vshrl.u32 %v842, 7
      %v844 = vsub.s32 %v841, %v843
      %v845 = vrot.slane %v831, %v844
      %v847 = vpack.i.b16 %v838, %v838
      %v849 = vlaneseq
      %v850 = vshrl.u32 %v849, 7
      %v851 = vsub.s32 0, %v850
      %v852 = vrot.slane %v847, %v851
      %v854 = vpack.i.b16 %v845, %v845
      %v856 = vlaneseq
      %v857 = vshrl.u32 %v856, 7
      %v858 = vsub.s32 0, %v857
      %v859 = vrot.slane %v854, %v858
      %v862 = vcombine.low %v852, %v859
      %v864 = vunpack.c.l.s4 1983009808
      %v865 = vunpack.c.0.s8 %v864
      %v866 = vlaneseq
      %v867 = vshrl.u32 %v866, 7
      %v868 = vsub.s32 %v865, %v867
      %v869 = vrot.slane %v862, %v868
      %v871 = vadd.bf16 %v820, %v869
      %v872 = vadd.bf16 %v821, %v869
      %v873 = vmax.bf16 %v871, 0
      %v874 = vmax.bf16 %v872, 0
      %v875 = vmin.bf16 %v873, 1086341312
      %v876 = vmin.bf16 %v874, 1086341312
      %v880 = vunpack.c.l.s4 1966171168
      %v881 = vunpack.c.0.s8 %v880
      %v882 = vlaneseq
      %v883 = vshrl.u32 %v882, 7
      %v884 = vsub.s32 %v881, %v883
      %v885 = vrot.slane %v875, %v884
      %v887 = vunpack.c.l.s4 1966171168
      %v888 = vunpack.c.0.s8 %v887
      %v889 = vlaneseq
      %v890 = vshrl.u32 %v889, 7
      %v891 = vsub.s32 %v888, %v890
      %v892 = vrot.slane %v876, %v891
      %v893 = vld [vmem:[%s3] sm:$0xff]
      %v894 = vld [vmem:[%s3 + $0x8] sm:$0xff]
      %v895 = vld [vmem:[%s3 + $0x10] sm:$0xff]
      %v896 = vld [vmem:[%s3 + $0x18] sm:$0xff]
      %v897 = vld [vmem:[%s3 + $0x20] sm:$0xff]
      %v898 = vld [vmem:[%s3 + $0x28] sm:$0xff]
      %v899 = vld [vmem:[%s3 + $0x30] sm:$0xff]
      %v900 = vld [vmem:[%s3 + $0x38] sm:$0xff]
      %v901 = vld [vmem:[%s3 + $0x40] sm:$0xff]
      %v902 = vld [vmem:[%s3 + $0x48] sm:$0xff]
      %v903 = vld [vmem:[%s3 + $0x50] sm:$0xff]
      %v904 = vld [vmem:[%s3 + $0x58] sm:$0xff]
      %v905 = vld [vmem:[%s3 + $0x60] sm:$0xff]
      %v906 = vld [vmem:[%s3 + $0x68] sm:$0xff]
      %v907 = vld [vmem:[%s3 + $0x70] sm:$0xff]
      %v908 = vld [vmem:[%s3 + $0x78] sm:$0xff]
      %v909 = vld [vmem:[%s3 + $0x80] sm:$0xff]
      %v910 = vld [vmem:[%s3 + $0x88] sm:$0xff]
      %v911 = vld [vmem:[%s3 + $0x90] sm:$0xff]
      %v912 = vld [vmem:[%s3 + $0x98] sm:$0xff]
      %v913 = vld [vmem:[%s3 + $0xa0] sm:$0xff]
      %v914 = vld [vmem:[%s3 + $0xa8] sm:$0xff]
      %v915 = vld [vmem:[%s3 + $0xb0] sm:$0xff]
      %v916 = vld [vmem:[%s3 + $0xb8] sm:$0xff]
      %v917 = vld [vmem:[%s3 + $0xc0] sm:$0xff]
      %v918 = vld [vmem:[%s3 + $0xc8] sm:$0xff]
      %v919 = vld [vmem:[%s3 + $0xd0] sm:$0xff]
      %v920 = vld [vmem:[%s3 + $0xd8] sm:$0xff]
      %v921 = vld [vmem:[%s3 + $0xe0] sm:$0xff]
      %v922 = vld [vmem:[%s3 + $0xe8] sm:$0xff]
      %v923 = vld [vmem:[%s3 + $0xf0] sm:$0xff]
      %v924 = vld [vmem:[%s3 + $0xf8] sm:$0xff]
      %v925 = vld [vmem:[%s4] sm:$0x3]
      %v927 = vlaneseq
      %v928 = vshrl.u32 %v927, 7
      %v929 = vsub.s32 0, %v928
      %v930 = vrot.slane %v925, %v929
      %v931 = vlaneseq
      %v932 = vshrl.u32 %v931, 7
      %v933 = vsub.s32 1, %v932
      %v934 = vrot.slane %v925, %v933
      %v937 = vcombine.low %v885, %v892
      %v939 = vunpack.c.l.s4 1966171168
      %v940 = vunpack.c.0.s8 %v939
      %v941 = vlaneseq
      %v942 = vshrl.u32 %v941, 7
      %v943 = vsub.s32 %v940, %v942
      %v944 = vrot.slane %v937, %v943
      %v945 = vcombine.high %v944, %v944
      %v947 = vunpack.c.l.s4 1966171168
      %v948 = vunpack.c.0.s8 %v947
      %v949 = vlaneseq
      %v950 = vshrl.u32 %v949, 7
      %v951 = vsub.s32 %v948, %v950
      %v952 = vrot.slane %v944, %v951
      %v954 = vunpack.c.l.s4 1966171168
      %v955 = vunpack.c.0.s8 %v954
      %v956 = vlaneseq
      %v957 = vshrl.u32 %v956, 7
      %v958 = vsub.s32 %v955, %v957
      %v959 = vrot.slane %v945, %v958
      %v994 = vunpack.c.l.b16 %v893
      %v995 = vunpack.c.h.b16 %v893
      %v996 = vunpack.c.l.b16 %v894
      %v997 = vunpack.c.h.b16 %v894
      %v998 = vunpack.c.l.b16 %v895
      %v999 = vunpack.c.h.b16 %v895
      %v1000 = vunpack.c.l.b16 %v896
      %v1001 = vunpack.c.h.b16 %v896
      %v1002 = vunpack.c.l.b16 %v897
      %v1003 = vunpack.c.h.b16 %v897
      %v1004 = vunpack.c.l.b16 %v898
      %v1005 = vunpack.c.h.b16 %v898
      %v1006 = vunpack.c.l.b16 %v899
      %v1007 = vunpack.c.h.b16 %v899
      %v1008 = vunpack.c.l.b16 %v900
      %v1009 = vunpack.c.h.b16 %v900
      %v1010 = vunpack.c.l.b16 %v901
      %v1011 = vunpack.c.h.b16 %v901
      %v1012 = vunpack.c.l.b16 %v902
      %v1013 = vunpack.c.h.b16 %v902
      %v1014 = vunpack.c.l.b16 %v903
      %v1015 = vunpack.c.h.b16 %v903
      %v1016 = vunpack.c.l.b16 %v904
      %v1017 = vunpack.c.h.b16 %v904
      %v1018 = vunpack.c.l.b16 %v905
      %v1019 = vunpack.c.h.b16 %v905
      %v1020 = vunpack.c.l.b16 %v906
      %v1021 = vunpack.c.h.b16 %v906
      %v1022 = vunpack.c.l.b16 %v907
      %v1023 = vunpack.c.h.b16 %v907
      %v1024 = vunpack.c.l.b16 %v908
      %v1025 = vunpack.c.h.b16 %v908
      %v1026 = vunpack.c.l.b16 %v909
      %v1027 = vunpack.c.h.b16 %v909
      %v1028 = vunpack.c.l.b16 %v910
      %v1029 = vunpack.c.h.b16 %v910
      %v1030 = vunpack.c.l.b16 %v911
      %v1031 = vunpack.c.h.b16 %v911
      %v1032 = vunpack.c.l.b16 %v912
      %v1033 = vunpack.c.h.b16 %v912
      %v1034 = vunpack.c.l.b16 %v913
      %v1035 = vunpack.c.h.b16 %v913
      %v1036 = vunpack.c.l.b16 %v914
      %v1037 = vunpack.c.h.b16 %v914
      %v1038 = vunpack.c.l.b16 %v915
      %v1039 = vunpack.c.h.b16 %v915
      %v1040 = vunpack.c.l.b16 %v916
      %v1041 = vunpack.c.h.b16 %v916
      %v1042 = vunpack.c.l.b16 %v917
      %v1043 = vunpack.c.h.b16 %v917
      %v1044 = vunpack.c.l.b16 %v918
      %v1045 = vunpack.c.h.b16 %v918
      %v1046 = vunpack.c.l.b16 %v919
      %v1047 = vunpack.c.h.b16 %v919
      %v1048 = vunpack.c.l.b16 %v920
      %v1049 = vunpack.c.h.b16 %v920
      %v1050 = vunpack.c.l.b16 %v921
      %v1051 = vunpack.c.h.b16 %v921
      %v1052 = vunpack.c.l.b16 %v922
      %v1053 = vunpack.c.h.b16 %v922
      %v1054 = vunpack.c.l.b16 %v923
      %v1055 = vunpack.c.h.b16 %v923
      %v1056 = vunpack.c.l.b16 %v924
      %v1057 = vunpack.c.h.b16 %v924
      %v1058 = vpack.c.b16 %v996, %v994
      %v1059 = vpack.c.b16 %v997, %v995
      %v1060 = vpack.c.b16 %v1000, %v998
      %v1061 = vpack.c.b16 %v1001, %v999
      %v1062 = vpack.c.b16 %v1004, %v1002
      %v1063 = vpack.c.b16 %v1005, %v1003
      %v1064 = vpack.c.b16 %v1008, %v1006
      %v1065 = vpack.c.b16 %v1009, %v1007
      %v1066 = vpack.c.b16 %v1012, %v1010
      %v1067 = vpack.c.b16 %v1013, %v1011
      %v1068 = vpack.c.b16 %v1016, %v1014
      %v1069 = vpack.c.b16 %v1017, %v1015
      %v1070 = vpack.c.b16 %v1020, %v1018
      %v1071 = vpack.c.b16 %v1021, %v1019
      %v1072 = vpack.c.b16 %v1024, %v1022
      %v1073 = vpack.c.b16 %v1025, %v1023
      %v1074 = vpack.c.b16 %v1028, %v1026
      %v1075 = vpack.c.b16 %v1029, %v1027
      %v1076 = vpack.c.b16 %v1032, %v1030
      %v1077 = vpack.c.b16 %v1033, %v1031
      %v1078 = vpack.c.b16 %v1036, %v1034
      %v1079 = vpack.c.b16 %v1037, %v1035
      %v1080 = vpack.c.b16 %v1040, %v1038
      %v1081 = vpack.c.b16 %v1041, %v1039
      %v1082 = vpack.c.b16 %v1044, %v1042
      %v1083 = vpack.c.b16 %v1045, %v1043
      %v1084 = vpack.c.b16 %v1048, %v1046
      %v1085 = vpack.c.b16 %v1049, %v1047
      %v1086 = vpack.c.b16 %v1052, %v1050
      %v1087 = vpack.c.b16 %v1053, %v1051
      %v1088 = vpack.c.b16 %v1056, %v1054
      %v1089 = vpack.c.b16 %v1057, %v1055
      %1122 = vmatprep.subr.bf16.mxu0 %v1059
      %1123 = vmatpush1.bf16.msra.mxu0 %v1058
      %1124 = vmatprep.subr.bf16.mxu0 %v1061
      %1125 = vmatpush1.bf16.msra.mxu0 %v1060
      %1126 = vmatprep.subr.bf16.mxu0 %v1063
      %1127 = vmatpush1.bf16.msra.mxu0 %v1062
      %1128 = vmatprep.subr.bf16.mxu0 %v1065
      %1129 = vmatpush1.bf16.msra.mxu0 %v1064
      %1130 = vmatprep.subr.bf16.mxu0 %v1067
      %1131 = vmatpush1.bf16.msra.mxu0 %v1066
      %1132 = vmatprep.subr.bf16.mxu0 %v1069
      %1133 = vmatpush1.bf16.msra.mxu0 %v1068
      %1134 = vmatprep.subr.bf16.mxu0 %v1071
      %1135 = vmatpush1.bf16.msra.mxu0 %v1070
      %1136 = vmatprep.subr.bf16.mxu0 %v1073
      %1137 = vmatpush1.bf16.msra.mxu0 %v1072
      %1138 = vmatprep.subr.bf16.mxu0 %v1075
      %1139 = vmatpush1.bf16.msra.mxu0 %v1074
      %1140 = vmatprep.subr.bf16.mxu0 %v1077
      %1141 = vmatpush1.bf16.msra.mxu0 %v1076
      %1142 = vmatprep.subr.bf16.mxu0 %v1079
      %1143 = vmatpush1.bf16.msra.mxu0 %v1078
      %1144 = vmatprep.subr.bf16.mxu0 %v1081
      %1145 = vmatpush1.bf16.msra.mxu0 %v1080
      %1146 = vmatprep.subr.bf16.mxu0 %v1083
      %1147 = vmatpush1.bf16.msra.mxu0 %v1082
      %1148 = vmatprep.subr.bf16.mxu0 %v1085
      %1149 = vmatpush1.bf16.msra.mxu0 %v1084
      %1150 = vmatprep.subr.bf16.mxu0 %v1087
      %1151 = vmatpush1.bf16.msra.mxu0 %v1086
      %1152 = vmatprep.subr.bf16.mxu0 %v1089
      %1153 = vmatpush1.bf16.msra.mxu0 %v1088
      %1154 = vmatprep.mubr.bf16.mxu0 %v959
      %1155 = vmatmul.mubr.bf16.gmra.mrb[0].mxu0 %v952
      %v1156 = vpop.f32.mrb[0].mxu0
      %v1157 = vadd.f32 %v930, %v1156
      %v1158 = vpop.f32.mrb[0].mxu0
      %v1159 = vadd.f32 %v934, %v1158
      %v1160 = vpop.f32.mrb[0].mxu0
      %v1161 = vpop.f32.mrb[0].mxu0
      %1162 = vdwg.mxu0
      %v1163 = vmax.f32 %v1157, 0.0
      %v1164 = vmax.f32 %v1159, 0.0
      %v1165 = vmin.f32 %v1163, 6.0
      %v1166 = vmin.f32 %v1164, 6.0
      %v1167 = vpack.c.bf16 %v1165, %v1165
      %v1168 = vpack.c.bf16 %v1166, %v1166
      %v1171 = vcombine.low %v1167, %v1168
      %v1173 = vunpack.c.l.s4 1983009808
      %v1174 = vunpack.c.0.s8 %v1173
      %v1175 = vlaneseq
      %v1176 = vshrl.u32 %v1175, 7
      %v1177 = vsub.s32 %v1174, %v1176
      %v1178 = vrot.slane %v1171, %v1177
      %1180 = vst [vmem:[%s224] sm:$0xf] %v1178
      %p1181 = scmp.lt.s32.totalorder %s16, 1
      %s1182 = scalar_select %p1181, %s16, 1
      %s1183 = smul.addr %s1182, 2
      %s1184 = smul.addr %s1183, 2
      %s1185 = scalar_lea.vmem %s5, %s1184
      // Predicated region
      $region41: #{mobilenet_v1_forward.17} parent=39 // pred_check
        %p1186 = pneg %p144
      $region42: #{mobilenet_v1_forward.17} parent=39 // pred_check_branch
        %1188 = sbr.rel (%p1186) target = $region44
      $region43: #{mobilenet_v1_forward.17} parent=39 // pred_region
        _
      $region44: #{mobilenet_v1_forward.17} parent=39 // pred_fallthru
        _
    $region40: #{mobilenet_v1_forward.17} parent=5 // pred_fallthru
      _
    %p1189 = scmp.le.s32.totalorder 2, %s11
    // Predicated region
    $region45: #{mobilenet_v1_forward.17} parent=5 // pred_check
      %p1190 = pneg %p1189
    $region46: #{mobilenet_v1_forward.17} parent=5 // pred_check_branch
      %1192 = sbr.rel (%p1190) target = $region48
    $region47: #{mobilenet_v1_forward.17} parent=5 // pred_region
      %s1193 = ssub.s32 %s11, 2
      // Predicated region
      $region49: #{mobilenet_v1_forward.17} parent=47 // pred_check
        %p1194 = pneg %p150
      $region50: #{mobilenet_v1_forward.17} parent=47 // pred_check_branch
        %1196 = sbr.rel (%p1194) target = $region52
      $region51: #{mobilenet_v1_forward.17} parent=47 // pred_region
        %p1197 = scmp.lt.s32.totalorder %s17, 1
        %s1198 = scalar_select %p1197, %s17, 1
        %s1199 = smul.addr %s1198, 2
        %s1200 = smul.addr %s1199, 2
        %s1201 = scalar_lea.vmem %s5, %s1200
      $region52: #{mobilenet_v1_forward.17} parent=47 // pred_fallthru
        _
    $region48: #{mobilenet_v1_forward.17} parent=5 // pred_fallthru
      _
  $region6: #{mobilenet_v1_forward.17} parent=0 // loop_footer
    %s15 = sadd.s32 1, %s11
  $region7: #{mobilenet_v1_forward.17} parent=0 // loop_footer_branch
    %10 = sbr.rel target = $region3
  $region8: #{mobilenet_v1_forward.17} parent=0 // loop_exit
    _

// kernel: mobilenet_v1_forward.18
$region0: #{mobilenet_v1_forward.18}
  #allocation0 [shape = 'u32[]', space=smem, size = 0x4, offset = 0x4, fixed_abs, tag = 'smem constant byte address 0x4 - core index']
  #allocation1 [shape = 'u32[144,128]{1,0:T(1,128)}', space=vmem, size = 0x12000, scoped, tag = 'internal scratch']
  %s0 = inlined_call_operand.vmem [shape: bf16[2,4,2,2,256], index: 0, kind: input, shape index: {}]
  %s1 = inlined_call_operand.vmem [shape: bf16[9,1,1,256], index: 1, kind: input, shape index: {}]
  %s2 = inlined_call_operand.vmem [shape: bf16[1,1,256], index: 2, kind: input, shape index: {}]
  %s3 = inlined_call_operand.vmem [shape: bf16[256,512], index: 3, kind: input, shape index: {}]
  %s4 = inlined_call_operand.vmem [shape: f32[1,512], index: 4, kind: input, shape index: {}]
  %s5 = inlined_call_operand.vmem [shape: bf16[2,1,512], index: 5, kind: output, shape index: {}]
  %s6 = sld [smem:[#allocation0]]
  $region53: #{mobilenet_v1_forward.18} parent=0
    _
  %s8 = ssub.s32 1, %s6
  %s9 = scalar_select 0, %s8, %s6
  loop: start=0, step=1, limit=4
  $region2: #{mobilenet_v1_forward.18} parent=0 // loop_pre_header
    _
  $region3: #{mobilenet_v1_forward.18} parent=0 // loop_header
    %s11 = sphi 0, %s15
    %p12 = scmp.ge.s32.totalorder %s11, 4
    %s21 = sphi 0, %s23
    %s24 = sphi 0, %s21
    %s25 = sphi 0, %s24
    %s41 = sphi 0, %s25
    %s45 = sphi 0, %s45
    %s47 = sphi 0, %s45
    %s48 = sphi 0, %s47
    %s62 = sphi 0, %s48
    %s66 = sphi 0, %s66
    %s68 = sphi 0, %s66
    %s69 = sphi 0, %s68
    %s83 = sphi 0, %s69
    %s87 = sphi 0, %s87
    %s89 = sphi 0, %s87
    %s90 = sphi 0, %s89
    %s104 = sphi 0, %s90
    %s108 = sphi 0, %s108
    %s110 = sphi 0, %s108
    %s111 = sphi 0, %s110
    %s125 = sphi 0, %s111
    %s131 = sphi 0, %s133
    %s134 = sphi 0, %s131
    %s135 = sphi 0, %s134
    %s151 = sphi 0, %s135
  $region4: #{mobilenet_v1_forward.18} parent=0 // loop_header_branch
    %14 = sbr.rel (%p12) target = $region8
  $region5: #{mobilenet_v1_forward.18} parent=0 // loop_body
    %s16 = ssub.s32 %s11, 1
    %s17 = ssub.s32 %s11, 2
    %s18 = sadd.s32 %s11, 1
    %s19 = ssub.s32 %s11, %s18
    %p20 = scmp.eq.s32.totalorder %s19, 0
    %s22 = sadd.s32 %s21, 1
    %s23 = scalar_select %p20, %s21, %s22
    %p26 = pneg %p20
    %p27 = scmp.eq.s32.totalorder %s11, 1
    %p28 = por %p26, %p27
    %p29 = scmp.ne.s32.totalorder %s21, %s24
    %p30 = scmp.eq.s32.totalorder %s11, 0
    %p31 = por %p29, %p30
    %p32 = scmp.ne.s32.totalorder %s21, %s24
    %p33 = scmp.eq.s32.totalorder %s16, 1
    %p34 = por %p32, %p33
    %p35 = scmp.ne.s32.totalorder %s24, %s25
    %p36 = scmp.eq.s32.totalorder %s16, 0
    %p37 = por %p35, %p36
    %p38 = scmp.ne.s32.totalorder %s24, %s25
    %p39 = scmp.eq.s32.totalorder %s17, 1
    %p40 = por %p38, %p39
    %p42 = scmp.ne.s32.totalorder %s25, %s41
    %p43 = scmp.eq.s32.totalorder %s17, 0
    %p44 = por %p42, %p43
    %s46 = sadd.s32 %s45, 1
    %p49 = scmp.eq.s32.totalorder %s11, 1
    %p50 = scmp.ne.s32.totalorder %s45, %s47
    %p51 = scmp.eq.s32.totalorder %s11, 0
    %p52 = por %p50, %p51
    %p53 = scmp.ne.s32.totalorder %s45, %s47
    %p54 = scmp.eq.s32.totalorder %s16, 1
    %p55 = por %p53, %p54
    %p56 = scmp.ne.s32.totalorder %s47, %s48
    %p57 = scmp.eq.s32.totalorder %s16, 0
    %p58 = por %p56, %p57
    %p59 = scmp.ne.s32.totalorder %s47, %s48
    %p60 = scmp.eq.s32.totalorder %s17, 1
    %p61 = por %p59, %p60
    %p63 = scmp.ne.s32.totalorder %s48, %s62
    %p64 = scmp.eq.s32.totalorder %s17, 0
    %p65 = por %p63, %p64
    %s67 = sadd.s32 %s66, 1
    %p70 = scmp.eq.s32.totalorder %s11, 1
    %p71 = scmp.ne.s32.totalorder %s66, %s68
    %p72 = scmp.eq.s32.totalorder %s11, 0
    %p73 = por %p71, %p72
    %p74 = scmp.ne.s32.totalorder %s66, %s68
    %p75 = scmp.eq.s32.totalorder %s16, 1
    %p76 = por %p74, %p75
    %p77 = scmp.ne.s32.totalorder %s68, %s69
    %p78 = scmp.eq.s32.totalorder %s16, 0
    %p79 = por %p77, %p78
    %p80 = scmp.ne.s32.totalorder %s68, %s69
    %p81 = scmp.eq.s32.totalorder %s17, 1
    %p82 = por %p80, %p81
    %p84 = scmp.ne.s32.totalorder %s69, %s83
    %p85 = scmp.eq.s32.totalorder %s17, 0
    %p86 = por %p84, %p85
    %s88 = sadd.s32 %s87, 1
    %p91 = scmp.eq.s32.totalorder %s11, 1
    %p92 = scmp.ne.s32.totalorder %s87, %s89
    %p93 = scmp.eq.s32.totalorder %s11, 0
    %p94 = por %p92, %p93
    %p95 = scmp.ne.s32.totalorder %s87, %s89
    %p96 = scmp.eq.s32.totalorder %s16, 1
    %p97 = por %p95, %p96
    %p98 = scmp.ne.s32.totalorder %s89, %s90
    %p99 = scmp.eq.s32.totalorder %s16, 0
    %p100 = por %p98, %p99
    %p101 = scmp.ne.s32.totalorder %s89, %s90
    %p102 = scmp.eq.s32.totalorder %s17, 1
    %p103 = por %p101, %p102
    %p105 = scmp.ne.s32.totalorder %s90, %s104
    %p106 = scmp.eq.s32.totalorder %s17, 0
    %p107 = por %p105, %p106
    %s109 = sadd.s32 %s108, 1
    %p112 = scmp.eq.s32.totalorder %s11, 1
    %p113 = scmp.ne.s32.totalorder %s108, %s110
    %p114 = scmp.eq.s32.totalorder %s11, 0
    %p115 = por %p113, %p114
    %p116 = scmp.ne.s32.totalorder %s108, %s110
    %p117 = scmp.eq.s32.totalorder %s16, 1
    %p118 = por %p116, %p117
    %p119 = scmp.ne.s32.totalorder %s110, %s111
    %p120 = scmp.eq.s32.totalorder %s16, 0
    %p121 = por %p119, %p120
    %p122 = scmp.ne.s32.totalorder %s110, %s111
    %p123 = scmp.eq.s32.totalorder %s17, 1
    %p124 = por %p122, %p123
    %p126 = scmp.ne.s32.totalorder %s111, %s125
    %p127 = scmp.eq.s32.totalorder %s17, 0
    %p128 = por %p126, %p127
    %s129 = ssub.s32 %s11, %s18
    %p130 = scmp.eq.s32.totalorder %s129, 0
    %s132 = sadd.s32 %s131, 1
    %s133 = scalar_select %p130, %s131, %s132
    %p136 = pneg %p130
    %p137 = scmp.eq.s32.totalorder %s11, 1
    %p138 = por %p136, %p137
    %p139 = scmp.ne.s32.totalorder %s131, %s134
    %p140 = scmp.eq.s32.totalorder %s11, 0
    %p141 = por %p139, %p140
    %p142 = scmp.ne.s32.totalorder %s131, %s134
    %p143 = scmp.eq.s32.totalorder %s16, 1
    %p144 = por %p142, %p143
    %p145 = scmp.ne.s32.totalorder %s134, %s135
    %p146 = scmp.eq.s32.totalorder %s16, 0
    %p147 = por %p145, %p146
    %p148 = scmp.ne.s32.totalorder %s134, %s135
    %p149 = scmp.eq.s32.totalorder %s17, 1
    %p150 = por %p148, %p149
    %p152 = scmp.ne.s32.totalorder %s135, %s151
    %p153 = scmp.eq.s32.totalorder %s17, 0
    %p154 = por %p152, %p153
    %p155 = scmp.le.s32.totalorder 1, %s11
    %p156 = scmp.lt.s32.totalorder %s11, 3
    %p157 = pnand %p155, %p156
    %p158 = pneg %p157
    // Predicated region
    $region9: #{mobilenet_v1_forward.18} parent=5 // pred_check
      _
    $region10: #{mobilenet_v1_forward.18} parent=5 // pred_check_branch
      %160 = sbr.rel (%p157) target = $region12
    $region11: #{mobilenet_v1_forward.18} parent=5 // pred_region
      %s161 = ssub.s32 %s11, 1
      // Predicated region
      $region13: #{mobilenet_v1_forward.18} parent=11 // pred_check
        %p162 = pneg %p58
      $region14: #{mobilenet_v1_forward.18} parent=11 // pred_check_branch
        %164 = sbr.rel (%p162) target = $region16
      $region15: #{mobilenet_v1_forward.18} parent=11 // pred_region
        _
      $region16: #{mobilenet_v1_forward.18} parent=11 // pred_fallthru
        _
      // Predicated region
      $region17: #{mobilenet_v1_forward.18} parent=11 // pred_check
        %p165 = pneg %p79
      $region18: #{mobilenet_v1_forward.18} parent=11 // pred_check_branch
        %167 = sbr.rel (%p165) target = $region20
      $region19: #{mobilenet_v1_forward.18} parent=11 // pred_region
        _
      $region20: #{mobilenet_v1_forward.18} parent=11 // pred_fallthru
        _
      // Predicated region
      $region21: #{mobilenet_v1_forward.18} parent=11 // pred_check
        %p168 = pneg %p100
      $region22: #{mobilenet_v1_forward.18} parent=11 // pred_check_branch
        %170 = sbr.rel (%p168) target = $region24
      $region23: #{mobilenet_v1_forward.18} parent=11 // pred_region
        _
      $region24: #{mobilenet_v1_forward.18} parent=11 // pred_fallthru
        _
      // Predicated region
      $region25: #{mobilenet_v1_forward.18} parent=11 // pred_check
        %p171 = pneg %p121
      $region26: #{mobilenet_v1_forward.18} parent=11 // pred_check_branch
        %173 = sbr.rel (%p171) target = $region28
      $region27: #{mobilenet_v1_forward.18} parent=11 // pred_region
        _
      $region28: #{mobilenet_v1_forward.18} parent=11 // pred_fallthru
        _
    $region12: #{mobilenet_v1_forward.18} parent=5 // pred_fallthru
      _
    %p174 = scmp.lt.s32.totalorder %s11, 2
    // Predicated region
    $region29: #{mobilenet_v1_forward.18} parent=5 // pred_check
      %p175 = pneg %p174
    $region30: #{mobilenet_v1_forward.18} parent=5 // pred_check_branch
      %177 = sbr.rel (%p175) target = $region32
    $region31: #{mobilenet_v1_forward.18} parent=5 // pred_region
      // Predicated region
      $region33: #{mobilenet_v1_forward.18} parent=31 // pred_check
        %p178 = pneg %p31
      $region34: #{mobilenet_v1_forward.18} parent=31 // pred_check_branch
        %180 = sbr.rel (%p178) target = $region36
      $region35: #{mobilenet_v1_forward.18} parent=31 // pred_region
        %p181 = scmp.lt.s32.totalorder %s11, 1
        %s182 = scalar_select %p181, %s11, 1
        %s183 = smul.addr %s182, 16
        %s184 = scalar_lea.vmem %s0, %s183
      $region36: #{mobilenet_v1_forward.18} parent=31 // pred_fallthru
        _
    $region32: #{mobilenet_v1_forward.18} parent=5 // pred_fallthru
      _
    %p185 = scmp.le.s32.totalorder 1, %s11
    %p186 = scmp.lt.s32.totalorder %s11, 3
    %p187 = pnand %p185, %p186
    %p188 = pneg %p187
    // Predicated region
    $region37: #{mobilenet_v1_forward.18} parent=5 // pred_check
      _
    $region38: #{mobilenet_v1_forward.18} parent=5 // pred_check_branch
      %190 = sbr.rel (%p187) target = $region40
    $region39: #{mobilenet_v1_forward.18} parent=5 // pred_region
      %s191 = ssub.s32 %s11, 1
      %p192 = scmp.lt.s32.totalorder %s16, 1
      %s193 = scalar_select %p192, %s16, 1
      %s194 = smul.addr %s193, 16
      %s195 = scalar_lea.vmem %s0, %s194
      %p196 = pneg %p37
      %p197 = pneg %p34
      %p198 = pneg %p58
      %p199 = pneg %p55
      %p200 = pneg %p79
      %p201 = pneg %p76
      %p202 = pneg %p100
      %p203 = pneg %p97
      %p204 = pneg %p121
      %p205 = pneg %p118
      %p206 = pneg %p147
      %p207 = pneg %p144
      %p208 = scmp.lt.s32.totalorder %s16, 1
      %s209 = scalar_select %p208, %s16, 1
      %s210 = smul.addr %s209, 4
      %s211 = scalar_lea.vmem %s5, %s210
      %p212 = scmp.lt.s32.totalorder %s16, 1
      %s213 = scalar_select %p212, %s16, 1
      %s214 = smul.addr %s213, 16
      %s215 = scalar_lea.vmem %s0, %s214
      %p216 = scmp.lt.s32.totalorder %s16, 1
      %s217 = scalar_select %p216, %s16, 1
      %s218 = smul.addr %s217, 4
      %s219 = scalar_lea.vmem %s5, %s218
      %v222 = vld [vmem:[%s215] sm:$0x3]
      %v223 = vld [vmem:[%s215 + $0x2] sm:$0x3]
      %v224 = vld [vmem:[%s215 + $0x4] sm:$0x3]
      %v225 = vld [vmem:[%s215 + $0x6] sm:$0x3]
      %v226 = vld [vmem:[%s215 + $0x8] sm:$0x3]
      %v227 = vld [vmem:[%s215 + $0xc] sm:$0x3]
      %v228 = vld [vmem:[%s1] sm:$0x3]
      %v229 = vmul.bf16 %v222, %v228
      %s230 = scalar_lea.vmem %s1, 2
      %v231 = vld [vmem:[%s230] sm:$0x3]
      %v232 = vmul.bf16 %v224, %v231
      %v233 = vadd.bf16 %v229, %v232
      %s234 = scalar_lea.vmem %s1, 4
      %v235 = vld [vmem:[%s234] sm:$0x3]
      %v237 = vshll.u32 %v235, 16
      %v240 = vmul.bf16 %v222, %v237
      %v242 = vshrl.u32 %v240, 16
      %v244 = vrot.slane %v242, 7
      %v245 = vrot.slane %v244, 1
      %v247 = vadd.bf16 %v233, %v245
      %s248 = scalar_lea.vmem %s1, 6
      %v249 = vld [vmem:[%s248] sm:$0x3]
      %v250 = vmul.bf16 %v226, %v249
      %v251 = vadd.bf16 %v247, %v250
      %s252 = scalar_lea.vmem %s1, 8
      %v253 = vld [vmem:[%s252] sm:$0x3]
      %v254 = vmul.bf16 %v227, %v253
      %v255 = vadd.bf16 %v251, %v254
      %s256 = scalar_lea.vmem %s1, 10
      %v257 = vld [vmem:[%s256] sm:$0x3]
      %v259 = vshll.u32 %v257, 16
      %v262 = vmul.bf16 %v226, %v259
      %v264 = vshrl.u32 %v262, 16
      %v266 = vrot.slane %v264, 7
      %v267 = vrot.slane %v266, 1
      %v269 = vadd.bf16 %v255, %v267
      %s270 = scalar_lea.vmem %s1, 12
      %v271 = vld [vmem:[%s270] sm:$0x3]
      %v272 = vmul.bf16 %v223, %v271
      %v273 = vadd.bf16 %v269, %v272
      %s274 = scalar_lea.vmem %s1, 14
      %v275 = vld [vmem:[%s274] sm:$0x3]
      %v276 = vmul.bf16 %v225, %v275
      %v277 = vadd.bf16 %v273, %v276
      %s278 = scalar_lea.vmem %s1, 16
      %v279 = vld [vmem:[%s278] sm:$0x3]
      %v281 = vshll.u32 %v279, 16
      %v284 = vmul.bf16 %v223, %v281
      %v286 = vshrl.u32 %v284, 16
      %v288 = vrot.slane %v286, 7
      %v289 = vrot.slane %v288, 1
      %v291 = vadd.bf16 %v277, %v289
      %v292 = vld [vmem:[%s2] sm:$0x3]
      %v293 = vadd.bf16 %v291, %v292
      %v294 = vmax.bf16 %v293, 0
      %v295 = vmin.bf16 %v294, 1086341312
      %v296 = vld [vmem:[%s3] sm:$0xff]
      %v297 = vld [vmem:[%s3 + $0x8] sm:$0xff]
      %v298 = vld [vmem:[%s3 + $0x10] sm:$0xff]
      %v299 = vld [vmem:[%s3 + $0x18] sm:$0xff]
      %v300 = vld [vmem:[%s3 + $0x20] sm:$0xff]
      %v301 = vld [vmem:[%s3 + $0x28] sm:$0xff]
      %v302 = vld [vmem:[%s3 + $0x30] sm:$0xff]
      %v303 = vld [vmem:[%s3 + $0x38] sm:$0xff]
      %v304 = vld [vmem:[%s3 + $0x40] sm:$0xff]
      %v305 = vld [vmem:[%s3 + $0x48] sm:$0xff]
      %v306 = vld [vmem:[%s3 + $0x50] sm:$0xff]
      %v307 = vld [vmem:[%s3 + $0x58] sm:$0xff]
      %v308 = vld [vmem:[%s3 + $0x60] sm:$0xff]
      %v309 = vld [vmem:[%s3 + $0x68] sm:$0xff]
      %v310 = vld [vmem:[%s3 + $0x70] sm:$0xff]
      %v311 = vld [vmem:[%s3 + $0x78] sm:$0xff]
      %v312 = vld [vmem:[%s3 + $0x80] sm:$0xff]
      %v313 = vld [vmem:[%s3 + $0x88] sm:$0xff]
      %v314 = vld [vmem:[%s3 + $0x90] sm:$0xff]
      %v315 = vld [vmem:[%s3 + $0x98] sm:$0xff]
      %v316 = vld [vmem:[%s3 + $0xa0] sm:$0xff]
      %v317 = vld [vmem:[%s3 + $0xa8] sm:$0xff]
      %v318 = vld [vmem:[%s3 + $0xb0] sm:$0xff]
      %v319 = vld [vmem:[%s3 + $0xb8] sm:$0xff]
      %v320 = vld [vmem:[%s3 + $0xc0] sm:$0xff]
      %v321 = vld [vmem:[%s3 + $0xc8] sm:$0xff]
      %v322 = vld [vmem:[%s3 + $0xd0] sm:$0xff]
      %v323 = vld [vmem:[%s3 + $0xd8] sm:$0xff]
      %v324 = vld [vmem:[%s3 + $0xe0] sm:$0xff]
      %v325 = vld [vmem:[%s3 + $0xe8] sm:$0xff]
      %v326 = vld [vmem:[%s3 + $0xf0] sm:$0xff]
      %v327 = vld [vmem:[%s3 + $0xf8] sm:$0xff]
      %v328 = vld [vmem:[%s3 + $0x100] sm:$0xff]
      %v329 = vld [vmem:[%s3 + $0x108] sm:$0xff]
      %v330 = vld [vmem:[%s3 + $0x110] sm:$0xff]
      %v331 = vld [vmem:[%s3 + $0x118] sm:$0xff]
      %v332 = vld [vmem:[%s3 + $0x120] sm:$0xff]
      %v333 = vld [vmem:[%s3 + $0x128] sm:$0xff]
      %v334 = vld [vmem:[%s3 + $0x130] sm:$0xff]
      %v335 = vld [vmem:[%s3 + $0x138] sm:$0xff]
      %v336 = vld [vmem:[%s3 + $0x140] sm:$0xff]
      %v337 = vld [vmem:[%s3 + $0x148] sm:$0xff]
      %v338 = vld [vmem:[%s3 + $0x150] sm:$0xff]
      %v339 = vld [vmem:[%s3 + $0x158] sm:$0xff]
      %v340 = vld [vmem:[%s3 + $0x160] sm:$0xff]
      %v341 = vld [vmem:[%s3 + $0x168] sm:$0xff]
      %v342 = vld [vmem:[%s3 + $0x170] sm:$0xff]
      %v343 = vld [vmem:[%s3 + $0x178] sm:$0xff]
      %v344 = vld [vmem:[%s3 + $0x180] sm:$0xff]
      %v345 = vld [vmem:[%s3 + $0x188] sm:$0xff]
      %v346 = vld [vmem:[%s3 + $0x190] sm:$0xff]
      %v347 = vld [vmem:[%s3 + $0x198] sm:$0xff]
      %v348 = vld [vmem:[%s3 + $0x1a0] sm:$0xff]
      %v349 = vld [vmem:[%s3 + $0x1a8] sm:$0xff]
      %v350 = vld [vmem:[%s3 + $0x1b0] sm:$0xff]
      %v351 = vld [vmem:[%s3 + $0x1b8] sm:$0xff]
      %v352 = vld [vmem:[%s3 + $0x1c0] sm:$0xff]
      %v353 = vld [vmem:[%s3 + $0x1c8] sm:$0xff]
      %v354 = vld [vmem:[%s3 + $0x1d0] sm:$0xff]
      %v355 = vld [vmem:[%s3 + $0x1d8] sm:$0xff]
      %v356 = vld [vmem:[%s3 + $0x1e0] sm:$0xff]
      %v357 = vld [vmem:[%s3 + $0x1e8] sm:$0xff]
      %v358 = vld [vmem:[%s3 + $0x1f0] sm:$0xff]
      %v359 = vld [vmem:[%s3 + $0x1f8] sm:$0xff]
      %v360 = vld [vmem:[%s4] sm:$0xf]
      %v363 = vunpack.c.l.s4 1966171168
      %v364 = vunpack.c.0.s8 %v363
      %v365 = vlaneseq
      %v366 = vshrl.u32 %v365, 7
      %v367 = vsub.s32 %v364, %v366
      %v368 = vrot.slane %v295, %v367
      %v369 = vcombine.high %v368, %v368
      %v371 = vunpack.c.l.s4 1966171168
      %v372 = vunpack.c.0.s8 %v371
      %v373 = vlaneseq
      %v374 = vshrl.u32 %v373, 7
      %v375 = vsub.s32 %v372, %v374
      %v376 = vrot.slane %v368, %v375
      %v378 = vunpack.c.l.s4 1966171168
      %v379 = vunpack.c.0.s8 %v378
      %v380 = vlaneseq
      %v381 = vshrl.u32 %v380, 7
      %v382 = vsub.s32 %v379, %v381
      %v383 = vrot.slane %v369, %v382
      %v450 = vunpack.c.l.b16 %v296
      %v451 = vunpack.c.h.b16 %v296
      %v452 = vunpack.c.l.b16 %v297
      %v453 = vunpack.c.h.b16 %v297
      %v454 = vunpack.c.l.b16 %v298
      %v455 = vunpack.c.h.b16 %v298
      %v456 = vunpack.c.l.b16 %v299
      %v457 = vunpack.c.h.b16 %v299
      %v458 = vunpack.c.l.b16 %v300
      %v459 = vunpack.c.h.b16 %v300
      %v460 = vunpack.c.l.b16 %v301
      %v461 = vunpack.c.h.b16 %v301
      %v462 = vunpack.c.l.b16 %v302
      %v463 = vunpack.c.h.b16 %v302
      %v464 = vunpack.c.l.b16 %v303
      %v465 = vunpack.c.h.b16 %v303
      %v466 = vunpack.c.l.b16 %v304
      %v467 = vunpack.c.h.b16 %v304
      %v468 = vunpack.c.l.b16 %v305
      %v469 = vunpack.c.h.b16 %v305
      %v470 = vunpack.c.l.b16 %v306
      %v471 = vunpack.c.h.b16 %v306
      %v472 = vunpack.c.l.b16 %v307
      %v473 = vunpack.c.h.b16 %v307
      %v474 = vunpack.c.l.b16 %v308
      %v475 = vunpack.c.h.b16 %v308
      %v476 = vunpack.c.l.b16 %v309
      %v477 = vunpack.c.h.b16 %v309
      %v478 = vunpack.c.l.b16 %v310
      %v479 = vunpack.c.h.b16 %v310
      %v480 = vunpack.c.l.b16 %v311
      %v481 = vunpack.c.h.b16 %v311
      %v482 = vunpack.c.l.b16 %v312
      %v483 = vunpack.c.h.b16 %v312
      %v484 = vunpack.c.l.b16 %v313
      %v485 = vunpack.c.h.b16 %v313
      %v486 = vunpack.c.l.b16 %v314
      %v487 = vunpack.c.h.b16 %v314
      %v488 = vunpack.c.l.b16 %v315
      %v489 = vunpack.c.h.b16 %v315
      %v490 = vunpack.c.l.b16 %v316
      %v491 = vunpack.c.h.b16 %v316
      %v492 = vunpack.c.l.b16 %v317
      %v493 = vunpack.c.h.b16 %v317
      %v494 = vunpack.c.l.b16 %v318
      %v495 = vunpack.c.h.b16 %v318
      %v496 = vunpack.c.l.b16 %v319
      %v497 = vunpack.c.h.b16 %v319
      %v498 = vunpack.c.l.b16 %v320
      %v499 = vunpack.c.h.b16 %v320
      %v500 = vunpack.c.l.b16 %v321
      %v501 = vunpack.c.h.b16 %v321
      %v502 = vunpack.c.l.b16 %v322
      %v503 = vunpack.c.h.b16 %v322
      %v504 = vunpack.c.l.b16 %v323
      %v505 = vunpack.c.h.b16 %v323
      %v506 = vunpack.c.l.b16 %v324
      %v507 = vunpack.c.h.b16 %v324
      %v508 = vunpack.c.l.b16 %v325
      %v509 = vunpack.c.h.b16 %v325
      %v510 = vunpack.c.l.b16 %v326
      %v511 = vunpack.c.h.b16 %v326
      %v512 = vunpack.c.l.b16 %v327
      %v513 = vunpack.c.h.b16 %v327
      %v514 = vunpack.c.l.b16 %v328
      %v515 = vunpack.c.h.b16 %v328
      %v516 = vunpack.c.l.b16 %v329
      %v517 = vunpack.c.h.b16 %v329
      %v518 = vunpack.c.l.b16 %v330
      %v519 = vunpack.c.h.b16 %v330
      %v520 = vunpack.c.l.b16 %v331
      %v521 = vunpack.c.h.b16 %v331
      %v522 = vunpack.c.l.b16 %v332
      %v523 = vunpack.c.h.b16 %v332
      %v524 = vunpack.c.l.b16 %v333
      %v525 = vunpack.c.h.b16 %v333
      %v526 = vunpack.c.l.b16 %v334
      %v527 = vunpack.c.h.b16 %v334
      %v528 = vunpack.c.l.b16 %v335
      %v529 = vunpack.c.h.b16 %v335
      %v530 = vunpack.c.l.b16 %v336
      %v531 = vunpack.c.h.b16 %v336
      %v532 = vunpack.c.l.b16 %v337
      %v533 = vunpack.c.h.b16 %v337
      %v534 = vunpack.c.l.b16 %v338
      %v535 = vunpack.c.h.b16 %v338
      %v536 = vunpack.c.l.b16 %v339
      %v537 = vunpack.c.h.b16 %v339
      %v538 = vunpack.c.l.b16 %v340
      %v539 = vunpack.c.h.b16 %v340
      %v540 = vunpack.c.l.b16 %v341
      %v541 = vunpack.c.h.b16 %v341
      %v542 = vunpack.c.l.b16 %v342
      %v543 = vunpack.c.h.b16 %v342
      %v544 = vunpack.c.l.b16 %v343
      %v545 = vunpack.c.h.b16 %v343
      %v546 = vunpack.c.l.b16 %v344
      %v547 = vunpack.c.h.b16 %v344
      %v548 = vunpack.c.l.b16 %v345
      %v549 = vunpack.c.h.b16 %v345
      %v550 = vunpack.c.l.b16 %v346
      %v551 = vunpack.c.h.b16 %v346
      %v552 = vunpack.c.l.b16 %v347
      %v553 = vunpack.c.h.b16 %v347
      %v554 = vunpack.c.l.b16 %v348
      %v555 = vunpack.c.h.b16 %v348
      %v556 = vunpack.c.l.b16 %v349
      %v557 = vunpack.c.h.b16 %v349
      %v558 = vunpack.c.l.b16 %v350
      %v559 = vunpack.c.h.b16 %v350
      %v560 = vunpack.c.l.b16 %v351
      %v561 = vunpack.c.h.b16 %v351
      %v562 = vunpack.c.l.b16 %v352
      %v563 = vunpack.c.h.b16 %v352
      %v564 = vunpack.c.l.b16 %v353
      %v565 = vunpack.c.h.b16 %v353
      %v566 = vunpack.c.l.b16 %v354
      %v567 = vunpack.c.h.b16 %v354
      %v568 = vunpack.c.l.b16 %v355
      %v569 = vunpack.c.h.b16 %v355
      %v570 = vunpack.c.l.b16 %v356
      %v571 = vunpack.c.h.b16 %v356
      %v572 = vunpack.c.l.b16 %v357
      %v573 = vunpack.c.h.b16 %v357
      %v574 = vunpack.c.l.b16 %v358
      %v575 = vunpack.c.h.b16 %v358
      %v576 = vunpack.c.l.b16 %v359
      %v577 = vunpack.c.h.b16 %v359
      %v578 = vpack.c.b16 %v454, %v450
      %v579 = vpack.c.b16 %v455, %v451
      %v580 = vpack.c.b16 %v456, %v452
      %v581 = vpack.c.b16 %v457, %v453
      %v582 = vpack.c.b16 %v462, %v458
      %v583 = vpack.c.b16 %v463, %v459
      %v584 = vpack.c.b16 %v464, %v460
      %v585 = vpack.c.b16 %v465, %v461
      %v586 = vpack.c.b16 %v470, %v466
      %v587 = vpack.c.b16 %v471, %v467
      %v588 = vpack.c.b16 %v472, %v468
      %v589 = vpack.c.b16 %v473, %v469
      %v590 = vpack.c.b16 %v478, %v474
      %v591 = vpack.c.b16 %v479, %v475
      %v592 = vpack.c.b16 %v480, %v476
      %v593 = vpack.c.b16 %v481, %v477
      %v594 = vpack.c.b16 %v486, %v482
      %v595 = vpack.c.b16 %v487, %v483
      %v596 = vpack.c.b16 %v488, %v484
      %v597 = vpack.c.b16 %v489, %v485
      %v598 = vpack.c.b16 %v494, %v490
      %v599 = vpack.c.b16 %v495, %v491
      %v600 = vpack.c.b16 %v496, %v492
      %v601 = vpack.c.b16 %v497, %v493
      %v602 = vpack.c.b16 %v502, %v498
      %v603 = vpack.c.b16 %v503, %v499
      %v604 = vpack.c.b16 %v504, %v500
      %v605 = vpack.c.b16 %v505, %v501
      %v606 = vpack.c.b16 %v510, %v506
      %v607 = vpack.c.b16 %v511, %v507
      %v608 = vpack.c.b16 %v512, %v508
      %v609 = vpack.c.b16 %v513, %v509
      %v610 = vpack.c.b16 %v518, %v514
      %v611 = vpack.c.b16 %v519, %v515
      %v612 = vpack.c.b16 %v520, %v516
      %v613 = vpack.c.b16 %v521, %v517
      %v614 = vpack.c.b16 %v526, %v522
      %v615 = vpack.c.b16 %v527, %v523
      %v616 = vpack.c.b16 %v528, %v524
      %v617 = vpack.c.b16 %v529, %v525
      %v618 = vpack.c.b16 %v534, %v530
      %v619 = vpack.c.b16 %v535, %v531
      %v620 = vpack.c.b16 %v536, %v532
      %v621 = vpack.c.b16 %v537, %v533
      %v622 = vpack.c.b16 %v542, %v538
      %v623 = vpack.c.b16 %v543, %v539
      %v624 = vpack.c.b16 %v544, %v540
      %v625 = vpack.c.b16 %v545, %v541
      %v626 = vpack.c.b16 %v550, %v546
      %v627 = vpack.c.b16 %v551, %v547
      %v628 = vpack.c.b16 %v552, %v548
      %v629 = vpack.c.b16 %v553, %v549
      %v630 = vpack.c.b16 %v558, %v554
      %v631 = vpack.c.b16 %v559, %v555
      %v632 = vpack.c.b16 %v560, %v556
      %v633 = vpack.c.b16 %v561, %v557
      %v634 = vpack.c.b16 %v566, %v562
      %v635 = vpack.c.b16 %v567, %v563
      %v636 = vpack.c.b16 %v568, %v564
      %v637 = vpack.c.b16 %v569, %v565
      %v638 = vpack.c.b16 %v574, %v570
      %v639 = vpack.c.b16 %v575, %v571
      %v640 = vpack.c.b16 %v576, %v572
      %v641 = vpack.c.b16 %v577, %v573
      %v707 = vlaneseq
      %v708 = vshrl.u32 %v707, 7
      %v709 = vsub.s32 0, %v708
      %v710 = vrot.slane %v360, %v709
      %v711 = vlaneseq
      %v712 = vshrl.u32 %v711, 7
      %v713 = vsub.s32 1, %v712
      %v714 = vrot.slane %v360, %v713
      %v715 = vlaneseq
      %v716 = vshrl.u32 %v715, 7
      %v717 = vsub.s32 2, %v716
      %v718 = vrot.slane %v360, %v717
      %v719 = vlaneseq
      %v720 = vshrl.u32 %v719, 7
      %v721 = vsub.s32 3, %v720
      %v722 = vrot.slane %v360, %v721
      %727 = vmatprep.subr.bf16.mxu0 %v579
      %728 = vmatpush1.bf16.msra.mxu0 %v578
      %729 = vmatprep.subr.bf16.mxu0 %v583
      %730 = vmatpush1.bf16.msra.mxu0 %v582
      %731 = vmatprep.subr.bf16.mxu0 %v587
      %732 = vmatpush1.bf16.msra.mxu0 %v586
      %733 = vmatprep.subr.bf16.mxu0 %v591
      %734 = vmatpush1.bf16.msra.mxu0 %v590
      %735 = vmatprep.subr.bf16.mxu0 %v595
      %736 = vmatpush1.bf16.msra.mxu0 %v594
      %737 = vmatprep.subr.bf16.mxu0 %v599
      %738 = vmatpush1.bf16.msra.mxu0 %v598
      %739 = vmatprep.subr.bf16.mxu0 %v603
      %740 = vmatpush1.bf16.msra.mxu0 %v602
      %741 = vmatprep.subr.bf16.mxu0 %v607
      %742 = vmatpush1.bf16.msra.mxu0 %v606
      %743 = vmatprep.subr.bf16.mxu0 %v611
      %744 = vmatpush1.bf16.msra.mxu0 %v610
      %745 = vmatprep.subr.bf16.mxu0 %v615
      %746 = vmatpush1.bf16.msra.mxu0 %v614
      %747 = vmatprep.subr.bf16.mxu0 %v619
      %748 = vmatpush1.bf16.msra.mxu0 %v618
      %749 = vmatprep.subr.bf16.mxu0 %v623
      %750 = vmatpush1.bf16.msra.mxu0 %v622
      %751 = vmatprep.subr.bf16.mxu0 %v627
      %752 = vmatpush1.bf16.msra.mxu0 %v626
      %753 = vmatprep.subr.bf16.mxu0 %v631
      %754 = vmatpush1.bf16.msra.mxu0 %v630
      %755 = vmatprep.subr.bf16.mxu0 %v635
      %756 = vmatpush1.bf16.msra.mxu0 %v634
      %757 = vmatprep.subr.bf16.mxu0 %v639
      %758 = vmatpush1.bf16.msra.mxu0 %v638
      %759 = vmatprep.mubr.bf16.mxu0 %v383
      %760 = vmatmul.mubr.bf16.gmra.mrb[0].mxu0 %v376
      %v761 = vpop.f32.mrb[0].mxu0
      %v762 = vadd.f32 %v710, %v761
      %v763 = vpop.f32.mrb[0].mxu0
      %v764 = vadd.f32 %v714, %v763
      %v765 = vpop.f32.mrb[0].mxu0
      %v766 = vpop.f32.mrb[0].mxu0
      %767 = vdwg.mxu0
      %768 = vmatprep.subr.bf16.mxu0 %v581
      %769 = vmatpush1.bf16.msra.mxu0 %v580
      %770 = vmatprep.subr.bf16.mxu0 %v585
      %771 = vmatpush1.bf16.msra.mxu0 %v584
      %772 = vmatprep.subr.bf16.mxu0 %v589
      %773 = vmatpush1.bf16.msra.mxu0 %v588
      %774 = vmatprep.subr.bf16.mxu0 %v593
      %775 = vmatpush1.bf16.msra.mxu0 %v592
      %776 = vmatprep.subr.bf16.mxu0 %v597
      %777 = vmatpush1.bf16.msra.mxu0 %v596
      %778 = vmatprep.subr.bf16.mxu0 %v601
      %779 = vmatpush1.bf16.msra.mxu0 %v600
      %780 = vmatprep.subr.bf16.mxu0 %v605
      %781 = vmatpush1.bf16.msra.mxu0 %v604
      %782 = vmatprep.subr.bf16.mxu0 %v609
      %783 = vmatpush1.bf16.msra.mxu0 %v608
      %784 = vmatprep.subr.bf16.mxu0 %v613
      %785 = vmatpush1.bf16.msra.mxu0 %v612
      %786 = vmatprep.subr.bf16.mxu0 %v617
      %787 = vmatpush1.bf16.msra.mxu0 %v616
      %788 = vmatprep.subr.bf16.mxu0 %v621
      %789 = vmatpush1.bf16.msra.mxu0 %v620
      %790 = vmatprep.subr.bf16.mxu0 %v625
      %791 = vmatpush1.bf16.msra.mxu0 %v624
      %792 = vmatprep.subr.bf16.mxu0 %v629
      %793 = vmatpush1.bf16.msra.mxu0 %v628
      %794 = vmatprep.subr.bf16.mxu0 %v633
      %795 = vmatpush1.bf16.msra.mxu0 %v632
      %796 = vmatprep.subr.bf16.mxu0 %v637
      %797 = vmatpush1.bf16.msra.mxu0 %v636
      %798 = vmatprep.subr.bf16.mxu0 %v641
      %799 = vmatpush1.bf16.msra.mxu0 %v640
      %800 = vmatprep.mubr.bf16.mxu0 %v383
      %801 = vmatmul.mubr.bf16.gmra.mrb[0].mxu0 %v376
      %v802 = vpop.f32.mrb[0].mxu0
      %v803 = vadd.f32 %v718, %v802
      %v804 = vpop.f32.mrb[0].mxu0
      %v805 = vadd.f32 %v722, %v804
      %v806 = vpop.f32.mrb[0].mxu0
      %v807 = vpop.f32.mrb[0].mxu0
      %808 = vdwg.mxu0
      %v809 = vmax.f32 %v762, 0.0
      %v810 = vmax.f32 %v764, 0.0
      %v811 = vmax.f32 %v803, 0.0
      %v812 = vmax.f32 %v805, 0.0
      %v813 = vmin.f32 %v809, 6.0
      %v814 = vmin.f32 %v810, 6.0
      %v815 = vmin.f32 %v811, 6.0
      %v816 = vmin.f32 %v812, 6.0
      %v817 = vpack.c.bf16 %v813, %v813
      %v818 = vpack.c.bf16 %v814, %v814
      %v819 = vpack.c.bf16 %v815, %v815
      %v820 = vpack.c.bf16 %v816, %v816
      %v825 = vcombine.low %v817, %v818
      %v826 = vcombine.low %v819, %v820
      %v828 = vunpack.c.l.s4 1966171168
      %v829 = vunpack.c.0.s8 %v828
      %v830 = vlaneseq
      %v831 = vshrl.u32 %v830, 7
      %v832 = vsub.s32 %v829, %v831
      %v833 = vrot.slane %v825, %v832
      %v835 = vunpack.c.l.s4 1966171168
      %v836 = vunpack.c.0.s8 %v835
      %v837 = vlaneseq
      %v838 = vshrl.u32 %v837, 7
      %v839 = vsub.s32 %v836, %v838
      %v840 = vrot.slane %v826, %v839
      %v841 = vcombine.low %v833, %v840
      %v843 = vunpack.c.l.s4 1966171168
      %v844 = vunpack.c.0.s8 %v843
      %v845 = vlaneseq
      %v846 = vshrl.u32 %v845, 7
      %v847 = vsub.s32 %v844, %v846
      %v848 = vrot.slane %v841, %v847
      %vm850 = vcmask 1040384
      %vm851 = vsmask.f32 256
      %vm852 = vmand %vm850, %vm851
      %vm853 = vcmask 1041409
      %vm854 = vsmask.f32 1280
      %vm855 = vmand %vm853, %vm854
      %vm856 = vmor %vm855, %vm852
      %vm857 = vcmask 1042434
      %vm858 = vsmask.f32 2304
      %vm859 = vmand %vm857, %vm858
      %vm860 = vmor %vm859, %vm856
      %vm861 = vcmask 1043459
      %vm862 = vsmask.f32 3328
      %vm863 = vmand %vm861, %vm862
      %vm864 = vmor %vm863, %vm860
      %v865 = vld [vmem:[%s219] sm:$0xf]
      %v866 = vsel %vm864, %v848, %v865
      %867 = vst [vmem:[%s219] sm:$0xf] %v866
      %p868 = scmp.lt.s32.totalorder %s16, 1
      %s869 = scalar_select %p868, %s16, 1
      %s870 = smul.addr %s869, 4
      %s871 = scalar_lea.vmem %s5, %s870
      // Predicated region
      $region41: #{mobilenet_v1_forward.18} parent=39 // pred_check
        %p872 = pneg %p144
      $region42: #{mobilenet_v1_forward.18} parent=39 // pred_check_branch
        %874 = sbr.rel (%p872) target = $region44
      $region43: #{mobilenet_v1_forward.18} parent=39 // pred_region
        _
      $region44: #{mobilenet_v1_forward.18} parent=39 // pred_fallthru
        _
    $region40: #{mobilenet_v1_forward.18} parent=5 // pred_fallthru
      _
    %p875 = scmp.le.s32.totalorder 2, %s11
    // Predicated region
    $region45: #{mobilenet_v1_forward.18} parent=5 // pred_check
      %p876 = pneg %p875
    $region46: #{mobilenet_v1_forward.18} parent=5 // pred_check_branch
      %878 = sbr.rel (%p876) target = $region48
    $region47: #{mobilenet_v1_forward.18} parent=5 // pred_region
      %s879 = ssub.s32 %s11, 2
      // Predicated region
      $region49: #{mobilenet_v1_forward.18} parent=47 // pred_check
        %p880 = pneg %p150
      $region50: #{mobilenet_v1_forward.18} parent=47 // pred_check_branch
        %882 = sbr.rel (%p880) target = $region52
      $region51: #{mobilenet_v1_forward.18} parent=47 // pred_region
        %p883 = scmp.lt.s32.totalorder %s17, 1
        %s884 = scalar_select %p883, %s17, 1
        %s885 = smul.addr %s884, 4
        %s886 = scalar_lea.vmem %s5, %s885
      $region52: #{mobilenet_v1_forward.18} parent=47 // pred_fallthru
        _
    $region48: #{mobilenet_v1_forward.18} parent=5 // pred_fallthru
      _
  $region6: #{mobilenet_v1_forward.18} parent=0 // loop_footer
    %s15 = sadd.s32 1, %s11
  $region7: #{mobilenet_v1_forward.18} parent=0 // loop_footer_branch
    %10 = sbr.rel target = $region3
  $region8: #{mobilenet_v1_forward.18} parent=0 // loop_exit
    _

// kernel: mobilenet_v1_forward.19
$region0: #{mobilenet_v1_forward.19}
  #allocation0 [shape = 'u32[]', space=smem, size = 0x4, offset = 0x4, fixed_abs, tag = 'smem constant byte address 0x4 - core index']
  #allocation1 [shape = 'u32[144,128]{1,0:T(1,128)}', space=vmem, size = 0x12000, scoped, tag = 'internal scratch']
  %s0 = inlined_call_operand.vmem [shape: bf16[2,3,3,512], index: 0, kind: input, shape index: {}]
  %s1 = inlined_call_operand.vmem [shape: bf16[9,1,1,512], index: 1, kind: input, shape index: {}]
  %s2 = inlined_call_operand.vmem [shape: bf16[1,1,512], index: 2, kind: input, shape index: {}]
  %s3 = inlined_call_operand.vmem [shape: bf16[512,512], index: 3, kind: input, shape index: {}]
  %s4 = inlined_call_operand.vmem [shape: f32[1,512], index: 4, kind: input, shape index: {}]
  %s5 = inlined_call_operand.vmem [shape: bf16[2,1,512], index: 5, kind: output, shape index: {}]
  %s6 = sld [smem:[#allocation0]]
  $region53: #{mobilenet_v1_forward.19} parent=0
    _
  %s8 = ssub.s32 1, %s6
  %s9 = scalar_select 0, %s8, %s6
  loop: start=0, step=1, limit=4
  $region2: #{mobilenet_v1_forward.19} parent=0 // loop_pre_header
    _
  $region3: #{mobilenet_v1_forward.19} parent=0 // loop_header
    %s11 = sphi 0, %s15
    %p12 = scmp.ge.s32.totalorder %s11, 4
    %s21 = sphi 0, %s23
    %s24 = sphi 0, %s21
    %s25 = sphi 0, %s24
    %s41 = sphi 0, %s25
    %s45 = sphi 0, %s45
    %s47 = sphi 0, %s45
    %s48 = sphi 0, %s47
    %s62 = sphi 0, %s48
    %s66 = sphi 0, %s66
    %s68 = sphi 0, %s66
    %s69 = sphi 0, %s68
    %s83 = sphi 0, %s69
    %s87 = sphi 0, %s87
    %s89 = sphi 0, %s87
    %s90 = sphi 0, %s89
    %s104 = sphi 0, %s90
    %s108 = sphi 0, %s108
    %s110 = sphi 0, %s108
    %s111 = sphi 0, %s110
    %s125 = sphi 0, %s111
    %s131 = sphi 0, %s133
    %s134 = sphi 0, %s131
    %s135 = sphi 0, %s134
    %s151 = sphi 0, %s135
  $region4: #{mobilenet_v1_forward.19} parent=0 // loop_header_branch
    %14 = sbr.rel (%p12) target = $region8
  $region5: #{mobilenet_v1_forward.19} parent=0 // loop_body
    %s16 = ssub.s32 %s11, 1
    %s17 = ssub.s32 %s11, 2
    %s18 = sadd.s32 %s11, 1
    %s19 = ssub.s32 %s11, %s18
    %p20 = scmp.eq.s32.totalorder %s19, 0
    %s22 = sadd.s32 %s21, 1
    %s23 = scalar_select %p20, %s21, %s22
    %p26 = pneg %p20
    %p27 = scmp.eq.s32.totalorder %s11, 1
    %p28 = por %p26, %p27
    %p29 = scmp.ne.s32.totalorder %s21, %s24
    %p30 = scmp.eq.s32.totalorder %s11, 0
    %p31 = por %p29, %p30
    %p32 = scmp.ne.s32.totalorder %s21, %s24
    %p33 = scmp.eq.s32.totalorder %s16, 1
    %p34 = por %p32, %p33
    %p35 = scmp.ne.s32.totalorder %s24, %s25
    %p36 = scmp.eq.s32.totalorder %s16, 0
    %p37 = por %p35, %p36
    %p38 = scmp.ne.s32.totalorder %s24, %s25
    %p39 = scmp.eq.s32.totalorder %s17, 1
    %p40 = por %p38, %p39
    %p42 = scmp.ne.s32.totalorder %s25, %s41
    %p43 = scmp.eq.s32.totalorder %s17, 0
    %p44 = por %p42, %p43
    %s46 = sadd.s32 %s45, 1
    %p49 = scmp.eq.s32.totalorder %s11, 1
    %p50 = scmp.ne.s32.totalorder %s45, %s47
    %p51 = scmp.eq.s32.totalorder %s11, 0
    %p52 = por %p50, %p51
    %p53 = scmp.ne.s32.totalorder %s45, %s47
    %p54 = scmp.eq.s32.totalorder %s16, 1
    %p55 = por %p53, %p54
    %p56 = scmp.ne.s32.totalorder %s47, %s48
    %p57 = scmp.eq.s32.totalorder %s16, 0
    %p58 = por %p56, %p57
    %p59 = scmp.ne.s32.totalorder %s47, %s48
    %p60 = scmp.eq.s32.totalorder %s17, 1
    %p61 = por %p59, %p60
    %p63 = scmp.ne.s32.totalorder %s48, %s62
    %p64 = scmp.eq.s32.totalorder %s17, 0
    %p65 = por %p63, %p64
    %s67 = sadd.s32 %s66, 1
    %p70 = scmp.eq.s32.totalorder %s11, 1
    %p71 = scmp.ne.s32.totalorder %s66, %s68
    %p72 = scmp.eq.s32.totalorder %s11, 0
    %p73 = por %p71, %p72
    %p74 = scmp.ne.s32.totalorder %s66, %s68
    %p75 = scmp.eq.s32.totalorder %s16, 1
    %p76 = por %p74, %p75
    %p77 = scmp.ne.s32.totalorder %s68, %s69
    %p78 = scmp.eq.s32.totalorder %s16, 0
    %p79 = por %p77, %p78
    %p80 = scmp.ne.s32.totalorder %s68, %s69
    %p81 = scmp.eq.s32.totalorder %s17, 1
    %p82 = por %p80, %p81
    %p84 = scmp.ne.s32.totalorder %s69, %s83
    %p85 = scmp.eq.s32.totalorder %s17, 0
    %p86 = por %p84, %p85
    %s88 = sadd.s32 %s87, 1
    %p91 = scmp.eq.s32.totalorder %s11, 1
    %p92 = scmp.ne.s32.totalorder %s87, %s89
    %p93 = scmp.eq.s32.totalorder %s11, 0
    %p94 = por %p92, %p93
    %p95 = scmp.ne.s32.totalorder %s87, %s89
    %p96 = scmp.eq.s32.totalorder %s16, 1
    %p97 = por %p95, %p96
    %p98 = scmp.ne.s32.totalorder %s89, %s90
    %p99 = scmp.eq.s32.totalorder %s16, 0
    %p100 = por %p98, %p99
    %p101 = scmp.ne.s32.totalorder %s89, %s90
    %p102 = scmp.eq.s32.totalorder %s17, 1
    %p103 = por %p101, %p102
    %p105 = scmp.ne.s32.totalorder %s90, %s104
    %p106 = scmp.eq.s32.totalorder %s17, 0
    %p107 = por %p105, %p106
    %s109 = sadd.s32 %s108, 1
    %p112 = scmp.eq.s32.totalorder %s11, 1
    %p113 = scmp.ne.s32.totalorder %s108, %s110
    %p114 = scmp.eq.s32.totalorder %s11, 0
    %p115 = por %p113, %p114
    %p116 = scmp.ne.s32.totalorder %s108, %s110
    %p117 = scmp.eq.s32.totalorder %s16, 1
    %p118 = por %p116, %p117
    %p119 = scmp.ne.s32.totalorder %s110, %s111
    %p120 = scmp.eq.s32.totalorder %s16, 0
    %p121 = por %p119, %p120
    %p122 = scmp.ne.s32.totalorder %s110, %s111
    %p123 = scmp.eq.s32.totalorder %s17, 1
    %p124 = por %p122, %p123
    %p126 = scmp.ne.s32.totalorder %s111, %s125
    %p127 = scmp.eq.s32.totalorder %s17, 0
    %p128 = por %p126, %p127
    %s129 = ssub.s32 %s11, %s18
    %p130 = scmp.eq.s32.totalorder %s129, 0
    %s132 = sadd.s32 %s131, 1
    %s133 = scalar_select %p130, %s131, %s132
    %p136 = pneg %p130
    %p137 = scmp.eq.s32.totalorder %s11, 1
    %p138 = por %p136, %p137
    %p139 = scmp.ne.s32.totalorder %s131, %s134
    %p140 = scmp.eq.s32.totalorder %s11, 0
    %p141 = por %p139, %p140
    %p142 = scmp.ne.s32.totalorder %s131, %s134
    %p143 = scmp.eq.s32.totalorder %s16, 1
    %p144 = por %p142, %p143
    %p145 = scmp.ne.s32.totalorder %s134, %s135
    %p146 = scmp.eq.s32.totalorder %s16, 0
    %p147 = por %p145, %p146
    %p148 = scmp.ne.s32.totalorder %s134, %s135
    %p149 = scmp.eq.s32.totalorder %s17, 1
    %p150 = por %p148, %p149
    %p152 = scmp.ne.s32.totalorder %s135, %s151
    %p153 = scmp.eq.s32.totalorder %s17, 0
    %p154 = por %p152, %p153
    %p155 = scmp.le.s32.totalorder 1, %s11
    %p156 = scmp.lt.s32.totalorder %s11, 3
    %p157 = pnand %p155, %p156
    %p158 = pneg %p157
    // Predicated region
    $region9: #{mobilenet_v1_forward.19} parent=5 // pred_check
      _
    $region10: #{mobilenet_v1_forward.19} parent=5 // pred_check_branch
      %160 = sbr.rel (%p157) target = $region12
    $region11: #{mobilenet_v1_forward.19} parent=5 // pred_region
      %s161 = ssub.s32 %s11, 1
      // Predicated region
      $region13: #{mobilenet_v1_forward.19} parent=11 // pred_check
        %p162 = pneg %p58
      $region14: #{mobilenet_v1_forward.19} parent=11 // pred_check_branch
        %164 = sbr.rel (%p162) target = $region16
      $region15: #{mobilenet_v1_forward.19} parent=11 // pred_region
        _
      $region16: #{mobilenet_v1_forward.19} parent=11 // pred_fallthru
        _
      // Predicated region
      $region17: #{mobilenet_v1_forward.19} parent=11 // pred_check
        %p165 = pneg %p79
      $region18: #{mobilenet_v1_forward.19} parent=11 // pred_check_branch
        %167 = sbr.rel (%p165) target = $region20
      $region19: #{mobilenet_v1_forward.19} parent=11 // pred_region
        _
      $region20: #{mobilenet_v1_forward.19} parent=11 // pred_fallthru
        _
      // Predicated region
      $region21: #{mobilenet_v1_forward.19} parent=11 // pred_check
        %p168 = pneg %p100
      $region22: #{mobilenet_v1_forward.19} parent=11 // pred_check_branch
        %170 = sbr.rel (%p168) target = $region24
      $region23: #{mobilenet_v1_forward.19} parent=11 // pred_region
        _
      $region24: #{mobilenet_v1_forward.19} parent=11 // pred_fallthru
        _
      // Predicated region
      $region25: #{mobilenet_v1_forward.19} parent=11 // pred_check
        %p171 = pneg %p121
      $region26: #{mobilenet_v1_forward.19} parent=11 // pred_check_branch
        %173 = sbr.rel (%p171) target = $region28
      $region27: #{mobilenet_v1_forward.19} parent=11 // pred_region
        _
      $region28: #{mobilenet_v1_forward.19} parent=11 // pred_fallthru
        _
    $region12: #{mobilenet_v1_forward.19} parent=5 // pred_fallthru
      _
    %p174 = scmp.lt.s32.totalorder %s11, 2
    // Predicated region
    $region29: #{mobilenet_v1_forward.19} parent=5 // pred_check
      %p175 = pneg %p174
    $region30: #{mobilenet_v1_forward.19} parent=5 // pred_check_branch
      %177 = sbr.rel (%p175) target = $region32
    $region31: #{mobilenet_v1_forward.19} parent=5 // pred_region
      // Predicated region
      $region33: #{mobilenet_v1_forward.19} parent=31 // pred_check
        %p178 = pneg %p31
      $region34: #{mobilenet_v1_forward.19} parent=31 // pred_check_branch
        %180 = sbr.rel (%p178) target = $region36
      $region35: #{mobilenet_v1_forward.19} parent=31 // pred_region
        %p181 = scmp.lt.s32.totalorder %s11, 1
        %s182 = scalar_select %p181, %s11, 1
        %s183 = smul.addr %s182, 12
        %s184 = smul.addr %s183, 2
        %s185 = scalar_lea.vmem %s0, %s184
      $region36: #{mobilenet_v1_forward.19} parent=31 // pred_fallthru
        _
    $region32: #{mobilenet_v1_forward.19} parent=5 // pred_fallthru
      _
    %p186 = scmp.le.s32.totalorder 1, %s11
    %p187 = scmp.lt.s32.totalorder %s11, 3
    %p188 = pnand %p186, %p187
    %p189 = pneg %p188
    // Predicated region
    $region37: #{mobilenet_v1_forward.19} parent=5 // pred_check
      _
    $region38: #{mobilenet_v1_forward.19} parent=5 // pred_check_branch
      %191 = sbr.rel (%p188) target = $region40
    $region39: #{mobilenet_v1_forward.19} parent=5 // pred_region
      %s192 = ssub.s32 %s11, 1
      %p193 = scmp.lt.s32.totalorder %s16, 1
      %s194 = scalar_select %p193, %s16, 1
      %s195 = smul.addr %s194, 12
      %s196 = smul.addr %s195, 2
      %s197 = scalar_lea.vmem %s0, %s196
      %p198 = pneg %p37
      %p199 = pneg %p34
      %p200 = pneg %p58
      %p201 = pneg %p55
      %p202 = pneg %p79
      %p203 = pneg %p76
      %p204 = pneg %p100
      %p205 = pneg %p97
      %p206 = pneg %p121
      %p207 = pneg %p118
      %p208 = pneg %p147
      %p209 = pneg %p144
      %p210 = scmp.lt.s32.totalorder %s16, 1
      %s211 = scalar_select %p210, %s16, 1
      %s212 = smul.addr %s211, 4
      %s213 = scalar_lea.vmem %s5, %s212
      %p214 = scmp.lt.s32.totalorder %s16, 1
      %s215 = scalar_select %p214, %s16, 1
      %s216 = smul.addr %s215, 12
      %s217 = smul.addr %s216, 2
      %s218 = scalar_lea.vmem %s0, %s217
      %p219 = scmp.lt.s32.totalorder %s16, 1
      %s220 = scalar_select %p219, %s16, 1
      %s221 = smul.addr %s220, 4
      %s222 = scalar_lea.vmem %s5, %s221
      %v225 = vld [vmem:[%s218] sm:$0xff]
      %v226 = vld [vmem:[%s218 + $0x8] sm:$0xff]
      %v227 = vld [vmem:[%s218 + $0x10] sm:$0xff]
      %v228 = vld [vmem:[%s1] sm:$0xf]
      %v231 = vunpack.c.l.s4 1935823168
      %v232 = vunpack.c.0.s8 %v231
      %v233 = vlaneseq
      %v234 = vshrl.u32 %v233, 7
      %v235 = vsub.s32 %v232, %v234
      %v236 = vrot.slane %v228, %v235
      %v238 = vmul.bf16 %v225, %v236
      %s239 = scalar_lea.vmem %s1, 4
      %v240 = vld [vmem:[%s239] sm:$0xf]
      %v243 = vunpack.c.l.s4 1935823168
      %v244 = vunpack.c.0.s8 %v243
      %v245 = vlaneseq
      %v246 = vshrl.u32 %v245, 7
      %v247 = vsub.s32 %v244, %v246
      %v248 = vrot.slane %v240, %v247
      %v250 = vshll.u32 %v248, 16
      %v253 = vmul.bf16 %v225, %v250
      %v255 = vshrl.u32 %v253, 16
      %v257 = vrot.slane %v255, 6
      %v258 = vrot.slane %v257, 2
      %v260 = vadd.bf16 %v238, %v258
      %s261 = scalar_lea.vmem %s1, 8
      %v262 = vld [vmem:[%s261] sm:$0xf]
      %v264 = vcombine.low %v262, %v262
      %v266 = vunpack.c.l.s4 1935823168
      %v267 = vunpack.c.0.s8 %v266
      %v268 = vlaneseq
      %v269 = vshrl.u32 %v268, 7
      %v270 = vsub.s32 %v267, %v269
      %v271 = vrot.slane %v264, %v270
      %v273 = vmul.bf16 %v225, %v271
      %v275 = vrot.slane %v273, 7
      %v276 = vrot.slane %v275, 2
      %v278 = vadd.bf16 %v260, %v276
      %s279 = scalar_lea.vmem %s1, 12
      %v280 = vld [vmem:[%s279] sm:$0xf]
      %v283 = vunpack.c.l.s4 1935823168
      %v284 = vunpack.c.0.s8 %v283
      %v285 = vlaneseq
      %v286 = vshrl.u32 %v285, 7
      %v287 = vsub.s32 %v284, %v286
      %v288 = vrot.slane %v280, %v287
      %v290 = vmul.bf16 %v226, %v288
      %v291 = vadd.bf16 %v278, %v290
      %s292 = scalar_lea.vmem %s1, 16
      %v293 = vld [vmem:[%s292] sm:$0xf]
      %v296 = vunpack.c.l.s4 1935823168
      %v297 = vunpack.c.0.s8 %v296
      %v298 = vlaneseq
      %v299 = vshrl.u32 %v298, 7
      %v300 = vsub.s32 %v297, %v299
      %v301 = vrot.slane %v293, %v300
      %v303 = vshll.u32 %v301, 16
      %v306 = vmul.bf16 %v226, %v303
      %v308 = vshrl.u32 %v306, 16
      %v310 = vrot.slane %v308, 6
      %v311 = vrot.slane %v310, 2
      %v313 = vadd.bf16 %v291, %v311
      %s314 = scalar_lea.vmem %s1, 20
      %v315 = vld [vmem:[%s314] sm:$0xf]
      %v317 = vcombine.low %v315, %v315
      %v319 = vunpack.c.l.s4 1935823168
      %v320 = vunpack.c.0.s8 %v319
      %v321 = vlaneseq
      %v322 = vshrl.u32 %v321, 7
      %v323 = vsub.s32 %v320, %v322
      %v324 = vrot.slane %v317, %v323
      %v326 = vmul.bf16 %v226, %v324
      %v328 = vrot.slane %v326, 7
      %v329 = vrot.slane %v328, 2
      %v331 = vadd.bf16 %v313, %v329
      %s332 = scalar_lea.vmem %s1, 24
      %v333 = vld [vmem:[%s332] sm:$0xf]
      %v336 = vunpack.c.l.s4 1935823168
      %v337 = vunpack.c.0.s8 %v336
      %v338 = vlaneseq
      %v339 = vshrl.u32 %v338, 7
      %v340 = vsub.s32 %v337, %v339
      %v341 = vrot.slane %v333, %v340
      %v343 = vmul.bf16 %v227, %v341
      %v344 = vadd.bf16 %v331, %v343
      %s345 = scalar_lea.vmem %s1, 28
      %v346 = vld [vmem:[%s345] sm:$0xf]
      %v349 = vunpack.c.l.s4 1935823168
      %v350 = vunpack.c.0.s8 %v349
      %v351 = vlaneseq
      %v352 = vshrl.u32 %v351, 7
      %v353 = vsub.s32 %v350, %v352
      %v354 = vrot.slane %v346, %v353
      %v356 = vshll.u32 %v354, 16
      %v359 = vmul.bf16 %v227, %v356
      %v361 = vshrl.u32 %v359, 16
      %v363 = vrot.slane %v361, 6
      %v364 = vrot.slane %v363, 2
      %v366 = vadd.bf16 %v344, %v364
      %s367 = scalar_lea.vmem %s1, 32
      %v368 = vld [vmem:[%s367] sm:$0xf]
      %v370 = vcombine.low %v368, %v368
      %v372 = vunpack.c.l.s4 1935823168
      %v373 = vunpack.c.0.s8 %v372
      %v374 = vlaneseq
      %v375 = vshrl.u32 %v374, 7
      %v376 = vsub.s32 %v373, %v375
      %v377 = vrot.slane %v370, %v376
      %v379 = vmul.bf16 %v227, %v377
      %v381 = vrot.slane %v379, 7
      %v382 = vrot.slane %v381, 2
      %v384 = vadd.bf16 %v366, %v382
      %v385 = vld [vmem:[%s2] sm:$0xf]
      %v388 = vunpack.c.l.s4 1935823168
      %v389 = vunpack.c.0.s8 %v388
      %v390 = vlaneseq
      %v391 = vshrl.u32 %v390, 7
      %v392 = vsub.s32 %v389, %v391
      %v393 = vrot.slane %v385, %v392
      %v395 = vadd.bf16 %v384, %v393
      %v396 = vmax.bf16 %v395, 0
      %v397 = vmin.bf16 %v396, 1086341312
      %v398 = vld [vmem:[%s3] sm:$0xff]
      %v399 = vld [vmem:[%s3 + $0x8] sm:$0xff]
      %v400 = vld [vmem:[%s3 + $0x10] sm:$0xff]
      %v401 = vld [vmem:[%s3 + $0x18] sm:$0xff]
      %v402 = vld [vmem:[%s3 + $0x20] sm:$0xff]
      %v403 = vld [vmem:[%s3 + $0x28] sm:$0xff]
      %v404 = vld [vmem:[%s3 + $0x30] sm:$0xff]
      %v405 = vld [vmem:[%s3 + $0x38] sm:$0xff]
      %v406 = vld [vmem:[%s3 + $0x40] sm:$0xff]
      %v407 = vld [vmem:[%s3 + $0x48] sm:$0xff]
      %v408 = vld [vmem:[%s3 + $0x50] sm:$0xff]
      %v409 = vld [vmem:[%s3 + $0x58] sm:$0xff]
      %v410 = vld [vmem:[%s3 + $0x60] sm:$0xff]
      %v411 = vld [vmem:[%s3 + $0x68] sm:$0xff]
      %v412 = vld [vmem:[%s3 + $0x70] sm:$0xff]
      %v413 = vld [vmem:[%s3 + $0x78] sm:$0xff]
      %v414 = vld [vmem:[%s3 + $0x80] sm:$0xff]
      %v415 = vld [vmem:[%s3 + $0x88] sm:$0xff]
      %v416 = vld [vmem:[%s3 + $0x90] sm:$0xff]
      %v417 = vld [vmem:[%s3 + $0x98] sm:$0xff]
      %v418 = vld [vmem:[%s3 + $0xa0] sm:$0xff]
      %v419 = vld [vmem:[%s3 + $0xa8] sm:$0xff]
      %v420 = vld [vmem:[%s3 + $0xb0] sm:$0xff]
      %v421 = vld [vmem:[%s3 + $0xb8] sm:$0xff]
      %v422 = vld [vmem:[%s3 + $0xc0] sm:$0xff]
      %v423 = vld [vmem:[%s3 + $0xc8] sm:$0xff]
      %v424 = vld [vmem:[%s3 + $0xd0] sm:$0xff]
      %v425 = vld [vmem:[%s3 + $0xd8] sm:$0xff]
      %v426 = vld [vmem:[%s3 + $0xe0] sm:$0xff]
      %v427 = vld [vmem:[%s3 + $0xe8] sm:$0xff]
      %v428 = vld [vmem:[%s3 + $0xf0] sm:$0xff]
      %v429 = vld [vmem:[%s3 + $0xf8] sm:$0xff]
      %v430 = vld [vmem:[%s3 + $0x100] sm:$0xff]
      %v431 = vld [vmem:[%s3 + $0x108] sm:$0xff]
      %v432 = vld [vmem:[%s3 + $0x110] sm:$0xff]
      %v433 = vld [vmem:[%s3 + $0x118] sm:$0xff]
      %v434 = vld [vmem:[%s3 + $0x120] sm:$0xff]
      %v435 = vld [vmem:[%s3 + $0x128] sm:$0xff]
      %v436 = vld [vmem:[%s3 + $0x130] sm:$0xff]
      %v437 = vld [vmem:[%s3 + $0x138] sm:$0xff]
      %v438 = vld [vmem:[%s3 + $0x140] sm:$0xff]
      %v439 = vld [vmem:[%s3 + $0x148] sm:$0xff]
      %v440 = vld [vmem:[%s3 + $0x150] sm:$0xff]
      %v441 = vld [vmem:[%s3 + $0x158] sm:$0xff]
      %v442 = vld [vmem:[%s3 + $0x160] sm:$0xff]
      %v443 = vld [vmem:[%s3 + $0x168] sm:$0xff]
      %v444 = vld [vmem:[%s3 + $0x170] sm:$0xff]
      %v445 = vld [vmem:[%s3 + $0x178] sm:$0xff]
      %v446 = vld [vmem:[%s3 + $0x180] sm:$0xff]
      %v447 = vld [vmem:[%s3 + $0x188] sm:$0xff]
      %v448 = vld [vmem:[%s3 + $0x190] sm:$0xff]
      %v449 = vld [vmem:[%s3 + $0x198] sm:$0xff]
      %v450 = vld [vmem:[%s3 + $0x1a0] sm:$0xff]
      %v451 = vld [vmem:[%s3 + $0x1a8] sm:$0xff]
      %v452 = vld [vmem:[%s3 + $0x1b0] sm:$0xff]
      %v453 = vld [vmem:[%s3 + $0x1b8] sm:$0xff]
      %v454 = vld [vmem:[%s3 + $0x1c0] sm:$0xff]
      %v455 = vld [vmem:[%s3 + $0x1c8] sm:$0xff]
      %v456 = vld [vmem:[%s3 + $0x1d0] sm:$0xff]
      %v457 = vld [vmem:[%s3 + $0x1d8] sm:$0xff]
      %v458 = vld [vmem:[%s3 + $0x1e0] sm:$0xff]
      %v459 = vld [vmem:[%s3 + $0x1e8] sm:$0xff]
      %v460 = vld [vmem:[%s3 + $0x1f0] sm:$0xff]
      %v461 = vld [vmem:[%s3 + $0x1f8] sm:$0xff]
      %v462 = vld [vmem:[%s3 + $0x200] sm:$0xff]
      %v463 = vld [vmem:[%s3 + $0x208] sm:$0xff]
      %v464 = vld [vmem:[%s3 + $0x210] sm:$0xff]
      %v465 = vld [vmem:[%s3 + $0x218] sm:$0xff]
      %v466 = vld [vmem:[%s3 + $0x220] sm:$0xff]
      %v467 = vld [vmem:[%s3 + $0x228] sm:$0xff]
      %v468 = vld [vmem:[%s3 + $0x230] sm:$0xff]
      %v469 = vld [vmem:[%s3 + $0x238] sm:$0xff]
      %v470 = vld [vmem:[%s3 + $0x240] sm:$0xff]
      %v471 = vld [vmem:[%s3 + $0x248] sm:$0xff]
      %v472 = vld [vmem:[%s3 + $0x250] sm:$0xff]
      %v473 = vld [vmem:[%s3 + $0x258] sm:$0xff]
      %v474 = vld [vmem:[%s3 + $0x260] sm:$0xff]
      %v475 = vld [vmem:[%s3 + $0x268] sm:$0xff]
      %v476 = vld [vmem:[%s3 + $0x270] sm:$0xff]
      %v477 = vld [vmem:[%s3 + $0x278] sm:$0xff]
      %v478 = vld [vmem:[%s3 + $0x280] sm:$0xff]
      %v479 = vld [vmem:[%s3 + $0x288] sm:$0xff]
      %v480 = vld [vmem:[%s3 + $0x290] sm:$0xff]
      %v481 = vld [vmem:[%s3 + $0x298] sm:$0xff]
      %v482 = vld [vmem:[%s3 + $0x2a0] sm:$0xff]
      %v483 = vld [vmem:[%s3 + $0x2a8] sm:$0xff]
      %v484 = vld [vmem:[%s3 + $0x2b0] sm:$0xff]
      %v485 = vld [vmem:[%s3 + $0x2b8] sm:$0xff]
      %v486 = vld [vmem:[%s3 + $0x2c0] sm:$0xff]
      %v487 = vld [vmem:[%s3 + $0x2c8] sm:$0xff]
      %v488 = vld [vmem:[%s3 + $0x2d0] sm:$0xff]
      %v489 = vld [vmem:[%s3 + $0x2d8] sm:$0xff]
      %v490 = vld [vmem:[%s3 + $0x2e0] sm:$0xff]
      %v491 = vld [vmem:[%s3 + $0x2e8] sm:$0xff]
      %v492 = vld [vmem:[%s3 + $0x2f0] sm:$0xff]
      %v493 = vld [vmem:[%s3 + $0x2f8] sm:$0xff]
      %v494 = vld [vmem:[%s3 + $0x300] sm:$0xff]
      %v495 = vld [vmem:[%s3 + $0x308] sm:$0xff]
      %v496 = vld [vmem:[%s3 + $0x310] sm:$0xff]
      %v497 = vld [vmem:[%s3 + $0x318] sm:$0xff]
      %v498 = vld [vmem:[%s3 + $0x320] sm:$0xff]
      %v499 = vld [vmem:[%s3 + $0x328] sm:$0xff]
      %v500 = vld [vmem:[%s3 + $0x330] sm:$0xff]
      %v501 = vld [vmem:[%s3 + $0x338] sm:$0xff]
      %v502 = vld [vmem:[%s3 + $0x340] sm:$0xff]
      %v503 = vld [vmem:[%s3 + $0x348] sm:$0xff]
      %v504 = vld [vmem:[%s3 + $0x350] sm:$0xff]
      %v505 = vld [vmem:[%s3 + $0x358] sm:$0xff]
      %v506 = vld [vmem:[%s3 + $0x360] sm:$0xff]
      %v507 = vld [vmem:[%s3 + $0x368] sm:$0xff]
      %v508 = vld [vmem:[%s3 + $0x370] sm:$0xff]
      %v509 = vld [vmem:[%s3 + $0x378] sm:$0xff]
      %v510 = vld [vmem:[%s3 + $0x380] sm:$0xff]
      %v511 = vld [vmem:[%s3 + $0x388] sm:$0xff]
      %v512 = vld [vmem:[%s3 + $0x390] sm:$0xff]
      %v513 = vld [vmem:[%s3 + $0x398] sm:$0xff]
      %v514 = vld [vmem:[%s3 + $0x3a0] sm:$0xff]
      %v515 = vld [vmem:[%s3 + $0x3a8] sm:$0xff]
      %v516 = vld [vmem:[%s3 + $0x3b0] sm:$0xff]
      %v517 = vld [vmem:[%s3 + $0x3b8] sm:$0xff]
      %v518 = vld [vmem:[%s3 + $0x3c0] sm:$0xff]
      %v519 = vld [vmem:[%s3 + $0x3c8] sm:$0xff]
      %v520 = vld [vmem:[%s3 + $0x3d0] sm:$0xff]
      %v521 = vld [vmem:[%s3 + $0x3d8] sm:$0xff]
      %v522 = vld [vmem:[%s3 + $0x3e0] sm:$0xff]
      %v523 = vld [vmem:[%s3 + $0x3e8] sm:$0xff]
      %v524 = vld [vmem:[%s3 + $0x3f0] sm:$0xff]
      %v525 = vld [vmem:[%s3 + $0x3f8] sm:$0xff]
      %v526 = vld [vmem:[%s4] sm:$0xf]
      %v528 = vcombine.high %v397, %v397
      %v530 = vunpack.c.l.s4 1983009808
      %v531 = vunpack.c.0.s8 %v530
      %v532 = vlaneseq
      %v533 = vshrl.u32 %v532, 7
      %v534 = vsub.s32 %v531, %v533
      %v535 = vrot.slane %v397, %v534
      %v537 = vunpack.c.l.s4 1983009808
      %v538 = vunpack.c.0.s8 %v537
      %v539 = vlaneseq
      %v540 = vshrl.u32 %v539, 7
      %v541 = vsub.s32 %v538, %v540
      %v542 = vrot.slane %v528, %v541
      %v543 = vcombine.high %v535, %v535
      %v544 = vcombine.high %v542, %v542
      %v677 = vunpack.c.l.b16 %v398
      %v678 = vunpack.c.h.b16 %v398
      %v679 = vunpack.c.l.b16 %v399
      %v680 = vunpack.c.h.b16 %v399
      %v681 = vunpack.c.l.b16 %v400
      %v682 = vunpack.c.h.b16 %v400
      %v683 = vunpack.c.l.b16 %v401
      %v684 = vunpack.c.h.b16 %v401
      %v685 = vunpack.c.l.b16 %v402
      %v686 = vunpack.c.h.b16 %v402
      %v687 = vunpack.c.l.b16 %v403
      %v688 = vunpack.c.h.b16 %v403
      %v689 = vunpack.c.l.b16 %v404
      %v690 = vunpack.c.h.b16 %v404
      %v691 = vunpack.c.l.b16 %v405
      %v692 = vunpack.c.h.b16 %v405
      %v693 = vunpack.c.l.b16 %v406
      %v694 = vunpack.c.h.b16 %v406
      %v695 = vunpack.c.l.b16 %v407
      %v696 = vunpack.c.h.b16 %v407
      %v697 = vunpack.c.l.b16 %v408
      %v698 = vunpack.c.h.b16 %v408
      %v699 = vunpack.c.l.b16 %v409
      %v700 = vunpack.c.h.b16 %v409
      %v701 = vunpack.c.l.b16 %v410
      %v702 = vunpack.c.h.b16 %v410
      %v703 = vunpack.c.l.b16 %v411
      %v704 = vunpack.c.h.b16 %v411
      %v705 = vunpack.c.l.b16 %v412
      %v706 = vunpack.c.h.b16 %v412
      %v707 = vunpack.c.l.b16 %v413
      %v708 = vunpack.c.h.b16 %v413
      %v709 = vunpack.c.l.b16 %v414
      %v710 = vunpack.c.h.b16 %v414
      %v711 = vunpack.c.l.b16 %v415
      %v712 = vunpack.c.h.b16 %v415
      %v713 = vunpack.c.l.b16 %v416
      %v714 = vunpack.c.h.b16 %v416
      %v715 = vunpack.c.l.b16 %v417
      %v716 = vunpack.c.h.b16 %v417
      %v717 = vunpack.c.l.b16 %v418
      %v718 = vunpack.c.h.b16 %v418
      %v719 = vunpack.c.l.b16 %v419
      %v720 = vunpack.c.h.b16 %v419
      %v721 = vunpack.c.l.b16 %v420
      %v722 = vunpack.c.h.b16 %v420
      %v723 = vunpack.c.l.b16 %v421
      %v724 = vunpack.c.h.b16 %v421
      %v725 = vunpack.c.l.b16 %v422
      %v726 = vunpack.c.h.b16 %v422
      %v727 = vunpack.c.l.b16 %v423
      %v728 = vunpack.c.h.b16 %v423
      %v729 = vunpack.c.l.b16 %v424
      %v730 = vunpack.c.h.b16 %v424
      %v731 = vunpack.c.l.b16 %v425
      %v732 = vunpack.c.h.b16 %v425
      %v733 = vunpack.c.l.b16 %v426
      %v734 = vunpack.c.h.b16 %v426
      %v735 = vunpack.c.l.b16 %v427
      %v736 = vunpack.c.h.b16 %v427
      %v737 = vunpack.c.l.b16 %v428
      %v738 = vunpack.c.h.b16 %v428
      %v739 = vunpack.c.l.b16 %v429
      %v740 = vunpack.c.h.b16 %v429
      %v741 = vunpack.c.l.b16 %v430
      %v742 = vunpack.c.h.b16 %v430
      %v743 = vunpack.c.l.b16 %v431
      %v744 = vunpack.c.h.b16 %v431
      %v745 = vunpack.c.l.b16 %v432
      %v746 = vunpack.c.h.b16 %v432
      %v747 = vunpack.c.l.b16 %v433
      %v748 = vunpack.c.h.b16 %v433
      %v749 = vunpack.c.l.b16 %v434
      %v750 = vunpack.c.h.b16 %v434
      %v751 = vunpack.c.l.b16 %v435
      %v752 = vunpack.c.h.b16 %v435
      %v753 = vunpack.c.l.b16 %v436
      %v754 = vunpack.c.h.b16 %v436
      %v755 = vunpack.c.l.b16 %v437
      %v756 = vunpack.c.h.b16 %v437
      %v757 = vunpack.c.l.b16 %v438
      %v758 = vunpack.c.h.b16 %v438
      %v759 = vunpack.c.l.b16 %v439
      %v760 = vunpack.c.h.b16 %v439
      %v761 = vunpack.c.l.b16 %v440
      %v762 = vunpack.c.h.b16 %v440
      %v763 = vunpack.c.l.b16 %v441
      %v764 = vunpack.c.h.b16 %v441
      %v765 = vunpack.c.l.b16 %v442
      %v766 = vunpack.c.h.b16 %v442
      %v767 = vunpack.c.l.b16 %v443
      %v768 = vunpack.c.h.b16 %v443
      %v769 = vunpack.c.l.b16 %v444
      %v770 = vunpack.c.h.b16 %v444
      %v771 = vunpack.c.l.b16 %v445
      %v772 = vunpack.c.h.b16 %v445
      %v773 = vunpack.c.l.b16 %v446
      %v774 = vunpack.c.h.b16 %v446
      %v775 = vunpack.c.l.b16 %v447
      %v776 = vunpack.c.h.b16 %v447
      %v777 = vunpack.c.l.b16 %v448
      %v778 = vunpack.c.h.b16 %v448
      %v779 = vunpack.c.l.b16 %v449
      %v780 = vunpack.c.h.b16 %v449
      %v781 = vunpack.c.l.b16 %v450
      %v782 = vunpack.c.h.b16 %v450
      %v783 = vunpack.c.l.b16 %v451
      %v784 = vunpack.c.h.b16 %v451
      %v785 = vunpack.c.l.b16 %v452
      %v786 = vunpack.c.h.b16 %v452
      %v787 = vunpack.c.l.b16 %v453
      %v788 = vunpack.c.h.b16 %v453
      %v789 = vunpack.c.l.b16 %v454
      %v790 = vunpack.c.h.b16 %v454
      %v791 = vunpack.c.l.b16 %v455
      %v792 = vunpack.c.h.b16 %v455
      %v793 = vunpack.c.l.b16 %v456
      %v794 = vunpack.c.h.b16 %v456
      %v795 = vunpack.c.l.b16 %v457
      %v796 = vunpack.c.h.b16 %v457
      %v797 = vunpack.c.l.b16 %v458
      %v798 = vunpack.c.h.b16 %v458
      %v799 = vunpack.c.l.b16 %v459
      %v800 = vunpack.c.h.b16 %v459
      %v801 = vunpack.c.l.b16 %v460
      %v802 = vunpack.c.h.b16 %v460
      %v803 = vunpack.c.l.b16 %v461
      %v804 = vunpack.c.h.b16 %v461
      %v805 = vunpack.c.l.b16 %v462
      %v806 = vunpack.c.h.b16 %v462
      %v807 = vunpack.c.l.b16 %v463
      %v808 = vunpack.c.h.b16 %v463
      %v809 = vunpack.c.l.b16 %v464
      %v810 = vunpack.c.h.b16 %v464
      %v811 = vunpack.c.l.b16 %v465
      %v812 = vunpack.c.h.b16 %v465
      %v813 = vunpack.c.l.b16 %v466
      %v814 = vunpack.c.h.b16 %v466
      %v815 = vunpack.c.l.b16 %v467
      %v816 = vunpack.c.h.b16 %v467
      %v817 = vunpack.c.l.b16 %v468
      %v818 = vunpack.c.h.b16 %v468
      %v819 = vunpack.c.l.b16 %v469
      %v820 = vunpack.c.h.b16 %v469
      %v821 = vunpack.c.l.b16 %v470
      %v822 = vunpack.c.h.b16 %v470
      %v823 = vunpack.c.l.b16 %v471
      %v824 = vunpack.c.h.b16 %v471
      %v825 = vunpack.c.l.b16 %v472
      %v826 = vunpack.c.h.b16 %v472
      %v827 = vunpack.c.l.b16 %v473
      %v828 = vunpack.c.h.b16 %v473
      %v829 = vunpack.c.l.b16 %v474
      %v830 = vunpack.c.h.b16 %v474
      %v831 = vunpack.c.l.b16 %v475
      %v832 = vunpack.c.h.b16 %v475
      %v833 = vunpack.c.l.b16 %v476
      %v834 = vunpack.c.h.b16 %v476
      %v835 = vunpack.c.l.b16 %v477
      %v836 = vunpack.c.h.b16 %v477
      %v837 = vunpack.c.l.b16 %v478
      %v838 = vunpack.c.h.b16 %v478
      %v839 = vunpack.c.l.b16 %v479
      %v840 = vunpack.c.h.b16 %v479
      %v841 = vunpack.c.l.b16 %v480
      %v842 = vunpack.c.h.b16 %v480
      %v843 = vunpack.c.l.b16 %v481
      %v844 = vunpack.c.h.b16 %v481
      %v845 = vunpack.c.l.b16 %v482
      %v846 = vunpack.c.h.b16 %v482
      %v847 = vunpack.c.l.b16 %v483
      %v848 = vunpack.c.h.b16 %v483
      %v849 = vunpack.c.l.b16 %v484
      %v850 = vunpack.c.h.b16 %v484
      %v851 = vunpack.c.l.b16 %v485
      %v852 = vunpack.c.h.b16 %v485
      %v853 = vunpack.c.l.b16 %v486
      %v854 = vunpack.c.h.b16 %v486
      %v855 = vunpack.c.l.b16 %v487
      %v856 = vunpack.c.h.b16 %v487
      %v857 = vunpack.c.l.b16 %v488
      %v858 = vunpack.c.h.b16 %v488
      %v859 = vunpack.c.l.b16 %v489
      %v860 = vunpack.c.h.b16 %v489
      %v861 = vunpack.c.l.b16 %v490
      %v862 = vunpack.c.h.b16 %v490
      %v863 = vunpack.c.l.b16 %v491
      %v864 = vunpack.c.h.b16 %v491
      %v865 = vunpack.c.l.b16 %v492
      %v866 = vunpack.c.h.b16 %v492
      %v867 = vunpack.c.l.b16 %v493
      %v868 = vunpack.c.h.b16 %v493
      %v869 = vunpack.c.l.b16 %v494
      %v870 = vunpack.c.h.b16 %v494
      %v871 = vunpack.c.l.b16 %v495
      %v872 = vunpack.c.h.b16 %v495
      %v873 = vunpack.c.l.b16 %v496
      %v874 = vunpack.c.h.b16 %v496
      %v875 = vunpack.c.l.b16 %v497
      %v876 = vunpack.c.h.b16 %v497
      %v877 = vunpack.c.l.b16 %v498
      %v878 = vunpack.c.h.b16 %v498
      %v879 = vunpack.c.l.b16 %v499
      %v880 = vunpack.c.h.b16 %v499
      %v881 = vunpack.c.l.b16 %v500
      %v882 = vunpack.c.h.b16 %v500
      %v883 = vunpack.c.l.b16 %v501
      %v884 = vunpack.c.h.b16 %v501
      %v885 = vunpack.c.l.b16 %v502
      %v886 = vunpack.c.h.b16 %v502
      %v887 = vunpack.c.l.b16 %v503
      %v888 = vunpack.c.h.b16 %v503
      %v889 = vunpack.c.l.b16 %v504
      %v890 = vunpack.c.h.b16 %v504
      %v891 = vunpack.c.l.b16 %v505
      %v892 = vunpack.c.h.b16 %v505
      %v893 = vunpack.c.l.b16 %v506
      %v894 = vunpack.c.h.b16 %v506
      %v895 = vunpack.c.l.b16 %v507
      %v896 = vunpack.c.h.b16 %v507
      %v897 = vunpack.c.l.b16 %v508
      %v898 = vunpack.c.h.b16 %v508
      %v899 = vunpack.c.l.b16 %v509
      %v900 = vunpack.c.h.b16 %v509
      %v901 = vunpack.c.l.b16 %v510
      %v902 = vunpack.c.h.b16 %v510
      %v903 = vunpack.c.l.b16 %v511
      %v904 = vunpack.c.h.b16 %v511
      %v905 = vunpack.c.l.b16 %v512
      %v906 = vunpack.c.h.b16 %v512
      %v907 = vunpack.c.l.b16 %v513
      %v908 = vunpack.c.h.b16 %v513
      %v909 = vunpack.c.l.b16 %v514
      %v910 = vunpack.c.h.b16 %v514
      %v911 = vunpack.c.l.b16 %v515
      %v912 = vunpack.c.h.b16 %v515
      %v913 = vunpack.c.l.b16 %v516
      %v914 = vunpack.c.h.b16 %v516
      %v915 = vunpack.c.l.b16 %v517
      %v916 = vunpack.c.h.b16 %v517
      %v917 = vunpack.c.l.b16 %v518
      %v918 = vunpack.c.h.b16 %v518
      %v919 = vunpack.c.l.b16 %v519
      %v920 = vunpack.c.h.b16 %v519
      %v921 = vunpack.c.l.b16 %v520
      %v922 = vunpack.c.h.b16 %v520
      %v923 = vunpack.c.l.b16 %v521
      %v924 = vunpack.c.h.b16 %v521
      %v925 = vunpack.c.l.b16 %v522
      %v926 = vunpack.c.h.b16 %v522
      %v927 = vunpack.c.l.b16 %v523
      %v928 = vunpack.c.h.b16 %v523
      %v929 = vunpack.c.l.b16 %v524
      %v930 = vunpack.c.h.b16 %v524
      %v931 = vunpack.c.l.b16 %v525
      %v932 = vunpack.c.h.b16 %v525
      %v933 = vpack.c.b16 %v681, %v677
      %v934 = vpack.c.b16 %v682, %v678
      %v935 = vpack.c.b16 %v683, %v679
      %v936 = vpack.c.b16 %v684, %v680
      %v937 = vpack.c.b16 %v689, %v685
      %v938 = vpack.c.b16 %v690, %v686
      %v939 = vpack.c.b16 %v691, %v687
      %v940 = vpack.c.b16 %v692, %v688
      %v941 = vpack.c.b16 %v697, %v693
      %v942 = vpack.c.b16 %v698, %v694
      %v943 = vpack.c.b16 %v699, %v695
      %v944 = vpack.c.b16 %v700, %v696
      %v945 = vpack.c.b16 %v705, %v701
      %v946 = vpack.c.b16 %v706, %v702
      %v947 = vpack.c.b16 %v707, %v703
      %v948 = vpack.c.b16 %v708, %v704
      %v949 = vpack.c.b16 %v713, %v709
      %v950 = vpack.c.b16 %v714, %v710
      %v951 = vpack.c.b16 %v715, %v711
      %v952 = vpack.c.b16 %v716, %v712
      %v953 = vpack.c.b16 %v721, %v717
      %v954 = vpack.c.b16 %v722, %v718
      %v955 = vpack.c.b16 %v723, %v719
      %v956 = vpack.c.b16 %v724, %v720
      %v957 = vpack.c.b16 %v729, %v725
      %v958 = vpack.c.b16 %v730, %v726
      %v959 = vpack.c.b16 %v731, %v727
      %v960 = vpack.c.b16 %v732, %v728
      %v961 = vpack.c.b16 %v737, %v733
      %v962 = vpack.c.b16 %v738, %v734
      %v963 = vpack.c.b16 %v739, %v735
      %v964 = vpack.c.b16 %v740, %v736
      %v965 = vpack.c.b16 %v745, %v741
      %v966 = vpack.c.b16 %v746, %v742
      %v967 = vpack.c.b16 %v747, %v743
      %v968 = vpack.c.b16 %v748, %v744
      %v969 = vpack.c.b16 %v753, %v749
      %v970 = vpack.c.b16 %v754, %v750
      %v971 = vpack.c.b16 %v755, %v751
      %v972 = vpack.c.b16 %v756, %v752
      %v973 = vpack.c.b16 %v761, %v757
      %v974 = vpack.c.b16 %v762, %v758
      %v975 = vpack.c.b16 %v763, %v759
      %v976 = vpack.c.b16 %v764, %v760
      %v977 = vpack.c.b16 %v769, %v765
      %v978 = vpack.c.b16 %v770, %v766
      %v979 = vpack.c.b16 %v771, %v767
      %v980 = vpack.c.b16 %v772, %v768
      %v981 = vpack.c.b16 %v777, %v773
      %v982 = vpack.c.b16 %v778, %v774
      %v983 = vpack.c.b16 %v779, %v775
      %v984 = vpack.c.b16 %v780, %v776
      %v985 = vpack.c.b16 %v785, %v781
      %v986 = vpack.c.b16 %v786, %v782
      %v987 = vpack.c.b16 %v787, %v783
      %v988 = vpack.c.b16 %v788, %v784
      %v989 = vpack.c.b16 %v793, %v789
      %v990 = vpack.c.b16 %v794, %v790
      %v991 = vpack.c.b16 %v795, %v791
      %v992 = vpack.c.b16 %v796, %v792
      %v993 = vpack.c.b16 %v801, %v797
      %v994 = vpack.c.b16 %v802, %v798
      %v995 = vpack.c.b16 %v803, %v799
      %v996 = vpack.c.b16 %v804, %v800
      %v997 = vpack.c.b16 %v809, %v805
      %v998 = vpack.c.b16 %v810, %v806
      %v999 = vpack.c.b16 %v811, %v807
      %v1000 = vpack.c.b16 %v812, %v808
      %v1001 = vpack.c.b16 %v817, %v813
      %v1002 = vpack.c.b16 %v818, %v814
      %v1003 = vpack.c.b16 %v819, %v815
      %v1004 = vpack.c.b16 %v820, %v816
      %v1005 = vpack.c.b16 %v825, %v821
      %v1006 = vpack.c.b16 %v826, %v822
      %v1007 = vpack.c.b16 %v827, %v823
      %v1008 = vpack.c.b16 %v828, %v824
      %v1009 = vpack.c.b16 %v833, %v829
      %v1010 = vpack.c.b16 %v834, %v830
      %v1011 = vpack.c.b16 %v835, %v831
      %v1012 = vpack.c.b16 %v836, %v832
      %v1013 = vpack.c.b16 %v841, %v837
      %v1014 = vpack.c.b16 %v842, %v838
      %v1015 = vpack.c.b16 %v843, %v839
      %v1016 = vpack.c.b16 %v844, %v840
      %v1017 = vpack.c.b16 %v849, %v845
      %v1018 = vpack.c.b16 %v850, %v846
      %v1019 = vpack.c.b16 %v851, %v847
      %v1020 = vpack.c.b16 %v852, %v848
      %v1021 = vpack.c.b16 %v857, %v853
      %v1022 = vpack.c.b16 %v858, %v854
      %v1023 = vpack.c.b16 %v859, %v855
      %v1024 = vpack.c.b16 %v860, %v856
      %v1025 = vpack.c.b16 %v865, %v861
      %v1026 = vpack.c.b16 %v866, %v862
      %v1027 = vpack.c.b16 %v867, %v863
      %v1028 = vpack.c.b16 %v868, %v864
      %v1029 = vpack.c.b16 %v873, %v869
      %v1030 = vpack.c.b16 %v874, %v870
      %v1031 = vpack.c.b16 %v875, %v871
      %v1032 = vpack.c.b16 %v876, %v872
      %v1033 = vpack.c.b16 %v881, %v877
      %v1034 = vpack.c.b16 %v882, %v878
      %v1035 = vpack.c.b16 %v883, %v879
      %v1036 = vpack.c.b16 %v884, %v880
      %v1037 = vpack.c.b16 %v889, %v885
      %v1038 = vpack.c.b16 %v890, %v886
      %v1039 = vpack.c.b16 %v891, %v887
      %v1040 = vpack.c.b16 %v892, %v888
      %v1041 = vpack.c.b16 %v897, %v893
      %v1042 = vpack.c.b16 %v898, %v894
      %v1043 = vpack.c.b16 %v899, %v895
      %v1044 = vpack.c.b16 %v900, %v896
      %v1045 = vpack.c.b16 %v905, %v901
      %v1046 = vpack.c.b16 %v906, %v902
      %v1047 = vpack.c.b16 %v907, %v903
      %v1048 = vpack.c.b16 %v908, %v904
      %v1049 = vpack.c.b16 %v913, %v909
      %v1050 = vpack.c.b16 %v914, %v910
      %v1051 = vpack.c.b16 %v915, %v911
      %v1052 = vpack.c.b16 %v916, %v912
      %v1053 = vpack.c.b16 %v921, %v917
      %v1054 = vpack.c.b16 %v922, %v918
      %v1055 = vpack.c.b16 %v923, %v919
      %v1056 = vpack.c.b16 %v924, %v920
      %v1057 = vpack.c.b16 %v929, %v925
      %v1058 = vpack.c.b16 %v930, %v926
      %v1059 = vpack.c.b16 %v931, %v927
      %v1060 = vpack.c.b16 %v932, %v928
      %v1190 = vlaneseq
      %v1191 = vshrl.u32 %v1190, 7
      %v1192 = vsub.s32 0, %v1191
      %v1193 = vrot.slane %v526, %v1192
      %v1194 = vlaneseq
      %v1195 = vshrl.u32 %v1194, 7
      %v1196 = vsub.s32 1, %v1195
      %v1197 = vrot.slane %v526, %v1196
      %v1198 = vlaneseq
      %v1199 = vshrl.u32 %v1198, 7
      %v1200 = vsub.s32 2, %v1199
      %v1201 = vrot.slane %v526, %v1200
      %v1202 = vlaneseq
      %v1203 = vshrl.u32 %v1202, 7
      %v1204 = vsub.s32 3, %v1203
      %v1205 = vrot.slane %v526, %v1204
      %1210 = vmatprep.subr.bf16.mxu0 %v934
      %1211 = vmatpush1.bf16.msra.mxu0 %v933
      %1212 = vmatprep.subr.bf16.mxu0 %v938
      %1213 = vmatpush1.bf16.msra.mxu0 %v937
      %1214 = vmatprep.subr.bf16.mxu0 %v942
      %1215 = vmatpush1.bf16.msra.mxu0 %v941
      %1216 = vmatprep.subr.bf16.mxu0 %v946
      %1217 = vmatpush1.bf16.msra.mxu0 %v945
      %1218 = vmatprep.subr.bf16.mxu0 %v950
      %1219 = vmatpush1.bf16.msra.mxu0 %v949
      %1220 = vmatprep.subr.bf16.mxu0 %v954
      %1221 = vmatpush1.bf16.msra.mxu0 %v953
      %1222 = vmatprep.subr.bf16.mxu0 %v958
      %1223 = vmatpush1.bf16.msra.mxu0 %v957
      %1224 = vmatprep.subr.bf16.mxu0 %v962
      %1225 = vmatpush1.bf16.msra.mxu0 %v961
      %1226 = vmatprep.subr.bf16.mxu0 %v966
      %1227 = vmatpush1.bf16.msra.mxu0 %v965
      %1228 = vmatprep.subr.bf16.mxu0 %v970
      %1229 = vmatpush1.bf16.msra.mxu0 %v969
      %1230 = vmatprep.subr.bf16.mxu0 %v974
      %1231 = vmatpush1.bf16.msra.mxu0 %v973
      %1232 = vmatprep.subr.bf16.mxu0 %v978
      %1233 = vmatpush1.bf16.msra.mxu0 %v977
      %1234 = vmatprep.subr.bf16.mxu0 %v982
      %1235 = vmatpush1.bf16.msra.mxu0 %v981
      %1236 = vmatprep.subr.bf16.mxu0 %v986
      %1237 = vmatpush1.bf16.msra.mxu0 %v985
      %1238 = vmatprep.subr.bf16.mxu0 %v990
      %1239 = vmatpush1.bf16.msra.mxu0 %v989
      %1240 = vmatprep.subr.bf16.mxu0 %v994
      %1241 = vmatpush1.bf16.msra.mxu0 %v993
      %1242 = vmatprep.mubr.bf16.mxu0 %v543
      %1243 = vmatmul.mubr.bf16.gmra.mrb[0].mxu0 %v535
      %v1244 = vpop.f32.mrb[0].mxu0
      %v1245 = vadd.f32 %v1193, %v1244
      %v1246 = vpop.f32.mrb[0].mxu0
      %v1247 = vadd.f32 %v1197, %v1246
      %v1248 = vpop.f32.mrb[0].mxu0
      %v1249 = vpop.f32.mrb[0].mxu0
      %1250 = vdwg.mxu0
      %1251 = vmatprep.subr.bf16.mxu0 %v998
      %1252 = vmatpush1.bf16.msra.mxu0 %v997
      %1253 = vmatprep.subr.bf16.mxu0 %v1002
      %1254 = vmatpush1.bf16.msra.mxu0 %v1001
      %1255 = vmatprep.subr.bf16.mxu0 %v1006
      %1256 = vmatpush1.bf16.msra.mxu0 %v1005
      %1257 = vmatprep.subr.bf16.mxu0 %v1010
      %1258 = vmatpush1.bf16.msra.mxu0 %v1009
      %1259 = vmatprep.subr.bf16.mxu0 %v1014
      %1260 = vmatpush1.bf16.msra.mxu0 %v1013
      %1261 = vmatprep.subr.bf16.mxu0 %v1018
      %1262 = vmatpush1.bf16.msra.mxu0 %v1017
      %1263 = vmatprep.subr.bf16.mxu0 %v1022
      %1264 = vmatpush1.bf16.msra.mxu0 %v1021
      %1265 = vmatprep.subr.bf16.mxu0 %v1026
      %1266 = vmatpush1.bf16.msra.mxu0 %v1025
      %1267 = vmatprep.subr.bf16.mxu0 %v1030
      %1268 = vmatpush1.bf16.msra.mxu0 %v1029
      %1269 = vmatprep.subr.bf16.mxu0 %v1034
      %1270 = vmatpush1.bf16.msra.mxu0 %v1033
      %1271 = vmatprep.subr.bf16.mxu0 %v1038
      %1272 = vmatpush1.bf16.msra.mxu0 %v1037
      %1273 = vmatprep.subr.bf16.mxu0 %v1042
      %1274 = vmatpush1.bf16.msra.mxu0 %v1041
      %1275 = vmatprep.subr.bf16.mxu0 %v1046
      %1276 = vmatpush1.bf16.msra.mxu0 %v1045
      %1277 = vmatprep.subr.bf16.mxu0 %v1050
      %1278 = vmatpush1.bf16.msra.mxu0 %v1049
      %1279 = vmatprep.subr.bf16.mxu0 %v1054
      %1280 = vmatpush1.bf16.msra.mxu0 %v1053
      %1281 = vmatprep.subr.bf16.mxu0 %v1058
      %1282 = vmatpush1.bf16.msra.mxu0 %v1057
      %1283 = vmatprep.mubr.bf16.mxu0 %v544
      %1284 = vmatmul.mubr.bf16.gmra.mrb[0].mxu0 %v542
      %v1285 = vpop.f32.mrb[0].mxu0
      %v1286 = vadd.f32 %v1245, %v1285
      %v1287 = vpop.f32.mrb[0].mxu0
      %v1288 = vadd.f32 %v1247, %v1287
      %v1289 = vpop.f32.mrb[0].mxu0
      %v1290 = vpop.f32.mrb[0].mxu0
      %1291 = vdwg.mxu0
      %1292 = vmatprep.subr.bf16.mxu0 %v936
      %1293 = vmatpush1.bf16.msra.mxu0 %v935
      %1294 = vmatprep.subr.bf16.mxu0 %v940
      %1295 = vmatpush1.bf16.msra.mxu0 %v939
      %1296 = vmatprep.subr.bf16.mxu0 %v944
      %1297 = vmatpush1.bf16.msra.mxu0 %v943
      %1298 = vmatprep.subr.bf16.mxu0 %v948
      %1299 = vmatpush1.bf16.msra.mxu0 %v947
      %1300 = vmatprep.subr.bf16.mxu0 %v952
      %1301 = vmatpush1.bf16.msra.mxu0 %v951
      %1302 = vmatprep.subr.bf16.mxu0 %v956
      %1303 = vmatpush1.bf16.msra.mxu0 %v955
      %1304 = vmatprep.subr.bf16.mxu0 %v960
      %1305 = vmatpush1.bf16.msra.mxu0 %v959
      %1306 = vmatprep.subr.bf16.mxu0 %v964
      %1307 = vmatpush1.bf16.msra.mxu0 %v963
      %1308 = vmatprep.subr.bf16.mxu0 %v968
      %1309 = vmatpush1.bf16.msra.mxu0 %v967
      %1310 = vmatprep.subr.bf16.mxu0 %v972
      %1311 = vmatpush1.bf16.msra.mxu0 %v971
      %1312 = vmatprep.subr.bf16.mxu0 %v976
      %1313 = vmatpush1.bf16.msra.mxu0 %v975
      %1314 = vmatprep.subr.bf16.mxu0 %v980
      %1315 = vmatpush1.bf16.msra.mxu0 %v979
      %1316 = vmatprep.subr.bf16.mxu0 %v984
      %1317 = vmatpush1.bf16.msra.mxu0 %v983
      %1318 = vmatprep.subr.bf16.mxu0 %v988
      %1319 = vmatpush1.bf16.msra.mxu0 %v987
      %1320 = vmatprep.subr.bf16.mxu0 %v992
      %1321 = vmatpush1.bf16.msra.mxu0 %v991
      %1322 = vmatprep.subr.bf16.mxu0 %v996
      %1323 = vmatpush1.bf16.msra.mxu0 %v995
      %1324 = vmatprep.mubr.bf16.mxu0 %v543
      %1325 = vmatmul.mubr.bf16.gmra.mrb[0].mxu0 %v535
      %v1326 = vpop.f32.mrb[0].mxu0
      %v1327 = vadd.f32 %v1201, %v1326
      %v1328 = vpop.f32.mrb[0].mxu0
      %v1329 = vadd.f32 %v1205, %v1328
      %v1330 = vpop.f32.mrb[0].mxu0
      %v1331 = vpop.f32.mrb[0].mxu0
      %1332 = vdwg.mxu0
      %1333 = vmatprep.subr.bf16.mxu0 %v1000
      %1334 = vmatpush1.bf16.msra.mxu0 %v999
      %1335 = vmatprep.subr.bf16.mxu0 %v1004
      %1336 = vmatpush1.bf16.msra.mxu0 %v1003
      %1337 = vmatprep.subr.bf16.mxu0 %v1008
      %1338 = vmatpush1.bf16.msra.mxu0 %v1007
      %1339 = vmatprep.subr.bf16.mxu0 %v1012
      %1340 = vmatpush1.bf16.msra.mxu0 %v1011
      %1341 = vmatprep.subr.bf16.mxu0 %v1016
      %1342 = vmatpush1.bf16.msra.mxu0 %v1015
      %1343 = vmatprep.subr.bf16.mxu0 %v1020
      %1344 = vmatpush1.bf16.msra.mxu0 %v1019
      %1345 = vmatprep.subr.bf16.mxu0 %v1024
      %1346 = vmatpush1.bf16.msra.mxu0 %v1023
      %1347 = vmatprep.subr.bf16.mxu0 %v1028
      %1348 = vmatpush1.bf16.msra.mxu0 %v1027
      %1349 = vmatprep.subr.bf16.mxu0 %v1032
      %1350 = vmatpush1.bf16.msra.mxu0 %v1031
      %1351 = vmatprep.subr.bf16.mxu0 %v1036
      %1352 = vmatpush1.bf16.msra.mxu0 %v1035
      %1353 = vmatprep.subr.bf16.mxu0 %v1040
      %1354 = vmatpush1.bf16.msra.mxu0 %v1039
      %1355 = vmatprep.subr.bf16.mxu0 %v1044
      %1356 = vmatpush1.bf16.msra.mxu0 %v1043
      %1357 = vmatprep.subr.bf16.mxu0 %v1048
      %1358 = vmatpush1.bf16.msra.mxu0 %v1047
      %1359 = vmatprep.subr.bf16.mxu0 %v1052
      %1360 = vmatpush1.bf16.msra.mxu0 %v1051
      %1361 = vmatprep.subr.bf16.mxu0 %v1056
      %1362 = vmatpush1.bf16.msra.mxu0 %v1055
      %1363 = vmatprep.subr.bf16.mxu0 %v1060
      %1364 = vmatpush1.bf16.msra.mxu0 %v1059
      %1365 = vmatprep.mubr.bf16.mxu0 %v544
      %1366 = vmatmul.mubr.bf16.gmra.mrb[0].mxu0 %v542
      %v1367 = vpop.f32.mrb[0].mxu0
      %v1368 = vadd.f32 %v1327, %v1367
      %v1369 = vpop.f32.mrb[0].mxu0
      %v1370 = vadd.f32 %v1329, %v1369
      %v1371 = vpop.f32.mrb[0].mxu0
      %v1372 = vpop.f32.mrb[0].mxu0
      %1373 = vdwg.mxu0
      %v1374 = vmax.f32 %v1286, 0.0
      %v1375 = vmax.f32 %v1288, 0.0
      %v1376 = vmax.f32 %v1368, 0.0
      %v1377 = vmax.f32 %v1370, 0.0
      %v1378 = vmin.f32 %v1374, 6.0
      %v1379 = vmin.f32 %v1375, 6.0
      %v1380 = vmin.f32 %v1376, 6.0
      %v1381 = vmin.f32 %v1377, 6.0
      %v1382 = vpack.c.bf16 %v1378, %v1378
      %v1383 = vpack.c.bf16 %v1379, %v1379
      %v1384 = vpack.c.bf16 %v1380, %v1380
      %v1385 = vpack.c.bf16 %v1381, %v1381
      %v1390 = vcombine.low %v1382, %v1383
      %v1391 = vcombine.low %v1384, %v1385
      %v1393 = vunpack.c.l.s4 1966171168
      %v1394 = vunpack.c.0.s8 %v1393
      %v1395 = vlaneseq
      %v1396 = vshrl.u32 %v1395, 7
      %v1397 = vsub.s32 %v1394, %v1396
      %v1398 = vrot.slane %v1390, %v1397
      %v1400 = vunpack.c.l.s4 1966171168
      %v1401 = vunpack.c.0.s8 %v1400
      %v1402 = vlaneseq
      %v1403 = vshrl.u32 %v1402, 7
      %v1404 = vsub.s32 %v1401, %v1403
      %v1405 = vrot.slane %v1391, %v1404
      %v1406 = vcombine.low %v1398, %v1405
      %v1408 = vunpack.c.l.s4 1966171168
      %v1409 = vunpack.c.0.s8 %v1408
      %v1410 = vlaneseq
      %v1411 = vshrl.u32 %v1410, 7
      %v1412 = vsub.s32 %v1409, %v1411
      %v1413 = vrot.slane %v1406, %v1412
      %vm1415 = vcmask 1040384
      %vm1416 = vsmask.f32 256
      %vm1417 = vmand %vm1415, %vm1416
      %vm1418 = vcmask 1041409
      %vm1419 = vsmask.f32 1280
      %vm1420 = vmand %vm1418, %vm1419
      %vm1421 = vmor %vm1420, %vm1417
      %vm1422 = vcmask 1042434
      %vm1423 = vsmask.f32 2304
      %vm1424 = vmand %vm1422, %vm1423
      %vm1425 = vmor %vm1424, %vm1421
      %vm1426 = vcmask 1043459
      %vm1427 = vsmask.f32 3328
      %vm1428 = vmand %vm1426, %vm1427
      %vm1429 = vmor %vm1428, %vm1425
      %v1430 = vld [vmem:[%s222] sm:$0xf]
      %v1431 = vsel %vm1429, %v1413, %v1430
      %1432 = vst [vmem:[%s222] sm:$0xf] %v1431
      %p1433 = scmp.lt.s32.totalorder %s16, 1
      %s1434 = scalar_select %p1433, %s16, 1
      %s1435 = smul.addr %s1434, 4
      %s1436 = scalar_lea.vmem %s5, %s1435
      // Predicated region
      $region41: #{mobilenet_v1_forward.19} parent=39 // pred_check
        %p1437 = pneg %p144
      $region42: #{mobilenet_v1_forward.19} parent=39 // pred_check_branch
        %1439 = sbr.rel (%p1437) target = $region44
      $region43: #{mobilenet_v1_forward.19} parent=39 // pred_region
        _
      $region44: #{mobilenet_v1_forward.19} parent=39 // pred_fallthru
        _
    $region40: #{mobilenet_v1_forward.19} parent=5 // pred_fallthru
      _
    %p1440 = scmp.le.s32.totalorder 2, %s11
    // Predicated region
    $region45: #{mobilenet_v1_forward.19} parent=5 // pred_check
      %p1441 = pneg %p1440
    $region46: #{mobilenet_v1_forward.19} parent=5 // pred_check_branch
      %1443 = sbr.rel (%p1441) target = $region48
    $region47: #{mobilenet_v1_forward.19} parent=5 // pred_region
      %s1444 = ssub.s32 %s11, 2
      // Predicated region
      $region49: #{mobilenet_v1_forward.19} parent=47 // pred_check
        %p1445 = pneg %p150
      $region50: #{mobilenet_v1_forward.19} parent=47 // pred_check_branch
        %1447 = sbr.rel (%p1445) target = $region52
      $region51: #{mobilenet_v1_forward.19} parent=47 // pred_region
        %p1448 = scmp.lt.s32.totalorder %s17, 1
        %s1449 = scalar_select %p1448, %s17, 1
        %s1450 = smul.addr %s1449, 4
        %s1451 = scalar_lea.vmem %s5, %s1450
      $region52: #{mobilenet_v1_forward.19} parent=47 // pred_fallthru
        _
    $region48: #{mobilenet_v1_forward.19} parent=5 // pred_fallthru
      _
  $region6: #{mobilenet_v1_forward.19} parent=0 // loop_footer
    %s15 = sadd.s32 1, %s11
  $region7: #{mobilenet_v1_forward.19} parent=0 // loop_footer_branch
    %10 = sbr.rel target = $region3
  $region8: #{mobilenet_v1_forward.19} parent=0 // loop_exit
    _

</llo_original>
